<compile_context>
chip_gen: v7x
topology: tpu7x:2x2x1
jax: 0.10.0
libtpu: 0.0.40
codegen_flags: <defaults>
</compile_context>

<pallas_src>
import functools

import jax
import jax.numpy as jnp
from jax.experimental import pallas as pl
from jax.experimental.pallas import tpu as pltpu


# ---------------------------------------------------------------------------
# Pallas kernel: 3x3 reflect-padded conv (+ folded BN affine) + activation.
# ---------------------------------------------------------------------------
def _conv3x3_kernel(*refs, n_streams, act, wp):
    """One (batch, row-tile) grid step.

    refs = x_0..x_{S-1}, w_0..w_{S-1}, bias, out
      x_s  : (1, 1, C_s, (TH+3)*Wp)   bf16/f32, reflect-padded rows flattened
      w_s  : (9, Cout_p, C_s)         tap-major, transposed, BN-scale folded
      bias : (Cout_p, 1)              f32
      out  : (1, 1, Cout, TH*Wp)      f32, lane-dense (spatial on lanes)
    """
    x_refs = refs[:n_streams]
    w_refs = refs[n_streams:2 * n_streams]
    b_ref = refs[2 * n_streams]
    o_ref = refs[2 * n_streams + 1]

    cout = o_ref.shape[2]
    l_out = o_ref.shape[3]
    cout_p = b_ref.shape[0]

    acc = jnp.zeros((cout_p, l_out), jnp.float32)
    for s in range(n_streams):
        for dy in range(3):
            for dx in range(3):
                off = dy * wp + dx                      # tap == constant lane shift
                win = x_refs[s][0, 0, :, off:off + l_out]          # (C_s, TH*Wp)
                acc = acc + jnp.dot(w_refs[s][dy * 3 + dx], win,
                                    preferred_element_type=jnp.float32)

    y = acc + b_ref[...]                                 # (Cout_p, 1) bcast over lanes
    if act == "elu":
        # F.elu, alpha=1; clamp before exp so the unselected branch never overflows.
        y = jnp.where(y > 0.0, y, jnp.exp(jnp.minimum(y, 0.0)) - 1.0)
    elif act == "sigmoid":
        # exp on EUP + approximate reciprocal on EUP; clamp keeps the output in [0,1].
        y = jnp.minimum(pl.reciprocal(1.0 + jnp.exp(-y), approx=True), 1.0)
    o_ref[0, 0] = y[:cout].astype(o_ref.dtype)


# ---------------------------------------------------------------------------
# Wrapper-side layout glue (cheap XLA data movement only).
# ---------------------------------------------------------------------------
def _pad_and_tile(x_nchw, tile_rows, compute_dtype):
    """(N,C,H,W) -> (N, T, C, (TH+3)*Wp): reflect pad by 1, add one spare zero row
    (tap windows of the junk right-pad columns read up to 2 elements past TH+2 rows),
    then cut overlapping row tiles and flatten rows of width Wp = W+2."""
    n, c, h, w = x_nchw.shape
    wp = w + 2
    xp = jnp.pad(x_nchw, ((0, 0), (0, 0), (1, 1), (1, 1)), mode="reflect")
    xp = jnp.pad(xp, ((0, 0), (0, 0), (0, 1), (0, 0)))             # (n, c, h+3, wp)
    num_tiles = h // tile_rows
    tiles = jnp.stack(
        [xp[:, :, i * tile_rows:i * tile_rows + tile_rows + 3, :]
         for i in range(num_tiles)], axis=1)                        # (n,T,c,TH+3,wp)
    return tiles.reshape(n, num_tiles, c, (tile_rows + 3) * wp).astype(compute_dtype)


def _prep_weights(w_hwio, scale, cout_pad, compute_dtype):
    """(3,3,Cin,Cout) HWIO -> (9, Cout_pad, Cin), BN scale folded, tap-major."""
    _, _, cin, cout = w_hwio.shape
    w = jnp.transpose(w_hwio, (0, 1, 3, 2)) * scale[None, None, :, None]
    w = w.reshape(9, cout, cin)
    if cout_pad > cout:
        w = jnp.pad(w, ((0, 0), (0, cout_pad - cout), (0, 0)))
    return w.astype(compute_dtype)


def _pick_tile_rows(h, wp, cins, cout_p, itemsize, budget_bytes, max_tile_rows=None):
    """Largest divisor of h whose double-buffered block footprint fits the budget."""
    cap = h if max_tile_rows is None else max(1, min(h, max_tile_rows))
    best = 1
    for th in range(1, cap + 1):
        if h % th:
            continue
        l_in = (th + 3) * wp
        l_out = th * wp
        fp = sum(2 * c * l_in * itemsize for c in cins)     # double-buffered inputs
        fp += 2 * cout_p * l_out * 4                          # double-buffered output
        fp += cout_p * l_out * 4                              # f32 accumulator
        if fp <= budget_bytes:
            best = th
    return best


def conv3x3_bn_act(xs_nchw, ws_hwio, scale, bias, act, *,
                   compute_dtype=jnp.bfloat16, vmem_budget_bytes=8 << 20,
                   max_tile_rows=None):
    """3x3 reflect-padded conv over the channel concatenation of `xs_nchw`
    (the concat is never materialized: split-K in-kernel), plus per-out-channel
    affine (folded BN) and activation.  Returns f32 NCHW."""
    n, _, h, w = xs_nchw[0].shape
    assert h >= 2 and w >= 2, "reflect padding needs H, W >= 2"
    for xi in xs_nchw:
        assert xi.shape[0] == n and xi.shape[2:] == (h, w)
    cout = ws_hwio[0].shape[-1]
    cout_p = max(8, ((cout + 7) // 8) * 8)      # pad out-channels to a sublane group
    wp = w + 2
    cins = [wi.shape[2] for wi in ws_hwio]

    itemsize = jnp.dtype(compute_dtype).itemsize
    tile_rows = _pick_tile_rows(h, wp, cins, cout_p, itemsize,
                                vmem_budget_bytes, max_tile_rows)
    num_tiles = h // tile_rows
    l_in = (tile_rows + 3) * wp
    l_out = tile_rows * wp

    x_tiles = [_pad_and_tile(xi, tile_rows, compute_dtype) for xi in xs_nchw]
    w_mats = [_prep_weights(wi, scale, cout_p, compute_dtype) for wi in ws_hwio]
    b_arr = jnp.zeros((cout_p, 1), jnp.float32).at[:cout, 0].set(
        bias.astype(jnp.float32))

    n_streams = len(xs_nchw)
    in_specs = (
        [pl.BlockSpec((1, 1, c, l_in), lambda ni, ti: (ni, ti, 0, 0)) for c in cins]
        + [pl.BlockSpec((9, cout_p, c), lambda ni, ti: (0, 0, 0)) for c in cins]
        + [pl.BlockSpec((cout_p, 1), lambda ni, ti: (0, 0))]
    )
    out_spec = pl.BlockSpec((1, 1, cout, l_out), lambda ni, ti: (ni, ti, 0, 0))

    kernel = functools.partial(_conv3x3_kernel, n_streams=n_streams, act=act, wp=wp)
    out = pl.pallas_call(
        kernel,
        out_shape=jax.ShapeDtypeStruct((n, num_tiles, cout, l_out), jnp.float32),
        grid=(n, num_tiles),
        in_specs=in_specs,
        out_specs=out_spec,
        compiler_params=pltpu.CompilerParams(
            dimension_semantics=("parallel", "parallel"),
            vmem_limit_bytes=32 * 1024 * 1024,
        ),
    )(*x_tiles, *w_mats, b_arr)

    out = out.reshape(n, num_tiles, cout, tile_rows, wp)[:, :, :, :, :w]
    out = out.transpose(0, 2, 1, 3, 4).reshape(n, cout, h, w)
    return out


# ---------------------------------------------------------------------------
# DecoderLayer forward.
# ---------------------------------------------------------------------------
def _fold_bn(gamma, beta, running_mean, running_var, conv_bias, eps=1e-5):
    """Fold eval-mode BatchNorm2d + conv bias into per-channel (scale, bias)."""
    scale = gamma / jnp.sqrt(running_var + eps)
    bias = beta + scale * (conv_bias - running_mean)
    return scale, bias


def init_decoder_layer_params(key, in_channels, out_channels, concat_channels,
                              regression=True):
    """Deterministic synthetic parameters matching DecoderLayer.__init__ shapes."""
    ks = jax.random.split(key, 10)

    def conv_w(k, cin, cout):
        return 0.1 * jax.random.normal(k, (3, 3, cin, cout), jnp.float32)  # HWIO

    p = {}
    p["w0"] = conv_w(ks[0], in_channels, out_channels)
    p["b0_conv"] = 0.1 * jax.random.normal(ks[1], (out_channels,), jnp.float32)
    p["g0"] = 1.0 + 0.1 * jax.random.normal(ks[2], (out_channels,), jnp.float32)
    p["beta0"] = 0.1 * jax.random.normal(ks[3], (out_channels,), jnp.float32)
    p["m0"] = jnp.zeros((out_channels,), jnp.float32)   # BN running_mean (fresh module)
    p["v0"] = jnp.ones((out_channels,), jnp.float32)    # BN running_var  (fresh module)
    p["w1"] = conv_w(ks[4], out_channels + concat_channels, out_channels)
    p["b1_conv"] = 0.1 * jax.random.normal(ks[5], (out_channels,), jnp.float32)
    p["g1"] = 1.0 + 0.1 * jax.random.normal(ks[6], (out_channels,), jnp.float32)
    p["beta1"] = 0.1 * jax.random.normal(ks[7], (out_channels,), jnp.float32)
    p["m1"] = jnp.zeros((out_channels,), jnp.float32)
    p["v1"] = jnp.ones((out_channels,), jnp.float32)
    rc = 1 if regression else 80
    p["w_out"] = 0.1 * jax.random.normal(ks[8], (3, 3, out_channels, rc), jnp.float32)
    p["b_out"] = 0.1 * jax.random.normal(ks[9], (rc,), jnp.float32)
    return p


def decoder_layer_forward(params, x_nchw, skip_nchw=None, upsampling=True,
                          output=True, compute_dtype=jnp.bfloat16,
                          max_tile_rows=None):
    """DecoderLayer.forward: returns (features, output) in NCHW like PyTorch."""
    kw = dict(compute_dtype=compute_dtype, max_tile_rows=max_tile_rows)

    # x = elu(b0(c0(x)))
    s0, b0 = _fold_bn(params["g0"], params["beta0"], params["m0"], params["v0"],
                      params["b0_conv"])
    x = conv3x3_bn_act([x_nchw], [params["w0"]], s0, b0, act="elu", **kw)

    # x = upsample(x)  (nearest, scale 2).
    # TODO(synk): fold the 2x nearest upsample into conv1's lane indexing instead of
    # materializing the 4x intermediate here.
    if upsampling:
        x = jnp.repeat(jnp.repeat(x, 2, axis=2), 2, axis=3)

    # cat([x, skip], dim=1) is NOT materialized: split-K streams into conv1.
    cx = x.shape[1]
    if skip_nchw is not None:
        streams = [x, skip_nchw]
        w1s = [params["w1"][:, :, :cx, :], params["w1"][:, :, cx:, :]]
    else:
        assert params["w1"].shape[2] == cx, "concat_channels > 0 requires a skip input"
        streams = [x]
        w1s = [params["w1"]]

    # x = elu(b1(c1(x)))
    s1, b1 = _fold_bn(params["g1"], params["beta1"], params["m1"], params["v1"],
                      params["b1_conv"])
    feats = conv3x3_bn_act(streams, w1s, s1, b1, act="elu", **kw)

    # o = sigmoid(output(x))
    # TODO(synk): fuse this conv with conv1 (keep the ELU'd tile in VMEM) to skip
    # one feature-map HBM read; kept as a second pallas_call for simplicity.
    o = None
    if output:
        rc = params["w_out"].shape[-1]
        o = conv3x3_bn_act([feats], [params["w_out"]], jnp.ones((rc,), jnp.float32),
                           params["b_out"], act="sigmoid", **kw)
    return feats, o


# ---------------------------------------------------------------------------
# Pure-XLA reference (for the in-script correctness check).
# ---------------------------------------------------------------------------
def _conv3x3_ref(x, w_hwio, bias):
    xp = jnp.pad(x, ((0, 0), (0, 0), (1, 1), (1, 1)), mode="reflect")
    y = jax.lax.conv_general_dilated(
        xp, w_hwio, window_strides=(1, 1), padding="VALID",
        dimension_numbers=("NCHW", "HWIO", "NCHW"))
    return y + bias[None, :, None, None]


def _elu_ref(y):
    return jnp.where(y > 0, y, jnp.exp(jnp.minimum(y, 0.0)) - 1.0)


def decoder_layer_forward_ref(params, x, skip=None, upsampling=True, output=True):
    s0, b0 = _fold_bn(params["g0"], params["beta0"], params["m0"], params["v0"],
                      params["b0_conv"])
    y = _elu_ref(_conv3x3_ref(x, params["w0"] * s0[None, None, None, :], b0))
    if upsampling:
        y = jnp.repeat(jnp.repeat(y, 2, axis=2), 2, axis=3)
    if skip is not None:
        y = jnp.concatenate([y, skip], axis=1)
    s1, b1 = _fold_bn(params["g1"], params["beta1"], params["m1"], params["v1"],
                      params["b1_conv"])
    y = _elu_ref(_conv3x3_ref(y, params["w1"] * s1[None, None, None, :], b1))
    o = None
    if output:
        o = _conv3x3_ref(y, params["w_out"], params["b_out"])
        o = 1.0 / (1.0 + jnp.exp(-o))
    return y, o


if __name__ == "__main__":
    key = jax.random.PRNGKey(0)
    kx, kskip, kparam = jax.random.split(key, 3)

    N, Cin, H, W = 2, 4, 16, 16        # small shapes consistent with the module
    Cout, Cskip = 8, 4                  # out_channels=8, concat_channels=4
    x = jax.random.normal(kx, (N, Cin, H, W), jnp.float32)           # NCHW like PyTorch
    skip = jax.random.normal(kskip, (N, Cskip, 2 * H, 2 * W), jnp.float32)
    params = init_decoder_layer_params(kparam, Cin, Cout, Cskip, regression=True)

    # Default (bf16-operand) path.
    fwd = jax.jit(functools.partial(decoder_layer_forward, upsampling=True, output=True))
    feats, out = jax.block_until_ready(fwd(params, x, skip))

    assert feats.shape == (N, Cout, 2 * H, 2 * W)
    assert out.shape == (N, 1, 2 * H, 2 * W)
    assert bool(jnp.isfinite(feats).all()) and bool(jnp.isfinite(out).all())
    assert bool((out >= 0.0).all()) and bool((out <= 1.0).all())

    # f32-compute kernels vs. pure-XLA reference (sigmoid uses the EUP approx recip).
    feats32, out32 = jax.block_until_ready(
        decoder_layer_forward(params, x, skip, compute_dtype=jnp.float32))
    feats_ref, out_ref = decoder_layer_forward_ref(params, x, skip)
    assert float(jnp.max(jnp.abs(feats32 - feats_ref))) < 1e-3
    assert float(jnp.max(jnp.abs(out32 - out_ref))) < 2e-2

    # Multi-row-tile grid path (forced small tiles) must match the single-tile path.
    feats_t, out_t = jax.block_until_ready(
        decoder_layer_forward(params, x, skip, compute_dtype=jnp.float32,
                              max_tile_rows=8))
    assert float(jnp.max(jnp.abs(feats_t - feats32))) < 1e-5
    assert float(jnp.max(jnp.abs(out_t - out32))) < 1e-5

    # bf16 operands stay close to the f32 path.
    assert float(jnp.max(jnp.abs(feats - feats32))) < 0.1

    print("KERNEL_OK")
</pallas_src>

<mosaic_0001>
module attributes {stable_mosaic.version = 11 : i64} {
  func.func @_conv3x3_kernel(%arg0: i32, %arg1: i32, %arg2: memref<1x1x4x342xbf16, #tpu.memory_space<vmem>>, %arg3: memref<9x8x4xbf16, #tpu.memory_space<vmem>>, %arg4: memref<8x1xf32, #tpu.memory_space<vmem>>, %arg5: memref<1x1x8x288xf32, #tpu.memory_space<vmem>>) attributes {dimension_semantics = [#tpu.dimension_semantics<parallel>, #tpu.dimension_semantics<parallel>], iteration_bounds = array<i64: 2, 1>, scalar_prefetch = 0 : i64, scratch_operands = 0 : i64, tpu.core_type = #tpu.core_type<tc>, window_params = [{transform_indices = @transform_0, window_bounds = array<i64: 1, 1, 4, 342>}, {pipeline_mode = #tpu.pipeline_mode<synchronous>, transform_indices = @transform_1, window_bounds = array<i64: 9, 8, 4>}, {pipeline_mode = #tpu.pipeline_mode<synchronous>, transform_indices = @transform_2, window_bounds = array<i64: 8, 1>}, {transform_indices = @transform_3, window_bounds = array<i64: 1, 1, 8, 288>}]} {
    %cst = arith.constant 0.000000e+00 : f32
    %0 = vector.broadcast %cst : f32 to vector<8x288xf32>
    %c0 = arith.constant 0 : index
    %c0_0 = arith.constant 0 : index
    %c0_1 = arith.constant 0 : index
    %c0_2 = arith.constant 0 : index
    %1 = vector.load %arg2[%c0, %c0_0, %c0_1, %c0_2] : memref<1x1x4x342xbf16, #tpu.memory_space<vmem>>, vector<1x1x4x288xbf16>
    %2 = vector.shape_cast %1 : vector<1x1x4x288xbf16> to vector<4x288xbf16>
    %c0_3 = arith.constant 0 : index
    %c0_4 = arith.constant 0 : index
    %c0_5 = arith.constant 0 : index
    %3 = vector.load %arg3[%c0_3, %c0_4, %c0_5] : memref<9x8x4xbf16, #tpu.memory_space<vmem>>, vector<1x8x4xbf16>
    %4 = vector.shape_cast %3 : vector<1x8x4xbf16> to vector<8x4xbf16>
    %cst_6 = arith.constant dense<0.000000e+00> : vector<8x288xf32>
    %5 = tpu.matmul %4, %2, %cst_6 {dimension_numbers = #tpu.dot_dimension_numbers<[1], [0], [0], [1], [0, 0, 1, 1], [], []>} : vector<8x4xbf16>, vector<4x288xbf16>, vector<8x288xf32> -> vector<8x288xf32>
    %6 = arith.addf %0, %5 : vector<8x288xf32>
    %c0_7 = arith.constant 0 : index
    %c0_8 = arith.constant 0 : index
    %c0_9 = arith.constant 0 : index
    %c1 = arith.constant 1 : index
    %7 = vector.load %arg2[%c0_7, %c0_8, %c0_9, %c1] : memref<1x1x4x342xbf16, #tpu.memory_space<vmem>>, vector<1x1x4x288xbf16>
    %8 = vector.shape_cast %7 : vector<1x1x4x288xbf16> to vector<4x288xbf16>
    %c1_10 = arith.constant 1 : index
    %c0_11 = arith.constant 0 : index
    %c0_12 = arith.constant 0 : index
    %9 = vector.load %arg3[%c1_10, %c0_11, %c0_12] : memref<9x8x4xbf16, #tpu.memory_space<vmem>>, vector<1x8x4xbf16>
    %10 = vector.shape_cast %9 : vector<1x8x4xbf16> to vector<8x4xbf16>
    %cst_13 = arith.constant dense<0.000000e+00> : vector<8x288xf32>
    %11 = tpu.matmul %10, %8, %cst_13 {dimension_numbers = #tpu.dot_dimension_numbers<[1], [0], [0], [1], [0, 0, 1, 1], [], []>} : vector<8x4xbf16>, vector<4x288xbf16>, vector<8x288xf32> -> vector<8x288xf32>
    %12 = arith.addf %6, %11 : vector<8x288xf32>
    %c0_14 = arith.constant 0 : index
    %c0_15 = arith.constant 0 : index
    %c0_16 = arith.constant 0 : index
    %c2 = arith.constant 2 : index
    %13 = vector.load %arg2[%c0_14, %c0_15, %c0_16, %c2] : memref<1x1x4x342xbf16, #tpu.memory_space<vmem>>, vector<1x1x4x288xbf16>
    %14 = vector.shape_cast %13 : vector<1x1x4x288xbf16> to vector<4x288xbf16>
    %c2_17 = arith.constant 2 : index
    %c0_18 = arith.constant 0 : index
    %c0_19 = arith.constant 0 : index
    %15 = vector.load %arg3[%c2_17, %c0_18, %c0_19] : memref<9x8x4xbf16, #tpu.memory_space<vmem>>, vector<1x8x4xbf16>
    %16 = vector.shape_cast %15 : vector<1x8x4xbf16> to vector<8x4xbf16>
    %cst_20 = arith.constant dense<0.000000e+00> : vector<8x288xf32>
    %17 = tpu.matmul %16, %14, %cst_20 {dimension_numbers = #tpu.dot_dimension_numbers<[1], [0], [0], [1], [0, 0, 1, 1], [], []>} : vector<8x4xbf16>, vector<4x288xbf16>, vector<8x288xf32> -> vector<8x288xf32>
    %18 = arith.addf %12, %17 : vector<8x288xf32>
    %c0_21 = arith.constant 0 : index
    %c0_22 = arith.constant 0 : index
    %c0_23 = arith.constant 0 : index
    %c18 = arith.constant 18 : index
    %19 = vector.load %arg2[%c0_21, %c0_22, %c0_23, %c18] : memref<1x1x4x342xbf16, #tpu.memory_space<vmem>>, vector<1x1x4x288xbf16>
    %20 = vector.shape_cast %19 : vector<1x1x4x288xbf16> to vector<4x288xbf16>
    %c3 = arith.constant 3 : index
    %c0_24 = arith.constant 0 : index
    %c0_25 = arith.constant 0 : index
    %21 = vector.load %arg3[%c3, %c0_24, %c0_25] : memref<9x8x4xbf16, #tpu.memory_space<vmem>>, vector<1x8x4xbf16>
    %22 = vector.shape_cast %21 : vector<1x8x4xbf16> to vector<8x4xbf16>
    %cst_26 = arith.constant dense<0.000000e+00> : vector<8x288xf32>
    %23 = tpu.matmul %22, %20, %cst_26 {dimension_numbers = #tpu.dot_dimension_numbers<[1], [0], [0], [1], [0, 0, 1, 1], [], []>} : vector<8x4xbf16>, vector<4x288xbf16>, vector<8x288xf32> -> vector<8x288xf32>
    %24 = arith.addf %18, %23 : vector<8x288xf32>
    %c0_27 = arith.constant 0 : index
    %c0_28 = arith.constant 0 : index
    %c0_29 = arith.constant 0 : index
    %c19 = arith.constant 19 : index
    %25 = vector.load %arg2[%c0_27, %c0_28, %c0_29, %c19] : memref<1x1x4x342xbf16, #tpu.memory_space<vmem>>, vector<1x1x4x288xbf16>
    %26 = vector.shape_cast %25 : vector<1x1x4x288xbf16> to vector<4x288xbf16>
    %c4 = arith.constant 4 : index
    %c0_30 = arith.constant 0 : index
    %c0_31 = arith.constant 0 : index
    %27 = vector.load %arg3[%c4, %c0_30, %c0_31] : memref<9x8x4xbf16, #tpu.memory_space<vmem>>, vector<1x8x4xbf16>
    %28 = vector.shape_cast %27 : vector<1x8x4xbf16> to vector<8x4xbf16>
    %cst_32 = arith.constant dense<0.000000e+00> : vector<8x288xf32>
    %29 = tpu.matmul %28, %26, %cst_32 {dimension_numbers = #tpu.dot_dimension_numbers<[1], [0], [0], [1], [0, 0, 1, 1], [], []>} : vector<8x4xbf16>, vector<4x288xbf16>, vector<8x288xf32> -> vector<8x288xf32>
    %30 = arith.addf %24, %29 : vector<8x288xf32>
    %c0_33 = arith.constant 0 : index
    %c0_34 = arith.constant 0 : index
    %c0_35 = arith.constant 0 : index
    %c20 = arith.constant 20 : index
    %31 = vector.load %arg2[%c0_33, %c0_34, %c0_35, %c20] : memref<1x1x4x342xbf16, #tpu.memory_space<vmem>>, vector<1x1x4x288xbf16>
    %32 = vector.shape_cast %31 : vector<1x1x4x288xbf16> to vector<4x288xbf16>
    %c5 = arith.constant 5 : index
    %c0_36 = arith.constant 0 : index
    %c0_37 = arith.constant 0 : index
    %33 = vector.load %arg3[%c5, %c0_36, %c0_37] : memref<9x8x4xbf16, #tpu.memory_space<vmem>>, vector<1x8x4xbf16>
    %34 = vector.shape_cast %33 : vector<1x8x4xbf16> to vector<8x4xbf16>
    %cst_38 = arith.constant dense<0.000000e+00> : vector<8x288xf32>
    %35 = tpu.matmul %34, %32, %cst_38 {dimension_numbers = #tpu.dot_dimension_numbers<[1], [0], [0], [1], [0, 0, 1, 1], [], []>} : vector<8x4xbf16>, vector<4x288xbf16>, vector<8x288xf32> -> vector<8x288xf32>
    %36 = arith.addf %30, %35 : vector<8x288xf32>
    %c0_39 = arith.constant 0 : index
    %c0_40 = arith.constant 0 : index
    %c0_41 = arith.constant 0 : index
    %c36 = arith.constant 36 : index
    %37 = vector.load %arg2[%c0_39, %c0_40, %c0_41, %c36] : memref<1x1x4x342xbf16, #tpu.memory_space<vmem>>, vector<1x1x4x288xbf16>
    %38 = vector.shape_cast %37 : vector<1x1x4x288xbf16> to vector<4x288xbf16>
    %c6 = arith.constant 6 : index
    %c0_42 = arith.constant 0 : index
    %c0_43 = arith.constant 0 : index
    %39 = vector.load %arg3[%c6, %c0_42, %c0_43] : memref<9x8x4xbf16, #tpu.memory_space<vmem>>, vector<1x8x4xbf16>
    %40 = vector.shape_cast %39 : vector<1x8x4xbf16> to vector<8x4xbf16>
    %cst_44 = arith.constant dense<0.000000e+00> : vector<8x288xf32>
    %41 = tpu.matmul %40, %38, %cst_44 {dimension_numbers = #tpu.dot_dimension_numbers<[1], [0], [0], [1], [0, 0, 1, 1], [], []>} : vector<8x4xbf16>, vector<4x288xbf16>, vector<8x288xf32> -> vector<8x288xf32>
    %42 = arith.addf %36, %41 : vector<8x288xf32>
    %c0_45 = arith.constant 0 : index
    %c0_46 = arith.constant 0 : index
    %c0_47 = arith.constant 0 : index
    %c37 = arith.constant 37 : index
    %43 = vector.load %arg2[%c0_45, %c0_46, %c0_47, %c37] : memref<1x1x4x342xbf16, #tpu.memory_space<vmem>>, vector<1x1x4x288xbf16>
    %44 = vector.shape_cast %43 : vector<1x1x4x288xbf16> to vector<4x288xbf16>
    %c7 = arith.constant 7 : index
    %c0_48 = arith.constant 0 : index
    %c0_49 = arith.constant 0 : index
    %45 = vector.load %arg3[%c7, %c0_48, %c0_49] : memref<9x8x4xbf16, #tpu.memory_space<vmem>>, vector<1x8x4xbf16>
    %46 = vector.shape_cast %45 : vector<1x8x4xbf16> to vector<8x4xbf16>
    %cst_50 = arith.constant dense<0.000000e+00> : vector<8x288xf32>
    %47 = tpu.matmul %46, %44, %cst_50 {dimension_numbers = #tpu.dot_dimension_numbers<[1], [0], [0], [1], [0, 0, 1, 1], [], []>} : vector<8x4xbf16>, vector<4x288xbf16>, vector<8x288xf32> -> vector<8x288xf32>
    %48 = arith.addf %42, %47 : vector<8x288xf32>
    %c0_51 = arith.constant 0 : index
    %c0_52 = arith.constant 0 : index
    %c0_53 = arith.constant 0 : index
    %c38 = arith.constant 38 : index
    %49 = vector.load %arg2[%c0_51, %c0_52, %c0_53, %c38] : memref<1x1x4x342xbf16, #tpu.memory_space<vmem>>, vector<1x1x4x288xbf16>
    %50 = vector.shape_cast %49 : vector<1x1x4x288xbf16> to vector<4x288xbf16>
    %c8 = arith.constant 8 : index
    %c0_54 = arith.constant 0 : index
    %c0_55 = arith.constant 0 : index
    %51 = vector.load %arg3[%c8, %c0_54, %c0_55] : memref<9x8x4xbf16, #tpu.memory_space<vmem>>, vector<1x8x4xbf16>
    %52 = vector.shape_cast %51 : vector<1x8x4xbf16> to vector<8x4xbf16>
    %cst_56 = arith.constant dense<0.000000e+00> : vector<8x288xf32>
    %53 = tpu.matmul %52, %50, %cst_56 {dimension_numbers = #tpu.dot_dimension_numbers<[1], [0], [0], [1], [0, 0, 1, 1], [], []>} : vector<8x4xbf16>, vector<4x288xbf16>, vector<8x288xf32> -> vector<8x288xf32>
    %54 = arith.addf %48, %53 : vector<8x288xf32>
    %c0_57 = arith.constant 0 : index
    %c0_58 = arith.constant 0 : index
    %55 = vector.load %arg4[%c0_57, %c0_58] : memref<8x1xf32, #tpu.memory_space<vmem>>, vector<8x1xf32>
    %56 = vector.broadcast %55 : vector<8x1xf32> to vector<8x288xf32>
    %57 = arith.addf %54, %56 : vector<8x288xf32>
    %cst_59 = arith.constant 0.000000e+00 : f32
    %58 = vector.broadcast %cst_59 : f32 to vector<8x288xf32>
    %59 = arith.cmpf ogt, %57, %58 : vector<8x288xf32>
    %cst_60 = arith.constant 0.000000e+00 : f32
    %60 = vector.broadcast %cst_60 : f32 to vector<8x288xf32>
    %61 = arith.minimumf %57, %60 : vector<8x288xf32>
    %62 = math.exp %61 : vector<8x288xf32>
    %cst_61 = arith.constant 1.000000e+00 : f32
    %63 = vector.broadcast %cst_61 : f32 to vector<8x288xf32>
    %64 = arith.subf %62, %63 : vector<8x288xf32>
    %65 = arith.select %59, %57, %64 : vector<8x288xi1>, vector<8x288xf32>
    %c0_62 = arith.constant 0 : index
    %c0_63 = arith.constant 0 : index
    %c0_64 = arith.constant 0 : index
    %c0_65 = arith.constant 0 : index
    %66 = vector.load %arg5[%c0_62, %c0_63, %c0_64, %c0_65] : memref<1x1x8x288xf32, #tpu.memory_space<vmem>>, vector<1x1x8x288xf32>
    %67 = vector.shape_cast %66 : vector<1x1x8x288xf32> to vector<8x288xf32>
    %68 = vector.shape_cast %65 : vector<8x288xf32> to vector<1x1x8x288xf32>
    tpu.vector_store %arg5[%c0_62, %c0_63, %c0_64, %c0_65], %68 {strides = array<i32>} : memref<1x1x8x288xf32, #tpu.memory_space<vmem>>, vector<1x1x8x288xf32>,
    return
  }
  func.func @transform_0(%arg0: i32, %arg1: i32) -> (i32, i32, i32, i32) {
    %c0_i32 = arith.constant 0 : i32
    %c0_i32_0 = arith.constant 0 : i32
    %c0_i32_1 = arith.constant 0 : i32
    return %arg0, %arg1, %c0_i32, %c0_i32_0 : i32, i32, i32, i32
  }
  func.func @transform_1(%arg0: i32, %arg1: i32) -> (i32, i32, i32) {
    %c0_i32 = arith.constant 0 : i32
    %c0_i32_0 = arith.constant 0 : i32
    %c0_i32_1 = arith.constant 0 : i32
    %c0_i32_2 = arith.constant 0 : i32
    return %c0_i32, %c0_i32_0, %c0_i32_1 : i32, i32, i32
  }
  func.func @transform_2(%arg0: i32, %arg1: i32) -> (i32, i32) {
    %c0_i32 = arith.constant 0 : i32
    %c0_i32_0 = arith.constant 0 : i32
    %c0_i32_1 = arith.constant 0 : i32
    return %c0_i32, %c0_i32_0 : i32, i32
  }
  func.func @transform_3(%arg0: i32, %arg1: i32) -> (i32, i32, i32, i32) {
    %c0_i32 = arith.constant 0 : i32
    %c0_i32_0 = arith.constant 0 : i32
    %c0_i32_1 = arith.constant 0 : i32
    return %arg0, %arg1, %c0_i32, %c0_i32_0 : i32, i32, i32, i32
  }
}

module attributes {stable_mosaic.version = 11 : i64} {
  func.func @_conv3x3_kernel(%arg0: i32, %arg1: i32, %arg2: memref<1x1x8x1190xbf16, #tpu.memory_space<vmem>>, %arg3: memref<1x1x4x1190xbf16, #tpu.memory_space<vmem>>, %arg4: memref<9x8x8xbf16, #tpu.memory_space<vmem>>, %arg5: memref<9x8x4xbf16, #tpu.memory_space<vmem>>, %arg6: memref<8x1xf32, #tpu.memory_space<vmem>>, %arg7: memref<1x1x8x1088xf32, #tpu.memory_space<vmem>>) attributes {dimension_semantics = [#tpu.dimension_semantics<parallel>, #tpu.dimension_semantics<parallel>], iteration_bounds = array<i64: 2, 1>, scalar_prefetch = 0 : i64, scratch_operands = 0 : i64, tpu.core_type = #tpu.core_type<tc>, window_params = [{transform_indices = @transform_0, window_bounds = array<i64: 1, 1, 8, 1190>}, {transform_indices = @transform_1, window_bounds = array<i64: 1, 1, 4, 1190>}, {pipeline_mode = #tpu.pipeline_mode<synchronous>, transform_indices = @transform_2, window_bounds = array<i64: 9, 8, 8>}, {pipeline_mode = #tpu.pipeline_mode<synchronous>, transform_indices = @transform_3, window_bounds = array<i64: 9, 8, 4>}, {pipeline_mode = #tpu.pipeline_mode<synchronous>, transform_indices = @transform_4, window_bounds = array<i64: 8, 1>}, {transform_indices = @transform_5, window_bounds = array<i64: 1, 1, 8, 1088>}]} {
    %cst = arith.constant 0.000000e+00 : f32
    %0 = vector.broadcast %cst : f32 to vector<8x1088xf32>
    %c0 = arith.constant 0 : index
    %c0_0 = arith.constant 0 : index
    %c0_1 = arith.constant 0 : index
    %c0_2 = arith.constant 0 : index
    %1 = vector.load %arg2[%c0, %c0_0, %c0_1, %c0_2] : memref<1x1x8x1190xbf16, #tpu.memory_space<vmem>>, vector<1x1x8x1088xbf16>
    %2 = vector.shape_cast %1 : vector<1x1x8x1088xbf16> to vector<8x1088xbf16>
    %c0_3 = arith.constant 0 : index
    %c0_4 = arith.constant 0 : index
    %c0_5 = arith.constant 0 : index
    %3 = vector.load %arg4[%c0_3, %c0_4, %c0_5] : memref<9x8x8xbf16, #tpu.memory_space<vmem>>, vector<1x8x8xbf16>
    %4 = vector.shape_cast %3 : vector<1x8x8xbf16> to vector<8x8xbf16>
    %cst_6 = arith.constant dense<0.000000e+00> : vector<8x1088xf32>
    %5 = tpu.matmul %4, %2, %cst_6 {dimension_numbers = #tpu.dot_dimension_numbers<[1], [0], [0], [1], [0, 0, 1, 1], [], []>} : vector<8x8xbf16>, vector<8x1088xbf16>, vector<8x1088xf32> -> vector<8x1088xf32>
    %6 = arith.addf %0, %5 : vector<8x1088xf32>
    %c0_7 = arith.constant 0 : index
    %c0_8 = arith.constant 0 : index
    %c0_9 = arith.constant 0 : index
    %c1 = arith.constant 1 : index
    %7 = vector.load %arg2[%c0_7, %c0_8, %c0_9, %c1] : memref<1x1x8x1190xbf16, #tpu.memory_space<vmem>>, vector<1x1x8x1088xbf16>
    %8 = vector.shape_cast %7 : vector<1x1x8x1088xbf16> to vector<8x1088xbf16>
    %c1_10 = arith.constant 1 : index
    %c0_11 = arith.constant 0 : index
    %c0_12 = arith.constant 0 : index
    %9 = vector.load %arg4[%c1_10, %c0_11, %c0_12] : memref<9x8x8xbf16, #tpu.memory_space<vmem>>, vector<1x8x8xbf16>
    %10 = vector.shape_cast %9 : vector<1x8x8xbf16> to vector<8x8xbf16>
    %cst_13 = arith.constant dense<0.000000e+00> : vector<8x1088xf32>
    %11 = tpu.matmul %10, %8, %cst_13 {dimension_numbers = #tpu.dot_dimension_numbers<[1], [0], [0], [1], [0, 0, 1, 1], [], []>} : vector<8x8xbf16>, vector<8x1088xbf16>, vector<8x1088xf32> -> vector<8x1088xf32>
    %12 = arith.addf %6, %11 : vector<8x1088xf32>
    %c0_14 = arith.constant 0 : index
    %c0_15 = arith.constant 0 : index
    %c0_16 = arith.constant 0 : index
    %c2 = arith.constant 2 : index
    %13 = vector.load %arg2[%c0_14, %c0_15, %c0_16, %c2] : memref<1x1x8x1190xbf16, #tpu.memory_space<vmem>>, vector<1x1x8x1088xbf16>
    %14 = vector.shape_cast %13 : vector<1x1x8x1088xbf16> to vector<8x1088xbf16>
    %c2_17 = arith.constant 2 : index
    %c0_18 = arith.constant 0 : index
    %c0_19 = arith.constant 0 : index
    %15 = vector.load %arg4[%c2_17, %c0_18, %c0_19] : memref<9x8x8xbf16, #tpu.memory_space<vmem>>, vector<1x8x8xbf16>
    %16 = vector.shape_cast %15 : vector<1x8x8xbf16> to vector<8x8xbf16>
    %cst_20 = arith.constant dense<0.000000e+00> : vector<8x1088xf32>
    %17 = tpu.matmul %16, %14, %cst_20 {dimension_numbers = #tpu.dot_dimension_numbers<[1], [0], [0], [1], [0, 0, 1, 1], [], []>} : vector<8x8xbf16>, vector<8x1088xbf16>, vector<8x1088xf32> -> vector<8x1088xf32>
    %18 = arith.addf %12, %17 : vector<8x1088xf32>
    %c0_21 = arith.constant 0 : index
    %c0_22 = arith.constant 0 : index
    %c0_23 = arith.constant 0 : index
    %c34 = arith.constant 34 : index
    %19 = vector.load %arg2[%c0_21, %c0_22, %c0_23, %c34] : memref<1x1x8x1190xbf16, #tpu.memory_space<vmem>>, vector<1x1x8x1088xbf16>
    %20 = vector.shape_cast %19 : vector<1x1x8x1088xbf16> to vector<8x1088xbf16>
    %c3 = arith.constant 3 : index
    %c0_24 = arith.constant 0 : index
    %c0_25 = arith.constant 0 : index
    %21 = vector.load %arg4[%c3, %c0_24, %c0_25] : memref<9x8x8xbf16, #tpu.memory_space<vmem>>, vector<1x8x8xbf16>
    %22 = vector.shape_cast %21 : vector<1x8x8xbf16> to vector<8x8xbf16>
    %cst_26 = arith.constant dense<0.000000e+00> : vector<8x1088xf32>
    %23 = tpu.matmul %22, %20, %cst_26 {dimension_numbers = #tpu.dot_dimension_numbers<[1], [0], [0], [1], [0, 0, 1, 1], [], []>} : vector<8x8xbf16>, vector<8x1088xbf16>, vector<8x1088xf32> -> vector<8x1088xf32>
    %24 = arith.addf %18, %23 : vector<8x1088xf32>
    %c0_27 = arith.constant 0 : index
    %c0_28 = arith.constant 0 : index
    %c0_29 = arith.constant 0 : index
    %c35 = arith.constant 35 : index
    %25 = vector.load %arg2[%c0_27, %c0_28, %c0_29, %c35] : memref<1x1x8x1190xbf16, #tpu.memory_space<vmem>>, vector<1x1x8x1088xbf16>
    %26 = vector.shape_cast %25 : vector<1x1x8x1088xbf16> to vector<8x1088xbf16>
    %c4 = arith.constant 4 : index
    %c0_30 = arith.constant 0 : index
    %c0_31 = arith.constant 0 : index
    %27 = vector.load %arg4[%c4, %c0_30, %c0_31] : memref<9x8x8xbf16, #tpu.memory_space<vmem>>, vector<1x8x8xbf16>
    %28 = vector.shape_cast %27 : vector<1x8x8xbf16> to vector<8x8xbf16>
    %cst_32 = arith.constant dense<0.000000e+00> : vector<8x1088xf32>
    %29 = tpu.matmul %28, %26, %cst_32 {dimension_numbers = #tpu.dot_dimension_numbers<[1], [0], [0], [1], [0, 0, 1, 1], [], []>} : vector<8x8xbf16>, vector<8x1088xbf16>, vector<8x1088xf32> -> vector<8x1088xf32>
    %30 = arith.addf %24, %29 : vector<8x1088xf32>
    %c0_33 = arith.constant 0 : index
    %c0_34 = arith.constant 0 : index
    %c0_35 = arith.constant 0 : index
    %c36 = arith.constant 36 : index
    %31 = vector.load %arg2[%c0_33, %c0_34, %c0_35, %c36] : memref<1x1x8x1190xbf16, #tpu.memory_space<vmem>>, vector<1x1x8x1088xbf16>
    %32 = vector.shape_cast %31 : vector<1x1x8x1088xbf16> to vector<8x1088xbf16>
    %c5 = arith.constant 5 : index
    %c0_36 = arith.constant 0 : index
    %c0_37 = arith.constant 0 : index
    %33 = vector.load %arg4[%c5, %c0_36, %c0_37] : memref<9x8x8xbf16, #tpu.memory_space<vmem>>, vector<1x8x8xbf16>
    %34 = vector.shape_cast %33 : vector<1x8x8xbf16> to vector<8x8xbf16>
    %cst_38 = arith.constant dense<0.000000e+00> : vector<8x1088xf32>
    %35 = tpu.matmul %34, %32, %cst_38 {dimension_numbers = #tpu.dot_dimension_numbers<[1], [0], [0], [1], [0, 0, 1, 1], [], []>} : vector<8x8xbf16>, vector<8x1088xbf16>, vector<8x1088xf32> -> vector<8x1088xf32>
    %36 = arith.addf %30, %35 : vector<8x1088xf32>
    %c0_39 = arith.constant 0 : index
    %c0_40 = arith.constant 0 : index
    %c0_41 = arith.constant 0 : index
    %c68 = arith.constant 68 : index
    %37 = vector.load %arg2[%c0_39, %c0_40, %c0_41, %c68] : memref<1x1x8x1190xbf16, #tpu.memory_space<vmem>>, vector<1x1x8x1088xbf16>
    %38 = vector.shape_cast %37 : vector<1x1x8x1088xbf16> to vector<8x1088xbf16>
    %c6 = arith.constant 6 : index
    %c0_42 = arith.constant 0 : index
    %c0_43 = arith.constant 0 : index
    %39 = vector.load %arg4[%c6, %c0_42, %c0_43] : memref<9x8x8xbf16, #tpu.memory_space<vmem>>, vector<1x8x8xbf16>
    %40 = vector.shape_cast %39 : vector<1x8x8xbf16> to vector<8x8xbf16>
    %cst_44 = arith.constant dense<0.000000e+00> : vector<8x1088xf32>
    %41 = tpu.matmul %40, %38, %cst_44 {dimension_numbers = #tpu.dot_dimension_numbers<[1], [0], [0], [1], [0, 0, 1, 1], [], []>} : vector<8x8xbf16>, vector<8x1088xbf16>, vector<8x1088xf32> -> vector<8x1088xf32>
    %42 = arith.addf %36, %41 : vector<8x1088xf32>
    %c0_45 = arith.constant 0 : index
    %c0_46 = arith.constant 0 : index
    %c0_47 = arith.constant 0 : index
    %c69 = arith.constant 69 : index
    %43 = vector.load %arg2[%c0_45, %c0_46, %c0_47, %c69] : memref<1x1x8x1190xbf16, #tpu.memory_space<vmem>>, vector<1x1x8x1088xbf16>
    %44 = vector.shape_cast %43 : vector<1x1x8x1088xbf16> to vector<8x1088xbf16>
    %c7 = arith.constant 7 : index
    %c0_48 = arith.constant 0 : index
    %c0_49 = arith.constant 0 : index
    %45 = vector.load %arg4[%c7, %c0_48, %c0_49] : memref<9x8x8xbf16, #tpu.memory_space<vmem>>, vector<1x8x8xbf16>
    %46 = vector.shape_cast %45 : vector<1x8x8xbf16> to vector<8x8xbf16>
    %cst_50 = arith.constant dense<0.000000e+00> : vector<8x1088xf32>
    %47 = tpu.matmul %46, %44, %cst_50 {dimension_numbers = #tpu.dot_dimension_numbers<[1], [0], [0], [1], [0, 0, 1, 1], [], []>} : vector<8x8xbf16>, vector<8x1088xbf16>, vector<8x1088xf32> -> vector<8x1088xf32>
    %48 = arith.addf %42, %47 : vector<8x1088xf32>
    %c0_51 = arith.constant 0 : index
    %c0_52 = arith.constant 0 : index
    %c0_53 = arith.constant 0 : index
    %c70 = arith.constant 70 : index
    %49 = vector.load %arg2[%c0_51, %c0_52, %c0_53, %c70] : memref<1x1x8x1190xbf16, #tpu.memory_space<vmem>>, vector<1x1x8x1088xbf16>
    %50 = vector.shape_cast %49 : vector<1x1x8x1088xbf16> to vector<8x1088xbf16>
    %c8 = arith.constant 8 : index
    %c0_54 = arith.constant 0 : index
    %c0_55 = arith.constant 0 : index
    %51 = vector.load %arg4[%c8, %c0_54, %c0_55] : memref<9x8x8xbf16, #tpu.memory_space<vmem>>, vector<1x8x8xbf16>
    %52 = vector.shape_cast %51 : vector<1x8x8xbf16> to vector<8x8xbf16>
    %cst_56 = arith.constant dense<0.000000e+00> : vector<8x1088xf32>
    %53 = tpu.matmul %52, %50, %cst_56 {dimension_numbers = #tpu.dot_dimension_numbers<[1], [0], [0], [1], [0, 0, 1, 1], [], []>} : vector<8x8xbf16>, vector<8x1088xbf16>, vector<8x1088xf32> -> vector<8x1088xf32>
    %54 = arith.addf %48, %53 : vector<8x1088xf32>
    %c0_57 = arith.constant 0 : index
    %c0_58 = arith.constant 0 : index
    %c0_59 = arith.constant 0 : index
    %c0_60 = arith.constant 0 : index
    %55 = vector.load %arg3[%c0_57, %c0_58, %c0_59, %c0_60] : memref<1x1x4x1190xbf16, #tpu.memory_space<vmem>>, vector<1x1x4x1088xbf16>
    %56 = vector.shape_cast %55 : vector<1x1x4x1088xbf16> to vector<4x1088xbf16>
    %c0_61 = arith.constant 0 : index
    %c0_62 = arith.constant 0 : index
    %c0_63 = arith.constant 0 : index
    %57 = vector.load %arg5[%c0_61, %c0_62, %c0_63] : memref<9x8x4xbf16, #tpu.memory_space<vmem>>, vector<1x8x4xbf16>
    %58 = vector.shape_cast %57 : vector<1x8x4xbf16> to vector<8x4xbf16>
    %cst_64 = arith.constant dense<0.000000e+00> : vector<8x1088xf32>
    %59 = tpu.matmul %58, %56, %cst_64 {dimension_numbers = #tpu.dot_dimension_numbers<[1], [0], [0], [1], [0, 0, 1, 1], [], []>} : vector<8x4xbf16>, vector<4x1088xbf16>, vector<8x1088xf32> -> vector<8x1088xf32>
    %60 = arith.addf %54, %59 : vector<8x1088xf32>
    %c0_65 = arith.constant 0 : index
    %c0_66 = arith.constant 0 : index
    %c0_67 = arith.constant 0 : index
    %c1_68 = arith.constant 1 : index
    %61 = vector.load %arg3[%c0_65, %c0_66, %c0_67, %c1_68] : memref<1x1x4x1190xbf16, #tpu.memory_space<vmem>>, vector<1x1x4x1088xbf16>
    %62 = vector.shape_cast %61 : vector<1x1x4x1088xbf16> to vector<4x1088xbf16>
    %c1_69 = arith.constant 1 : index
    %c0_70 = arith.constant 0 : index
    %c0_71 = arith.constant 0 : index
    %63 = vector.load %arg5[%c1_69, %c0_70, %c0_71] : memref<9x8x4xbf16, #tpu.memory_space<vmem>>, vector<1x8x4xbf16>
    %64 = vector.shape_cast %63 : vector<1x8x4xbf16> to vector<8x4xbf16>
    %cst_72 = arith.constant dense<0.000000e+00> : vector<8x1088xf32>
    %65 = tpu.matmul %64, %62, %cst_72 {dimension_numbers = #tpu.dot_dimension_numbers<[1], [0], [0], [1], [0, 0, 1, 1], [], []>} : vector<8x4xbf16>, vector<4x1088xbf16>, vector<8x1088xf32> -> vector<8x1088xf32>
    %66 = arith.addf %60, %65 : vector<8x1088xf32>
    %c0_73 = arith.constant 0 : index
    %c0_74 = arith.constant 0 : index
    %c0_75 = arith.constant 0 : index
    %c2_76 = arith.constant 2 : index
    %67 = vector.load %arg3[%c0_73, %c0_74, %c0_75, %c2_76] : memref<1x1x4x1190xbf16, #tpu.memory_space<vmem>>, vector<1x1x4x1088xbf16>
    %68 = vector.shape_cast %67 : vector<1x1x4x1088xbf16> to vector<4x1088xbf16>
    %c2_77 = arith.constant 2 : index
    %c0_78 = arith.constant 0 : index
    %c0_79 = arith.constant 0 : index
    %69 = vector.load %arg5[%c2_77, %c0_78, %c0_79] : memref<9x8x4xbf16, #tpu.memory_space<vmem>>, vector<1x8x4xbf16>
    %70 = vector.shape_cast %69 : vector<1x8x4xbf16> to vector<8x4xbf16>
    %cst_80 = arith.constant dense<0.000000e+00> : vector<8x1088xf32>
    %71 = tpu.matmul %70, %68, %cst_80 {dimension_numbers = #tpu.dot_dimension_numbers<[1], [0], [0], [1], [0, 0, 1, 1], [], []>} : vector<8x4xbf16>, vector<4x1088xbf16>, vector<8x1088xf32> -> vector<8x1088xf32>
    %72 = arith.addf %66, %71 : vector<8x1088xf32>
    %c0_81 = arith.constant 0 : index
    %c0_82 = arith.constant 0 : index
    %c0_83 = arith.constant 0 : index
    %c34_84 = arith.constant 34 : index
    %73 = vector.load %arg3[%c0_81, %c0_82, %c0_83, %c34_84] : memref<1x1x4x1190xbf16, #tpu.memory_space<vmem>>, vector<1x1x4x1088xbf16>
    %74 = vector.shape_cast %73 : vector<1x1x4x1088xbf16> to vector<4x1088xbf16>
    %c3_85 = arith.constant 3 : index
    %c0_86 = arith.constant 0 : index
    %c0_87 = arith.constant 0 : index
    %75 = vector.load %arg5[%c3_85, %c0_86, %c0_87] : memref<9x8x4xbf16, #tpu.memory_space<vmem>>, vector<1x8x4xbf16>
    %76 = vector.shape_cast %75 : vector<1x8x4xbf16> to vector<8x4xbf16>
    %cst_88 = arith.constant dense<0.000000e+00> : vector<8x1088xf32>
    %77 = tpu.matmul %76, %74, %cst_88 {dimension_numbers = #tpu.dot_dimension_numbers<[1], [0], [0], [1], [0, 0, 1, 1], [], []>} : vector<8x4xbf16>, vector<4x1088xbf16>, vector<8x1088xf32> -> vector<8x1088xf32>
    %78 = arith.addf %72, %77 : vector<8x1088xf32>
    %c0_89 = arith.constant 0 : index
    %c0_90 = arith.constant 0 : index
    %c0_91 = arith.constant 0 : index
    %c35_92 = arith.constant 35 : index
    %79 = vector.load %arg3[%c0_89, %c0_90, %c0_91, %c35_92] : memref<1x1x4x1190xbf16, #tpu.memory_space<vmem>>, vector<1x1x4x1088xbf16>
    %80 = vector.shape_cast %79 : vector<1x1x4x1088xbf16> to vector<4x1088xbf16>
    %c4_93 = arith.constant 4 : index
    %c0_94 = arith.constant 0 : index
    %c0_95 = arith.constant 0 : index
    %81 = vector.load %arg5[%c4_93, %c0_94, %c0_95] : memref<9x8x4xbf16, #tpu.memory_space<vmem>>, vector<1x8x4xbf16>
    %82 = vector.shape_cast %81 : vector<1x8x4xbf16> to vector<8x4xbf16>
    %cst_96 = arith.constant dense<0.000000e+00> : vector<8x1088xf32>
    %83 = tpu.matmul %82, %80, %cst_96 {dimension_numbers = #tpu.dot_dimension_numbers<[1], [0], [0], [1], [0, 0, 1, 1], [], []>} : vector<8x4xbf16>, vector<4x1088xbf16>, vector<8x1088xf32> -> vector<8x1088xf32>
    %84 = arith.addf %78, %83 : vector<8x1088xf32>
    %c0_97 = arith.constant 0 : index
    %c0_98 = arith.constant 0 : index
    %c0_99 = arith.constant 0 : index
    %c36_100 = arith.constant 36 : index
    %85 = vector.load %arg3[%c0_97, %c0_98, %c0_99, %c36_100] : memref<1x1x4x1190xbf16, #tpu.memory_space<vmem>>, vector<1x1x4x1088xbf16>
    %86 = vector.shape_cast %85 : vector<1x1x4x1088xbf16> to vector<4x1088xbf16>
    %c5_101 = arith.constant 5 : index
    %c0_102 = arith.constant 0 : index
    %c0_103 = arith.constant 0 : index
    %87 = vector.load %arg5[%c5_101, %c0_102, %c0_103] : memref<9x8x4xbf16, #tpu.memory_space<vmem>>, vector<1x8x4xbf16>
    %88 = vector.shape_cast %87 : vector<1x8x4xbf16> to vector<8x4xbf16>
    %cst_104 = arith.constant dense<0.000000e+00> : vector<8x1088xf32>
    %89 = tpu.matmul %88, %86, %cst_104 {dimension_numbers = #tpu.dot_dimension_numbers<[1], [0], [0], [1], [0, 0, 1, 1], [], []>} : vector<8x4xbf16>, vector<4x1088xbf16>, vector<8x1088xf32> -> vector<8x1088xf32>
    %90 = arith.addf %84, %89 : vector<8x1088xf32>
    %c0_105 = arith.constant 0 : index
    %c0_106 = arith.constant 0 : index
    %c0_107 = arith.constant 0 : index
    %c68_108 = arith.constant 68 : index
    %91 = vector.load %arg3[%c0_105, %c0_106, %c0_107, %c68_108] : memref<1x1x4x1190xbf16, #tpu.memory_space<vmem>>, vector<1x1x4x1088xbf16>
    %92 = vector.shape_cast %91 : vector<1x1x4x1088xbf16> to vector<4x1088xbf16>
    %c6_109 = arith.constant 6 : index
    %c0_110 = arith.constant 0 : index
    %c0_111 = arith.constant 0 : index
    %93 = vector.load %arg5[%c6_109, %c0_110, %c0_111] : memref<9x8x4xbf16, #tpu.memory_space<vmem>>, vector<1x8x4xbf16>
    %94 = vector.shape_cast %93 : vector<1x8x4xbf16> to vector<8x4xbf16>
    %cst_112 = arith.constant dense<0.000000e+00> : vector<8x1088xf32>
    %95 = tpu.matmul %94, %92, %cst_112 {dimension_numbers = #tpu.dot_dimension_numbers<[1], [0], [0], [1], [0, 0, 1, 1], [], []>} : vector<8x4xbf16>, vector<4x1088xbf16>, vector<8x1088xf32> -> vector<8x1088xf32>
    %96 = arith.addf %90, %95 : vector<8x1088xf32>
    %c0_113 = arith.constant 0 : index
    %c0_114 = arith.constant 0 : index
    %c0_115 = arith.constant 0 : index
    %c69_116 = arith.constant 69 : index
    %97 = vector.load %arg3[%c0_113, %c0_114, %c0_115, %c69_116] : memref<1x1x4x1190xbf16, #tpu.memory_space<vmem>>, vector<1x1x4x1088xbf16>
    %98 = vector.shape_cast %97 : vector<1x1x4x1088xbf16> to vector<4x1088xbf16>
    %c7_117 = arith.constant 7 : index
    %c0_118 = arith.constant 0 : index
    %c0_119 = arith.constant 0 : index
    %99 = vector.load %arg5[%c7_117, %c0_118, %c0_119] : memref<9x8x4xbf16, #tpu.memory_space<vmem>>, vector<1x8x4xbf16>
    %100 = vector.shape_cast %99 : vector<1x8x4xbf16> to vector<8x4xbf16>
    %cst_120 = arith.constant dense<0.000000e+00> : vector<8x1088xf32>
    %101 = tpu.matmul %100, %98, %cst_120 {dimension_numbers = #tpu.dot_dimension_numbers<[1], [0], [0], [1], [0, 0, 1, 1], [], []>} : vector<8x4xbf16>, vector<4x1088xbf16>, vector<8x1088xf32> -> vector<8x1088xf32>
    %102 = arith.addf %96, %101 : vector<8x1088xf32>
    %c0_121 = arith.constant 0 : index
    %c0_122 = arith.constant 0 : index
    %c0_123 = arith.constant 0 : index
    %c70_124 = arith.constant 70 : index
    %103 = vector.load %arg3[%c0_121, %c0_122, %c0_123, %c70_124] : memref<1x1x4x1190xbf16, #tpu.memory_space<vmem>>, vector<1x1x4x1088xbf16>
    %104 = vector.shape_cast %103 : vector<1x1x4x1088xbf16> to vector<4x1088xbf16>
    %c8_125 = arith.constant 8 : index
    %c0_126 = arith.constant 0 : index
    %c0_127 = arith.constant 0 : index
    %105 = vector.load %arg5[%c8_125, %c0_126, %c0_127] : memref<9x8x4xbf16, #tpu.memory_space<vmem>>, vector<1x8x4xbf16>
    %106 = vector.shape_cast %105 : vector<1x8x4xbf16> to vector<8x4xbf16>
    %cst_128 = arith.constant dense<0.000000e+00> : vector<8x1088xf32>
    %107 = tpu.matmul %106, %104, %cst_128 {dimension_numbers = #tpu.dot_dimension_numbers<[1], [0], [0], [1], [0, 0, 1, 1], [], []>} : vector<8x4xbf16>, vector<4x1088xbf16>, vector<8x1088xf32> -> vector<8x1088xf32>
    %108 = arith.addf %102, %107 : vector<8x1088xf32>
    %c0_129 = arith.constant 0 : index
    %c0_130 = arith.constant 0 : index
    %109 = vector.load %arg6[%c0_129, %c0_130] : memref<8x1xf32, #tpu.memory_space<vmem>>, vector<8x1xf32>
    %110 = vector.broadcast %109 : vector<8x1xf32> to vector<8x1088xf32>
    %111 = arith.addf %108, %110 : vector<8x1088xf32>
    %cst_131 = arith.constant 0.000000e+00 : f32
    %112 = vector.broadcast %cst_131 : f32 to vector<8x1088xf32>
    %113 = arith.cmpf ogt, %111, %112 : vector<8x1088xf32>
    %cst_132 = arith.constant 0.000000e+00 : f32
    %114 = vector.broadcast %cst_132 : f32 to vector<8x1088xf32>
    %115 = arith.minimumf %111, %114 : vector<8x1088xf32>
    %116 = math.exp %115 : vector<8x1088xf32>
    %cst_133 = arith.constant 1.000000e+00 : f32
    %117 = vector.broadcast %cst_133 : f32 to vector<8x1088xf32>
    %118 = arith.subf %116, %117 : vector<8x1088xf32>
    %119 = arith.select %113, %111, %118 : vector<8x1088xi1>, vector<8x1088xf32>
    %c0_134 = arith.constant 0 : index
    %c0_135 = arith.constant 0 : index
    %c0_136 = arith.constant 0 : index
    %c0_137 = arith.constant 0 : index
    %120 = vector.load %arg7[%c0_134, %c0_135, %c0_136, %c0_137] : memref<1x1x8x1088xf32, #tpu.memory_space<vmem>>, vector<1x1x8x1088xf32>
    %121 = vector.shape_cast %120 : vector<1x1x8x1088xf32> to vector<8x1088xf32>
    %122 = vector.shape_cast %119 : vector<8x1088xf32> to vector<1x1x8x1088xf32>
    tpu.vector_store %arg7[%c0_134, %c0_135, %c0_136, %c0_137], %122 {strides = array<i32>} : memref<1x1x8x1088xf32, #tpu.memory_space<vmem>>, vector<1x1x8x1088xf32>,
    return
  }
  func.func @transform_0(%arg0: i32, %arg1: i32) -> (i32, i32, i32, i32) {
    %c0_i32 = arith.constant 0 : i32
    %c0_i32_0 = arith.constant 0 : i32
    %c0_i32_1 = arith.constant 0 : i32
    return %arg0, %arg1, %c0_i32, %c0_i32_0 : i32, i32, i32, i32
  }
  func.func @transform_1(%arg0: i32, %arg1: i32) -> (i32, i32, i32, i32) {
    %c0_i32 = arith.constant 0 : i32
    %c0_i32_0 = arith.constant 0 : i32
    %c0_i32_1 = arith.constant 0 : i32
    return %arg0, %arg1, %c0_i32, %c0_i32_0 : i32, i32, i32, i32
  }
  func.func @transform_2(%arg0: i32, %arg1: i32) -> (i32, i32, i32) {
    %c0_i32 = arith.constant 0 : i32
    %c0_i32_0 = arith.constant 0 : i32
    %c0_i32_1 = arith.constant 0 : i32
    %c0_i32_2 = arith.constant 0 : i32
    return %c0_i32, %c0_i32_0, %c0_i32_1 : i32, i32, i32
  }
  func.func @transform_3(%arg0: i32, %arg1: i32) -> (i32, i32, i32) {
    %c0_i32 = arith.constant 0 : i32
    %c0_i32_0 = arith.constant 0 : i32
    %c0_i32_1 = arith.constant 0 : i32
    %c0_i32_2 = arith.constant 0 : i32
    return %c0_i32, %c0_i32_0, %c0_i32_1 : i32, i32, i32
  }
  func.func @transform_4(%arg0: i32, %arg1: i32) -> (i32, i32) {
    %c0_i32 = arith.constant 0 : i32
    %c0_i32_0 = arith.constant 0 : i32
    %c0_i32_1 = arith.constant 0 : i32
    return %c0_i32, %c0_i32_0 : i32, i32
  }
  func.func @transform_5(%arg0: i32, %arg1: i32) -> (i32, i32, i32, i32) {
    %c0_i32 = arith.constant 0 : i32
    %c0_i32_0 = arith.constant 0 : i32
    %c0_i32_1 = arith.constant 0 : i32
    return %arg0, %arg1, %c0_i32, %c0_i32_0 : i32, i32, i32, i32
  }
}

module attributes {stable_mosaic.version = 11 : i64} {
  func.func @_conv3x3_kernel(%arg0: i32, %arg1: i32, %arg2: memref<1x1x8x1190xbf16, #tpu.memory_space<vmem>>, %arg3: memref<9x8x8xbf16, #tpu.memory_space<vmem>>, %arg4: memref<8x1xf32, #tpu.memory_space<vmem>>, %arg5: memref<1x1x1x1088xf32, #tpu.memory_space<vmem>>) attributes {dimension_semantics = [#tpu.dimension_semantics<parallel>, #tpu.dimension_semantics<parallel>], iteration_bounds = array<i64: 2, 1>, scalar_prefetch = 0 : i64, scratch_operands = 0 : i64, tpu.core_type = #tpu.core_type<tc>, window_params = [{transform_indices = @transform_0, window_bounds = array<i64: 1, 1, 8, 1190>}, {pipeline_mode = #tpu.pipeline_mode<synchronous>, transform_indices = @transform_1, window_bounds = array<i64: 9, 8, 8>}, {pipeline_mode = #tpu.pipeline_mode<synchronous>, transform_indices = @transform_2, window_bounds = array<i64: 8, 1>}, {transform_indices = @transform_3, window_bounds = array<i64: 1, 1, 1, 1088>}]} {
    %cst = arith.constant 0.000000e+00 : f32
    %0 = vector.broadcast %cst : f32 to vector<8x1088xf32>
    %c0 = arith.constant 0 : index
    %c0_0 = arith.constant 0 : index
    %c0_1 = arith.constant 0 : index
    %c0_2 = arith.constant 0 : index
    %1 = vector.load %arg2[%c0, %c0_0, %c0_1, %c0_2] : memref<1x1x8x1190xbf16, #tpu.memory_space<vmem>>, vector<1x1x8x1088xbf16>
    %2 = vector.shape_cast %1 : vector<1x1x8x1088xbf16> to vector<8x1088xbf16>
    %c0_3 = arith.constant 0 : index
    %c0_4 = arith.constant 0 : index
    %c0_5 = arith.constant 0 : index
    %3 = vector.load %arg3[%c0_3, %c0_4, %c0_5] : memref<9x8x8xbf16, #tpu.memory_space<vmem>>, vector<1x8x8xbf16>
    %4 = vector.shape_cast %3 : vector<1x8x8xbf16> to vector<8x8xbf16>
    %cst_6 = arith.constant dense<0.000000e+00> : vector<8x1088xf32>
    %5 = tpu.matmul %4, %2, %cst_6 {dimension_numbers = #tpu.dot_dimension_numbers<[1], [0], [0], [1], [0, 0, 1, 1], [], []>} : vector<8x8xbf16>, vector<8x1088xbf16>, vector<8x1088xf32> -> vector<8x1088xf32>
    %6 = arith.addf %0, %5 : vector<8x1088xf32>
    %c0_7 = arith.constant 0 : index
    %c0_8 = arith.constant 0 : index
    %c0_9 = arith.constant 0 : index
    %c1 = arith.constant 1 : index
    %7 = vector.load %arg2[%c0_7, %c0_8, %c0_9, %c1] : memref<1x1x8x1190xbf16, #tpu.memory_space<vmem>>, vector<1x1x8x1088xbf16>
    %8 = vector.shape_cast %7 : vector<1x1x8x1088xbf16> to vector<8x1088xbf16>
    %c1_10 = arith.constant 1 : index
    %c0_11 = arith.constant 0 : index
    %c0_12 = arith.constant 0 : index
    %9 = vector.load %arg3[%c1_10, %c0_11, %c0_12] : memref<9x8x8xbf16, #tpu.memory_space<vmem>>, vector<1x8x8xbf16>
    %10 = vector.shape_cast %9 : vector<1x8x8xbf16> to vector<8x8xbf16>
    %cst_13 = arith.constant dense<0.000000e+00> : vector<8x1088xf32>
    %11 = tpu.matmul %10, %8, %cst_13 {dimension_numbers = #tpu.dot_dimension_numbers<[1], [0], [0], [1], [0, 0, 1, 1], [], []>} : vector<8x8xbf16>, vector<8x1088xbf16>, vector<8x1088xf32> -> vector<8x1088xf32>
    %12 = arith.addf %6, %11 : vector<8x1088xf32>
    %c0_14 = arith.constant 0 : index
    %c0_15 = arith.constant 0 : index
    %c0_16 = arith.constant 0 : index
    %c2 = arith.constant 2 : index
    %13 = vector.load %arg2[%c0_14, %c0_15, %c0_16, %c2] : memref<1x1x8x1190xbf16, #tpu.memory_space<vmem>>, vector<1x1x8x1088xbf16>
    %14 = vector.shape_cast %13 : vector<1x1x8x1088xbf16> to vector<8x1088xbf16>
    %c2_17 = arith.constant 2 : index
    %c0_18 = arith.constant 0 : index
    %c0_19 = arith.constant 0 : index
    %15 = vector.load %arg3[%c2_17, %c0_18, %c0_19] : memref<9x8x8xbf16, #tpu.memory_space<vmem>>, vector<1x8x8xbf16>
    %16 = vector.shape_cast %15 : vector<1x8x8xbf16> to vector<8x8xbf16>
    %cst_20 = arith.constant dense<0.000000e+00> : vector<8x1088xf32>
    %17 = tpu.matmul %16, %14, %cst_20 {dimension_numbers = #tpu.dot_dimension_numbers<[1], [0], [0], [1], [0, 0, 1, 1], [], []>} : vector<8x8xbf16>, vector<8x1088xbf16>, vector<8x1088xf32> -> vector<8x1088xf32>
    %18 = arith.addf %12, %17 : vector<8x1088xf32>
    %c0_21 = arith.constant 0 : index
    %c0_22 = arith.constant 0 : index
    %c0_23 = arith.constant 0 : index
    %c34 = arith.constant 34 : index
    %19 = vector.load %arg2[%c0_21, %c0_22, %c0_23, %c34] : memref<1x1x8x1190xbf16, #tpu.memory_space<vmem>>, vector<1x1x8x1088xbf16>
    %20 = vector.shape_cast %19 : vector<1x1x8x1088xbf16> to vector<8x1088xbf16>
    %c3 = arith.constant 3 : index
    %c0_24 = arith.constant 0 : index
    %c0_25 = arith.constant 0 : index
    %21 = vector.load %arg3[%c3, %c0_24, %c0_25] : memref<9x8x8xbf16, #tpu.memory_space<vmem>>, vector<1x8x8xbf16>
    %22 = vector.shape_cast %21 : vector<1x8x8xbf16> to vector<8x8xbf16>
    %cst_26 = arith.constant dense<0.000000e+00> : vector<8x1088xf32>
    %23 = tpu.matmul %22, %20, %cst_26 {dimension_numbers = #tpu.dot_dimension_numbers<[1], [0], [0], [1], [0, 0, 1, 1], [], []>} : vector<8x8xbf16>, vector<8x1088xbf16>, vector<8x1088xf32> -> vector<8x1088xf32>
    %24 = arith.addf %18, %23 : vector<8x1088xf32>
    %c0_27 = arith.constant 0 : index
    %c0_28 = arith.constant 0 : index
    %c0_29 = arith.constant 0 : index
    %c35 = arith.constant 35 : index
    %25 = vector.load %arg2[%c0_27, %c0_28, %c0_29, %c35] : memref<1x1x8x1190xbf16, #tpu.memory_space<vmem>>, vector<1x1x8x1088xbf16>
    %26 = vector.shape_cast %25 : vector<1x1x8x1088xbf16> to vector<8x1088xbf16>
    %c4 = arith.constant 4 : index
    %c0_30 = arith.constant 0 : index
    %c0_31 = arith.constant 0 : index
    %27 = vector.load %arg3[%c4, %c0_30, %c0_31] : memref<9x8x8xbf16, #tpu.memory_space<vmem>>, vector<1x8x8xbf16>
    %28 = vector.shape_cast %27 : vector<1x8x8xbf16> to vector<8x8xbf16>
    %cst_32 = arith.constant dense<0.000000e+00> : vector<8x1088xf32>
    %29 = tpu.matmul %28, %26, %cst_32 {dimension_numbers = #tpu.dot_dimension_numbers<[1], [0], [0], [1], [0, 0, 1, 1], [], []>} : vector<8x8xbf16>, vector<8x1088xbf16>, vector<8x1088xf32> -> vector<8x1088xf32>
    %30 = arith.addf %24, %29 : vector<8x1088xf32>
    %c0_33 = arith.constant 0 : index
    %c0_34 = arith.constant 0 : index
    %c0_35 = arith.constant 0 : index
    %c36 = arith.constant 36 : index
    %31 = vector.load %arg2[%c0_33, %c0_34, %c0_35, %c36] : memref<1x1x8x1190xbf16, #tpu.memory_space<vmem>>, vector<1x1x8x1088xbf16>
    %32 = vector.shape_cast %31 : vector<1x1x8x1088xbf16> to vector<8x1088xbf16>
    %c5 = arith.constant 5 : index
    %c0_36 = arith.constant 0 : index
    %c0_37 = arith.constant 0 : index
    %33 = vector.load %arg3[%c5, %c0_36, %c0_37] : memref<9x8x8xbf16, #tpu.memory_space<vmem>>, vector<1x8x8xbf16>
    %34 = vector.shape_cast %33 : vector<1x8x8xbf16> to vector<8x8xbf16>
    %cst_38 = arith.constant dense<0.000000e+00> : vector<8x1088xf32>
    %35 = tpu.matmul %34, %32, %cst_38 {dimension_numbers = #tpu.dot_dimension_numbers<[1], [0], [0], [1], [0, 0, 1, 1], [], []>} : vector<8x8xbf16>, vector<8x1088xbf16>, vector<8x1088xf32> -> vector<8x1088xf32>
    %36 = arith.addf %30, %35 : vector<8x1088xf32>
    %c0_39 = arith.constant 0 : index
    %c0_40 = arith.constant 0 : index
    %c0_41 = arith.constant 0 : index
    %c68 = arith.constant 68 : index
    %37 = vector.load %arg2[%c0_39, %c0_40, %c0_41, %c68] : memref<1x1x8x1190xbf16, #tpu.memory_space<vmem>>, vector<1x1x8x1088xbf16>
    %38 = vector.shape_cast %37 : vector<1x1x8x1088xbf16> to vector<8x1088xbf16>
    %c6 = arith.constant 6 : index
    %c0_42 = arith.constant 0 : index
    %c0_43 = arith.constant 0 : index
    %39 = vector.load %arg3[%c6, %c0_42, %c0_43] : memref<9x8x8xbf16, #tpu.memory_space<vmem>>, vector<1x8x8xbf16>
    %40 = vector.shape_cast %39 : vector<1x8x8xbf16> to vector<8x8xbf16>
    %cst_44 = arith.constant dense<0.000000e+00> : vector<8x1088xf32>
    %41 = tpu.matmul %40, %38, %cst_44 {dimension_numbers = #tpu.dot_dimension_numbers<[1], [0], [0], [1], [0, 0, 1, 1], [], []>} : vector<8x8xbf16>, vector<8x1088xbf16>, vector<8x1088xf32> -> vector<8x1088xf32>
    %42 = arith.addf %36, %41 : vector<8x1088xf32>
    %c0_45 = arith.constant 0 : index
    %c0_46 = arith.constant 0 : index
    %c0_47 = arith.constant 0 : index
    %c69 = arith.constant 69 : index
    %43 = vector.load %arg2[%c0_45, %c0_46, %c0_47, %c69] : memref<1x1x8x1190xbf16, #tpu.memory_space<vmem>>, vector<1x1x8x1088xbf16>
    %44 = vector.shape_cast %43 : vector<1x1x8x1088xbf16> to vector<8x1088xbf16>
    %c7 = arith.constant 7 : index
    %c0_48 = arith.constant 0 : index
    %c0_49 = arith.constant 0 : index
    %45 = vector.load %arg3[%c7, %c0_48, %c0_49] : memref<9x8x8xbf16, #tpu.memory_space<vmem>>, vector<1x8x8xbf16>
    %46 = vector.shape_cast %45 : vector<1x8x8xbf16> to vector<8x8xbf16>
    %cst_50 = arith.constant dense<0.000000e+00> : vector<8x1088xf32>
    %47 = tpu.matmul %46, %44, %cst_50 {dimension_numbers = #tpu.dot_dimension_numbers<[1], [0], [0], [1], [0, 0, 1, 1], [], []>} : vector<8x8xbf16>, vector<8x1088xbf16>, vector<8x1088xf32> -> vector<8x1088xf32>
    %48 = arith.addf %42, %47 : vector<8x1088xf32>
    %c0_51 = arith.constant 0 : index
    %c0_52 = arith.constant 0 : index
    %c0_53 = arith.constant 0 : index
    %c70 = arith.constant 70 : index
    %49 = vector.load %arg2[%c0_51, %c0_52, %c0_53, %c70] : memref<1x1x8x1190xbf16, #tpu.memory_space<vmem>>, vector<1x1x8x1088xbf16>
    %50 = vector.shape_cast %49 : vector<1x1x8x1088xbf16> to vector<8x1088xbf16>
    %c8 = arith.constant 8 : index
    %c0_54 = arith.constant 0 : index
    %c0_55 = arith.constant 0 : index
    %51 = vector.load %arg3[%c8, %c0_54, %c0_55] : memref<9x8x8xbf16, #tpu.memory_space<vmem>>, vector<1x8x8xbf16>
    %52 = vector.shape_cast %51 : vector<1x8x8xbf16> to vector<8x8xbf16>
    %cst_56 = arith.constant dense<0.000000e+00> : vector<8x1088xf32>
    %53 = tpu.matmul %52, %50, %cst_56 {dimension_numbers = #tpu.dot_dimension_numbers<[1], [0], [0], [1], [0, 0, 1, 1], [], []>} : vector<8x8xbf16>, vector<8x1088xbf16>, vector<8x1088xf32> -> vector<8x1088xf32>
    %54 = arith.addf %48, %53 : vector<8x1088xf32>
    %c0_57 = arith.constant 0 : index
    %c0_58 = arith.constant 0 : index
    %55 = vector.load %arg4[%c0_57, %c0_58] : memref<8x1xf32, #tpu.memory_space<vmem>>, vector<8x1xf32>
    %56 = vector.broadcast %55 : vector<8x1xf32> to vector<8x1088xf32>
    %57 = arith.addf %54, %56 : vector<8x1088xf32>
    %cst_59 = arith.constant 0.000000e+00 : f32
    %58 = vector.broadcast %cst_59 : f32 to vector<8x1088xf32>
    %59 = arith.subf %58, %57 : vector<8x1088xf32>
    %60 = math.exp %59 : vector<8x1088xf32>
    %cst_60 = arith.constant 1.000000e+00 : f32
    %61 = vector.broadcast %cst_60 : f32 to vector<8x1088xf32>
    %62 = arith.addf %61, %60 : vector<8x1088xf32>
    %63 = tpu.reciprocal %62 {approx = true} : vector<8x1088xf32> -> vector<8x1088xf32>
    %cst_61 = arith.constant 1.000000e+00 : f32
    %64 = vector.broadcast %cst_61 : f32 to vector<8x1088xf32>
    %65 = arith.minimumf %63, %64 : vector<8x1088xf32>
    %66 = vector.extract_strided_slice %65 {offsets = [0, 0], sizes = [1, 1088], strides = [1, 1]} : vector<8x1088xf32> to vector<1x1088xf32>
    %c0_62 = arith.constant 0 : index
    %c0_63 = arith.constant 0 : index
    %c0_64 = arith.constant 0 : index
    %c0_65 = arith.constant 0 : index
    %67 = vector.load %arg5[%c0_62, %c0_63, %c0_64, %c0_65] : memref<1x1x1x1088xf32, #tpu.memory_space<vmem>>, vector<1x1x1x1088xf32>
    %68 = vector.shape_cast %67 : vector<1x1x1x1088xf32> to vector<1x1088xf32>
    %69 = vector.shape_cast %66 : vector<1x1088xf32> to vector<1x1x1x1088xf32>
    tpu.vector_store %arg5[%c0_62, %c0_63, %c0_64, %c0_65], %69 {strides = array<i32>} : memref<1x1x1x1088xf32, #tpu.memory_space<vmem>>, vector<1x1x1x1088xf32>,
    return
  }
  func.func @transform_0(%arg0: i32, %arg1: i32) -> (i32, i32, i32, i32) {
    %c0_i32 = arith.constant 0 : i32
    %c0_i32_0 = arith.constant 0 : i32
    %c0_i32_1 = arith.constant 0 : i32
    return %arg0, %arg1, %c0_i32, %c0_i32_0 : i32, i32, i32, i32
  }
  func.func @transform_1(%arg0: i32, %arg1: i32) -> (i32, i32, i32) {
    %c0_i32 = arith.constant 0 : i32
    %c0_i32_0 = arith.constant 0 : i32
    %c0_i32_1 = arith.constant 0 : i32
    %c0_i32_2 = arith.constant 0 : i32
    return %c0_i32, %c0_i32_0, %c0_i32_1 : i32, i32, i32
  }
  func.func @transform_2(%arg0: i32, %arg1: i32) -> (i32, i32) {
    %c0_i32 = arith.constant 0 : i32
    %c0_i32_0 = arith.constant 0 : i32
    %c0_i32_1 = arith.constant 0 : i32
    return %c0_i32, %c0_i32_0 : i32, i32
  }
  func.func @transform_3(%arg0: i32, %arg1: i32) -> (i32, i32, i32, i32) {
    %c0_i32 = arith.constant 0 : i32
    %c0_i32_0 = arith.constant 0 : i32
    %c0_i32_1 = arith.constant 0 : i32
    return %arg0, %arg1, %c0_i32, %c0_i32_0 : i32, i32, i32, i32
  }
}

</mosaic_0001>

<llo_original>
// kernel: decoder_layer_forward.3
$region0: #{decoder_layer_forward.3}
  #allocation0 [shape = 'u32[]', space=smem, size = 0x4, offset = 0x4, fixed_abs, tag = 'smem constant byte address 0x4 - core index']
  #allocation1 [shape = 'u32[144,128]{1,0:T(1,128)}', space=vmem, size = 0x12000, scoped, tag = 'internal scratch']
  %s0 = inlined_call_operand.vmem [shape: bf16[2,1,4,342], index: 0, kind: input, shape index: {}]
  %s1 = inlined_call_operand.vmem [shape: bf16[9,8,4], index: 1, kind: input, shape index: {}]
  %s2 = inlined_call_operand.vmem [shape: f32[8,1], index: 2, kind: input, shape index: {}]
  %s3 = inlined_call_operand.vmem [shape: f32[2,1,8,288], index: 3, kind: output, shape index: {}]
  %s4 = sld [smem:[#allocation0]]
  $region45: #{decoder_layer_forward.3} parent=0
    _
  %s6 = ssub.s32 1, %s4
  %s7 = scalar_select 0, %s6, %s4
  loop: start=0, step=1, limit=4
  $region2: #{decoder_layer_forward.3} parent=0 // loop_pre_header
    _
  $region3: #{decoder_layer_forward.3} parent=0 // loop_header
    %s9 = sphi 0, %s13
    %p10 = scmp.ge.s32.totalorder %s9, 4
    %s16 = sphi 0, %s28
    %s17 = sphi 0, %s24
    %s18 = sphi 0, %s16
    %s19 = sphi 0, %s17
    %s20 = sphi 0, %s18
    %s21 = sphi 0, %s19
    %s33 = sphi 0, %s35
    %s36 = sphi 0, %s33
    %s37 = sphi 0, %s36
    %s53 = sphi 0, %s37
    %s57 = sphi 0, %s57
    %s59 = sphi 0, %s57
    %s60 = sphi 0, %s59
    %s74 = sphi 0, %s60
    %s78 = sphi 0, %s78
    %s80 = sphi 0, %s78
    %s81 = sphi 0, %s80
    %s95 = sphi 0, %s81
    %s103 = sphi 0, %s105
    %s106 = sphi 0, %s103
    %s107 = sphi 0, %s106
    %s123 = sphi 0, %s107
  $region4: #{decoder_layer_forward.3} parent=0 // loop_header_branch
    %12 = sbr.rel (%p10) target = $region8
  $region5: #{decoder_layer_forward.3} parent=0 // loop_body
    %s14 = ssub.s32 %s9, 1
    %s15 = ssub.s32 %s9, 2
    %s22 = sadd.s32 1, %s17
    %p23 = scmp.ge.s32.totalorder %s22, 1
    %s24 = scalar_select %p23, 0, %s22
    %s25 = sadd.s32 1, %s16
    %s26 = scalar_select %p23, %s25, %s16
    %p27 = scmp.ge.s32.totalorder %s26, 2
    %s28 = scalar_select %p27, 0, %s26
    %s29 = ssub.s32 %s16, %s28
    %s30 = ssub.s32 %s17, %s24
    %s31 = sor.u32 %s29, %s30
    %p32 = scmp.eq.s32.totalorder %s31, 0
    %s34 = sadd.s32 %s33, 1
    %s35 = scalar_select %p32, %s33, %s34
    %p38 = pneg %p32
    %p39 = scmp.eq.s32.totalorder %s9, 1
    %p40 = por %p38, %p39
    %p41 = scmp.ne.s32.totalorder %s33, %s36
    %p42 = scmp.eq.s32.totalorder %s9, 0
    %p43 = por %p41, %p42
    %p44 = scmp.ne.s32.totalorder %s33, %s36
    %p45 = scmp.eq.s32.totalorder %s14, 1
    %p46 = por %p44, %p45
    %p47 = scmp.ne.s32.totalorder %s36, %s37
    %p48 = scmp.eq.s32.totalorder %s14, 0
    %p49 = por %p47, %p48
    %p50 = scmp.ne.s32.totalorder %s36, %s37
    %p51 = scmp.eq.s32.totalorder %s15, 1
    %p52 = por %p50, %p51
    %p54 = scmp.ne.s32.totalorder %s37, %s53
    %p55 = scmp.eq.s32.totalorder %s15, 0
    %p56 = por %p54, %p55
    %s58 = sadd.s32 %s57, 1
    %p61 = scmp.eq.s32.totalorder %s9, 1
    %p62 = scmp.ne.s32.totalorder %s57, %s59
    %p63 = scmp.eq.s32.totalorder %s9, 0
    %p64 = por %p62, %p63
    %p65 = scmp.ne.s32.totalorder %s57, %s59
    %p66 = scmp.eq.s32.totalorder %s14, 1
    %p67 = por %p65, %p66
    %p68 = scmp.ne.s32.totalorder %s59, %s60
    %p69 = scmp.eq.s32.totalorder %s14, 0
    %p70 = por %p68, %p69
    %p71 = scmp.ne.s32.totalorder %s59, %s60
    %p72 = scmp.eq.s32.totalorder %s15, 1
    %p73 = por %p71, %p72
    %p75 = scmp.ne.s32.totalorder %s60, %s74
    %p76 = scmp.eq.s32.totalorder %s15, 0
    %p77 = por %p75, %p76
    %s79 = sadd.s32 %s78, 1
    %p82 = scmp.eq.s32.totalorder %s9, 1
    %p83 = scmp.ne.s32.totalorder %s78, %s80
    %p84 = scmp.eq.s32.totalorder %s9, 0
    %p85 = por %p83, %p84
    %p86 = scmp.ne.s32.totalorder %s78, %s80
    %p87 = scmp.eq.s32.totalorder %s14, 1
    %p88 = por %p86, %p87
    %p89 = scmp.ne.s32.totalorder %s80, %s81
    %p90 = scmp.eq.s32.totalorder %s14, 0
    %p91 = por %p89, %p90
    %p92 = scmp.ne.s32.totalorder %s80, %s81
    %p93 = scmp.eq.s32.totalorder %s15, 1
    %p94 = por %p92, %p93
    %p96 = scmp.ne.s32.totalorder %s81, %s95
    %p97 = scmp.eq.s32.totalorder %s15, 0
    %p98 = por %p96, %p97
    %s99 = ssub.s32 %s16, %s28
    %s100 = ssub.s32 %s17, %s24
    %s101 = sor.u32 %s99, %s100
    %p102 = scmp.eq.s32.totalorder %s101, 0
    %s104 = sadd.s32 %s103, 1
    %s105 = scalar_select %p102, %s103, %s104
    %p108 = pneg %p102
    %p109 = scmp.eq.s32.totalorder %s9, 1
    %p110 = por %p108, %p109
    %p111 = scmp.ne.s32.totalorder %s103, %s106
    %p112 = scmp.eq.s32.totalorder %s9, 0
    %p113 = por %p111, %p112
    %p114 = scmp.ne.s32.totalorder %s103, %s106
    %p115 = scmp.eq.s32.totalorder %s14, 1
    %p116 = por %p114, %p115
    %p117 = scmp.ne.s32.totalorder %s106, %s107
    %p118 = scmp.eq.s32.totalorder %s14, 0
    %p119 = por %p117, %p118
    %p120 = scmp.ne.s32.totalorder %s106, %s107
    %p121 = scmp.eq.s32.totalorder %s15, 1
    %p122 = por %p120, %p121
    %p124 = scmp.ne.s32.totalorder %s107, %s123
    %p125 = scmp.eq.s32.totalorder %s15, 0
    %p126 = por %p124, %p125
    %p127 = scmp.le.s32.totalorder 1, %s9
    %p128 = scmp.lt.s32.totalorder %s9, 3
    %p129 = pnand %p127, %p128
    %p130 = pneg %p129
    // Predicated region
    $region9: #{decoder_layer_forward.3} parent=5 // pred_check
      _
    $region10: #{decoder_layer_forward.3} parent=5 // pred_check_branch
      %132 = sbr.rel (%p129) target = $region12
    $region11: #{decoder_layer_forward.3} parent=5 // pred_region
      %s133 = ssub.s32 %s9, 1
      // Predicated region
      $region13: #{decoder_layer_forward.3} parent=11 // pred_check
        %p134 = pneg %p70
      $region14: #{decoder_layer_forward.3} parent=11 // pred_check_branch
        %136 = sbr.rel (%p134) target = $region16
      $region15: #{decoder_layer_forward.3} parent=11 // pred_region
        _
      $region16: #{decoder_layer_forward.3} parent=11 // pred_fallthru
        _
      // Predicated region
      $region17: #{decoder_layer_forward.3} parent=11 // pred_check
        %p137 = pneg %p91
      $region18: #{decoder_layer_forward.3} parent=11 // pred_check_branch
        %139 = sbr.rel (%p137) target = $region20
      $region19: #{decoder_layer_forward.3} parent=11 // pred_region
        _
      $region20: #{decoder_layer_forward.3} parent=11 // pred_fallthru
        _
    $region12: #{decoder_layer_forward.3} parent=5 // pred_fallthru
      _
    %p140 = scmp.lt.s32.totalorder %s9, 2
    // Predicated region
    $region21: #{decoder_layer_forward.3} parent=5 // pred_check
      %p141 = pneg %p140
    $region22: #{decoder_layer_forward.3} parent=5 // pred_check_branch
      %143 = sbr.rel (%p141) target = $region24
    $region23: #{decoder_layer_forward.3} parent=5 // pred_region
      // Predicated region
      $region25: #{decoder_layer_forward.3} parent=23 // pred_check
        %p144 = pneg %p43
      $region26: #{decoder_layer_forward.3} parent=23 // pred_check_branch
        %146 = sbr.rel (%p144) target = $region28
      $region27: #{decoder_layer_forward.3} parent=23 // pred_region
        %p147 = scmp.lt.s32.totalorder %s16, 1
        %s148 = scalar_select %p147, %s16, 1
        %p149 = scmp.lt.s32.totalorder %s17, 0
        %s150 = scalar_select %p149, %s17, 0
        %s151 = smul.addr %s150, 3
        %s152 = smul.addr %s148, 3
        %s153 = sadd.s32 %s151, %s152
        %s154 = smul.addr %s153, 2
        %s155 = scalar_lea.vmem %s0, %s154
      $region28: #{decoder_layer_forward.3} parent=23 // pred_fallthru
        _
    $region24: #{decoder_layer_forward.3} parent=5 // pred_fallthru
      _
    %p156 = scmp.le.s32.totalorder 1, %s9
    %p157 = scmp.lt.s32.totalorder %s9, 3
    %p158 = pnand %p156, %p157
    %p159 = pneg %p158
    // Predicated region
    $region29: #{decoder_layer_forward.3} parent=5 // pred_check
      _
    $region30: #{decoder_layer_forward.3} parent=5 // pred_check_branch
      %161 = sbr.rel (%p158) target = $region32
    $region31: #{decoder_layer_forward.3} parent=5 // pred_region
      %s162 = ssub.s32 %s9, 1
      %p163 = scmp.lt.s32.totalorder %s18, 1
      %s164 = scalar_select %p163, %s18, 1
      %p165 = scmp.lt.s32.totalorder %s19, 0
      %s166 = scalar_select %p165, %s19, 0
      %s167 = smul.addr %s166, 3
      %s168 = smul.addr %s164, 3
      %s169 = sadd.s32 %s167, %s168
      %s170 = smul.addr %s169, 2
      %s171 = scalar_lea.vmem %s0, %s170
      %p172 = pneg %p49
      %p173 = pneg %p46
      %p174 = pneg %p70
      %p175 = pneg %p67
      %p176 = pneg %p91
      %p177 = pneg %p88
      %p178 = pneg %p119
      %p179 = pneg %p116
      %p180 = scmp.lt.s32.totalorder %s18, 1
      %s181 = scalar_select %p180, %s18, 1
      %p182 = scmp.lt.s32.totalorder %s19, 0
      %s183 = scalar_select %p182, %s19, 0
      %s184 = smul.addr %s183, 3
      %s185 = smul.addr %s181, 3
      %s186 = sadd.s32 %s184, %s185
      %s187 = smul.addr %s186, 8
      %s188 = scalar_lea.vmem %s3, %s187
      %p189 = scmp.lt.s32.totalorder %s18, 1
      %s190 = scalar_select %p189, %s18, 1
      %p191 = scmp.lt.s32.totalorder %s19, 0
      %s192 = scalar_select %p191, %s19, 0
      %s193 = smul.addr %s192, 3
      %s194 = smul.addr %s190, 3
      %s195 = sadd.s32 %s193, %s194
      %s196 = smul.addr %s195, 2
      %s197 = scalar_lea.vmem %s0, %s196
      %p198 = scmp.lt.s32.totalorder %s18, 1
      %s199 = scalar_select %p198, %s18, 1
      %p200 = scmp.lt.s32.totalorder %s19, 0
      %s201 = scalar_select %p200, %s19, 0
      %s202 = smul.addr %s201, 3
      %s203 = smul.addr %s199, 3
      %s204 = sadd.s32 %s202, %s203
      %s205 = smul.addr %s204, 8
      %s206 = scalar_lea.vmem %s3, %s205
      %v208 = vld [vmem:[%s197] sm:$0x3f]
      %v209 = vld [vmem:[%s1] sm:$0xf]
      %s210 = scalar_lea.vmem %s1, 4
      %v211 = vld [vmem:[%s210] sm:$0xf]
      %v213 = vcombine.high %v208, %v208
      %v215 = vunpack.c.l.s4 1983009808
      %v216 = vunpack.c.0.s8 %v215
      %v217 = vlaneseq
      %v218 = vshrl.u32 %v217, 7
      %v219 = vsub.s32 %v216, %v218
      %v220 = vrot.slane %v208, %v219
      %v222 = vunpack.c.l.s4 1983009808
      %v223 = vunpack.c.0.s8 %v222
      %v224 = vlaneseq
      %v225 = vshrl.u32 %v224, 7
      %v226 = vsub.s32 %v223, %v225
      %v227 = vrot.slane %v213, %v226
      %v228 = vcombine.high %v220, %v220
      %229 = vrot.lane.b32.xlu0 %v220, 127
      %v230 = vpop.permute.xlu0 %229
      %231 = vrot.lane.b32.xlu0 %v228, 127
      %v232 = vpop.permute.xlu0 %231
      %233 = vrot.lane.b32.xlu0 %v227, 127
      %v234 = vpop.permute.xlu0 %233
      %vm235 = vcmask 1039360
      %v236 = vsel %vm235, %v230, %v232
      %v237 = vsel %vm235, %v232, %v234
      %vm238 = vcmask 31744
      %v240 = vsel %vm238, %v211, 0
      %vm242 = vcmask 1041408
      %v244 = vsel %vm242, %v236, 0
      %v247 = vsel %vm242, %v237, 0
      %v250 = vsel %vm242, %v234, 0
      %252 = vmatprep.subr.bf16.mxu0 %v247
      %253 = vmatpush1.bf16.msra.mxu0 %v244
      %254 = vmatprep.subr.bf16.mxu0 0
      %255 = vmatpush1.bf16.msra.mxu0 0
      %256 = vmatprep.subr.bf16.mxu0 0
      %257 = vmatpush1.bf16.msra.mxu0 0
      %258 = vmatprep.subr.bf16.mxu0 0
      %259 = vmatpush1.bf16.msra.mxu0 0
      %260 = vmatprep.subr.bf16.mxu0 0
      %261 = vmatpush1.bf16.msra.mxu0 0
      %262 = vmatprep.subr.bf16.mxu0 0
      %263 = vmatpush1.bf16.msra.mxu0 0
      %264 = vmatprep.subr.bf16.mxu0 0
      %265 = vmatpush1.bf16.msra.mxu0 0
      %266 = vmatprep.subr.bf16.mxu0 0
      %267 = vmatpush1.bf16.msra.mxu0 0
      %268 = vmatprep.subr.bf16.mxu0 0
      %269 = vmatpush1.bf16.msra.mxu0 0
      %270 = vmatprep.subr.bf16.mxu0 0
      %271 = vmatpush1.bf16.msra.mxu0 0
      %272 = vmatprep.subr.bf16.mxu0 0
      %273 = vmatpush1.bf16.msra.mxu0 0
      %274 = vmatprep.subr.bf16.mxu0 0
      %275 = vmatpush1.bf16.msra.mxu0 0
      %276 = vmatprep.subr.bf16.mxu0 0
      %277 = vmatpush1.bf16.msra.mxu0 0
      %278 = vmatprep.subr.bf16.mxu0 0
      %279 = vmatpush1.bf16.msra.mxu0 0
      %280 = vmatprep.subr.bf16.mxu0 0
      %281 = vmatpush1.bf16.msra.mxu0 0
      %282 = vmatprep.subr.bf16.mxu0 0
      %283 = vmatpush1.bf16.msra.mxu0 0
      %284 = vmatprep.mubr.bf16.mxu0 0
      %285 = vmatmul.mubr.bf16.gmra.mrb[0].mxu0 %v240
      %v286 = vpop.f32.mrb[0].mxu0
      %v287 = vadd.f32 0.0, %v286
      %v288 = vpop.f32.mrb[0].mxu0
      %v289 = vadd.f32 0.0, %v288
      %v290 = vpop.f32.mrb[0].mxu0
      %v291 = vpop.f32.mrb[0].mxu0
      %292 = vdwg.mxu0
      %293 = vmatprep.subr.bf16.mxu0 0
      %294 = vmatpush1.bf16.msra.mxu0 %v250
      %295 = vmatprep.subr.bf16.mxu0 0
      %296 = vmatpush1.bf16.msra.mxu0 0
      %297 = vmatprep.subr.bf16.mxu0 0
      %298 = vmatpush1.bf16.msra.mxu0 0
      %299 = vmatprep.subr.bf16.mxu0 0
      %300 = vmatpush1.bf16.msra.mxu0 0
      %301 = vmatprep.subr.bf16.mxu0 0
      %302 = vmatpush1.bf16.msra.mxu0 0
      %303 = vmatprep.subr.bf16.mxu0 0
      %304 = vmatpush1.bf16.msra.mxu0 0
      %305 = vmatprep.subr.bf16.mxu0 0
      %306 = vmatpush1.bf16.msra.mxu0 0
      %307 = vmatprep.subr.bf16.mxu0 0
      %308 = vmatpush1.bf16.msra.mxu0 0
      %309 = vmatprep.subr.bf16.mxu0 0
      %310 = vmatpush1.bf16.msra.mxu0 0
      %311 = vmatprep.subr.bf16.mxu0 0
      %312 = vmatpush1.bf16.msra.mxu0 0
      %313 = vmatprep.subr.bf16.mxu0 0
      %314 = vmatpush1.bf16.msra.mxu0 0
      %315 = vmatprep.subr.bf16.mxu0 0
      %316 = vmatpush1.bf16.msra.mxu0 0
      %317 = vmatprep.subr.bf16.mxu0 0
      %318 = vmatpush1.bf16.msra.mxu0 0
      %319 = vmatprep.subr.bf16.mxu0 0
      %320 = vmatpush1.bf16.msra.mxu0 0
      %321 = vmatprep.subr.bf16.mxu0 0
      %322 = vmatpush1.bf16.msra.mxu0 0
      %323 = vmatprep.subr.bf16.mxu0 0
      %324 = vmatpush1.bf16.msra.mxu0 0
      %325 = vmatprep.mubr.bf16.mxu0 0
      %326 = vmatmul.mubr.bf16.gmra.mrb[0].mxu0 %v240
      %v327 = vpop.f32.mrb[0].mxu0
      %v328 = vadd.f32 0.0, %v327
      %v329 = vpop.f32.mrb[0].mxu0
      %v330 = vpop.f32.mrb[0].mxu0
      %v331 = vpop.f32.mrb[0].mxu0
      %332 = vdwg.mxu0
      %v334 = vsel %vm238, %v209, 0
      %v337 = vsel %vm242, %v220, 0
      %v340 = vsel %vm242, %v228, 0
      %v343 = vsel %vm242, %v227, 0
      %345 = vmatprep.subr.bf16.mxu0 %v340
      %346 = vmatpush1.bf16.msra.mxu0 %v337
      %347 = vmatprep.subr.bf16.mxu0 0
      %348 = vmatpush1.bf16.msra.mxu0 0
      %349 = vmatprep.subr.bf16.mxu0 0
      %350 = vmatpush1.bf16.msra.mxu0 0
      %351 = vmatprep.subr.bf16.mxu0 0
      %352 = vmatpush1.bf16.msra.mxu0 0
      %353 = vmatprep.subr.bf16.mxu0 0
      %354 = vmatpush1.bf16.msra.mxu0 0
      %355 = vmatprep.subr.bf16.mxu0 0
      %356 = vmatpush1.bf16.msra.mxu0 0
      %357 = vmatprep.subr.bf16.mxu0 0
      %358 = vmatpush1.bf16.msra.mxu0 0
      %359 = vmatprep.subr.bf16.mxu0 0
      %360 = vmatpush1.bf16.msra.mxu0 0
      %361 = vmatprep.subr.bf16.mxu0 0
      %362 = vmatpush1.bf16.msra.mxu0 0
      %363 = vmatprep.subr.bf16.mxu0 0
      %364 = vmatpush1.bf16.msra.mxu0 0
      %365 = vmatprep.subr.bf16.mxu0 0
      %366 = vmatpush1.bf16.msra.mxu0 0
      %367 = vmatprep.subr.bf16.mxu0 0
      %368 = vmatpush1.bf16.msra.mxu0 0
      %369 = vmatprep.subr.bf16.mxu0 0
      %370 = vmatpush1.bf16.msra.mxu0 0
      %371 = vmatprep.subr.bf16.mxu0 0
      %372 = vmatpush1.bf16.msra.mxu0 0
      %373 = vmatprep.subr.bf16.mxu0 0
      %374 = vmatpush1.bf16.msra.mxu0 0
      %375 = vmatprep.subr.bf16.mxu0 0
      %376 = vmatpush1.bf16.msra.mxu0 0
      %377 = vmatprep.mubr.bf16.mxu0 0
      %378 = vmatmul.mubr.bf16.gmra.mrb[0].mxu0 %v334
      %v379 = vpop.f32.mrb[0].mxu0
      %v380 = vadd.f32 %v287, %v379
      %v381 = vpop.f32.mrb[0].mxu0
      %v382 = vadd.f32 %v289, %v381
      %v383 = vpop.f32.mrb[0].mxu0
      %v384 = vpop.f32.mrb[0].mxu0
      %385 = vdwg.mxu0
      %386 = vmatprep.subr.bf16.mxu0 0
      %387 = vmatpush1.bf16.msra.mxu0 %v343
      %388 = vmatprep.subr.bf16.mxu0 0
      %389 = vmatpush1.bf16.msra.mxu0 0
      %390 = vmatprep.subr.bf16.mxu0 0
      %391 = vmatpush1.bf16.msra.mxu0 0
      %392 = vmatprep.subr.bf16.mxu0 0
      %393 = vmatpush1.bf16.msra.mxu0 0
      %394 = vmatprep.subr.bf16.mxu0 0
      %395 = vmatpush1.bf16.msra.mxu0 0
      %396 = vmatprep.subr.bf16.mxu0 0
      %397 = vmatpush1.bf16.msra.mxu0 0
      %398 = vmatprep.subr.bf16.mxu0 0
      %399 = vmatpush1.bf16.msra.mxu0 0
      %400 = vmatprep.subr.bf16.mxu0 0
      %401 = vmatpush1.bf16.msra.mxu0 0
      %402 = vmatprep.subr.bf16.mxu0 0
      %403 = vmatpush1.bf16.msra.mxu0 0
      %404 = vmatprep.subr.bf16.mxu0 0
      %405 = vmatpush1.bf16.msra.mxu0 0
      %406 = vmatprep.subr.bf16.mxu0 0
      %407 = vmatpush1.bf16.msra.mxu0 0
      %408 = vmatprep.subr.bf16.mxu0 0
      %409 = vmatpush1.bf16.msra.mxu0 0
      %410 = vmatprep.subr.bf16.mxu0 0
      %411 = vmatpush1.bf16.msra.mxu0 0
      %412 = vmatprep.subr.bf16.mxu0 0
      %413 = vmatpush1.bf16.msra.mxu0 0
      %414 = vmatprep.subr.bf16.mxu0 0
      %415 = vmatpush1.bf16.msra.mxu0 0
      %416 = vmatprep.subr.bf16.mxu0 0
      %417 = vmatpush1.bf16.msra.mxu0 0
      %418 = vmatprep.mubr.bf16.mxu0 0
      %419 = vmatmul.mubr.bf16.gmra.mrb[0].mxu0 %v334
      %v420 = vpop.f32.mrb[0].mxu0
      %v421 = vadd.f32 %v328, %v420
      %v422 = vpop.f32.mrb[0].mxu0
      %v423 = vpop.f32.mrb[0].mxu0
      %v424 = vpop.f32.mrb[0].mxu0
      %425 = vdwg.mxu0
      %v426 = vld [vmem:[%s197] sm:$0x3f]
      %s427 = scalar_lea.vmem %s1, 8
      %v428 = vld [vmem:[%s427] sm:$0xf]
      %v430 = vcombine.high %v426, %v426
      %v432 = vunpack.c.l.s4 1983009808
      %v433 = vunpack.c.0.s8 %v432
      %v434 = vlaneseq
      %v435 = vshrl.u32 %v434, 7
      %v436 = vsub.s32 %v433, %v435
      %v437 = vrot.slane %v426, %v436
      %v439 = vunpack.c.l.s4 1983009808
      %v440 = vunpack.c.0.s8 %v439
      %v441 = vlaneseq
      %v442 = vshrl.u32 %v441, 7
      %v443 = vsub.s32 %v440, %v442
      %v444 = vrot.slane %v430, %v443
      %v445 = vcombine.high %v437, %v437
      %446 = vrot.lane.b32.xlu0 %v437, 126
      %v447 = vpop.permute.xlu0 %446
      %448 = vrot.lane.b32.xlu0 %v445, 126
      %v449 = vpop.permute.xlu0 %448
      %450 = vrot.lane.b32.xlu0 %v444, 126
      %v451 = vpop.permute.xlu0 %450
      %vm452 = vcmask 1031168
      %v453 = vsel %vm452, %v447, %v449
      %v454 = vsel %vm452, %v449, %v451
      %v456 = vsel %vm238, %v428, 0
      %v459 = vsel %vm242, %v453, 0
      %v462 = vsel %vm242, %v454, 0
      %v465 = vsel %vm242, %v451, 0
      %467 = vmatprep.subr.bf16.mxu0 %v462
      %468 = vmatpush1.bf16.msra.mxu0 %v459
      %469 = vmatprep.subr.bf16.mxu0 0
      %470 = vmatpush1.bf16.msra.mxu0 0
      %471 = vmatprep.subr.bf16.mxu0 0
      %472 = vmatpush1.bf16.msra.mxu0 0
      %473 = vmatprep.subr.bf16.mxu0 0
      %474 = vmatpush1.bf16.msra.mxu0 0
      %475 = vmatprep.subr.bf16.mxu0 0
      %476 = vmatpush1.bf16.msra.mxu0 0
      %477 = vmatprep.subr.bf16.mxu0 0
      %478 = vmatpush1.bf16.msra.mxu0 0
      %479 = vmatprep.subr.bf16.mxu0 0
      %480 = vmatpush1.bf16.msra.mxu0 0
      %481 = vmatprep.subr.bf16.mxu0 0
      %482 = vmatpush1.bf16.msra.mxu0 0
      %483 = vmatprep.subr.bf16.mxu0 0
      %484 = vmatpush1.bf16.msra.mxu0 0
      %485 = vmatprep.subr.bf16.mxu0 0
      %486 = vmatpush1.bf16.msra.mxu0 0
      %487 = vmatprep.subr.bf16.mxu0 0
      %488 = vmatpush1.bf16.msra.mxu0 0
      %489 = vmatprep.subr.bf16.mxu0 0
      %490 = vmatpush1.bf16.msra.mxu0 0
      %491 = vmatprep.subr.bf16.mxu0 0
      %492 = vmatpush1.bf16.msra.mxu0 0
      %493 = vmatprep.subr.bf16.mxu0 0
      %494 = vmatpush1.bf16.msra.mxu0 0
      %495 = vmatprep.subr.bf16.mxu0 0
      %496 = vmatpush1.bf16.msra.mxu0 0
      %497 = vmatprep.subr.bf16.mxu0 0
      %498 = vmatpush1.bf16.msra.mxu0 0
      %499 = vmatprep.mubr.bf16.mxu0 0
      %500 = vmatmul.mubr.bf16.gmra.mrb[0].mxu0 %v456
      %v501 = vpop.f32.mrb[0].mxu0
      %v502 = vadd.f32 0.0, %v501
      %v503 = vpop.f32.mrb[0].mxu0
      %v504 = vadd.f32 0.0, %v503
      %v505 = vpop.f32.mrb[0].mxu0
      %v506 = vpop.f32.mrb[0].mxu0
      %507 = vdwg.mxu0
      %508 = vmatprep.subr.bf16.mxu0 0
      %509 = vmatpush1.bf16.msra.mxu0 %v465
      %510 = vmatprep.subr.bf16.mxu0 0
      %511 = vmatpush1.bf16.msra.mxu0 0
      %512 = vmatprep.subr.bf16.mxu0 0
      %513 = vmatpush1.bf16.msra.mxu0 0
      %514 = vmatprep.subr.bf16.mxu0 0
      %515 = vmatpush1.bf16.msra.mxu0 0
      %516 = vmatprep.subr.bf16.mxu0 0
      %517 = vmatpush1.bf16.msra.mxu0 0
      %518 = vmatprep.subr.bf16.mxu0 0
      %519 = vmatpush1.bf16.msra.mxu0 0
      %520 = vmatprep.subr.bf16.mxu0 0
      %521 = vmatpush1.bf16.msra.mxu0 0
      %522 = vmatprep.subr.bf16.mxu0 0
      %523 = vmatpush1.bf16.msra.mxu0 0
      %524 = vmatprep.subr.bf16.mxu0 0
      %525 = vmatpush1.bf16.msra.mxu0 0
      %526 = vmatprep.subr.bf16.mxu0 0
      %527 = vmatpush1.bf16.msra.mxu0 0
      %528 = vmatprep.subr.bf16.mxu0 0
      %529 = vmatpush1.bf16.msra.mxu0 0
      %530 = vmatprep.subr.bf16.mxu0 0
      %531 = vmatpush1.bf16.msra.mxu0 0
      %532 = vmatprep.subr.bf16.mxu0 0
      %533 = vmatpush1.bf16.msra.mxu0 0
      %534 = vmatprep.subr.bf16.mxu0 0
      %535 = vmatpush1.bf16.msra.mxu0 0
      %536 = vmatprep.subr.bf16.mxu0 0
      %537 = vmatpush1.bf16.msra.mxu0 0
      %538 = vmatprep.subr.bf16.mxu0 0
      %539 = vmatpush1.bf16.msra.mxu0 0
      %540 = vmatprep.mubr.bf16.mxu0 0
      %541 = vmatmul.mubr.bf16.gmra.mrb[0].mxu0 %v456
      %v542 = vpop.f32.mrb[0].mxu0
      %v543 = vadd.f32 0.0, %v542
      %v544 = vpop.f32.mrb[0].mxu0
      %v545 = vpop.f32.mrb[0].mxu0
      %v546 = vpop.f32.mrb[0].mxu0
      %547 = vdwg.mxu0
      %v548 = vadd.f32 %v380, %v502
      %v549 = vadd.f32 %v382, %v504
      %v550 = vadd.f32 %v421, %v543
      %v551 = vld [vmem:[%s197] sm:$0x3f]
      %s552 = scalar_lea.vmem %s1, 12
      %v553 = vld [vmem:[%s552] sm:$0xf]
      %v555 = vcombine.high %v551, %v551
      %v557 = vunpack.c.l.s4 1983009808
      %v558 = vunpack.c.0.s8 %v557
      %v559 = vlaneseq
      %v560 = vshrl.u32 %v559, 7
      %v561 = vsub.s32 %v558, %v560
      %v562 = vrot.slane %v551, %v561
      %v564 = vunpack.c.l.s4 1983009808
      %v565 = vunpack.c.0.s8 %v564
      %v566 = vlaneseq
      %v567 = vshrl.u32 %v566, 7
      %v568 = vsub.s32 %v565, %v567
      %v569 = vrot.slane %v555, %v568
      %v570 = vcombine.high %v562, %v562
      %571 = vrot.lane.b32.xlu0 %v562, 110
      %v572 = vpop.permute.xlu0 %571
      %573 = vrot.lane.b32.xlu0 %v570, 110
      %v574 = vpop.permute.xlu0 %573
      %575 = vrot.lane.b32.xlu0 %v569, 110
      %v576 = vpop.permute.xlu0 %575
      %vm577 = vcmask 900096
      %v578 = vsel %vm577, %v572, %v574
      %v579 = vsel %vm577, %v574, %v576
      %v581 = vsel %vm238, %v553, 0
      %v584 = vsel %vm242, %v578, 0
      %v587 = vsel %vm242, %v579, 0
      %v590 = vsel %vm242, %v576, 0
      %592 = vmatprep.subr.bf16.mxu0 %v587
      %593 = vmatpush1.bf16.msra.mxu0 %v584
      %594 = vmatprep.subr.bf16.mxu0 0
      %595 = vmatpush1.bf16.msra.mxu0 0
      %596 = vmatprep.subr.bf16.mxu0 0
      %597 = vmatpush1.bf16.msra.mxu0 0
      %598 = vmatprep.subr.bf16.mxu0 0
      %599 = vmatpush1.bf16.msra.mxu0 0
      %600 = vmatprep.subr.bf16.mxu0 0
      %601 = vmatpush1.bf16.msra.mxu0 0
      %602 = vmatprep.subr.bf16.mxu0 0
      %603 = vmatpush1.bf16.msra.mxu0 0
      %604 = vmatprep.subr.bf16.mxu0 0
      %605 = vmatpush1.bf16.msra.mxu0 0
      %606 = vmatprep.subr.bf16.mxu0 0
      %607 = vmatpush1.bf16.msra.mxu0 0
      %608 = vmatprep.subr.bf16.mxu0 0
      %609 = vmatpush1.bf16.msra.mxu0 0
      %610 = vmatprep.subr.bf16.mxu0 0
      %611 = vmatpush1.bf16.msra.mxu0 0
      %612 = vmatprep.subr.bf16.mxu0 0
      %613 = vmatpush1.bf16.msra.mxu0 0
      %614 = vmatprep.subr.bf16.mxu0 0
      %615 = vmatpush1.bf16.msra.mxu0 0
      %616 = vmatprep.subr.bf16.mxu0 0
      %617 = vmatpush1.bf16.msra.mxu0 0
      %618 = vmatprep.subr.bf16.mxu0 0
      %619 = vmatpush1.bf16.msra.mxu0 0
      %620 = vmatprep.subr.bf16.mxu0 0
      %621 = vmatpush1.bf16.msra.mxu0 0
      %622 = vmatprep.subr.bf16.mxu0 0
      %623 = vmatpush1.bf16.msra.mxu0 0
      %624 = vmatprep.mubr.bf16.mxu0 0
      %625 = vmatmul.mubr.bf16.gmra.mrb[0].mxu0 %v581
      %v626 = vpop.f32.mrb[0].mxu0
      %v627 = vadd.f32 0.0, %v626
      %v628 = vpop.f32.mrb[0].mxu0
      %v629 = vadd.f32 0.0, %v628
      %v630 = vpop.f32.mrb[0].mxu0
      %v631 = vpop.f32.mrb[0].mxu0
      %632 = vdwg.mxu0
      %633 = vmatprep.subr.bf16.mxu0 0
      %634 = vmatpush1.bf16.msra.mxu0 %v590
      %635 = vmatprep.subr.bf16.mxu0 0
      %636 = vmatpush1.bf16.msra.mxu0 0
      %637 = vmatprep.subr.bf16.mxu0 0
      %638 = vmatpush1.bf16.msra.mxu0 0
      %639 = vmatprep.subr.bf16.mxu0 0
      %640 = vmatpush1.bf16.msra.mxu0 0
      %641 = vmatprep.subr.bf16.mxu0 0
      %642 = vmatpush1.bf16.msra.mxu0 0
      %643 = vmatprep.subr.bf16.mxu0 0
      %644 = vmatpush1.bf16.msra.mxu0 0
      %645 = vmatprep.subr.bf16.mxu0 0
      %646 = vmatpush1.bf16.msra.mxu0 0
      %647 = vmatprep.subr.bf16.mxu0 0
      %648 = vmatpush1.bf16.msra.mxu0 0
      %649 = vmatprep.subr.bf16.mxu0 0
      %650 = vmatpush1.bf16.msra.mxu0 0
      %651 = vmatprep.subr.bf16.mxu0 0
      %652 = vmatpush1.bf16.msra.mxu0 0
      %653 = vmatprep.subr.bf16.mxu0 0
      %654 = vmatpush1.bf16.msra.mxu0 0
      %655 = vmatprep.subr.bf16.mxu0 0
      %656 = vmatpush1.bf16.msra.mxu0 0
      %657 = vmatprep.subr.bf16.mxu0 0
      %658 = vmatpush1.bf16.msra.mxu0 0
      %659 = vmatprep.subr.bf16.mxu0 0
      %660 = vmatpush1.bf16.msra.mxu0 0
      %661 = vmatprep.subr.bf16.mxu0 0
      %662 = vmatpush1.bf16.msra.mxu0 0
      %663 = vmatprep.subr.bf16.mxu0 0
      %664 = vmatpush1.bf16.msra.mxu0 0
      %665 = vmatprep.mubr.bf16.mxu0 0
      %666 = vmatmul.mubr.bf16.gmra.mrb[0].mxu0 %v581
      %v667 = vpop.f32.mrb[0].mxu0
      %v668 = vadd.f32 0.0, %v667
      %v669 = vpop.f32.mrb[0].mxu0
      %v670 = vpop.f32.mrb[0].mxu0
      %v671 = vpop.f32.mrb[0].mxu0
      %672 = vdwg.mxu0
      %v673 = vadd.f32 %v548, %v627
      %v674 = vadd.f32 %v549, %v629
      %v675 = vadd.f32 %v550, %v668
      %v676 = vld [vmem:[%s197] sm:$0x3f]
      %s677 = scalar_lea.vmem %s1, 16
      %v678 = vld [vmem:[%s677] sm:$0xf]
      %v680 = vcombine.high %v676, %v676
      %v682 = vunpack.c.l.s4 1983009808
      %v683 = vunpack.c.0.s8 %v682
      %v684 = vlaneseq
      %v685 = vshrl.u32 %v684, 7
      %v686 = vsub.s32 %v683, %v685
      %v687 = vrot.slane %v676, %v686
      %v689 = vunpack.c.l.s4 1983009808
      %v690 = vunpack.c.0.s8 %v689
      %v691 = vlaneseq
      %v692 = vshrl.u32 %v691, 7
      %v693 = vsub.s32 %v690, %v692
      %v694 = vrot.slane %v680, %v693
      %v695 = vcombine.high %v687, %v687
      %696 = vrot.lane.b32.xlu0 %v687, 109
      %v697 = vpop.permute.xlu0 %696
      %698 = vrot.lane.b32.xlu0 %v695, 109
      %v699 = vpop.permute.xlu0 %698
      %700 = vrot.lane.b32.xlu0 %v694, 109
      %v701 = vpop.permute.xlu0 %700
      %vm702 = vcmask 891904
      %v703 = vsel %vm702, %v697, %v699
      %v704 = vsel %vm702, %v699, %v701
      %v706 = vsel %vm238, %v678, 0
      %v709 = vsel %vm242, %v703, 0
      %v712 = vsel %vm242, %v704, 0
      %v715 = vsel %vm242, %v701, 0
      %717 = vmatprep.subr.bf16.mxu0 %v712
      %718 = vmatpush1.bf16.msra.mxu0 %v709
      %719 = vmatprep.subr.bf16.mxu0 0
      %720 = vmatpush1.bf16.msra.mxu0 0
      %721 = vmatprep.subr.bf16.mxu0 0
      %722 = vmatpush1.bf16.msra.mxu0 0
      %723 = vmatprep.subr.bf16.mxu0 0
      %724 = vmatpush1.bf16.msra.mxu0 0
      %725 = vmatprep.subr.bf16.mxu0 0
      %726 = vmatpush1.bf16.msra.mxu0 0
      %727 = vmatprep.subr.bf16.mxu0 0
      %728 = vmatpush1.bf16.msra.mxu0 0
      %729 = vmatprep.subr.bf16.mxu0 0
      %730 = vmatpush1.bf16.msra.mxu0 0
      %731 = vmatprep.subr.bf16.mxu0 0
      %732 = vmatpush1.bf16.msra.mxu0 0
      %733 = vmatprep.subr.bf16.mxu0 0
      %734 = vmatpush1.bf16.msra.mxu0 0
      %735 = vmatprep.subr.bf16.mxu0 0
      %736 = vmatpush1.bf16.msra.mxu0 0
      %737 = vmatprep.subr.bf16.mxu0 0
      %738 = vmatpush1.bf16.msra.mxu0 0
      %739 = vmatprep.subr.bf16.mxu0 0
      %740 = vmatpush1.bf16.msra.mxu0 0
      %741 = vmatprep.subr.bf16.mxu0 0
      %742 = vmatpush1.bf16.msra.mxu0 0
      %743 = vmatprep.subr.bf16.mxu0 0
      %744 = vmatpush1.bf16.msra.mxu0 0
      %745 = vmatprep.subr.bf16.mxu0 0
      %746 = vmatpush1.bf16.msra.mxu0 0
      %747 = vmatprep.subr.bf16.mxu0 0
      %748 = vmatpush1.bf16.msra.mxu0 0
      %749 = vmatprep.mubr.bf16.mxu0 0
      %750 = vmatmul.mubr.bf16.gmra.mrb[0].mxu0 %v706
      %v751 = vpop.f32.mrb[0].mxu0
      %v752 = vadd.f32 0.0, %v751
      %v753 = vpop.f32.mrb[0].mxu0
      %v754 = vadd.f32 0.0, %v753
      %v755 = vpop.f32.mrb[0].mxu0
      %v756 = vpop.f32.mrb[0].mxu0
      %757 = vdwg.mxu0
      %758 = vmatprep.subr.bf16.mxu0 0
      %759 = vmatpush1.bf16.msra.mxu0 %v715
      %760 = vmatprep.subr.bf16.mxu0 0
      %761 = vmatpush1.bf16.msra.mxu0 0
      %762 = vmatprep.subr.bf16.mxu0 0
      %763 = vmatpush1.bf16.msra.mxu0 0
      %764 = vmatprep.subr.bf16.mxu0 0
      %765 = vmatpush1.bf16.msra.mxu0 0
      %766 = vmatprep.subr.bf16.mxu0 0
      %767 = vmatpush1.bf16.msra.mxu0 0
      %768 = vmatprep.subr.bf16.mxu0 0
      %769 = vmatpush1.bf16.msra.mxu0 0
      %770 = vmatprep.subr.bf16.mxu0 0
      %771 = vmatpush1.bf16.msra.mxu0 0
      %772 = vmatprep.subr.bf16.mxu0 0
      %773 = vmatpush1.bf16.msra.mxu0 0
      %774 = vmatprep.subr.bf16.mxu0 0
      %775 = vmatpush1.bf16.msra.mxu0 0
      %776 = vmatprep.subr.bf16.mxu0 0
      %777 = vmatpush1.bf16.msra.mxu0 0
      %778 = vmatprep.subr.bf16.mxu0 0
      %779 = vmatpush1.bf16.msra.mxu0 0
      %780 = vmatprep.subr.bf16.mxu0 0
      %781 = vmatpush1.bf16.msra.mxu0 0
      %782 = vmatprep.subr.bf16.mxu0 0
      %783 = vmatpush1.bf16.msra.mxu0 0
      %784 = vmatprep.subr.bf16.mxu0 0
      %785 = vmatpush1.bf16.msra.mxu0 0
      %786 = vmatprep.subr.bf16.mxu0 0
      %787 = vmatpush1.bf16.msra.mxu0 0
      %788 = vmatprep.subr.bf16.mxu0 0
      %789 = vmatpush1.bf16.msra.mxu0 0
      %790 = vmatprep.mubr.bf16.mxu0 0
      %791 = vmatmul.mubr.bf16.gmra.mrb[0].mxu0 %v706
      %v792 = vpop.f32.mrb[0].mxu0
      %v793 = vadd.f32 0.0, %v792
      %v794 = vpop.f32.mrb[0].mxu0
      %v795 = vpop.f32.mrb[0].mxu0
      %v796 = vpop.f32.mrb[0].mxu0
      %797 = vdwg.mxu0
      %v798 = vadd.f32 %v673, %v752
      %v799 = vadd.f32 %v674, %v754
      %v800 = vadd.f32 %v675, %v793
      %v801 = vld [vmem:[%s197] sm:$0x3f]
      %s802 = scalar_lea.vmem %s1, 20
      %v803 = vld [vmem:[%s802] sm:$0xf]
      %v805 = vcombine.high %v801, %v801
      %v807 = vunpack.c.l.s4 1983009808
      %v808 = vunpack.c.0.s8 %v807
      %v809 = vlaneseq
      %v810 = vshrl.u32 %v809, 7
      %v811 = vsub.s32 %v808, %v810
      %v812 = vrot.slane %v801, %v811
      %v814 = vunpack.c.l.s4 1983009808
      %v815 = vunpack.c.0.s8 %v814
      %v816 = vlaneseq
      %v817 = vshrl.u32 %v816, 7
      %v818 = vsub.s32 %v815, %v817
      %v819 = vrot.slane %v805, %v818
      %v820 = vcombine.high %v812, %v812
      %821 = vrot.lane.b32.xlu0 %v812, 108
      %v822 = vpop.permute.xlu0 %821
      %823 = vrot.lane.b32.xlu0 %v820, 108
      %v824 = vpop.permute.xlu0 %823
      %825 = vrot.lane.b32.xlu0 %v819, 108
      %v826 = vpop.permute.xlu0 %825
      %vm827 = vcmask 883712
      %v828 = vsel %vm827, %v822, %v824
      %v829 = vsel %vm827, %v824, %v826
      %v831 = vsel %vm238, %v803, 0
      %v834 = vsel %vm242, %v828, 0
      %v837 = vsel %vm242, %v829, 0
      %v840 = vsel %vm242, %v826, 0
      %842 = vmatprep.subr.bf16.mxu0 %v837
      %843 = vmatpush1.bf16.msra.mxu0 %v834
      %844 = vmatprep.subr.bf16.mxu0 0
      %845 = vmatpush1.bf16.msra.mxu0 0
      %846 = vmatprep.subr.bf16.mxu0 0
      %847 = vmatpush1.bf16.msra.mxu0 0
      %848 = vmatprep.subr.bf16.mxu0 0
      %849 = vmatpush1.bf16.msra.mxu0 0
      %850 = vmatprep.subr.bf16.mxu0 0
      %851 = vmatpush1.bf16.msra.mxu0 0
      %852 = vmatprep.subr.bf16.mxu0 0
      %853 = vmatpush1.bf16.msra.mxu0 0
      %854 = vmatprep.subr.bf16.mxu0 0
      %855 = vmatpush1.bf16.msra.mxu0 0
      %856 = vmatprep.subr.bf16.mxu0 0
      %857 = vmatpush1.bf16.msra.mxu0 0
      %858 = vmatprep.subr.bf16.mxu0 0
      %859 = vmatpush1.bf16.msra.mxu0 0
      %860 = vmatprep.subr.bf16.mxu0 0
      %861 = vmatpush1.bf16.msra.mxu0 0
      %862 = vmatprep.subr.bf16.mxu0 0
      %863 = vmatpush1.bf16.msra.mxu0 0
      %864 = vmatprep.subr.bf16.mxu0 0
      %865 = vmatpush1.bf16.msra.mxu0 0
      %866 = vmatprep.subr.bf16.mxu0 0
      %867 = vmatpush1.bf16.msra.mxu0 0
      %868 = vmatprep.subr.bf16.mxu0 0
      %869 = vmatpush1.bf16.msra.mxu0 0
      %870 = vmatprep.subr.bf16.mxu0 0
      %871 = vmatpush1.bf16.msra.mxu0 0
      %872 = vmatprep.subr.bf16.mxu0 0
      %873 = vmatpush1.bf16.msra.mxu0 0
      %874 = vmatprep.mubr.bf16.mxu0 0
      %875 = vmatmul.mubr.bf16.gmra.mrb[0].mxu0 %v831
      %v876 = vpop.f32.mrb[0].mxu0
      %v877 = vadd.f32 0.0, %v876
      %v878 = vpop.f32.mrb[0].mxu0
      %v879 = vadd.f32 0.0, %v878
      %v880 = vpop.f32.mrb[0].mxu0
      %v881 = vpop.f32.mrb[0].mxu0
      %882 = vdwg.mxu0
      %883 = vmatprep.subr.bf16.mxu0 0
      %884 = vmatpush1.bf16.msra.mxu0 %v840
      %885 = vmatprep.subr.bf16.mxu0 0
      %886 = vmatpush1.bf16.msra.mxu0 0
      %887 = vmatprep.subr.bf16.mxu0 0
      %888 = vmatpush1.bf16.msra.mxu0 0
      %889 = vmatprep.subr.bf16.mxu0 0
      %890 = vmatpush1.bf16.msra.mxu0 0
      %891 = vmatprep.subr.bf16.mxu0 0
      %892 = vmatpush1.bf16.msra.mxu0 0
      %893 = vmatprep.subr.bf16.mxu0 0
      %894 = vmatpush1.bf16.msra.mxu0 0
      %895 = vmatprep.subr.bf16.mxu0 0
      %896 = vmatpush1.bf16.msra.mxu0 0
      %897 = vmatprep.subr.bf16.mxu0 0
      %898 = vmatpush1.bf16.msra.mxu0 0
      %899 = vmatprep.subr.bf16.mxu0 0
      %900 = vmatpush1.bf16.msra.mxu0 0
      %901 = vmatprep.subr.bf16.mxu0 0
      %902 = vmatpush1.bf16.msra.mxu0 0
      %903 = vmatprep.subr.bf16.mxu0 0
      %904 = vmatpush1.bf16.msra.mxu0 0
      %905 = vmatprep.subr.bf16.mxu0 0
      %906 = vmatpush1.bf16.msra.mxu0 0
      %907 = vmatprep.subr.bf16.mxu0 0
      %908 = vmatpush1.bf16.msra.mxu0 0
      %909 = vmatprep.subr.bf16.mxu0 0
      %910 = vmatpush1.bf16.msra.mxu0 0
      %911 = vmatprep.subr.bf16.mxu0 0
      %912 = vmatpush1.bf16.msra.mxu0 0
      %913 = vmatprep.subr.bf16.mxu0 0
      %914 = vmatpush1.bf16.msra.mxu0 0
      %915 = vmatprep.mubr.bf16.mxu0 0
      %916 = vmatmul.mubr.bf16.gmra.mrb[0].mxu0 %v831
      %v917 = vpop.f32.mrb[0].mxu0
      %v918 = vadd.f32 0.0, %v917
      %v919 = vpop.f32.mrb[0].mxu0
      %v920 = vpop.f32.mrb[0].mxu0
      %v921 = vpop.f32.mrb[0].mxu0
      %922 = vdwg.mxu0
      %v923 = vadd.f32 %v798, %v877
      %v924 = vadd.f32 %v799, %v879
      %v925 = vadd.f32 %v800, %v918
      %v926 = vld [vmem:[%s197] sm:$0x3f]
      %s927 = scalar_lea.vmem %s1, 24
      %v928 = vld [vmem:[%s927] sm:$0xf]
      %v930 = vcombine.high %v926, %v926
      %v932 = vunpack.c.l.s4 1983009808
      %v933 = vunpack.c.0.s8 %v932
      %v934 = vlaneseq
      %v935 = vshrl.u32 %v934, 7
      %v936 = vsub.s32 %v933, %v935
      %v937 = vrot.slane %v926, %v936
      %v939 = vunpack.c.l.s4 1983009808
      %v940 = vunpack.c.0.s8 %v939
      %v941 = vlaneseq
      %v942 = vshrl.u32 %v941, 7
      %v943 = vsub.s32 %v940, %v942
      %v944 = vrot.slane %v930, %v943
      %v945 = vcombine.high %v937, %v937
      %946 = vrot.lane.b32.xlu0 %v937, 92
      %v947 = vpop.permute.xlu0 %946
      %948 = vrot.lane.b32.xlu0 %v945, 92
      %v949 = vpop.permute.xlu0 %948
      %950 = vrot.lane.b32.xlu0 %v944, 92
      %v951 = vpop.permute.xlu0 %950
      %vm952 = vcmask 752640
      %v953 = vsel %vm952, %v947, %v949
      %v954 = vsel %vm952, %v949, %v951
      %v956 = vsel %vm238, %v928, 0
      %v959 = vsel %vm242, %v953, 0
      %v962 = vsel %vm242, %v954, 0
      %v965 = vsel %vm242, %v951, 0
      %967 = vmatprep.subr.bf16.mxu0 %v962
      %968 = vmatpush1.bf16.msra.mxu0 %v959
      %969 = vmatprep.subr.bf16.mxu0 0
      %970 = vmatpush1.bf16.msra.mxu0 0
      %971 = vmatprep.subr.bf16.mxu0 0
      %972 = vmatpush1.bf16.msra.mxu0 0
      %973 = vmatprep.subr.bf16.mxu0 0
      %974 = vmatpush1.bf16.msra.mxu0 0
      %975 = vmatprep.subr.bf16.mxu0 0
      %976 = vmatpush1.bf16.msra.mxu0 0
      %977 = vmatprep.subr.bf16.mxu0 0
      %978 = vmatpush1.bf16.msra.mxu0 0
      %979 = vmatprep.subr.bf16.mxu0 0
      %980 = vmatpush1.bf16.msra.mxu0 0
      %981 = vmatprep.subr.bf16.mxu0 0
      %982 = vmatpush1.bf16.msra.mxu0 0
      %983 = vmatprep.subr.bf16.mxu0 0
      %984 = vmatpush1.bf16.msra.mxu0 0
      %985 = vmatprep.subr.bf16.mxu0 0
      %986 = vmatpush1.bf16.msra.mxu0 0
      %987 = vmatprep.subr.bf16.mxu0 0
      %988 = vmatpush1.bf16.msra.mxu0 0
      %989 = vmatprep.subr.bf16.mxu0 0
      %990 = vmatpush1.bf16.msra.mxu0 0
      %991 = vmatprep.subr.bf16.mxu0 0
      %992 = vmatpush1.bf16.msra.mxu0 0
      %993 = vmatprep.subr.bf16.mxu0 0
      %994 = vmatpush1.bf16.msra.mxu0 0
      %995 = vmatprep.subr.bf16.mxu0 0
      %996 = vmatpush1.bf16.msra.mxu0 0
      %997 = vmatprep.subr.bf16.mxu0 0
      %998 = vmatpush1.bf16.msra.mxu0 0
      %999 = vmatprep.mubr.bf16.mxu0 0
      %1000 = vmatmul.mubr.bf16.gmra.mrb[0].mxu0 %v956
      %v1001 = vpop.f32.mrb[0].mxu0
      %v1002 = vadd.f32 0.0, %v1001
      %v1003 = vpop.f32.mrb[0].mxu0
      %v1004 = vadd.f32 0.0, %v1003
      %v1005 = vpop.f32.mrb[0].mxu0
      %v1006 = vpop.f32.mrb[0].mxu0
      %1007 = vdwg.mxu0
      %1008 = vmatprep.subr.bf16.mxu0 0
      %1009 = vmatpush1.bf16.msra.mxu0 %v965
      %1010 = vmatprep.subr.bf16.mxu0 0
      %1011 = vmatpush1.bf16.msra.mxu0 0
      %1012 = vmatprep.subr.bf16.mxu0 0
      %1013 = vmatpush1.bf16.msra.mxu0 0
      %1014 = vmatprep.subr.bf16.mxu0 0
      %1015 = vmatpush1.bf16.msra.mxu0 0
      %1016 = vmatprep.subr.bf16.mxu0 0
      %1017 = vmatpush1.bf16.msra.mxu0 0
      %1018 = vmatprep.subr.bf16.mxu0 0
      %1019 = vmatpush1.bf16.msra.mxu0 0
      %1020 = vmatprep.subr.bf16.mxu0 0
      %1021 = vmatpush1.bf16.msra.mxu0 0
      %1022 = vmatprep.subr.bf16.mxu0 0
      %1023 = vmatpush1.bf16.msra.mxu0 0
      %1024 = vmatprep.subr.bf16.mxu0 0
      %1025 = vmatpush1.bf16.msra.mxu0 0
      %1026 = vmatprep.subr.bf16.mxu0 0
      %1027 = vmatpush1.bf16.msra.mxu0 0
      %1028 = vmatprep.subr.bf16.mxu0 0
      %1029 = vmatpush1.bf16.msra.mxu0 0
      %1030 = vmatprep.subr.bf16.mxu0 0
      %1031 = vmatpush1.bf16.msra.mxu0 0
      %1032 = vmatprep.subr.bf16.mxu0 0
      %1033 = vmatpush1.bf16.msra.mxu0 0
      %1034 = vmatprep.subr.bf16.mxu0 0
      %1035 = vmatpush1.bf16.msra.mxu0 0
      %1036 = vmatprep.subr.bf16.mxu0 0
      %1037 = vmatpush1.bf16.msra.mxu0 0
      %1038 = vmatprep.subr.bf16.mxu0 0
      %1039 = vmatpush1.bf16.msra.mxu0 0
      %1040 = vmatprep.mubr.bf16.mxu0 0
      %1041 = vmatmul.mubr.bf16.gmra.mrb[0].mxu0 %v956
      %v1042 = vpop.f32.mrb[0].mxu0
      %v1043 = vadd.f32 0.0, %v1042
      %v1044 = vpop.f32.mrb[0].mxu0
      %v1045 = vpop.f32.mrb[0].mxu0
      %v1046 = vpop.f32.mrb[0].mxu0
      %1047 = vdwg.mxu0
      %v1048 = vadd.f32 %v923, %v1002
      %v1049 = vadd.f32 %v924, %v1004
      %v1050 = vadd.f32 %v925, %v1043
      %v1051 = vld [vmem:[%s197] sm:$0x3f]
      %s1052 = scalar_lea.vmem %s1, 28
      %v1053 = vld [vmem:[%s1052] sm:$0xf]
      %v1055 = vcombine.high %v1051, %v1051
      %v1057 = vunpack.c.l.s4 1983009808
      %v1058 = vunpack.c.0.s8 %v1057
      %v1059 = vlaneseq
      %v1060 = vshrl.u32 %v1059, 7
      %v1061 = vsub.s32 %v1058, %v1060
      %v1062 = vrot.slane %v1051, %v1061
      %v1064 = vunpack.c.l.s4 1983009808
      %v1065 = vunpack.c.0.s8 %v1064
      %v1066 = vlaneseq
      %v1067 = vshrl.u32 %v1066, 7
      %v1068 = vsub.s32 %v1065, %v1067
      %v1069 = vrot.slane %v1055, %v1068
      %v1070 = vcombine.high %v1062, %v1062
      %1071 = vrot.lane.b32.xlu0 %v1062, 91
      %v1072 = vpop.permute.xlu0 %1071
      %1073 = vrot.lane.b32.xlu0 %v1070, 91
      %v1074 = vpop.permute.xlu0 %1073
      %1075 = vrot.lane.b32.xlu0 %v1069, 91
      %v1076 = vpop.permute.xlu0 %1075
      %vm1077 = vcmask 744448
      %v1078 = vsel %vm1077, %v1072, %v1074
      %v1079 = vsel %vm1077, %v1074, %v1076
      %v1081 = vsel %vm238, %v1053, 0
      %v1084 = vsel %vm242, %v1078, 0
      %v1087 = vsel %vm242, %v1079, 0
      %v1090 = vsel %vm242, %v1076, 0
      %1092 = vmatprep.subr.bf16.mxu0 %v1087
      %1093 = vmatpush1.bf16.msra.mxu0 %v1084
      %1094 = vmatprep.subr.bf16.mxu0 0
      %1095 = vmatpush1.bf16.msra.mxu0 0
      %1096 = vmatprep.subr.bf16.mxu0 0
      %1097 = vmatpush1.bf16.msra.mxu0 0
      %1098 = vmatprep.subr.bf16.mxu0 0
      %1099 = vmatpush1.bf16.msra.mxu0 0
      %1100 = vmatprep.subr.bf16.mxu0 0
      %1101 = vmatpush1.bf16.msra.mxu0 0
      %1102 = vmatprep.subr.bf16.mxu0 0
      %1103 = vmatpush1.bf16.msra.mxu0 0
      %1104 = vmatprep.subr.bf16.mxu0 0
      %1105 = vmatpush1.bf16.msra.mxu0 0
      %1106 = vmatprep.subr.bf16.mxu0 0
      %1107 = vmatpush1.bf16.msra.mxu0 0
      %1108 = vmatprep.subr.bf16.mxu0 0
      %1109 = vmatpush1.bf16.msra.mxu0 0
      %1110 = vmatprep.subr.bf16.mxu0 0
      %1111 = vmatpush1.bf16.msra.mxu0 0
      %1112 = vmatprep.subr.bf16.mxu0 0
      %1113 = vmatpush1.bf16.msra.mxu0 0
      %1114 = vmatprep.subr.bf16.mxu0 0
      %1115 = vmatpush1.bf16.msra.mxu0 0
      %1116 = vmatprep.subr.bf16.mxu0 0
      %1117 = vmatpush1.bf16.msra.mxu0 0
      %1118 = vmatprep.subr.bf16.mxu0 0
      %1119 = vmatpush1.bf16.msra.mxu0 0
      %1120 = vmatprep.subr.bf16.mxu0 0
      %1121 = vmatpush1.bf16.msra.mxu0 0
      %1122 = vmatprep.subr.bf16.mxu0 0
      %1123 = vmatpush1.bf16.msra.mxu0 0
      %1124 = vmatprep.mubr.bf16.mxu0 0
      %1125 = vmatmul.mubr.bf16.gmra.mrb[0].mxu0 %v1081
      %v1126 = vpop.f32.mrb[0].mxu0
      %v1127 = vadd.f32 0.0, %v1126
      %v1128 = vpop.f32.mrb[0].mxu0
      %v1129 = vadd.f32 0.0, %v1128
      %v1130 = vpop.f32.mrb[0].mxu0
      %v1131 = vpop.f32.mrb[0].mxu0
      %1132 = vdwg.mxu0
      %1133 = vmatprep.subr.bf16.mxu0 0
      %1134 = vmatpush1.bf16.msra.mxu0 %v1090
      %1135 = vmatprep.subr.bf16.mxu0 0
      %1136 = vmatpush1.bf16.msra.mxu0 0
      %1137 = vmatprep.subr.bf16.mxu0 0
      %1138 = vmatpush1.bf16.msra.mxu0 0
      %1139 = vmatprep.subr.bf16.mxu0 0
      %1140 = vmatpush1.bf16.msra.mxu0 0
      %1141 = vmatprep.subr.bf16.mxu0 0
      %1142 = vmatpush1.bf16.msra.mxu0 0
      %1143 = vmatprep.subr.bf16.mxu0 0
      %1144 = vmatpush1.bf16.msra.mxu0 0
      %1145 = vmatprep.subr.bf16.mxu0 0
      %1146 = vmatpush1.bf16.msra.mxu0 0
      %1147 = vmatprep.subr.bf16.mxu0 0
      %1148 = vmatpush1.bf16.msra.mxu0 0
      %1149 = vmatprep.subr.bf16.mxu0 0
      %1150 = vmatpush1.bf16.msra.mxu0 0
      %1151 = vmatprep.subr.bf16.mxu0 0
      %1152 = vmatpush1.bf16.msra.mxu0 0
      %1153 = vmatprep.subr.bf16.mxu0 0
      %1154 = vmatpush1.bf16.msra.mxu0 0
      %1155 = vmatprep.subr.bf16.mxu0 0
      %1156 = vmatpush1.bf16.msra.mxu0 0
      %1157 = vmatprep.subr.bf16.mxu0 0
      %1158 = vmatpush1.bf16.msra.mxu0 0
      %1159 = vmatprep.subr.bf16.mxu0 0
      %1160 = vmatpush1.bf16.msra.mxu0 0
      %1161 = vmatprep.subr.bf16.mxu0 0
      %1162 = vmatpush1.bf16.msra.mxu0 0
      %1163 = vmatprep.subr.bf16.mxu0 0
      %1164 = vmatpush1.bf16.msra.mxu0 0
      %1165 = vmatprep.mubr.bf16.mxu0 0
      %1166 = vmatmul.mubr.bf16.gmra.mrb[0].mxu0 %v1081
      %v1167 = vpop.f32.mrb[0].mxu0
      %v1168 = vadd.f32 0.0, %v1167
      %v1169 = vpop.f32.mrb[0].mxu0
      %v1170 = vpop.f32.mrb[0].mxu0
      %v1171 = vpop.f32.mrb[0].mxu0
      %1172 = vdwg.mxu0
      %v1173 = vadd.f32 %v1048, %v1127
      %v1174 = vadd.f32 %v1049, %v1129
      %v1175 = vadd.f32 %v1050, %v1168
      %v1176 = vld [vmem:[%s197] sm:$0x3f]
      %s1177 = scalar_lea.vmem %s1, 32
      %v1178 = vld [vmem:[%s1177] sm:$0xf]
      %v1180 = vcombine.high %v1176, %v1176
      %v1182 = vunpack.c.l.s4 1983009808
      %v1183 = vunpack.c.0.s8 %v1182
      %v1184 = vlaneseq
      %v1185 = vshrl.u32 %v1184, 7
      %v1186 = vsub.s32 %v1183, %v1185
      %v1187 = vrot.slane %v1176, %v1186
      %v1189 = vunpack.c.l.s4 1983009808
      %v1190 = vunpack.c.0.s8 %v1189
      %v1191 = vlaneseq
      %v1192 = vshrl.u32 %v1191, 7
      %v1193 = vsub.s32 %v1190, %v1192
      %v1194 = vrot.slane %v1180, %v1193
      %v1195 = vcombine.high %v1187, %v1187
      %1196 = vrot.lane.b32.xlu0 %v1187, 90
      %v1197 = vpop.permute.xlu0 %1196
      %1198 = vrot.lane.b32.xlu0 %v1195, 90
      %v1199 = vpop.permute.xlu0 %1198
      %1200 = vrot.lane.b32.xlu0 %v1194, 90
      %v1201 = vpop.permute.xlu0 %1200
      %vm1202 = vcmask 736256
      %v1203 = vsel %vm1202, %v1197, %v1199
      %v1204 = vsel %vm1202, %v1199, %v1201
      %v1206 = vsel %vm238, %v1178, 0
      %v1209 = vsel %vm242, %v1203, 0
      %v1212 = vsel %vm242, %v1204, 0
      %v1215 = vsel %vm242, %v1201, 0
      %1217 = vmatprep.subr.bf16.mxu0 %v1212
      %1218 = vmatpush1.bf16.msra.mxu0 %v1209
      %1219 = vmatprep.subr.bf16.mxu0 0
      %1220 = vmatpush1.bf16.msra.mxu0 0
      %1221 = vmatprep.subr.bf16.mxu0 0
      %1222 = vmatpush1.bf16.msra.mxu0 0
      %1223 = vmatprep.subr.bf16.mxu0 0
      %1224 = vmatpush1.bf16.msra.mxu0 0
      %1225 = vmatprep.subr.bf16.mxu0 0
      %1226 = vmatpush1.bf16.msra.mxu0 0
      %1227 = vmatprep.subr.bf16.mxu0 0
      %1228 = vmatpush1.bf16.msra.mxu0 0
      %1229 = vmatprep.subr.bf16.mxu0 0
      %1230 = vmatpush1.bf16.msra.mxu0 0
      %1231 = vmatprep.subr.bf16.mxu0 0
      %1232 = vmatpush1.bf16.msra.mxu0 0
      %1233 = vmatprep.subr.bf16.mxu0 0
      %1234 = vmatpush1.bf16.msra.mxu0 0
      %1235 = vmatprep.subr.bf16.mxu0 0
      %1236 = vmatpush1.bf16.msra.mxu0 0
      %1237 = vmatprep.subr.bf16.mxu0 0
      %1238 = vmatpush1.bf16.msra.mxu0 0
      %1239 = vmatprep.subr.bf16.mxu0 0
      %1240 = vmatpush1.bf16.msra.mxu0 0
      %1241 = vmatprep.subr.bf16.mxu0 0
      %1242 = vmatpush1.bf16.msra.mxu0 0
      %1243 = vmatprep.subr.bf16.mxu0 0
      %1244 = vmatpush1.bf16.msra.mxu0 0
      %1245 = vmatprep.subr.bf16.mxu0 0
      %1246 = vmatpush1.bf16.msra.mxu0 0
      %1247 = vmatprep.subr.bf16.mxu0 0
      %1248 = vmatpush1.bf16.msra.mxu0 0
      %1249 = vmatprep.mubr.bf16.mxu0 0
      %1250 = vmatmul.mubr.bf16.gmra.mrb[0].mxu0 %v1206
      %v1251 = vpop.f32.mrb[0].mxu0
      %v1252 = vadd.f32 0.0, %v1251
      %v1253 = vpop.f32.mrb[0].mxu0
      %v1254 = vadd.f32 0.0, %v1253
      %v1255 = vpop.f32.mrb[0].mxu0
      %v1256 = vpop.f32.mrb[0].mxu0
      %1257 = vdwg.mxu0
      %1258 = vmatprep.subr.bf16.mxu0 0
      %1259 = vmatpush1.bf16.msra.mxu0 %v1215
      %1260 = vmatprep.subr.bf16.mxu0 0
      %1261 = vmatpush1.bf16.msra.mxu0 0
      %1262 = vmatprep.subr.bf16.mxu0 0
      %1263 = vmatpush1.bf16.msra.mxu0 0
      %1264 = vmatprep.subr.bf16.mxu0 0
      %1265 = vmatpush1.bf16.msra.mxu0 0
      %1266 = vmatprep.subr.bf16.mxu0 0
      %1267 = vmatpush1.bf16.msra.mxu0 0
      %1268 = vmatprep.subr.bf16.mxu0 0
      %1269 = vmatpush1.bf16.msra.mxu0 0
      %1270 = vmatprep.subr.bf16.mxu0 0
      %1271 = vmatpush1.bf16.msra.mxu0 0
      %1272 = vmatprep.subr.bf16.mxu0 0
      %1273 = vmatpush1.bf16.msra.mxu0 0
      %1274 = vmatprep.subr.bf16.mxu0 0
      %1275 = vmatpush1.bf16.msra.mxu0 0
      %1276 = vmatprep.subr.bf16.mxu0 0
      %1277 = vmatpush1.bf16.msra.mxu0 0
      %1278 = vmatprep.subr.bf16.mxu0 0
      %1279 = vmatpush1.bf16.msra.mxu0 0
      %1280 = vmatprep.subr.bf16.mxu0 0
      %1281 = vmatpush1.bf16.msra.mxu0 0
      %1282 = vmatprep.subr.bf16.mxu0 0
      %1283 = vmatpush1.bf16.msra.mxu0 0
      %1284 = vmatprep.subr.bf16.mxu0 0
      %1285 = vmatpush1.bf16.msra.mxu0 0
      %1286 = vmatprep.subr.bf16.mxu0 0
      %1287 = vmatpush1.bf16.msra.mxu0 0
      %1288 = vmatprep.subr.bf16.mxu0 0
      %1289 = vmatpush1.bf16.msra.mxu0 0
      %1290 = vmatprep.mubr.bf16.mxu0 0
      %1291 = vmatmul.mubr.bf16.gmra.mrb[0].mxu0 %v1206
      %v1292 = vpop.f32.mrb[0].mxu0
      %v1293 = vadd.f32 0.0, %v1292
      %v1294 = vpop.f32.mrb[0].mxu0
      %v1295 = vpop.f32.mrb[0].mxu0
      %v1296 = vpop.f32.mrb[0].mxu0
      %1297 = vdwg.mxu0
      %v1298 = vadd.f32 %v1173, %v1252
      %v1299 = vadd.f32 %v1174, %v1254
      %v1300 = vadd.f32 %v1175, %v1293
      %v1301 = vld [vmem:[%s2] sm:$0xff]
      %1303 = vset.pattern.permute.xlu0 0
      %1304 = vperm.xlu0 %1303, %v1301
      %v1305 = vpop.permute.xlu0 %1304
      %v1307 = vadd.f32 %v1298, %v1305
      %v1308 = vadd.f32 %v1299, %v1305
      %v1309 = vadd.f32 %v1300, %v1305
      %vm1310 = vcmp.gt.f32.partialorder %v1307, 0.0
      %vm1311 = vcmp.gt.f32.partialorder %v1308, 0.0
      %vm1312 = vcmp.gt.f32.partialorder %v1309, 0.0
      %v1313 = vmin.f32 %v1307, 0.0
      %v1314 = vmin.f32 %v1308, 0.0
      %v1315 = vmin.f32 %v1309, 0.0
      %v1316 = vmul.f32 %v1313, 1.442695
      %v1317 = vpow.pop %v1316
      %v1318 = vmul.f32 %v1314, 1.442695
      %v1319 = vpow.pop %v1318
      %v1320 = vmul.f32 %v1315, 1.442695
      %v1321 = vpow.pop %v1320
      %v1322 = vsub.f32 %v1317, 1.0
      %v1323 = vsub.f32 %v1319, 1.0
      %v1324 = vsub.f32 %v1321, 1.0
      %v1325 = vsel %vm1310, %v1307, %v1322
      %v1326 = vsel %vm1311, %v1308, %v1323
      %v1327 = vsel %vm1312, %v1309, %v1324
      %1328 = vst [vmem:[%s206] sm:$0xff] %v1325
      %1329 = vst [vmem:[%s206 + $0x8] sm:$0xff] %v1326
      %vm1330 = vcmask 261120
      %1331 = vst.msk [vmem:[%s206 + $0x10] sm:$0xff] %vm1330, %v1327
      %p1332 = scmp.lt.s32.totalorder %s18, 1
      %s1333 = scalar_select %p1332, %s18, 1
      %p1334 = scmp.lt.s32.totalorder %s19, 0
      %s1335 = scalar_select %p1334, %s19, 0
      %s1336 = smul.addr %s1335, 3
      %s1337 = smul.addr %s1333, 3
      %s1338 = sadd.s32 %s1336, %s1337
      %s1339 = smul.addr %s1338, 8
      %s1340 = scalar_lea.vmem %s3, %s1339
      // Predicated region
      $region33: #{decoder_layer_forward.3} parent=31 // pred_check
        %p1341 = pneg %p116
      $region34: #{decoder_layer_forward.3} parent=31 // pred_check_branch
        %1343 = sbr.rel (%p1341) target = $region36
      $region35: #{decoder_layer_forward.3} parent=31 // pred_region
        _
      $region36: #{decoder_layer_forward.3} parent=31 // pred_fallthru
        _
    $region32: #{decoder_layer_forward.3} parent=5 // pred_fallthru
      _
    %p1344 = scmp.le.s32.totalorder 2, %s9
    // Predicated region
    $region37: #{decoder_layer_forward.3} parent=5 // pred_check
      %p1345 = pneg %p1344
    $region38: #{decoder_layer_forward.3} parent=5 // pred_check_branch
      %1347 = sbr.rel (%p1345) target = $region40
    $region39: #{decoder_layer_forward.3} parent=5 // pred_region
      %s1348 = ssub.s32 %s9, 2
      // Predicated region
      $region41: #{decoder_layer_forward.3} parent=39 // pred_check
        %p1349 = pneg %p122
      $region42: #{decoder_layer_forward.3} parent=39 // pred_check_branch
        %1351 = sbr.rel (%p1349) target = $region44
      $region43: #{decoder_layer_forward.3} parent=39 // pred_region
        %p1352 = scmp.lt.s32.totalorder %s20, 1
        %s1353 = scalar_select %p1352, %s20, 1
        %p1354 = scmp.lt.s32.totalorder %s21, 0
        %s1355 = scalar_select %p1354, %s21, 0
        %s1356 = smul.addr %s1355, 3
        %s1357 = smul.addr %s1353, 3
        %s1358 = sadd.s32 %s1356, %s1357
        %s1359 = smul.addr %s1358, 8
        %s1360 = scalar_lea.vmem %s3, %s1359
      $region44: #{decoder_layer_forward.3} parent=39 // pred_fallthru
        _
    $region40: #{decoder_layer_forward.3} parent=5 // pred_fallthru
      _
  $region6: #{decoder_layer_forward.3} parent=0 // loop_footer
    %s13 = sadd.s32 1, %s9
  $region7: #{decoder_layer_forward.3} parent=0 // loop_footer_branch
    %8 = sbr.rel target = $region3
  $region8: #{decoder_layer_forward.3} parent=0 // loop_exit
    _

// kernel: decoder_layer_forward.5
$region0: #{decoder_layer_forward.5}
  #allocation0 [shape = 'u32[]', space=smem, size = 0x4, offset = 0x4, fixed_abs, tag = 'smem constant byte address 0x4 - core index']
  #allocation1 [shape = 'u32[144,128]{1,0:T(1,128)}', space=vmem, size = 0x12000, scoped, tag = 'internal scratch']
  %s0 = inlined_call_operand.vmem [shape: bf16[2,1,8,1190], index: 0, kind: input, shape index: {}]
  %s1 = inlined_call_operand.vmem [shape: bf16[9,8,8], index: 1, kind: input, shape index: {}]
  %s2 = inlined_call_operand.vmem [shape: f32[8,1], index: 2, kind: input, shape index: {}]
  %s3 = inlined_call_operand.vmem [shape: f32[2,1,1,1088], index: 3, kind: output, shape index: {}]
  %s4 = sld [smem:[#allocation0]]
  $region45: #{decoder_layer_forward.5} parent=0
    _
  %s6 = ssub.s32 1, %s4
  %s7 = scalar_select 0, %s6, %s4
  loop: start=0, step=1, limit=4
  $region2: #{decoder_layer_forward.5} parent=0 // loop_pre_header
    _
  $region3: #{decoder_layer_forward.5} parent=0 // loop_header
    %s9 = sphi 0, %s13
    %p10 = scmp.ge.s32.totalorder %s9, 4
    %s16 = sphi 0, %s28
    %s17 = sphi 0, %s24
    %s18 = sphi 0, %s16
    %s19 = sphi 0, %s17
    %s20 = sphi 0, %s18
    %s21 = sphi 0, %s19
    %s33 = sphi 0, %s35
    %s36 = sphi 0, %s33
    %s37 = sphi 0, %s36
    %s53 = sphi 0, %s37
    %s57 = sphi 0, %s57
    %s59 = sphi 0, %s57
    %s60 = sphi 0, %s59
    %s74 = sphi 0, %s60
    %s78 = sphi 0, %s78
    %s80 = sphi 0, %s78
    %s81 = sphi 0, %s80
    %s95 = sphi 0, %s81
    %s103 = sphi 0, %s105
    %s106 = sphi 0, %s103
    %s107 = sphi 0, %s106
    %s123 = sphi 0, %s107
  $region4: #{decoder_layer_forward.5} parent=0 // loop_header_branch
    %12 = sbr.rel (%p10) target = $region8
  $region5: #{decoder_layer_forward.5} parent=0 // loop_body
    %s14 = ssub.s32 %s9, 1
    %s15 = ssub.s32 %s9, 2
    %s22 = sadd.s32 1, %s17
    %p23 = scmp.ge.s32.totalorder %s22, 1
    %s24 = scalar_select %p23, 0, %s22
    %s25 = sadd.s32 1, %s16
    %s26 = scalar_select %p23, %s25, %s16
    %p27 = scmp.ge.s32.totalorder %s26, 2
    %s28 = scalar_select %p27, 0, %s26
    %s29 = ssub.s32 %s16, %s28
    %s30 = ssub.s32 %s17, %s24
    %s31 = sor.u32 %s29, %s30
    %p32 = scmp.eq.s32.totalorder %s31, 0
    %s34 = sadd.s32 %s33, 1
    %s35 = scalar_select %p32, %s33, %s34
    %p38 = pneg %p32
    %p39 = scmp.eq.s32.totalorder %s9, 1
    %p40 = por %p38, %p39
    %p41 = scmp.ne.s32.totalorder %s33, %s36
    %p42 = scmp.eq.s32.totalorder %s9, 0
    %p43 = por %p41, %p42
    %p44 = scmp.ne.s32.totalorder %s33, %s36
    %p45 = scmp.eq.s32.totalorder %s14, 1
    %p46 = por %p44, %p45
    %p47 = scmp.ne.s32.totalorder %s36, %s37
    %p48 = scmp.eq.s32.totalorder %s14, 0
    %p49 = por %p47, %p48
    %p50 = scmp.ne.s32.totalorder %s36, %s37
    %p51 = scmp.eq.s32.totalorder %s15, 1
    %p52 = por %p50, %p51
    %p54 = scmp.ne.s32.totalorder %s37, %s53
    %p55 = scmp.eq.s32.totalorder %s15, 0
    %p56 = por %p54, %p55
    %s58 = sadd.s32 %s57, 1
    %p61 = scmp.eq.s32.totalorder %s9, 1
    %p62 = scmp.ne.s32.totalorder %s57, %s59
    %p63 = scmp.eq.s32.totalorder %s9, 0
    %p64 = por %p62, %p63
    %p65 = scmp.ne.s32.totalorder %s57, %s59
    %p66 = scmp.eq.s32.totalorder %s14, 1
    %p67 = por %p65, %p66
    %p68 = scmp.ne.s32.totalorder %s59, %s60
    %p69 = scmp.eq.s32.totalorder %s14, 0
    %p70 = por %p68, %p69
    %p71 = scmp.ne.s32.totalorder %s59, %s60
    %p72 = scmp.eq.s32.totalorder %s15, 1
    %p73 = por %p71, %p72
    %p75 = scmp.ne.s32.totalorder %s60, %s74
    %p76 = scmp.eq.s32.totalorder %s15, 0
    %p77 = por %p75, %p76
    %s79 = sadd.s32 %s78, 1
    %p82 = scmp.eq.s32.totalorder %s9, 1
    %p83 = scmp.ne.s32.totalorder %s78, %s80
    %p84 = scmp.eq.s32.totalorder %s9, 0
    %p85 = por %p83, %p84
    %p86 = scmp.ne.s32.totalorder %s78, %s80
    %p87 = scmp.eq.s32.totalorder %s14, 1
    %p88 = por %p86, %p87
    %p89 = scmp.ne.s32.totalorder %s80, %s81
    %p90 = scmp.eq.s32.totalorder %s14, 0
    %p91 = por %p89, %p90
    %p92 = scmp.ne.s32.totalorder %s80, %s81
    %p93 = scmp.eq.s32.totalorder %s15, 1
    %p94 = por %p92, %p93
    %p96 = scmp.ne.s32.totalorder %s81, %s95
    %p97 = scmp.eq.s32.totalorder %s15, 0
    %p98 = por %p96, %p97
    %s99 = ssub.s32 %s16, %s28
    %s100 = ssub.s32 %s17, %s24
    %s101 = sor.u32 %s99, %s100
    %p102 = scmp.eq.s32.totalorder %s101, 0
    %s104 = sadd.s32 %s103, 1
    %s105 = scalar_select %p102, %s103, %s104
    %p108 = pneg %p102
    %p109 = scmp.eq.s32.totalorder %s9, 1
    %p110 = por %p108, %p109
    %p111 = scmp.ne.s32.totalorder %s103, %s106
    %p112 = scmp.eq.s32.totalorder %s9, 0
    %p113 = por %p111, %p112
    %p114 = scmp.ne.s32.totalorder %s103, %s106
    %p115 = scmp.eq.s32.totalorder %s14, 1
    %p116 = por %p114, %p115
    %p117 = scmp.ne.s32.totalorder %s106, %s107
    %p118 = scmp.eq.s32.totalorder %s14, 0
    %p119 = por %p117, %p118
    %p120 = scmp.ne.s32.totalorder %s106, %s107
    %p121 = scmp.eq.s32.totalorder %s15, 1
    %p122 = por %p120, %p121
    %p124 = scmp.ne.s32.totalorder %s107, %s123
    %p125 = scmp.eq.s32.totalorder %s15, 0
    %p126 = por %p124, %p125
    %p127 = scmp.le.s32.totalorder 1, %s9
    %p128 = scmp.lt.s32.totalorder %s9, 3
    %p129 = pnand %p127, %p128
    %p130 = pneg %p129
    // Predicated region
    $region9: #{decoder_layer_forward.5} parent=5 // pred_check
      _
    $region10: #{decoder_layer_forward.5} parent=5 // pred_check_branch
      %132 = sbr.rel (%p129) target = $region12
    $region11: #{decoder_layer_forward.5} parent=5 // pred_region
      %s133 = ssub.s32 %s9, 1
      // Predicated region
      $region13: #{decoder_layer_forward.5} parent=11 // pred_check
        %p134 = pneg %p70
      $region14: #{decoder_layer_forward.5} parent=11 // pred_check_branch
        %136 = sbr.rel (%p134) target = $region16
      $region15: #{decoder_layer_forward.5} parent=11 // pred_region
        _
      $region16: #{decoder_layer_forward.5} parent=11 // pred_fallthru
        _
      // Predicated region
      $region17: #{decoder_layer_forward.5} parent=11 // pred_check
        %p137 = pneg %p91
      $region18: #{decoder_layer_forward.5} parent=11 // pred_check_branch
        %139 = sbr.rel (%p137) target = $region20
      $region19: #{decoder_layer_forward.5} parent=11 // pred_region
        _
      $region20: #{decoder_layer_forward.5} parent=11 // pred_fallthru
        _
    $region12: #{decoder_layer_forward.5} parent=5 // pred_fallthru
      _
    %p140 = scmp.lt.s32.totalorder %s9, 2
    // Predicated region
    $region21: #{decoder_layer_forward.5} parent=5 // pred_check
      %p141 = pneg %p140
    $region22: #{decoder_layer_forward.5} parent=5 // pred_check_branch
      %143 = sbr.rel (%p141) target = $region24
    $region23: #{decoder_layer_forward.5} parent=5 // pred_region
      // Predicated region
      $region25: #{decoder_layer_forward.5} parent=23 // pred_check
        %p144 = pneg %p43
      $region26: #{decoder_layer_forward.5} parent=23 // pred_check_branch
        %146 = sbr.rel (%p144) target = $region28
      $region27: #{decoder_layer_forward.5} parent=23 // pred_region
        %p147 = scmp.lt.s32.totalorder %s16, 1
        %s148 = scalar_select %p147, %s16, 1
        %p149 = scmp.lt.s32.totalorder %s17, 0
        %s150 = scalar_select %p149, %s17, 0
        %s151 = smul.addr %s150, 10
        %s152 = smul.addr %s148, 10
        %s153 = sadd.s32 %s151, %s152
        %s154 = smul.addr %s153, 4
        %s155 = scalar_lea.vmem %s0, %s154
      $region28: #{decoder_layer_forward.5} parent=23 // pred_fallthru
        _
    $region24: #{decoder_layer_forward.5} parent=5 // pred_fallthru
      _
    %p156 = scmp.le.s32.totalorder 1, %s9
    %p157 = scmp.lt.s32.totalorder %s9, 3
    %p158 = pnand %p156, %p157
    %p159 = pneg %p158
    // Predicated region
    $region29: #{decoder_layer_forward.5} parent=5 // pred_check
      _
    $region30: #{decoder_layer_forward.5} parent=5 // pred_check_branch
      %161 = sbr.rel (%p158) target = $region32
    $region31: #{decoder_layer_forward.5} parent=5 // pred_region
      %s162 = ssub.s32 %s9, 1
      %p163 = scmp.lt.s32.totalorder %s18, 1
      %s164 = scalar_select %p163, %s18, 1
      %p165 = scmp.lt.s32.totalorder %s19, 0
      %s166 = scalar_select %p165, %s19, 0
      %s167 = smul.addr %s166, 10
      %s168 = smul.addr %s164, 10
      %s169 = sadd.s32 %s167, %s168
      %s170 = smul.addr %s169, 4
      %s171 = scalar_lea.vmem %s0, %s170
      %p172 = pneg %p49
      %p173 = pneg %p46
      %p174 = pneg %p70
      %p175 = pneg %p67
      %p176 = pneg %p91
      %p177 = pneg %p88
      %p178 = pneg %p119
      %p179 = pneg %p116
      %p180 = scmp.lt.s32.totalorder %s18, 1
      %s181 = scalar_select %p180, %s18, 1
      %p182 = scmp.lt.s32.totalorder %s19, 0
      %s183 = scalar_select %p182, %s19, 0
      %s184 = smul.addr %s183, 9
      %s185 = smul.addr %s181, 9
      %s186 = sadd.s32 %s184, %s185
      %s187 = scalar_lea.vmem %s3, %s186
      %p188 = scmp.lt.s32.totalorder %s18, 1
      %s189 = scalar_select %p188, %s18, 1
      %p190 = scmp.lt.s32.totalorder %s19, 0
      %s191 = scalar_select %p190, %s19, 0
      %s192 = smul.addr %s191, 10
      %s193 = smul.addr %s189, 10
      %s194 = sadd.s32 %s192, %s193
      %s195 = smul.addr %s194, 4
      %s196 = scalar_lea.vmem %s0, %s195
      %p197 = scmp.lt.s32.totalorder %s18, 1
      %s198 = scalar_select %p197, %s18, 1
      %p199 = scmp.lt.s32.totalorder %s19, 0
      %s200 = scalar_select %p199, %s19, 0
      %s201 = smul.addr %s200, 9
      %s202 = smul.addr %s198, 9
      %s203 = sadd.s32 %s201, %s202
      %s204 = scalar_lea.vmem %s3, %s203
      %v206 = vld [vmem:[%s196] sm:$0xff]
      %v207 = vld [vmem:[%s196 + $0x8] sm:$0xff]
      %v208 = vld [vmem:[%s196 + $0x10] sm:$0xff]
      %v209 = vld [vmem:[%s196 + $0x18] sm:$0xff]
      %v210 = vld [vmem:[%s196 + $0x20] sm:$0xf]
      %v211 = vld [vmem:[%s1] sm:$0xf]
      %s212 = scalar_lea.vmem %s1, 4
      %v213 = vld [vmem:[%s212] sm:$0xf]
      %v219 = vunpack.c.l.b16 %v206
      %v220 = vunpack.c.h.b16 %v206
      %v221 = vunpack.c.l.b16 %v207
      %v222 = vunpack.c.h.b16 %v207
      %v223 = vunpack.c.l.b16 %v208
      %v224 = vunpack.c.h.b16 %v208
      %v225 = vunpack.c.l.b16 %v209
      %v226 = vunpack.c.h.b16 %v209
      %v227 = vunpack.c.l.b16 %v210
      %v228 = vpack.c.b16 %v219, %v219
      %v229 = vpack.c.b16 %v220, %v220
      %v230 = vpack.c.b16 %v221, %v221
      %v231 = vpack.c.b16 %v222, %v222
      %v232 = vpack.c.b16 %v223, %v223
      %v233 = vpack.c.b16 %v224, %v224
      %v234 = vpack.c.b16 %v225, %v225
      %v235 = vpack.c.b16 %v226, %v226
      %v236 = vpack.c.b16 %v227, %v227
      %237 = vrot.lane.b32.xlu0 %v228, 127
      %v238 = vpop.permute.xlu0 %237
      %239 = vrot.lane.b32.xlu0 %v229, 127
      %v240 = vpop.permute.xlu0 %239
      %241 = vrot.lane.b32.xlu0 %v230, 127
      %v242 = vpop.permute.xlu0 %241
      %243 = vrot.lane.b32.xlu0 %v231, 127
      %v244 = vpop.permute.xlu0 %243
      %245 = vrot.lane.b32.xlu0 %v232, 127
      %v246 = vpop.permute.xlu0 %245
      %247 = vrot.lane.b32.xlu0 %v233, 127
      %v248 = vpop.permute.xlu0 %247
      %249 = vrot.lane.b32.xlu0 %v234, 127
      %v250 = vpop.permute.xlu0 %249
      %251 = vrot.lane.b32.xlu0 %v235, 127
      %v252 = vpop.permute.xlu0 %251
      %253 = vrot.lane.b32.xlu0 %v236, 127
      %v254 = vpop.permute.xlu0 %253
      %vm255 = vcmask 1039360
      %v256 = vsel %vm255, %v238, %v240
      %v257 = vsel %vm255, %v240, %v242
      %v258 = vsel %vm255, %v242, %v244
      %v259 = vsel %vm255, %v244, %v246
      %v260 = vsel %vm255, %v246, %v248
      %v261 = vsel %vm255, %v248, %v250
      %v262 = vsel %vm255, %v250, %v252
      %v263 = vsel %vm255, %v252, %v254
      %vm264 = vcmask 64512
      %v266 = vsel %vm264, %v213, 0
      %vm268 = vcmask 1043456
      %v270 = vsel %vm268, %v256, 0
      %v273 = vsel %vm268, %v257, 0
      %v276 = vsel %vm268, %v258, 0
      %v279 = vsel %vm268, %v259, 0
      %v282 = vsel %vm268, %v260, 0
      %v285 = vsel %vm268, %v261, 0
      %v288 = vsel %vm268, %v262, 0
      %v291 = vsel %vm268, %v263, 0
      %v294 = vsel %vm268, %v254, 0
      %296 = vmatprep.subr.bf16.mxu0 %v273
      %297 = vmatpush1.bf16.msra.mxu0 %v270
      %298 = vmatprep.subr.bf16.mxu0 0
      %299 = vmatpush1.bf16.msra.mxu0 0
      %300 = vmatprep.subr.bf16.mxu0 0
      %301 = vmatpush1.bf16.msra.mxu0 0
      %302 = vmatprep.subr.bf16.mxu0 0
      %303 = vmatpush1.bf16.msra.mxu0 0
      %304 = vmatprep.subr.bf16.mxu0 0
      %305 = vmatpush1.bf16.msra.mxu0 0
      %306 = vmatprep.subr.bf16.mxu0 0
      %307 = vmatpush1.bf16.msra.mxu0 0
      %308 = vmatprep.subr.bf16.mxu0 0
      %309 = vmatpush1.bf16.msra.mxu0 0
      %310 = vmatprep.subr.bf16.mxu0 0
      %311 = vmatpush1.bf16.msra.mxu0 0
      %312 = vmatprep.subr.bf16.mxu0 0
      %313 = vmatpush1.bf16.msra.mxu0 0
      %314 = vmatprep.subr.bf16.mxu0 0
      %315 = vmatpush1.bf16.msra.mxu0 0
      %316 = vmatprep.subr.bf16.mxu0 0
      %317 = vmatpush1.bf16.msra.mxu0 0
      %318 = vmatprep.subr.bf16.mxu0 0
      %319 = vmatpush1.bf16.msra.mxu0 0
      %320 = vmatprep.subr.bf16.mxu0 0
      %321 = vmatpush1.bf16.msra.mxu0 0
      %322 = vmatprep.subr.bf16.mxu0 0
      %323 = vmatpush1.bf16.msra.mxu0 0
      %324 = vmatprep.subr.bf16.mxu0 0
      %325 = vmatpush1.bf16.msra.mxu0 0
      %326 = vmatprep.subr.bf16.mxu0 0
      %327 = vmatpush1.bf16.msra.mxu0 0
      %328 = vmatprep.mubr.bf16.mxu0 0
      %329 = vmatmul.mubr.bf16.gmra.mrb[0].mxu0 %v266
      %v330 = vpop.f32.mrb[0].mxu0
      %v331 = vadd.f32 0.0, %v330
      %v332 = vpop.f32.mrb[0].mxu0
      %v333 = vadd.f32 0.0, %v332
      %v334 = vpop.f32.mrb[0].mxu0
      %v335 = vpop.f32.mrb[0].mxu0
      %336 = vdwg.mxu0
      %337 = vmatprep.subr.bf16.mxu0 %v279
      %338 = vmatpush1.bf16.msra.mxu0 %v276
      %339 = vmatprep.subr.bf16.mxu0 0
      %340 = vmatpush1.bf16.msra.mxu0 0
      %341 = vmatprep.subr.bf16.mxu0 0
      %342 = vmatpush1.bf16.msra.mxu0 0
      %343 = vmatprep.subr.bf16.mxu0 0
      %344 = vmatpush1.bf16.msra.mxu0 0
      %345 = vmatprep.subr.bf16.mxu0 0
      %346 = vmatpush1.bf16.msra.mxu0 0
      %347 = vmatprep.subr.bf16.mxu0 0
      %348 = vmatpush1.bf16.msra.mxu0 0
      %349 = vmatprep.subr.bf16.mxu0 0
      %350 = vmatpush1.bf16.msra.mxu0 0
      %351 = vmatprep.subr.bf16.mxu0 0
      %352 = vmatpush1.bf16.msra.mxu0 0
      %353 = vmatprep.subr.bf16.mxu0 0
      %354 = vmatpush1.bf16.msra.mxu0 0
      %355 = vmatprep.subr.bf16.mxu0 0
      %356 = vmatpush1.bf16.msra.mxu0 0
      %357 = vmatprep.subr.bf16.mxu0 0
      %358 = vmatpush1.bf16.msra.mxu0 0
      %359 = vmatprep.subr.bf16.mxu0 0
      %360 = vmatpush1.bf16.msra.mxu0 0
      %361 = vmatprep.subr.bf16.mxu0 0
      %362 = vmatpush1.bf16.msra.mxu0 0
      %363 = vmatprep.subr.bf16.mxu0 0
      %364 = vmatpush1.bf16.msra.mxu0 0
      %365 = vmatprep.subr.bf16.mxu0 0
      %366 = vmatpush1.bf16.msra.mxu0 0
      %367 = vmatprep.subr.bf16.mxu0 0
      %368 = vmatpush1.bf16.msra.mxu0 0
      %369 = vmatprep.mubr.bf16.mxu0 0
      %370 = vmatmul.mubr.bf16.gmra.mrb[0].mxu0 %v266
      %v371 = vpop.f32.mrb[0].mxu0
      %v372 = vadd.f32 0.0, %v371
      %v373 = vpop.f32.mrb[0].mxu0
      %v374 = vadd.f32 0.0, %v373
      %v375 = vpop.f32.mrb[0].mxu0
      %v376 = vpop.f32.mrb[0].mxu0
      %377 = vdwg.mxu0
      %378 = vmatprep.subr.bf16.mxu0 %v285
      %379 = vmatpush1.bf16.msra.mxu0 %v282
      %380 = vmatprep.subr.bf16.mxu0 0
      %381 = vmatpush1.bf16.msra.mxu0 0
      %382 = vmatprep.subr.bf16.mxu0 0
      %383 = vmatpush1.bf16.msra.mxu0 0
      %384 = vmatprep.subr.bf16.mxu0 0
      %385 = vmatpush1.bf16.msra.mxu0 0
      %386 = vmatprep.subr.bf16.mxu0 0
      %387 = vmatpush1.bf16.msra.mxu0 0
      %388 = vmatprep.subr.bf16.mxu0 0
      %389 = vmatpush1.bf16.msra.mxu0 0
      %390 = vmatprep.subr.bf16.mxu0 0
      %391 = vmatpush1.bf16.msra.mxu0 0
      %392 = vmatprep.subr.bf16.mxu0 0
      %393 = vmatpush1.bf16.msra.mxu0 0
      %394 = vmatprep.subr.bf16.mxu0 0
      %395 = vmatpush1.bf16.msra.mxu0 0
      %396 = vmatprep.subr.bf16.mxu0 0
      %397 = vmatpush1.bf16.msra.mxu0 0
      %398 = vmatprep.subr.bf16.mxu0 0
      %399 = vmatpush1.bf16.msra.mxu0 0
      %400 = vmatprep.subr.bf16.mxu0 0
      %401 = vmatpush1.bf16.msra.mxu0 0
      %402 = vmatprep.subr.bf16.mxu0 0
      %403 = vmatpush1.bf16.msra.mxu0 0
      %404 = vmatprep.subr.bf16.mxu0 0
      %405 = vmatpush1.bf16.msra.mxu0 0
      %406 = vmatprep.subr.bf16.mxu0 0
      %407 = vmatpush1.bf16.msra.mxu0 0
      %408 = vmatprep.subr.bf16.mxu0 0
      %409 = vmatpush1.bf16.msra.mxu0 0
      %410 = vmatprep.mubr.bf16.mxu0 0
      %411 = vmatmul.mubr.bf16.gmra.mrb[0].mxu0 %v266
      %v412 = vpop.f32.mrb[0].mxu0
      %v413 = vadd.f32 0.0, %v412
      %v414 = vpop.f32.mrb[0].mxu0
      %v415 = vadd.f32 0.0, %v414
      %v416 = vpop.f32.mrb[0].mxu0
      %v417 = vpop.f32.mrb[0].mxu0
      %418 = vdwg.mxu0
      %419 = vmatprep.subr.bf16.mxu0 %v291
      %420 = vmatpush1.bf16.msra.mxu0 %v288
      %421 = vmatprep.subr.bf16.mxu0 0
      %422 = vmatpush1.bf16.msra.mxu0 0
      %423 = vmatprep.subr.bf16.mxu0 0
      %424 = vmatpush1.bf16.msra.mxu0 0
      %425 = vmatprep.subr.bf16.mxu0 0
      %426 = vmatpush1.bf16.msra.mxu0 0
      %427 = vmatprep.subr.bf16.mxu0 0
      %428 = vmatpush1.bf16.msra.mxu0 0
      %429 = vmatprep.subr.bf16.mxu0 0
      %430 = vmatpush1.bf16.msra.mxu0 0
      %431 = vmatprep.subr.bf16.mxu0 0
      %432 = vmatpush1.bf16.msra.mxu0 0
      %433 = vmatprep.subr.bf16.mxu0 0
      %434 = vmatpush1.bf16.msra.mxu0 0
      %435 = vmatprep.subr.bf16.mxu0 0
      %436 = vmatpush1.bf16.msra.mxu0 0
      %437 = vmatprep.subr.bf16.mxu0 0
      %438 = vmatpush1.bf16.msra.mxu0 0
      %439 = vmatprep.subr.bf16.mxu0 0
      %440 = vmatpush1.bf16.msra.mxu0 0
      %441 = vmatprep.subr.bf16.mxu0 0
      %442 = vmatpush1.bf16.msra.mxu0 0
      %443 = vmatprep.subr.bf16.mxu0 0
      %444 = vmatpush1.bf16.msra.mxu0 0
      %445 = vmatprep.subr.bf16.mxu0 0
      %446 = vmatpush1.bf16.msra.mxu0 0
      %447 = vmatprep.subr.bf16.mxu0 0
      %448 = vmatpush1.bf16.msra.mxu0 0
      %449 = vmatprep.subr.bf16.mxu0 0
      %450 = vmatpush1.bf16.msra.mxu0 0
      %451 = vmatprep.mubr.bf16.mxu0 0
      %452 = vmatmul.mubr.bf16.gmra.mrb[0].mxu0 %v266
      %v453 = vpop.f32.mrb[0].mxu0
      %v454 = vadd.f32 0.0, %v453
      %v455 = vpop.f32.mrb[0].mxu0
      %v456 = vadd.f32 0.0, %v455
      %v457 = vpop.f32.mrb[0].mxu0
      %v458 = vpop.f32.mrb[0].mxu0
      %459 = vdwg.mxu0
      %460 = vmatprep.subr.bf16.mxu0 0
      %461 = vmatpush1.bf16.msra.mxu0 %v294
      %462 = vmatprep.subr.bf16.mxu0 0
      %463 = vmatpush1.bf16.msra.mxu0 0
      %464 = vmatprep.subr.bf16.mxu0 0
      %465 = vmatpush1.bf16.msra.mxu0 0
      %466 = vmatprep.subr.bf16.mxu0 0
      %467 = vmatpush1.bf16.msra.mxu0 0
      %468 = vmatprep.subr.bf16.mxu0 0
      %469 = vmatpush1.bf16.msra.mxu0 0
      %470 = vmatprep.subr.bf16.mxu0 0
      %471 = vmatpush1.bf16.msra.mxu0 0
      %472 = vmatprep.subr.bf16.mxu0 0
      %473 = vmatpush1.bf16.msra.mxu0 0
      %474 = vmatprep.subr.bf16.mxu0 0
      %475 = vmatpush1.bf16.msra.mxu0 0
      %476 = vmatprep.subr.bf16.mxu0 0
      %477 = vmatpush1.bf16.msra.mxu0 0
      %478 = vmatprep.subr.bf16.mxu0 0
      %479 = vmatpush1.bf16.msra.mxu0 0
      %480 = vmatprep.subr.bf16.mxu0 0
      %481 = vmatpush1.bf16.msra.mxu0 0
      %482 = vmatprep.subr.bf16.mxu0 0
      %483 = vmatpush1.bf16.msra.mxu0 0
      %484 = vmatprep.subr.bf16.mxu0 0
      %485 = vmatpush1.bf16.msra.mxu0 0
      %486 = vmatprep.subr.bf16.mxu0 0
      %487 = vmatpush1.bf16.msra.mxu0 0
      %488 = vmatprep.subr.bf16.mxu0 0
      %489 = vmatpush1.bf16.msra.mxu0 0
      %490 = vmatprep.subr.bf16.mxu0 0
      %491 = vmatpush1.bf16.msra.mxu0 0
      %492 = vmatprep.mubr.bf16.mxu0 0
      %493 = vmatmul.mubr.bf16.gmra.mrb[0].mxu0 %v266
      %v494 = vpop.f32.mrb[0].mxu0
      %v495 = vadd.f32 0.0, %v494
      %v496 = vpop.f32.mrb[0].mxu0
      %v497 = vpop.f32.mrb[0].mxu0
      %v498 = vpop.f32.mrb[0].mxu0
      %499 = vdwg.mxu0
      %v501 = vsel %vm264, %v211, 0
      %v504 = vsel %vm268, %v228, 0
      %v507 = vsel %vm268, %v229, 0
      %v510 = vsel %vm268, %v230, 0
      %v513 = vsel %vm268, %v231, 0
      %v516 = vsel %vm268, %v232, 0
      %v519 = vsel %vm268, %v233, 0
      %v522 = vsel %vm268, %v234, 0
      %v525 = vsel %vm268, %v235, 0
      %v528 = vsel %vm268, %v236, 0
      %530 = vmatprep.subr.bf16.mxu0 %v507
      %531 = vmatpush1.bf16.msra.mxu0 %v504
      %532 = vmatprep.subr.bf16.mxu0 0
      %533 = vmatpush1.bf16.msra.mxu0 0
      %534 = vmatprep.subr.bf16.mxu0 0
      %535 = vmatpush1.bf16.msra.mxu0 0
      %536 = vmatprep.subr.bf16.mxu0 0
      %537 = vmatpush1.bf16.msra.mxu0 0
      %538 = vmatprep.subr.bf16.mxu0 0
      %539 = vmatpush1.bf16.msra.mxu0 0
      %540 = vmatprep.subr.bf16.mxu0 0
      %541 = vmatpush1.bf16.msra.mxu0 0
      %542 = vmatprep.subr.bf16.mxu0 0
      %543 = vmatpush1.bf16.msra.mxu0 0
      %544 = vmatprep.subr.bf16.mxu0 0
      %545 = vmatpush1.bf16.msra.mxu0 0
      %546 = vmatprep.subr.bf16.mxu0 0
      %547 = vmatpush1.bf16.msra.mxu0 0
      %548 = vmatprep.subr.bf16.mxu0 0
      %549 = vmatpush1.bf16.msra.mxu0 0
      %550 = vmatprep.subr.bf16.mxu0 0
      %551 = vmatpush1.bf16.msra.mxu0 0
      %552 = vmatprep.subr.bf16.mxu0 0
      %553 = vmatpush1.bf16.msra.mxu0 0
      %554 = vmatprep.subr.bf16.mxu0 0
      %555 = vmatpush1.bf16.msra.mxu0 0
      %556 = vmatprep.subr.bf16.mxu0 0
      %557 = vmatpush1.bf16.msra.mxu0 0
      %558 = vmatprep.subr.bf16.mxu0 0
      %559 = vmatpush1.bf16.msra.mxu0 0
      %560 = vmatprep.subr.bf16.mxu0 0
      %561 = vmatpush1.bf16.msra.mxu0 0
      %562 = vmatprep.mubr.bf16.mxu0 0
      %563 = vmatmul.mubr.bf16.gmra.mrb[0].mxu0 %v501
      %v564 = vpop.f32.mrb[0].mxu0
      %v565 = vadd.f32 %v331, %v564
      %v566 = vpop.f32.mrb[0].mxu0
      %v567 = vadd.f32 %v333, %v566
      %v568 = vpop.f32.mrb[0].mxu0
      %v569 = vpop.f32.mrb[0].mxu0
      %570 = vdwg.mxu0
      %571 = vmatprep.subr.bf16.mxu0 %v513
      %572 = vmatpush1.bf16.msra.mxu0 %v510
      %573 = vmatprep.subr.bf16.mxu0 0
      %574 = vmatpush1.bf16.msra.mxu0 0
      %575 = vmatprep.subr.bf16.mxu0 0
      %576 = vmatpush1.bf16.msra.mxu0 0
      %577 = vmatprep.subr.bf16.mxu0 0
      %578 = vmatpush1.bf16.msra.mxu0 0
      %579 = vmatprep.subr.bf16.mxu0 0
      %580 = vmatpush1.bf16.msra.mxu0 0
      %581 = vmatprep.subr.bf16.mxu0 0
      %582 = vmatpush1.bf16.msra.mxu0 0
      %583 = vmatprep.subr.bf16.mxu0 0
      %584 = vmatpush1.bf16.msra.mxu0 0
      %585 = vmatprep.subr.bf16.mxu0 0
      %586 = vmatpush1.bf16.msra.mxu0 0
      %587 = vmatprep.subr.bf16.mxu0 0
      %588 = vmatpush1.bf16.msra.mxu0 0
      %589 = vmatprep.subr.bf16.mxu0 0
      %590 = vmatpush1.bf16.msra.mxu0 0
      %591 = vmatprep.subr.bf16.mxu0 0
      %592 = vmatpush1.bf16.msra.mxu0 0
      %593 = vmatprep.subr.bf16.mxu0 0
      %594 = vmatpush1.bf16.msra.mxu0 0
      %595 = vmatprep.subr.bf16.mxu0 0
      %596 = vmatpush1.bf16.msra.mxu0 0
      %597 = vmatprep.subr.bf16.mxu0 0
      %598 = vmatpush1.bf16.msra.mxu0 0
      %599 = vmatprep.subr.bf16.mxu0 0
      %600 = vmatpush1.bf16.msra.mxu0 0
      %601 = vmatprep.subr.bf16.mxu0 0
      %602 = vmatpush1.bf16.msra.mxu0 0
      %603 = vmatprep.mubr.bf16.mxu0 0
      %604 = vmatmul.mubr.bf16.gmra.mrb[0].mxu0 %v501
      %v605 = vpop.f32.mrb[0].mxu0
      %v606 = vadd.f32 %v372, %v605
      %v607 = vpop.f32.mrb[0].mxu0
      %v608 = vadd.f32 %v374, %v607
      %v609 = vpop.f32.mrb[0].mxu0
      %v610 = vpop.f32.mrb[0].mxu0
      %611 = vdwg.mxu0
      %612 = vmatprep.subr.bf16.mxu0 %v519
      %613 = vmatpush1.bf16.msra.mxu0 %v516
      %614 = vmatprep.subr.bf16.mxu0 0
      %615 = vmatpush1.bf16.msra.mxu0 0
      %616 = vmatprep.subr.bf16.mxu0 0
      %617 = vmatpush1.bf16.msra.mxu0 0
      %618 = vmatprep.subr.bf16.mxu0 0
      %619 = vmatpush1.bf16.msra.mxu0 0
      %620 = vmatprep.subr.bf16.mxu0 0
      %621 = vmatpush1.bf16.msra.mxu0 0
      %622 = vmatprep.subr.bf16.mxu0 0
      %623 = vmatpush1.bf16.msra.mxu0 0
      %624 = vmatprep.subr.bf16.mxu0 0
      %625 = vmatpush1.bf16.msra.mxu0 0
      %626 = vmatprep.subr.bf16.mxu0 0
      %627 = vmatpush1.bf16.msra.mxu0 0
      %628 = vmatprep.subr.bf16.mxu0 0
      %629 = vmatpush1.bf16.msra.mxu0 0
      %630 = vmatprep.subr.bf16.mxu0 0
      %631 = vmatpush1.bf16.msra.mxu0 0
      %632 = vmatprep.subr.bf16.mxu0 0
      %633 = vmatpush1.bf16.msra.mxu0 0
      %634 = vmatprep.subr.bf16.mxu0 0
      %635 = vmatpush1.bf16.msra.mxu0 0
      %636 = vmatprep.subr.bf16.mxu0 0
      %637 = vmatpush1.bf16.msra.mxu0 0
      %638 = vmatprep.subr.bf16.mxu0 0
      %639 = vmatpush1.bf16.msra.mxu0 0
      %640 = vmatprep.subr.bf16.mxu0 0
      %641 = vmatpush1.bf16.msra.mxu0 0
      %642 = vmatprep.subr.bf16.mxu0 0
      %643 = vmatpush1.bf16.msra.mxu0 0
      %644 = vmatprep.mubr.bf16.mxu0 0
      %645 = vmatmul.mubr.bf16.gmra.mrb[0].mxu0 %v501
      %v646 = vpop.f32.mrb[0].mxu0
      %v647 = vadd.f32 %v413, %v646
      %v648 = vpop.f32.mrb[0].mxu0
      %v649 = vadd.f32 %v415, %v648
      %v650 = vpop.f32.mrb[0].mxu0
      %v651 = vpop.f32.mrb[0].mxu0
      %652 = vdwg.mxu0
      %653 = vmatprep.subr.bf16.mxu0 %v525
      %654 = vmatpush1.bf16.msra.mxu0 %v522
      %655 = vmatprep.subr.bf16.mxu0 0
      %656 = vmatpush1.bf16.msra.mxu0 0
      %657 = vmatprep.subr.bf16.mxu0 0
      %658 = vmatpush1.bf16.msra.mxu0 0
      %659 = vmatprep.subr.bf16.mxu0 0
      %660 = vmatpush1.bf16.msra.mxu0 0
      %661 = vmatprep.subr.bf16.mxu0 0
      %662 = vmatpush1.bf16.msra.mxu0 0
      %663 = vmatprep.subr.bf16.mxu0 0
      %664 = vmatpush1.bf16.msra.mxu0 0
      %665 = vmatprep.subr.bf16.mxu0 0
      %666 = vmatpush1.bf16.msra.mxu0 0
      %667 = vmatprep.subr.bf16.mxu0 0
      %668 = vmatpush1.bf16.msra.mxu0 0
      %669 = vmatprep.subr.bf16.mxu0 0
      %670 = vmatpush1.bf16.msra.mxu0 0
      %671 = vmatprep.subr.bf16.mxu0 0
      %672 = vmatpush1.bf16.msra.mxu0 0
      %673 = vmatprep.subr.bf16.mxu0 0
      %674 = vmatpush1.bf16.msra.mxu0 0
      %675 = vmatprep.subr.bf16.mxu0 0
      %676 = vmatpush1.bf16.msra.mxu0 0
      %677 = vmatprep.subr.bf16.mxu0 0
      %678 = vmatpush1.bf16.msra.mxu0 0
      %679 = vmatprep.subr.bf16.mxu0 0
      %680 = vmatpush1.bf16.msra.mxu0 0
      %681 = vmatprep.subr.bf16.mxu0 0
      %682 = vmatpush1.bf16.msra.mxu0 0
      %683 = vmatprep.subr.bf16.mxu0 0
      %684 = vmatpush1.bf16.msra.mxu0 0
      %685 = vmatprep.mubr.bf16.mxu0 0
      %686 = vmatmul.mubr.bf16.gmra.mrb[0].mxu0 %v501
      %v687 = vpop.f32.mrb[0].mxu0
      %v688 = vadd.f32 %v454, %v687
      %v689 = vpop.f32.mrb[0].mxu0
      %v690 = vadd.f32 %v456, %v689
      %v691 = vpop.f32.mrb[0].mxu0
      %v692 = vpop.f32.mrb[0].mxu0
      %693 = vdwg.mxu0
      %694 = vmatprep.subr.bf16.mxu0 0
      %695 = vmatpush1.bf16.msra.mxu0 %v528
      %696 = vmatprep.subr.bf16.mxu0 0
      %697 = vmatpush1.bf16.msra.mxu0 0
      %698 = vmatprep.subr.bf16.mxu0 0
      %699 = vmatpush1.bf16.msra.mxu0 0
      %700 = vmatprep.subr.bf16.mxu0 0
      %701 = vmatpush1.bf16.msra.mxu0 0
      %702 = vmatprep.subr.bf16.mxu0 0
      %703 = vmatpush1.bf16.msra.mxu0 0
      %704 = vmatprep.subr.bf16.mxu0 0
      %705 = vmatpush1.bf16.msra.mxu0 0
      %706 = vmatprep.subr.bf16.mxu0 0
      %707 = vmatpush1.bf16.msra.mxu0 0
      %708 = vmatprep.subr.bf16.mxu0 0
      %709 = vmatpush1.bf16.msra.mxu0 0
      %710 = vmatprep.subr.bf16.mxu0 0
      %711 = vmatpush1.bf16.msra.mxu0 0
      %712 = vmatprep.subr.bf16.mxu0 0
      %713 = vmatpush1.bf16.msra.mxu0 0
      %714 = vmatprep.subr.bf16.mxu0 0
      %715 = vmatpush1.bf16.msra.mxu0 0
      %716 = vmatprep.subr.bf16.mxu0 0
      %717 = vmatpush1.bf16.msra.mxu0 0
      %718 = vmatprep.subr.bf16.mxu0 0
      %719 = vmatpush1.bf16.msra.mxu0 0
      %720 = vmatprep.subr.bf16.mxu0 0
      %721 = vmatpush1.bf16.msra.mxu0 0
      %722 = vmatprep.subr.bf16.mxu0 0
      %723 = vmatpush1.bf16.msra.mxu0 0
      %724 = vmatprep.subr.bf16.mxu0 0
      %725 = vmatpush1.bf16.msra.mxu0 0
      %726 = vmatprep.mubr.bf16.mxu0 0
      %727 = vmatmul.mubr.bf16.gmra.mrb[0].mxu0 %v501
      %v728 = vpop.f32.mrb[0].mxu0
      %v729 = vadd.f32 %v495, %v728
      %v730 = vpop.f32.mrb[0].mxu0
      %v731 = vpop.f32.mrb[0].mxu0
      %v732 = vpop.f32.mrb[0].mxu0
      %733 = vdwg.mxu0
      %s734 = scalar_lea.vmem %s1, 8
      %v735 = vld [vmem:[%s734] sm:$0xf]
      %736 = vrot.lane.b32.xlu0 %v228, 126
      %v737 = vpop.permute.xlu0 %736
      %738 = vrot.lane.b32.xlu0 %v229, 126
      %v739 = vpop.permute.xlu0 %738
      %740 = vrot.lane.b32.xlu0 %v230, 126
      %v741 = vpop.permute.xlu0 %740
      %742 = vrot.lane.b32.xlu0 %v231, 126
      %v743 = vpop.permute.xlu0 %742
      %744 = vrot.lane.b32.xlu0 %v232, 126
      %v745 = vpop.permute.xlu0 %744
      %746 = vrot.lane.b32.xlu0 %v233, 126
      %v747 = vpop.permute.xlu0 %746
      %748 = vrot.lane.b32.xlu0 %v234, 126
      %v749 = vpop.permute.xlu0 %748
      %750 = vrot.lane.b32.xlu0 %v235, 126
      %v751 = vpop.permute.xlu0 %750
      %752 = vrot.lane.b32.xlu0 %v236, 126
      %v753 = vpop.permute.xlu0 %752
      %vm754 = vcmask 1031168
      %v755 = vsel %vm754, %v737, %v739
      %v756 = vsel %vm754, %v739, %v741
      %v757 = vsel %vm754, %v741, %v743
      %v758 = vsel %vm754, %v743, %v745
      %v759 = vsel %vm754, %v745, %v747
      %v760 = vsel %vm754, %v747, %v749
      %v761 = vsel %vm754, %v749, %v751
      %v762 = vsel %vm754, %v751, %v753
      %v764 = vsel %vm264, %v735, 0
      %v767 = vsel %vm268, %v755, 0
      %v770 = vsel %vm268, %v756, 0
      %v773 = vsel %vm268, %v757, 0
      %v776 = vsel %vm268, %v758, 0
      %v779 = vsel %vm268, %v759, 0
      %v782 = vsel %vm268, %v760, 0
      %v785 = vsel %vm268, %v761, 0
      %v788 = vsel %vm268, %v762, 0
      %v791 = vsel %vm268, %v753, 0
      %793 = vmatprep.subr.bf16.mxu0 %v770
      %794 = vmatpush1.bf16.msra.mxu0 %v767
      %795 = vmatprep.subr.bf16.mxu0 0
      %796 = vmatpush1.bf16.msra.mxu0 0
      %797 = vmatprep.subr.bf16.mxu0 0
      %798 = vmatpush1.bf16.msra.mxu0 0
      %799 = vmatprep.subr.bf16.mxu0 0
      %800 = vmatpush1.bf16.msra.mxu0 0
      %801 = vmatprep.subr.bf16.mxu0 0
      %802 = vmatpush1.bf16.msra.mxu0 0
      %803 = vmatprep.subr.bf16.mxu0 0
      %804 = vmatpush1.bf16.msra.mxu0 0
      %805 = vmatprep.subr.bf16.mxu0 0
      %806 = vmatpush1.bf16.msra.mxu0 0
      %807 = vmatprep.subr.bf16.mxu0 0
      %808 = vmatpush1.bf16.msra.mxu0 0
      %809 = vmatprep.subr.bf16.mxu0 0
      %810 = vmatpush1.bf16.msra.mxu0 0
      %811 = vmatprep.subr.bf16.mxu0 0
      %812 = vmatpush1.bf16.msra.mxu0 0
      %813 = vmatprep.subr.bf16.mxu0 0
      %814 = vmatpush1.bf16.msra.mxu0 0
      %815 = vmatprep.subr.bf16.mxu0 0
      %816 = vmatpush1.bf16.msra.mxu0 0
      %817 = vmatprep.subr.bf16.mxu0 0
      %818 = vmatpush1.bf16.msra.mxu0 0
      %819 = vmatprep.subr.bf16.mxu0 0
      %820 = vmatpush1.bf16.msra.mxu0 0
      %821 = vmatprep.subr.bf16.mxu0 0
      %822 = vmatpush1.bf16.msra.mxu0 0
      %823 = vmatprep.subr.bf16.mxu0 0
      %824 = vmatpush1.bf16.msra.mxu0 0
      %825 = vmatprep.mubr.bf16.mxu0 0
      %826 = vmatmul.mubr.bf16.gmra.mrb[0].mxu0 %v764
      %v827 = vpop.f32.mrb[0].mxu0
      %v828 = vadd.f32 0.0, %v827
      %v829 = vpop.f32.mrb[0].mxu0
      %v830 = vadd.f32 0.0, %v829
      %v831 = vpop.f32.mrb[0].mxu0
      %v832 = vpop.f32.mrb[0].mxu0
      %833 = vdwg.mxu0
      %834 = vmatprep.subr.bf16.mxu0 %v776
      %835 = vmatpush1.bf16.msra.mxu0 %v773
      %836 = vmatprep.subr.bf16.mxu0 0
      %837 = vmatpush1.bf16.msra.mxu0 0
      %838 = vmatprep.subr.bf16.mxu0 0
      %839 = vmatpush1.bf16.msra.mxu0 0
      %840 = vmatprep.subr.bf16.mxu0 0
      %841 = vmatpush1.bf16.msra.mxu0 0
      %842 = vmatprep.subr.bf16.mxu0 0
      %843 = vmatpush1.bf16.msra.mxu0 0
      %844 = vmatprep.subr.bf16.mxu0 0
      %845 = vmatpush1.bf16.msra.mxu0 0
      %846 = vmatprep.subr.bf16.mxu0 0
      %847 = vmatpush1.bf16.msra.mxu0 0
      %848 = vmatprep.subr.bf16.mxu0 0
      %849 = vmatpush1.bf16.msra.mxu0 0
      %850 = vmatprep.subr.bf16.mxu0 0
      %851 = vmatpush1.bf16.msra.mxu0 0
      %852 = vmatprep.subr.bf16.mxu0 0
      %853 = vmatpush1.bf16.msra.mxu0 0
      %854 = vmatprep.subr.bf16.mxu0 0
      %855 = vmatpush1.bf16.msra.mxu0 0
      %856 = vmatprep.subr.bf16.mxu0 0
      %857 = vmatpush1.bf16.msra.mxu0 0
      %858 = vmatprep.subr.bf16.mxu0 0
      %859 = vmatpush1.bf16.msra.mxu0 0
      %860 = vmatprep.subr.bf16.mxu0 0
      %861 = vmatpush1.bf16.msra.mxu0 0
      %862 = vmatprep.subr.bf16.mxu0 0
      %863 = vmatpush1.bf16.msra.mxu0 0
      %864 = vmatprep.subr.bf16.mxu0 0
      %865 = vmatpush1.bf16.msra.mxu0 0
      %866 = vmatprep.mubr.bf16.mxu0 0
      %867 = vmatmul.mubr.bf16.gmra.mrb[0].mxu0 %v764
      %v868 = vpop.f32.mrb[0].mxu0
      %v869 = vadd.f32 0.0, %v868
      %v870 = vpop.f32.mrb[0].mxu0
      %v871 = vadd.f32 0.0, %v870
      %v872 = vpop.f32.mrb[0].mxu0
      %v873 = vpop.f32.mrb[0].mxu0
      %874 = vdwg.mxu0
      %875 = vmatprep.subr.bf16.mxu0 %v782
      %876 = vmatpush1.bf16.msra.mxu0 %v779
      %877 = vmatprep.subr.bf16.mxu0 0
      %878 = vmatpush1.bf16.msra.mxu0 0
      %879 = vmatprep.subr.bf16.mxu0 0
      %880 = vmatpush1.bf16.msra.mxu0 0
      %881 = vmatprep.subr.bf16.mxu0 0
      %882 = vmatpush1.bf16.msra.mxu0 0
      %883 = vmatprep.subr.bf16.mxu0 0
      %884 = vmatpush1.bf16.msra.mxu0 0
      %885 = vmatprep.subr.bf16.mxu0 0
      %886 = vmatpush1.bf16.msra.mxu0 0
      %887 = vmatprep.subr.bf16.mxu0 0
      %888 = vmatpush1.bf16.msra.mxu0 0
      %889 = vmatprep.subr.bf16.mxu0 0
      %890 = vmatpush1.bf16.msra.mxu0 0
      %891 = vmatprep.subr.bf16.mxu0 0
      %892 = vmatpush1.bf16.msra.mxu0 0
      %893 = vmatprep.subr.bf16.mxu0 0
      %894 = vmatpush1.bf16.msra.mxu0 0
      %895 = vmatprep.subr.bf16.mxu0 0
      %896 = vmatpush1.bf16.msra.mxu0 0
      %897 = vmatprep.subr.bf16.mxu0 0
      %898 = vmatpush1.bf16.msra.mxu0 0
      %899 = vmatprep.subr.bf16.mxu0 0
      %900 = vmatpush1.bf16.msra.mxu0 0
      %901 = vmatprep.subr.bf16.mxu0 0
      %902 = vmatpush1.bf16.msra.mxu0 0
      %903 = vmatprep.subr.bf16.mxu0 0
      %904 = vmatpush1.bf16.msra.mxu0 0
      %905 = vmatprep.subr.bf16.mxu0 0
      %906 = vmatpush1.bf16.msra.mxu0 0
      %907 = vmatprep.mubr.bf16.mxu0 0
      %908 = vmatmul.mubr.bf16.gmra.mrb[0].mxu0 %v764
      %v909 = vpop.f32.mrb[0].mxu0
      %v910 = vadd.f32 0.0, %v909
      %v911 = vpop.f32.mrb[0].mxu0
      %v912 = vadd.f32 0.0, %v911
      %v913 = vpop.f32.mrb[0].mxu0
      %v914 = vpop.f32.mrb[0].mxu0
      %915 = vdwg.mxu0
      %916 = vmatprep.subr.bf16.mxu0 %v788
      %917 = vmatpush1.bf16.msra.mxu0 %v785
      %918 = vmatprep.subr.bf16.mxu0 0
      %919 = vmatpush1.bf16.msra.mxu0 0
      %920 = vmatprep.subr.bf16.mxu0 0
      %921 = vmatpush1.bf16.msra.mxu0 0
      %922 = vmatprep.subr.bf16.mxu0 0
      %923 = vmatpush1.bf16.msra.mxu0 0
      %924 = vmatprep.subr.bf16.mxu0 0
      %925 = vmatpush1.bf16.msra.mxu0 0
      %926 = vmatprep.subr.bf16.mxu0 0
      %927 = vmatpush1.bf16.msra.mxu0 0
      %928 = vmatprep.subr.bf16.mxu0 0
      %929 = vmatpush1.bf16.msra.mxu0 0
      %930 = vmatprep.subr.bf16.mxu0 0
      %931 = vmatpush1.bf16.msra.mxu0 0
      %932 = vmatprep.subr.bf16.mxu0 0
      %933 = vmatpush1.bf16.msra.mxu0 0
      %934 = vmatprep.subr.bf16.mxu0 0
      %935 = vmatpush1.bf16.msra.mxu0 0
      %936 = vmatprep.subr.bf16.mxu0 0
      %937 = vmatpush1.bf16.msra.mxu0 0
      %938 = vmatprep.subr.bf16.mxu0 0
      %939 = vmatpush1.bf16.msra.mxu0 0
      %940 = vmatprep.subr.bf16.mxu0 0
      %941 = vmatpush1.bf16.msra.mxu0 0
      %942 = vmatprep.subr.bf16.mxu0 0
      %943 = vmatpush1.bf16.msra.mxu0 0
      %944 = vmatprep.subr.bf16.mxu0 0
      %945 = vmatpush1.bf16.msra.mxu0 0
      %946 = vmatprep.subr.bf16.mxu0 0
      %947 = vmatpush1.bf16.msra.mxu0 0
      %948 = vmatprep.mubr.bf16.mxu0 0
      %949 = vmatmul.mubr.bf16.gmra.mrb[0].mxu0 %v764
      %v950 = vpop.f32.mrb[0].mxu0
      %v951 = vadd.f32 0.0, %v950
      %v952 = vpop.f32.mrb[0].mxu0
      %v953 = vadd.f32 0.0, %v952
      %v954 = vpop.f32.mrb[0].mxu0
      %v955 = vpop.f32.mrb[0].mxu0
      %956 = vdwg.mxu0
      %957 = vmatprep.subr.bf16.mxu0 0
      %958 = vmatpush1.bf16.msra.mxu0 %v791
      %959 = vmatprep.subr.bf16.mxu0 0
      %960 = vmatpush1.bf16.msra.mxu0 0
      %961 = vmatprep.subr.bf16.mxu0 0
      %962 = vmatpush1.bf16.msra.mxu0 0
      %963 = vmatprep.subr.bf16.mxu0 0
      %964 = vmatpush1.bf16.msra.mxu0 0
      %965 = vmatprep.subr.bf16.mxu0 0
      %966 = vmatpush1.bf16.msra.mxu0 0
      %967 = vmatprep.subr.bf16.mxu0 0
      %968 = vmatpush1.bf16.msra.mxu0 0
      %969 = vmatprep.subr.bf16.mxu0 0
      %970 = vmatpush1.bf16.msra.mxu0 0
      %971 = vmatprep.subr.bf16.mxu0 0
      %972 = vmatpush1.bf16.msra.mxu0 0
      %973 = vmatprep.subr.bf16.mxu0 0
      %974 = vmatpush1.bf16.msra.mxu0 0
      %975 = vmatprep.subr.bf16.mxu0 0
      %976 = vmatpush1.bf16.msra.mxu0 0
      %977 = vmatprep.subr.bf16.mxu0 0
      %978 = vmatpush1.bf16.msra.mxu0 0
      %979 = vmatprep.subr.bf16.mxu0 0
      %980 = vmatpush1.bf16.msra.mxu0 0
      %981 = vmatprep.subr.bf16.mxu0 0
      %982 = vmatpush1.bf16.msra.mxu0 0
      %983 = vmatprep.subr.bf16.mxu0 0
      %984 = vmatpush1.bf16.msra.mxu0 0
      %985 = vmatprep.subr.bf16.mxu0 0
      %986 = vmatpush1.bf16.msra.mxu0 0
      %987 = vmatprep.subr.bf16.mxu0 0
      %988 = vmatpush1.bf16.msra.mxu0 0
      %989 = vmatprep.mubr.bf16.mxu0 0
      %990 = vmatmul.mubr.bf16.gmra.mrb[0].mxu0 %v764
      %v991 = vpop.f32.mrb[0].mxu0
      %v992 = vadd.f32 0.0, %v991
      %v993 = vpop.f32.mrb[0].mxu0
      %v994 = vpop.f32.mrb[0].mxu0
      %v995 = vpop.f32.mrb[0].mxu0
      %996 = vdwg.mxu0
      %v997 = vadd.f32 %v565, %v828
      %v998 = vadd.f32 %v567, %v830
      %v999 = vadd.f32 %v606, %v869
      %v1000 = vadd.f32 %v608, %v871
      %v1001 = vadd.f32 %v647, %v910
      %v1002 = vadd.f32 %v649, %v912
      %v1003 = vadd.f32 %v688, %v951
      %v1004 = vadd.f32 %v690, %v953
      %v1005 = vadd.f32 %v729, %v992
      %s1006 = scalar_lea.vmem %s1, 12
      %v1007 = vld [vmem:[%s1006] sm:$0xf]
      %1008 = vrot.lane.b32.xlu0 %v228, 94
      %v1009 = vpop.permute.xlu0 %1008
      %1010 = vrot.lane.b32.xlu0 %v229, 94
      %v1011 = vpop.permute.xlu0 %1010
      %1012 = vrot.lane.b32.xlu0 %v230, 94
      %v1013 = vpop.permute.xlu0 %1012
      %1014 = vrot.lane.b32.xlu0 %v231, 94
      %v1015 = vpop.permute.xlu0 %1014
      %1016 = vrot.lane.b32.xlu0 %v232, 94
      %v1017 = vpop.permute.xlu0 %1016
      %1018 = vrot.lane.b32.xlu0 %v233, 94
      %v1019 = vpop.permute.xlu0 %1018
      %1020 = vrot.lane.b32.xlu0 %v234, 94
      %v1021 = vpop.permute.xlu0 %1020
      %1022 = vrot.lane.b32.xlu0 %v235, 94
      %v1023 = vpop.permute.xlu0 %1022
      %1024 = vrot.lane.b32.xlu0 %v236, 94
      %v1025 = vpop.permute.xlu0 %1024
      %vm1026 = vcmask 769024
      %v1027 = vsel %vm1026, %v1009, %v1011
      %v1028 = vsel %vm1026, %v1011, %v1013
      %v1029 = vsel %vm1026, %v1013, %v1015
      %v1030 = vsel %vm1026, %v1015, %v1017
      %v1031 = vsel %vm1026, %v1017, %v1019
      %v1032 = vsel %vm1026, %v1019, %v1021
      %v1033 = vsel %vm1026, %v1021, %v1023
      %v1034 = vsel %vm1026, %v1023, %v1025
      %v1036 = vsel %vm264, %v1007, 0
      %v1039 = vsel %vm268, %v1027, 0
      %v1042 = vsel %vm268, %v1028, 0
      %v1045 = vsel %vm268, %v1029, 0
      %v1048 = vsel %vm268, %v1030, 0
      %v1051 = vsel %vm268, %v1031, 0
      %v1054 = vsel %vm268, %v1032, 0
      %v1057 = vsel %vm268, %v1033, 0
      %v1060 = vsel %vm268, %v1034, 0
      %v1063 = vsel %vm268, %v1025, 0
      %1065 = vmatprep.subr.bf16.mxu0 %v1042
      %1066 = vmatpush1.bf16.msra.mxu0 %v1039
      %1067 = vmatprep.subr.bf16.mxu0 0
      %1068 = vmatpush1.bf16.msra.mxu0 0
      %1069 = vmatprep.subr.bf16.mxu0 0
      %1070 = vmatpush1.bf16.msra.mxu0 0
      %1071 = vmatprep.subr.bf16.mxu0 0
      %1072 = vmatpush1.bf16.msra.mxu0 0
      %1073 = vmatprep.subr.bf16.mxu0 0
      %1074 = vmatpush1.bf16.msra.mxu0 0
      %1075 = vmatprep.subr.bf16.mxu0 0
      %1076 = vmatpush1.bf16.msra.mxu0 0
      %1077 = vmatprep.subr.bf16.mxu0 0
      %1078 = vmatpush1.bf16.msra.mxu0 0
      %1079 = vmatprep.subr.bf16.mxu0 0
      %1080 = vmatpush1.bf16.msra.mxu0 0
      %1081 = vmatprep.subr.bf16.mxu0 0
      %1082 = vmatpush1.bf16.msra.mxu0 0
      %1083 = vmatprep.subr.bf16.mxu0 0
      %1084 = vmatpush1.bf16.msra.mxu0 0
      %1085 = vmatprep.subr.bf16.mxu0 0
      %1086 = vmatpush1.bf16.msra.mxu0 0
      %1087 = vmatprep.subr.bf16.mxu0 0
      %1088 = vmatpush1.bf16.msra.mxu0 0
      %1089 = vmatprep.subr.bf16.mxu0 0
      %1090 = vmatpush1.bf16.msra.mxu0 0
      %1091 = vmatprep.subr.bf16.mxu0 0
      %1092 = vmatpush1.bf16.msra.mxu0 0
      %1093 = vmatprep.subr.bf16.mxu0 0
      %1094 = vmatpush1.bf16.msra.mxu0 0
      %1095 = vmatprep.subr.bf16.mxu0 0
      %1096 = vmatpush1.bf16.msra.mxu0 0
      %1097 = vmatprep.mubr.bf16.mxu0 0
      %1098 = vmatmul.mubr.bf16.gmra.mrb[0].mxu0 %v1036
      %v1099 = vpop.f32.mrb[0].mxu0
      %v1100 = vadd.f32 0.0, %v1099
      %v1101 = vpop.f32.mrb[0].mxu0
      %v1102 = vadd.f32 0.0, %v1101
      %v1103 = vpop.f32.mrb[0].mxu0
      %v1104 = vpop.f32.mrb[0].mxu0
      %1105 = vdwg.mxu0
      %1106 = vmatprep.subr.bf16.mxu0 %v1048
      %1107 = vmatpush1.bf16.msra.mxu0 %v1045
      %1108 = vmatprep.subr.bf16.mxu0 0
      %1109 = vmatpush1.bf16.msra.mxu0 0
      %1110 = vmatprep.subr.bf16.mxu0 0
      %1111 = vmatpush1.bf16.msra.mxu0 0
      %1112 = vmatprep.subr.bf16.mxu0 0
      %1113 = vmatpush1.bf16.msra.mxu0 0
      %1114 = vmatprep.subr.bf16.mxu0 0
      %1115 = vmatpush1.bf16.msra.mxu0 0
      %1116 = vmatprep.subr.bf16.mxu0 0
      %1117 = vmatpush1.bf16.msra.mxu0 0
      %1118 = vmatprep.subr.bf16.mxu0 0
      %1119 = vmatpush1.bf16.msra.mxu0 0
      %1120 = vmatprep.subr.bf16.mxu0 0
      %1121 = vmatpush1.bf16.msra.mxu0 0
      %1122 = vmatprep.subr.bf16.mxu0 0
      %1123 = vmatpush1.bf16.msra.mxu0 0
      %1124 = vmatprep.subr.bf16.mxu0 0
      %1125 = vmatpush1.bf16.msra.mxu0 0
      %1126 = vmatprep.subr.bf16.mxu0 0
      %1127 = vmatpush1.bf16.msra.mxu0 0
      %1128 = vmatprep.subr.bf16.mxu0 0
      %1129 = vmatpush1.bf16.msra.mxu0 0
      %1130 = vmatprep.subr.bf16.mxu0 0
      %1131 = vmatpush1.bf16.msra.mxu0 0
      %1132 = vmatprep.subr.bf16.mxu0 0
      %1133 = vmatpush1.bf16.msra.mxu0 0
      %1134 = vmatprep.subr.bf16.mxu0 0
      %1135 = vmatpush1.bf16.msra.mxu0 0
      %1136 = vmatprep.subr.bf16.mxu0 0
      %1137 = vmatpush1.bf16.msra.mxu0 0
      %1138 = vmatprep.mubr.bf16.mxu0 0
      %1139 = vmatmul.mubr.bf16.gmra.mrb[0].mxu0 %v1036
      %v1140 = vpop.f32.mrb[0].mxu0
      %v1141 = vadd.f32 0.0, %v1140
      %v1142 = vpop.f32.mrb[0].mxu0
      %v1143 = vadd.f32 0.0, %v1142
      %v1144 = vpop.f32.mrb[0].mxu0
      %v1145 = vpop.f32.mrb[0].mxu0
      %1146 = vdwg.mxu0
      %1147 = vmatprep.subr.bf16.mxu0 %v1054
      %1148 = vmatpush1.bf16.msra.mxu0 %v1051
      %1149 = vmatprep.subr.bf16.mxu0 0
      %1150 = vmatpush1.bf16.msra.mxu0 0
      %1151 = vmatprep.subr.bf16.mxu0 0
      %1152 = vmatpush1.bf16.msra.mxu0 0
      %1153 = vmatprep.subr.bf16.mxu0 0
      %1154 = vmatpush1.bf16.msra.mxu0 0
      %1155 = vmatprep.subr.bf16.mxu0 0
      %1156 = vmatpush1.bf16.msra.mxu0 0
      %1157 = vmatprep.subr.bf16.mxu0 0
      %1158 = vmatpush1.bf16.msra.mxu0 0
      %1159 = vmatprep.subr.bf16.mxu0 0
      %1160 = vmatpush1.bf16.msra.mxu0 0
      %1161 = vmatprep.subr.bf16.mxu0 0
      %1162 = vmatpush1.bf16.msra.mxu0 0
      %1163 = vmatprep.subr.bf16.mxu0 0
      %1164 = vmatpush1.bf16.msra.mxu0 0
      %1165 = vmatprep.subr.bf16.mxu0 0
      %1166 = vmatpush1.bf16.msra.mxu0 0
      %1167 = vmatprep.subr.bf16.mxu0 0
      %1168 = vmatpush1.bf16.msra.mxu0 0
      %1169 = vmatprep.subr.bf16.mxu0 0
      %1170 = vmatpush1.bf16.msra.mxu0 0
      %1171 = vmatprep.subr.bf16.mxu0 0
      %1172 = vmatpush1.bf16.msra.mxu0 0
      %1173 = vmatprep.subr.bf16.mxu0 0
      %1174 = vmatpush1.bf16.msra.mxu0 0
      %1175 = vmatprep.subr.bf16.mxu0 0
      %1176 = vmatpush1.bf16.msra.mxu0 0
      %1177 = vmatprep.subr.bf16.mxu0 0
      %1178 = vmatpush1.bf16.msra.mxu0 0
      %1179 = vmatprep.mubr.bf16.mxu0 0
      %1180 = vmatmul.mubr.bf16.gmra.mrb[0].mxu0 %v1036
      %v1181 = vpop.f32.mrb[0].mxu0
      %v1182 = vadd.f32 0.0, %v1181
      %v1183 = vpop.f32.mrb[0].mxu0
      %v1184 = vadd.f32 0.0, %v1183
      %v1185 = vpop.f32.mrb[0].mxu0
      %v1186 = vpop.f32.mrb[0].mxu0
      %1187 = vdwg.mxu0
      %1188 = vmatprep.subr.bf16.mxu0 %v1060
      %1189 = vmatpush1.bf16.msra.mxu0 %v1057
      %1190 = vmatprep.subr.bf16.mxu0 0
      %1191 = vmatpush1.bf16.msra.mxu0 0
      %1192 = vmatprep.subr.bf16.mxu0 0
      %1193 = vmatpush1.bf16.msra.mxu0 0
      %1194 = vmatprep.subr.bf16.mxu0 0
      %1195 = vmatpush1.bf16.msra.mxu0 0
      %1196 = vmatprep.subr.bf16.mxu0 0
      %1197 = vmatpush1.bf16.msra.mxu0 0
      %1198 = vmatprep.subr.bf16.mxu0 0
      %1199 = vmatpush1.bf16.msra.mxu0 0
      %1200 = vmatprep.subr.bf16.mxu0 0
      %1201 = vmatpush1.bf16.msra.mxu0 0
      %1202 = vmatprep.subr.bf16.mxu0 0
      %1203 = vmatpush1.bf16.msra.mxu0 0
      %1204 = vmatprep.subr.bf16.mxu0 0
      %1205 = vmatpush1.bf16.msra.mxu0 0
      %1206 = vmatprep.subr.bf16.mxu0 0
      %1207 = vmatpush1.bf16.msra.mxu0 0
      %1208 = vmatprep.subr.bf16.mxu0 0
      %1209 = vmatpush1.bf16.msra.mxu0 0
      %1210 = vmatprep.subr.bf16.mxu0 0
      %1211 = vmatpush1.bf16.msra.mxu0 0
      %1212 = vmatprep.subr.bf16.mxu0 0
      %1213 = vmatpush1.bf16.msra.mxu0 0
      %1214 = vmatprep.subr.bf16.mxu0 0
      %1215 = vmatpush1.bf16.msra.mxu0 0
      %1216 = vmatprep.subr.bf16.mxu0 0
      %1217 = vmatpush1.bf16.msra.mxu0 0
      %1218 = vmatprep.subr.bf16.mxu0 0
      %1219 = vmatpush1.bf16.msra.mxu0 0
      %1220 = vmatprep.mubr.bf16.mxu0 0
      %1221 = vmatmul.mubr.bf16.gmra.mrb[0].mxu0 %v1036
      %v1222 = vpop.f32.mrb[0].mxu0
      %v1223 = vadd.f32 0.0, %v1222
      %v1224 = vpop.f32.mrb[0].mxu0
      %v1225 = vadd.f32 0.0, %v1224
      %v1226 = vpop.f32.mrb[0].mxu0
      %v1227 = vpop.f32.mrb[0].mxu0
      %1228 = vdwg.mxu0
      %1229 = vmatprep.subr.bf16.mxu0 0
      %1230 = vmatpush1.bf16.msra.mxu0 %v1063
      %1231 = vmatprep.subr.bf16.mxu0 0
      %1232 = vmatpush1.bf16.msra.mxu0 0
      %1233 = vmatprep.subr.bf16.mxu0 0
      %1234 = vmatpush1.bf16.msra.mxu0 0
      %1235 = vmatprep.subr.bf16.mxu0 0
      %1236 = vmatpush1.bf16.msra.mxu0 0
      %1237 = vmatprep.subr.bf16.mxu0 0
      %1238 = vmatpush1.bf16.msra.mxu0 0
      %1239 = vmatprep.subr.bf16.mxu0 0
      %1240 = vmatpush1.bf16.msra.mxu0 0
      %1241 = vmatprep.subr.bf16.mxu0 0
      %1242 = vmatpush1.bf16.msra.mxu0 0
      %1243 = vmatprep.subr.bf16.mxu0 0
      %1244 = vmatpush1.bf16.msra.mxu0 0
      %1245 = vmatprep.subr.bf16.mxu0 0
      %1246 = vmatpush1.bf16.msra.mxu0 0
      %1247 = vmatprep.subr.bf16.mxu0 0
      %1248 = vmatpush1.bf16.msra.mxu0 0
      %1249 = vmatprep.subr.bf16.mxu0 0
      %1250 = vmatpush1.bf16.msra.mxu0 0
      %1251 = vmatprep.subr.bf16.mxu0 0
      %1252 = vmatpush1.bf16.msra.mxu0 0
      %1253 = vmatprep.subr.bf16.mxu0 0
      %1254 = vmatpush1.bf16.msra.mxu0 0
      %1255 = vmatprep.subr.bf16.mxu0 0
      %1256 = vmatpush1.bf16.msra.mxu0 0
      %1257 = vmatprep.subr.bf16.mxu0 0
      %1258 = vmatpush1.bf16.msra.mxu0 0
      %1259 = vmatprep.subr.bf16.mxu0 0
      %1260 = vmatpush1.bf16.msra.mxu0 0
      %1261 = vmatprep.mubr.bf16.mxu0 0
      %1262 = vmatmul.mubr.bf16.gmra.mrb[0].mxu0 %v1036
      %v1263 = vpop.f32.mrb[0].mxu0
      %v1264 = vadd.f32 0.0, %v1263
      %v1265 = vpop.f32.mrb[0].mxu0
      %v1266 = vpop.f32.mrb[0].mxu0
      %v1267 = vpop.f32.mrb[0].mxu0
      %1268 = vdwg.mxu0
      %v1269 = vadd.f32 %v997, %v1100
      %v1270 = vadd.f32 %v998, %v1102
      %v1271 = vadd.f32 %v999, %v1141
      %v1272 = vadd.f32 %v1000, %v1143
      %v1273 = vadd.f32 %v1001, %v1182
      %v1274 = vadd.f32 %v1002, %v1184
      %v1275 = vadd.f32 %v1003, %v1223
      %v1276 = vadd.f32 %v1004, %v1225
      %v1277 = vadd.f32 %v1005, %v1264
      %s1278 = scalar_lea.vmem %s1, 16
      %v1279 = vld [vmem:[%s1278] sm:$0xf]
      %1280 = vrot.lane.b32.xlu0 %v228, 93
      %v1281 = vpop.permute.xlu0 %1280
      %1282 = vrot.lane.b32.xlu0 %v229, 93
      %v1283 = vpop.permute.xlu0 %1282
      %1284 = vrot.lane.b32.xlu0 %v230, 93
      %v1285 = vpop.permute.xlu0 %1284
      %1286 = vrot.lane.b32.xlu0 %v231, 93
      %v1287 = vpop.permute.xlu0 %1286
      %1288 = vrot.lane.b32.xlu0 %v232, 93
      %v1289 = vpop.permute.xlu0 %1288
      %1290 = vrot.lane.b32.xlu0 %v233, 93
      %v1291 = vpop.permute.xlu0 %1290
      %1292 = vrot.lane.b32.xlu0 %v234, 93
      %v1293 = vpop.permute.xlu0 %1292
      %1294 = vrot.lane.b32.xlu0 %v235, 93
      %v1295 = vpop.permute.xlu0 %1294
      %1296 = vrot.lane.b32.xlu0 %v236, 93
      %v1297 = vpop.permute.xlu0 %1296
      %vm1298 = vcmask 760832
      %v1299 = vsel %vm1298, %v1281, %v1283
      %v1300 = vsel %vm1298, %v1283, %v1285
      %v1301 = vsel %vm1298, %v1285, %v1287
      %v1302 = vsel %vm1298, %v1287, %v1289
      %v1303 = vsel %vm1298, %v1289, %v1291
      %v1304 = vsel %vm1298, %v1291, %v1293
      %v1305 = vsel %vm1298, %v1293, %v1295
      %v1306 = vsel %vm1298, %v1295, %v1297
      %v1308 = vsel %vm264, %v1279, 0
      %v1311 = vsel %vm268, %v1299, 0
      %v1314 = vsel %vm268, %v1300, 0
      %v1317 = vsel %vm268, %v1301, 0
      %v1320 = vsel %vm268, %v1302, 0
      %v1323 = vsel %vm268, %v1303, 0
      %v1326 = vsel %vm268, %v1304, 0
      %v1329 = vsel %vm268, %v1305, 0
      %v1332 = vsel %vm268, %v1306, 0
      %v1335 = vsel %vm268, %v1297, 0
      %1337 = vmatprep.subr.bf16.mxu0 %v1314
      %1338 = vmatpush1.bf16.msra.mxu0 %v1311
      %1339 = vmatprep.subr.bf16.mxu0 0
      %1340 = vmatpush1.bf16.msra.mxu0 0
      %1341 = vmatprep.subr.bf16.mxu0 0
      %1342 = vmatpush1.bf16.msra.mxu0 0
      %1343 = vmatprep.subr.bf16.mxu0 0
      %1344 = vmatpush1.bf16.msra.mxu0 0
      %1345 = vmatprep.subr.bf16.mxu0 0
      %1346 = vmatpush1.bf16.msra.mxu0 0
      %1347 = vmatprep.subr.bf16.mxu0 0
      %1348 = vmatpush1.bf16.msra.mxu0 0
      %1349 = vmatprep.subr.bf16.mxu0 0
      %1350 = vmatpush1.bf16.msra.mxu0 0
      %1351 = vmatprep.subr.bf16.mxu0 0
      %1352 = vmatpush1.bf16.msra.mxu0 0
      %1353 = vmatprep.subr.bf16.mxu0 0
      %1354 = vmatpush1.bf16.msra.mxu0 0
      %1355 = vmatprep.subr.bf16.mxu0 0
      %1356 = vmatpush1.bf16.msra.mxu0 0
      %1357 = vmatprep.subr.bf16.mxu0 0
      %1358 = vmatpush1.bf16.msra.mxu0 0
      %1359 = vmatprep.subr.bf16.mxu0 0
      %1360 = vmatpush1.bf16.msra.mxu0 0
      %1361 = vmatprep.subr.bf16.mxu0 0
      %1362 = vmatpush1.bf16.msra.mxu0 0
      %1363 = vmatprep.subr.bf16.mxu0 0
      %1364 = vmatpush1.bf16.msra.mxu0 0
      %1365 = vmatprep.subr.bf16.mxu0 0
      %1366 = vmatpush1.bf16.msra.mxu0 0
      %1367 = vmatprep.subr.bf16.mxu0 0
      %1368 = vmatpush1.bf16.msra.mxu0 0
      %1369 = vmatprep.mubr.bf16.mxu0 0
      %1370 = vmatmul.mubr.bf16.gmra.mrb[0].mxu0 %v1308
      %v1371 = vpop.f32.mrb[0].mxu0
      %v1372 = vadd.f32 0.0, %v1371
      %v1373 = vpop.f32.mrb[0].mxu0
      %v1374 = vadd.f32 0.0, %v1373
      %v1375 = vpop.f32.mrb[0].mxu0
      %v1376 = vpop.f32.mrb[0].mxu0
      %1377 = vdwg.mxu0
      %1378 = vmatprep.subr.bf16.mxu0 %v1320
      %1379 = vmatpush1.bf16.msra.mxu0 %v1317
      %1380 = vmatprep.subr.bf16.mxu0 0
      %1381 = vmatpush1.bf16.msra.mxu0 0
      %1382 = vmatprep.subr.bf16.mxu0 0
      %1383 = vmatpush1.bf16.msra.mxu0 0
      %1384 = vmatprep.subr.bf16.mxu0 0
      %1385 = vmatpush1.bf16.msra.mxu0 0
      %1386 = vmatprep.subr.bf16.mxu0 0
      %1387 = vmatpush1.bf16.msra.mxu0 0
      %1388 = vmatprep.subr.bf16.mxu0 0
      %1389 = vmatpush1.bf16.msra.mxu0 0
      %1390 = vmatprep.subr.bf16.mxu0 0
      %1391 = vmatpush1.bf16.msra.mxu0 0
      %1392 = vmatprep.subr.bf16.mxu0 0
      %1393 = vmatpush1.bf16.msra.mxu0 0
      %1394 = vmatprep.subr.bf16.mxu0 0
      %1395 = vmatpush1.bf16.msra.mxu0 0
      %1396 = vmatprep.subr.bf16.mxu0 0
      %1397 = vmatpush1.bf16.msra.mxu0 0
      %1398 = vmatprep.subr.bf16.mxu0 0
      %1399 = vmatpush1.bf16.msra.mxu0 0
      %1400 = vmatprep.subr.bf16.mxu0 0
      %1401 = vmatpush1.bf16.msra.mxu0 0
      %1402 = vmatprep.subr.bf16.mxu0 0
      %1403 = vmatpush1.bf16.msra.mxu0 0
      %1404 = vmatprep.subr.bf16.mxu0 0
      %1405 = vmatpush1.bf16.msra.mxu0 0
      %1406 = vmatprep.subr.bf16.mxu0 0
      %1407 = vmatpush1.bf16.msra.mxu0 0
      %1408 = vmatprep.subr.bf16.mxu0 0
      %1409 = vmatpush1.bf16.msra.mxu0 0
      %1410 = vmatprep.mubr.bf16.mxu0 0
      %1411 = vmatmul.mubr.bf16.gmra.mrb[0].mxu0 %v1308
      %v1412 = vpop.f32.mrb[0].mxu0
      %v1413 = vadd.f32 0.0, %v1412
      %v1414 = vpop.f32.mrb[0].mxu0
      %v1415 = vadd.f32 0.0, %v1414
      %v1416 = vpop.f32.mrb[0].mxu0
      %v1417 = vpop.f32.mrb[0].mxu0
      %1418 = vdwg.mxu0
      %1419 = vmatprep.subr.bf16.mxu0 %v1326
      %1420 = vmatpush1.bf16.msra.mxu0 %v1323
      %1421 = vmatprep.subr.bf16.mxu0 0
      %1422 = vmatpush1.bf16.msra.mxu0 0
      %1423 = vmatprep.subr.bf16.mxu0 0
      %1424 = vmatpush1.bf16.msra.mxu0 0
      %1425 = vmatprep.subr.bf16.mxu0 0
      %1426 = vmatpush1.bf16.msra.mxu0 0
      %1427 = vmatprep.subr.bf16.mxu0 0
      %1428 = vmatpush1.bf16.msra.mxu0 0
      %1429 = vmatprep.subr.bf16.mxu0 0
      %1430 = vmatpush1.bf16.msra.mxu0 0
      %1431 = vmatprep.subr.bf16.mxu0 0
      %1432 = vmatpush1.bf16.msra.mxu0 0
      %1433 = vmatprep.subr.bf16.mxu0 0
      %1434 = vmatpush1.bf16.msra.mxu0 0
      %1435 = vmatprep.subr.bf16.mxu0 0
      %1436 = vmatpush1.bf16.msra.mxu0 0
      %1437 = vmatprep.subr.bf16.mxu0 0
      %1438 = vmatpush1.bf16.msra.mxu0 0
      %1439 = vmatprep.subr.bf16.mxu0 0
      %1440 = vmatpush1.bf16.msra.mxu0 0
      %1441 = vmatprep.subr.bf16.mxu0 0
      %1442 = vmatpush1.bf16.msra.mxu0 0
      %1443 = vmatprep.subr.bf16.mxu0 0
      %1444 = vmatpush1.bf16.msra.mxu0 0
      %1445 = vmatprep.subr.bf16.mxu0 0
      %1446 = vmatpush1.bf16.msra.mxu0 0
      %1447 = vmatprep.subr.bf16.mxu0 0
      %1448 = vmatpush1.bf16.msra.mxu0 0
      %1449 = vmatprep.subr.bf16.mxu0 0
      %1450 = vmatpush1.bf16.msra.mxu0 0
      %1451 = vmatprep.mubr.bf16.mxu0 0
      %1452 = vmatmul.mubr.bf16.gmra.mrb[0].mxu0 %v1308
      %v1453 = vpop.f32.mrb[0].mxu0
      %v1454 = vadd.f32 0.0, %v1453
      %v1455 = vpop.f32.mrb[0].mxu0
      %v1456 = vadd.f32 0.0, %v1455
      %v1457 = vpop.f32.mrb[0].mxu0
      %v1458 = vpop.f32.mrb[0].mxu0
      %1459 = vdwg.mxu0
      %1460 = vmatprep.subr.bf16.mxu0 %v1332
      %1461 = vmatpush1.bf16.msra.mxu0 %v1329
      %1462 = vmatprep.subr.bf16.mxu0 0
      %1463 = vmatpush1.bf16.msra.mxu0 0
      %1464 = vmatprep.subr.bf16.mxu0 0
      %1465 = vmatpush1.bf16.msra.mxu0 0
      %1466 = vmatprep.subr.bf16.mxu0 0
      %1467 = vmatpush1.bf16.msra.mxu0 0
      %1468 = vmatprep.subr.bf16.mxu0 0
      %1469 = vmatpush1.bf16.msra.mxu0 0
      %1470 = vmatprep.subr.bf16.mxu0 0
      %1471 = vmatpush1.bf16.msra.mxu0 0
      %1472 = vmatprep.subr.bf16.mxu0 0
      %1473 = vmatpush1.bf16.msra.mxu0 0
      %1474 = vmatprep.subr.bf16.mxu0 0
      %1475 = vmatpush1.bf16.msra.mxu0 0
      %1476 = vmatprep.subr.bf16.mxu0 0
      %1477 = vmatpush1.bf16.msra.mxu0 0
      %1478 = vmatprep.subr.bf16.mxu0 0
      %1479 = vmatpush1.bf16.msra.mxu0 0
      %1480 = vmatprep.subr.bf16.mxu0 0
      %1481 = vmatpush1.bf16.msra.mxu0 0
      %1482 = vmatprep.subr.bf16.mxu0 0
      %1483 = vmatpush1.bf16.msra.mxu0 0
      %1484 = vmatprep.subr.bf16.mxu0 0
      %1485 = vmatpush1.bf16.msra.mxu0 0
      %1486 = vmatprep.subr.bf16.mxu0 0
      %1487 = vmatpush1.bf16.msra.mxu0 0
      %1488 = vmatprep.subr.bf16.mxu0 0
      %1489 = vmatpush1.bf16.msra.mxu0 0
      %1490 = vmatprep.subr.bf16.mxu0 0
      %1491 = vmatpush1.bf16.msra.mxu0 0
      %1492 = vmatprep.mubr.bf16.mxu0 0
      %1493 = vmatmul.mubr.bf16.gmra.mrb[0].mxu0 %v1308
      %v1494 = vpop.f32.mrb[0].mxu0
      %v1495 = vadd.f32 0.0, %v1494
      %v1496 = vpop.f32.mrb[0].mxu0
      %v1497 = vadd.f32 0.0, %v1496
      %v1498 = vpop.f32.mrb[0].mxu0
      %v1499 = vpop.f32.mrb[0].mxu0
      %1500 = vdwg.mxu0
      %1501 = vmatprep.subr.bf16.mxu0 0
      %1502 = vmatpush1.bf16.msra.mxu0 %v1335
      %1503 = vmatprep.subr.bf16.mxu0 0
      %1504 = vmatpush1.bf16.msra.mxu0 0
      %1505 = vmatprep.subr.bf16.mxu0 0
      %1506 = vmatpush1.bf16.msra.mxu0 0
      %1507 = vmatprep.subr.bf16.mxu0 0
      %1508 = vmatpush1.bf16.msra.mxu0 0
      %1509 = vmatprep.subr.bf16.mxu0 0
      %1510 = vmatpush1.bf16.msra.mxu0 0
      %1511 = vmatprep.subr.bf16.mxu0 0
      %1512 = vmatpush1.bf16.msra.mxu0 0
      %1513 = vmatprep.subr.bf16.mxu0 0
      %1514 = vmatpush1.bf16.msra.mxu0 0
      %1515 = vmatprep.subr.bf16.mxu0 0
      %1516 = vmatpush1.bf16.msra.mxu0 0
      %1517 = vmatprep.subr.bf16.mxu0 0
      %1518 = vmatpush1.bf16.msra.mxu0 0
      %1519 = vmatprep.subr.bf16.mxu0 0
      %1520 = vmatpush1.bf16.msra.mxu0 0
      %1521 = vmatprep.subr.bf16.mxu0 0
      %1522 = vmatpush1.bf16.msra.mxu0 0
      %1523 = vmatprep.subr.bf16.mxu0 0
      %1524 = vmatpush1.bf16.msra.mxu0 0
      %1525 = vmatprep.subr.bf16.mxu0 0
      %1526 = vmatpush1.bf16.msra.mxu0 0
      %1527 = vmatprep.subr.bf16.mxu0 0
      %1528 = vmatpush1.bf16.msra.mxu0 0
      %1529 = vmatprep.subr.bf16.mxu0 0
      %1530 = vmatpush1.bf16.msra.mxu0 0
      %1531 = vmatprep.subr.bf16.mxu0 0
      %1532 = vmatpush1.bf16.msra.mxu0 0
      %1533 = vmatprep.mubr.bf16.mxu0 0
      %1534 = vmatmul.mubr.bf16.gmra.mrb[0].mxu0 %v1308
      %v1535 = vpop.f32.mrb[0].mxu0
      %v1536 = vadd.f32 0.0, %v1535
      %v1537 = vpop.f32.mrb[0].mxu0
      %v1538 = vpop.f32.mrb[0].mxu0
      %v1539 = vpop.f32.mrb[0].mxu0
      %1540 = vdwg.mxu0
      %v1541 = vadd.f32 %v1269, %v1372
      %v1542 = vadd.f32 %v1270, %v1374
      %v1543 = vadd.f32 %v1271, %v1413
      %v1544 = vadd.f32 %v1272, %v1415
      %v1545 = vadd.f32 %v1273, %v1454
      %v1546 = vadd.f32 %v1274, %v1456
      %v1547 = vadd.f32 %v1275, %v1495
      %v1548 = vadd.f32 %v1276, %v1497
      %v1549 = vadd.f32 %v1277, %v1536
      %s1550 = scalar_lea.vmem %s1, 20
      %v1551 = vld [vmem:[%s1550] sm:$0xf]
      %1552 = vrot.lane.b32.xlu0 %v228, 92
      %v1553 = vpop.permute.xlu0 %1552
      %1554 = vrot.lane.b32.xlu0 %v229, 92
      %v1555 = vpop.permute.xlu0 %1554
      %1556 = vrot.lane.b32.xlu0 %v230, 92
      %v1557 = vpop.permute.xlu0 %1556
      %1558 = vrot.lane.b32.xlu0 %v231, 92
      %v1559 = vpop.permute.xlu0 %1558
      %1560 = vrot.lane.b32.xlu0 %v232, 92
      %v1561 = vpop.permute.xlu0 %1560
      %1562 = vrot.lane.b32.xlu0 %v233, 92
      %v1563 = vpop.permute.xlu0 %1562
      %1564 = vrot.lane.b32.xlu0 %v234, 92
      %v1565 = vpop.permute.xlu0 %1564
      %1566 = vrot.lane.b32.xlu0 %v235, 92
      %v1567 = vpop.permute.xlu0 %1566
      %1568 = vrot.lane.b32.xlu0 %v236, 92
      %v1569 = vpop.permute.xlu0 %1568
      %vm1570 = vcmask 752640
      %v1571 = vsel %vm1570, %v1553, %v1555
      %v1572 = vsel %vm1570, %v1555, %v1557
      %v1573 = vsel %vm1570, %v1557, %v1559
      %v1574 = vsel %vm1570, %v1559, %v1561
      %v1575 = vsel %vm1570, %v1561, %v1563
      %v1576 = vsel %vm1570, %v1563, %v1565
      %v1577 = vsel %vm1570, %v1565, %v1567
      %v1578 = vsel %vm1570, %v1567, %v1569
      %v1580 = vsel %vm264, %v1551, 0
      %v1583 = vsel %vm268, %v1571, 0
      %v1586 = vsel %vm268, %v1572, 0
      %v1589 = vsel %vm268, %v1573, 0
      %v1592 = vsel %vm268, %v1574, 0
      %v1595 = vsel %vm268, %v1575, 0
      %v1598 = vsel %vm268, %v1576, 0
      %v1601 = vsel %vm268, %v1577, 0
      %v1604 = vsel %vm268, %v1578, 0
      %v1607 = vsel %vm268, %v1569, 0
      %1609 = vmatprep.subr.bf16.mxu0 %v1586
      %1610 = vmatpush1.bf16.msra.mxu0 %v1583
      %1611 = vmatprep.subr.bf16.mxu0 0
      %1612 = vmatpush1.bf16.msra.mxu0 0
      %1613 = vmatprep.subr.bf16.mxu0 0
      %1614 = vmatpush1.bf16.msra.mxu0 0
      %1615 = vmatprep.subr.bf16.mxu0 0
      %1616 = vmatpush1.bf16.msra.mxu0 0
      %1617 = vmatprep.subr.bf16.mxu0 0
      %1618 = vmatpush1.bf16.msra.mxu0 0
      %1619 = vmatprep.subr.bf16.mxu0 0
      %1620 = vmatpush1.bf16.msra.mxu0 0
      %1621 = vmatprep.subr.bf16.mxu0 0
      %1622 = vmatpush1.bf16.msra.mxu0 0
      %1623 = vmatprep.subr.bf16.mxu0 0
      %1624 = vmatpush1.bf16.msra.mxu0 0
      %1625 = vmatprep.subr.bf16.mxu0 0
      %1626 = vmatpush1.bf16.msra.mxu0 0
      %1627 = vmatprep.subr.bf16.mxu0 0
      %1628 = vmatpush1.bf16.msra.mxu0 0
      %1629 = vmatprep.subr.bf16.mxu0 0
      %1630 = vmatpush1.bf16.msra.mxu0 0
      %1631 = vmatprep.subr.bf16.mxu0 0
      %1632 = vmatpush1.bf16.msra.mxu0 0
      %1633 = vmatprep.subr.bf16.mxu0 0
      %1634 = vmatpush1.bf16.msra.mxu0 0
      %1635 = vmatprep.subr.bf16.mxu0 0
      %1636 = vmatpush1.bf16.msra.mxu0 0
      %1637 = vmatprep.subr.bf16.mxu0 0
      %1638 = vmatpush1.bf16.msra.mxu0 0
      %1639 = vmatprep.subr.bf16.mxu0 0
      %1640 = vmatpush1.bf16.msra.mxu0 0
      %1641 = vmatprep.mubr.bf16.mxu0 0
      %1642 = vmatmul.mubr.bf16.gmra.mrb[0].mxu0 %v1580
      %v1643 = vpop.f32.mrb[0].mxu0
      %v1644 = vadd.f32 0.0, %v1643
      %v1645 = vpop.f32.mrb[0].mxu0
      %v1646 = vadd.f32 0.0, %v1645
      %v1647 = vpop.f32.mrb[0].mxu0
      %v1648 = vpop.f32.mrb[0].mxu0
      %1649 = vdwg.mxu0
      %1650 = vmatprep.subr.bf16.mxu0 %v1592
      %1651 = vmatpush1.bf16.msra.mxu0 %v1589
      %1652 = vmatprep.subr.bf16.mxu0 0
      %1653 = vmatpush1.bf16.msra.mxu0 0
      %1654 = vmatprep.subr.bf16.mxu0 0
      %1655 = vmatpush1.bf16.msra.mxu0 0
      %1656 = vmatprep.subr.bf16.mxu0 0
      %1657 = vmatpush1.bf16.msra.mxu0 0
      %1658 = vmatprep.subr.bf16.mxu0 0
      %1659 = vmatpush1.bf16.msra.mxu0 0
      %1660 = vmatprep.subr.bf16.mxu0 0
      %1661 = vmatpush1.bf16.msra.mxu0 0
      %1662 = vmatprep.subr.bf16.mxu0 0
      %1663 = vmatpush1.bf16.msra.mxu0 0
      %1664 = vmatprep.subr.bf16.mxu0 0
      %1665 = vmatpush1.bf16.msra.mxu0 0
      %1666 = vmatprep.subr.bf16.mxu0 0
      %1667 = vmatpush1.bf16.msra.mxu0 0
      %1668 = vmatprep.subr.bf16.mxu0 0
      %1669 = vmatpush1.bf16.msra.mxu0 0
      %1670 = vmatprep.subr.bf16.mxu0 0
      %1671 = vmatpush1.bf16.msra.mxu0 0
      %1672 = vmatprep.subr.bf16.mxu0 0
      %1673 = vmatpush1.bf16.msra.mxu0 0
      %1674 = vmatprep.subr.bf16.mxu0 0
      %1675 = vmatpush1.bf16.msra.mxu0 0
      %1676 = vmatprep.subr.bf16.mxu0 0
      %1677 = vmatpush1.bf16.msra.mxu0 0
      %1678 = vmatprep.subr.bf16.mxu0 0
      %1679 = vmatpush1.bf16.msra.mxu0 0
      %1680 = vmatprep.subr.bf16.mxu0 0
      %1681 = vmatpush1.bf16.msra.mxu0 0
      %1682 = vmatprep.mubr.bf16.mxu0 0
      %1683 = vmatmul.mubr.bf16.gmra.mrb[0].mxu0 %v1580
      %v1684 = vpop.f32.mrb[0].mxu0
      %v1685 = vadd.f32 0.0, %v1684
      %v1686 = vpop.f32.mrb[0].mxu0
      %v1687 = vadd.f32 0.0, %v1686
      %v1688 = vpop.f32.mrb[0].mxu0
      %v1689 = vpop.f32.mrb[0].mxu0
      %1690 = vdwg.mxu0
      %1691 = vmatprep.subr.bf16.mxu0 %v1598
      %1692 = vmatpush1.bf16.msra.mxu0 %v1595
      %1693 = vmatprep.subr.bf16.mxu0 0
      %1694 = vmatpush1.bf16.msra.mxu0 0
      %1695 = vmatprep.subr.bf16.mxu0 0
      %1696 = vmatpush1.bf16.msra.mxu0 0
      %1697 = vmatprep.subr.bf16.mxu0 0
      %1698 = vmatpush1.bf16.msra.mxu0 0
      %1699 = vmatprep.subr.bf16.mxu0 0
      %1700 = vmatpush1.bf16.msra.mxu0 0
      %1701 = vmatprep.subr.bf16.mxu0 0
      %1702 = vmatpush1.bf16.msra.mxu0 0
      %1703 = vmatprep.subr.bf16.mxu0 0
      %1704 = vmatpush1.bf16.msra.mxu0 0
      %1705 = vmatprep.subr.bf16.mxu0 0
      %1706 = vmatpush1.bf16.msra.mxu0 0
      %1707 = vmatprep.subr.bf16.mxu0 0
      %1708 = vmatpush1.bf16.msra.mxu0 0
      %1709 = vmatprep.subr.bf16.mxu0 0
      %1710 = vmatpush1.bf16.msra.mxu0 0
      %1711 = vmatprep.subr.bf16.mxu0 0
      %1712 = vmatpush1.bf16.msra.mxu0 0
      %1713 = vmatprep.subr.bf16.mxu0 0
      %1714 = vmatpush1.bf16.msra.mxu0 0
      %1715 = vmatprep.subr.bf16.mxu0 0
      %1716 = vmatpush1.bf16.msra.mxu0 0
      %1717 = vmatprep.subr.bf16.mxu0 0
      %1718 = vmatpush1.bf16.msra.mxu0 0
      %1719 = vmatprep.subr.bf16.mxu0 0
      %1720 = vmatpush1.bf16.msra.mxu0 0
      %1721 = vmatprep.subr.bf16.mxu0 0
      %1722 = vmatpush1.bf16.msra.mxu0 0
      %1723 = vmatprep.mubr.bf16.mxu0 0
      %1724 = vmatmul.mubr.bf16.gmra.mrb[0].mxu0 %v1580
      %v1725 = vpop.f32.mrb[0].mxu0
      %v1726 = vadd.f32 0.0, %v1725
      %v1727 = vpop.f32.mrb[0].mxu0
      %v1728 = vadd.f32 0.0, %v1727
      %v1729 = vpop.f32.mrb[0].mxu0
      %v1730 = vpop.f32.mrb[0].mxu0
      %1731 = vdwg.mxu0
      %1732 = vmatprep.subr.bf16.mxu0 %v1604
      %1733 = vmatpush1.bf16.msra.mxu0 %v1601
      %1734 = vmatprep.subr.bf16.mxu0 0
      %1735 = vmatpush1.bf16.msra.mxu0 0
      %1736 = vmatprep.subr.bf16.mxu0 0
      %1737 = vmatpush1.bf16.msra.mxu0 0
      %1738 = vmatprep.subr.bf16.mxu0 0
      %1739 = vmatpush1.bf16.msra.mxu0 0
      %1740 = vmatprep.subr.bf16.mxu0 0
      %1741 = vmatpush1.bf16.msra.mxu0 0
      %1742 = vmatprep.subr.bf16.mxu0 0
      %1743 = vmatpush1.bf16.msra.mxu0 0
      %1744 = vmatprep.subr.bf16.mxu0 0
      %1745 = vmatpush1.bf16.msra.mxu0 0
      %1746 = vmatprep.subr.bf16.mxu0 0
      %1747 = vmatpush1.bf16.msra.mxu0 0
      %1748 = vmatprep.subr.bf16.mxu0 0
      %1749 = vmatpush1.bf16.msra.mxu0 0
      %1750 = vmatprep.subr.bf16.mxu0 0
      %1751 = vmatpush1.bf16.msra.mxu0 0
      %1752 = vmatprep.subr.bf16.mxu0 0
      %1753 = vmatpush1.bf16.msra.mxu0 0
      %1754 = vmatprep.subr.bf16.mxu0 0
      %1755 = vmatpush1.bf16.msra.mxu0 0
      %1756 = vmatprep.subr.bf16.mxu0 0
      %1757 = vmatpush1.bf16.msra.mxu0 0
      %1758 = vmatprep.subr.bf16.mxu0 0
      %1759 = vmatpush1.bf16.msra.mxu0 0
      %1760 = vmatprep.subr.bf16.mxu0 0
      %1761 = vmatpush1.bf16.msra.mxu0 0
      %1762 = vmatprep.subr.bf16.mxu0 0
      %1763 = vmatpush1.bf16.msra.mxu0 0
      %1764 = vmatprep.mubr.bf16.mxu0 0
      %1765 = vmatmul.mubr.bf16.gmra.mrb[0].mxu0 %v1580
      %v1766 = vpop.f32.mrb[0].mxu0
      %v1767 = vadd.f32 0.0, %v1766
      %v1768 = vpop.f32.mrb[0].mxu0
      %v1769 = vadd.f32 0.0, %v1768
      %v1770 = vpop.f32.mrb[0].mxu0
      %v1771 = vpop.f32.mrb[0].mxu0
      %1772 = vdwg.mxu0
      %1773 = vmatprep.subr.bf16.mxu0 0
      %1774 = vmatpush1.bf16.msra.mxu0 %v1607
      %1775 = vmatprep.subr.bf16.mxu0 0
      %1776 = vmatpush1.bf16.msra.mxu0 0
      %1777 = vmatprep.subr.bf16.mxu0 0
      %1778 = vmatpush1.bf16.msra.mxu0 0
      %1779 = vmatprep.subr.bf16.mxu0 0
      %1780 = vmatpush1.bf16.msra.mxu0 0
      %1781 = vmatprep.subr.bf16.mxu0 0
      %1782 = vmatpush1.bf16.msra.mxu0 0
      %1783 = vmatprep.subr.bf16.mxu0 0
      %1784 = vmatpush1.bf16.msra.mxu0 0
      %1785 = vmatprep.subr.bf16.mxu0 0
      %1786 = vmatpush1.bf16.msra.mxu0 0
      %1787 = vmatprep.subr.bf16.mxu0 0
      %1788 = vmatpush1.bf16.msra.mxu0 0
      %1789 = vmatprep.subr.bf16.mxu0 0
      %1790 = vmatpush1.bf16.msra.mxu0 0
      %1791 = vmatprep.subr.bf16.mxu0 0
      %1792 = vmatpush1.bf16.msra.mxu0 0
      %1793 = vmatprep.subr.bf16.mxu0 0
      %1794 = vmatpush1.bf16.msra.mxu0 0
      %1795 = vmatprep.subr.bf16.mxu0 0
      %1796 = vmatpush1.bf16.msra.mxu0 0
      %1797 = vmatprep.subr.bf16.mxu0 0
      %1798 = vmatpush1.bf16.msra.mxu0 0
      %1799 = vmatprep.subr.bf16.mxu0 0
      %1800 = vmatpush1.bf16.msra.mxu0 0
      %1801 = vmatprep.subr.bf16.mxu0 0
      %1802 = vmatpush1.bf16.msra.mxu0 0
      %1803 = vmatprep.subr.bf16.mxu0 0
      %1804 = vmatpush1.bf16.msra.mxu0 0
      %1805 = vmatprep.mubr.bf16.mxu0 0
      %1806 = vmatmul.mubr.bf16.gmra.mrb[0].mxu0 %v1580
      %v1807 = vpop.f32.mrb[0].mxu0
      %v1808 = vadd.f32 0.0, %v1807
      %v1809 = vpop.f32.mrb[0].mxu0
      %v1810 = vpop.f32.mrb[0].mxu0
      %v1811 = vpop.f32.mrb[0].mxu0
      %1812 = vdwg.mxu0
      %v1813 = vadd.f32 %v1541, %v1644
      %v1814 = vadd.f32 %v1542, %v1646
      %v1815 = vadd.f32 %v1543, %v1685
      %v1816 = vadd.f32 %v1544, %v1687
      %v1817 = vadd.f32 %v1545, %v1726
      %v1818 = vadd.f32 %v1546, %v1728
      %v1819 = vadd.f32 %v1547, %v1767
      %v1820 = vadd.f32 %v1548, %v1769
      %v1821 = vadd.f32 %v1549, %v1808
      %v1822 = vld [vmem:[%s196] sm:$0xff]
      %v1823 = vld [vmem:[%s196 + $0x8] sm:$0xff]
      %v1824 = vld [vmem:[%s196 + $0x10] sm:$0xff]
      %v1825 = vld [vmem:[%s196 + $0x18] sm:$0xff]
      %v1826 = vld [vmem:[%s196 + $0x20] sm:$0xff]
      %s1827 = scalar_lea.vmem %s1, 24
      %v1828 = vld [vmem:[%s1827] sm:$0xf]
      %v1834 = vunpack.c.l.b16 %v1822
      %v1835 = vunpack.c.h.b16 %v1822
      %v1836 = vunpack.c.l.b16 %v1823
      %v1837 = vunpack.c.h.b16 %v1823
      %v1838 = vunpack.c.l.b16 %v1824
      %v1839 = vunpack.c.h.b16 %v1824
      %v1840 = vunpack.c.l.b16 %v1825
      %v1841 = vunpack.c.h.b16 %v1825
      %v1842 = vunpack.c.l.b16 %v1826
      %v1843 = vunpack.c.h.b16 %v1826
      %v1844 = vpack.c.b16 %v1834, %v1834
      %v1845 = vpack.c.b16 %v1835, %v1835
      %v1846 = vpack.c.b16 %v1836, %v1836
      %v1847 = vpack.c.b16 %v1837, %v1837
      %v1848 = vpack.c.b16 %v1838, %v1838
      %v1849 = vpack.c.b16 %v1839, %v1839
      %v1850 = vpack.c.b16 %v1840, %v1840
      %v1851 = vpack.c.b16 %v1841, %v1841
      %v1852 = vpack.c.b16 %v1842, %v1842
      %v1853 = vpack.c.b16 %v1843, %v1843
      %1854 = vrot.lane.b32.xlu0 %v1844, 60
      %v1855 = vpop.permute.xlu0 %1854
      %1856 = vrot.lane.b32.xlu0 %v1845, 60
      %v1857 = vpop.permute.xlu0 %1856
      %1858 = vrot.lane.b32.xlu0 %v1846, 60
      %v1859 = vpop.permute.xlu0 %1858
      %1860 = vrot.lane.b32.xlu0 %v1847, 60
      %v1861 = vpop.permute.xlu0 %1860
      %1862 = vrot.lane.b32.xlu0 %v1848, 60
      %v1863 = vpop.permute.xlu0 %1862
      %1864 = vrot.lane.b32.xlu0 %v1849, 60
      %v1865 = vpop.permute.xlu0 %1864
      %1866 = vrot.lane.b32.xlu0 %v1850, 60
      %v1867 = vpop.permute.xlu0 %1866
      %1868 = vrot.lane.b32.xlu0 %v1851, 60
      %v1869 = vpop.permute.xlu0 %1868
      %1870 = vrot.lane.b32.xlu0 %v1852, 60
      %v1871 = vpop.permute.xlu0 %1870
      %1872 = vrot.lane.b32.xlu0 %v1853, 60
      %v1873 = vpop.permute.xlu0 %1872
      %vm1874 = vcmask 490496
      %v1875 = vsel %vm1874, %v1855, %v1857
      %v1876 = vsel %vm1874, %v1857, %v1859
      %v1877 = vsel %vm1874, %v1859, %v1861
      %v1878 = vsel %vm1874, %v1861, %v1863
      %v1879 = vsel %vm1874, %v1863, %v1865
      %v1880 = vsel %vm1874, %v1865, %v1867
      %v1881 = vsel %vm1874, %v1867, %v1869
      %v1882 = vsel %vm1874, %v1869, %v1871
      %v1883 = vsel %vm1874, %v1871, %v1873
      %v1885 = vsel %vm264, %v1828, 0
      %v1888 = vsel %vm268, %v1875, 0
      %v1891 = vsel %vm268, %v1876, 0
      %v1894 = vsel %vm268, %v1877, 0
      %v1897 = vsel %vm268, %v1878, 0
      %v1900 = vsel %vm268, %v1879, 0
      %v1903 = vsel %vm268, %v1880, 0
      %v1906 = vsel %vm268, %v1881, 0
      %v1909 = vsel %vm268, %v1882, 0
      %v1912 = vsel %vm268, %v1883, 0
      %1914 = vmatprep.subr.bf16.mxu0 %v1891
      %1915 = vmatpush1.bf16.msra.mxu0 %v1888
      %1916 = vmatprep.subr.bf16.mxu0 0
      %1917 = vmatpush1.bf16.msra.mxu0 0
      %1918 = vmatprep.subr.bf16.mxu0 0
      %1919 = vmatpush1.bf16.msra.mxu0 0
      %1920 = vmatprep.subr.bf16.mxu0 0
      %1921 = vmatpush1.bf16.msra.mxu0 0
      %1922 = vmatprep.subr.bf16.mxu0 0
      %1923 = vmatpush1.bf16.msra.mxu0 0
      %1924 = vmatprep.subr.bf16.mxu0 0
      %1925 = vmatpush1.bf16.msra.mxu0 0
      %1926 = vmatprep.subr.bf16.mxu0 0
      %1927 = vmatpush1.bf16.msra.mxu0 0
      %1928 = vmatprep.subr.bf16.mxu0 0
      %1929 = vmatpush1.bf16.msra.mxu0 0
      %1930 = vmatprep.subr.bf16.mxu0 0
      %1931 = vmatpush1.bf16.msra.mxu0 0
      %1932 = vmatprep.subr.bf16.mxu0 0
      %1933 = vmatpush1.bf16.msra.mxu0 0
      %1934 = vmatprep.subr.bf16.mxu0 0
      %1935 = vmatpush1.bf16.msra.mxu0 0
      %1936 = vmatprep.subr.bf16.mxu0 0
      %1937 = vmatpush1.bf16.msra.mxu0 0
      %1938 = vmatprep.subr.bf16.mxu0 0
      %1939 = vmatpush1.bf16.msra.mxu0 0
      %1940 = vmatprep.subr.bf16.mxu0 0
      %1941 = vmatpush1.bf16.msra.mxu0 0
      %1942 = vmatprep.subr.bf16.mxu0 0
      %1943 = vmatpush1.bf16.msra.mxu0 0
      %1944 = vmatprep.subr.bf16.mxu0 0
      %1945 = vmatpush1.bf16.msra.mxu0 0
      %1946 = vmatprep.mubr.bf16.mxu0 0
      %1947 = vmatmul.mubr.bf16.gmra.mrb[0].mxu0 %v1885
      %v1948 = vpop.f32.mrb[0].mxu0
      %v1949 = vadd.f32 0.0, %v1948
      %v1950 = vpop.f32.mrb[0].mxu0
      %v1951 = vadd.f32 0.0, %v1950
      %v1952 = vpop.f32.mrb[0].mxu0
      %v1953 = vpop.f32.mrb[0].mxu0
      %1954 = vdwg.mxu0
      %1955 = vmatprep.subr.bf16.mxu0 %v1897
      %1956 = vmatpush1.bf16.msra.mxu0 %v1894
      %1957 = vmatprep.subr.bf16.mxu0 0
      %1958 = vmatpush1.bf16.msra.mxu0 0
      %1959 = vmatprep.subr.bf16.mxu0 0
      %1960 = vmatpush1.bf16.msra.mxu0 0
      %1961 = vmatprep.subr.bf16.mxu0 0
      %1962 = vmatpush1.bf16.msra.mxu0 0
      %1963 = vmatprep.subr.bf16.mxu0 0
      %1964 = vmatpush1.bf16.msra.mxu0 0
      %1965 = vmatprep.subr.bf16.mxu0 0
      %1966 = vmatpush1.bf16.msra.mxu0 0
      %1967 = vmatprep.subr.bf16.mxu0 0
      %1968 = vmatpush1.bf16.msra.mxu0 0
      %1969 = vmatprep.subr.bf16.mxu0 0
      %1970 = vmatpush1.bf16.msra.mxu0 0
      %1971 = vmatprep.subr.bf16.mxu0 0
      %1972 = vmatpush1.bf16.msra.mxu0 0
      %1973 = vmatprep.subr.bf16.mxu0 0
      %1974 = vmatpush1.bf16.msra.mxu0 0
      %1975 = vmatprep.subr.bf16.mxu0 0
      %1976 = vmatpush1.bf16.msra.mxu0 0
      %1977 = vmatprep.subr.bf16.mxu0 0
      %1978 = vmatpush1.bf16.msra.mxu0 0
      %1979 = vmatprep.subr.bf16.mxu0 0
      %1980 = vmatpush1.bf16.msra.mxu0 0
      %1981 = vmatprep.subr.bf16.mxu0 0
      %1982 = vmatpush1.bf16.msra.mxu0 0
      %1983 = vmatprep.subr.bf16.mxu0 0
      %1984 = vmatpush1.bf16.msra.mxu0 0
      %1985 = vmatprep.subr.bf16.mxu0 0
      %1986 = vmatpush1.bf16.msra.mxu0 0
      %1987 = vmatprep.mubr.bf16.mxu0 0
      %1988 = vmatmul.mubr.bf16.gmra.mrb[0].mxu0 %v1885
      %v1989 = vpop.f32.mrb[0].mxu0
      %v1990 = vadd.f32 0.0, %v1989
      %v1991 = vpop.f32.mrb[0].mxu0
      %v1992 = vadd.f32 0.0, %v1991
      %v1993 = vpop.f32.mrb[0].mxu0
      %v1994 = vpop.f32.mrb[0].mxu0
      %1995 = vdwg.mxu0
      %1996 = vmatprep.subr.bf16.mxu0 %v1903
      %1997 = vmatpush1.bf16.msra.mxu0 %v1900
      %1998 = vmatprep.subr.bf16.mxu0 0
      %1999 = vmatpush1.bf16.msra.mxu0 0
      %2000 = vmatprep.subr.bf16.mxu0 0
      %2001 = vmatpush1.bf16.msra.mxu0 0
      %2002 = vmatprep.subr.bf16.mxu0 0
      %2003 = vmatpush1.bf16.msra.mxu0 0
      %2004 = vmatprep.subr.bf16.mxu0 0
      %2005 = vmatpush1.bf16.msra.mxu0 0
      %2006 = vmatprep.subr.bf16.mxu0 0
      %2007 = vmatpush1.bf16.msra.mxu0 0
      %2008 = vmatprep.subr.bf16.mxu0 0
      %2009 = vmatpush1.bf16.msra.mxu0 0
      %2010 = vmatprep.subr.bf16.mxu0 0
      %2011 = vmatpush1.bf16.msra.mxu0 0
      %2012 = vmatprep.subr.bf16.mxu0 0
      %2013 = vmatpush1.bf16.msra.mxu0 0
      %2014 = vmatprep.subr.bf16.mxu0 0
      %2015 = vmatpush1.bf16.msra.mxu0 0
      %2016 = vmatprep.subr.bf16.mxu0 0
      %2017 = vmatpush1.bf16.msra.mxu0 0
      %2018 = vmatprep.subr.bf16.mxu0 0
      %2019 = vmatpush1.bf16.msra.mxu0 0
      %2020 = vmatprep.subr.bf16.mxu0 0
      %2021 = vmatpush1.bf16.msra.mxu0 0
      %2022 = vmatprep.subr.bf16.mxu0 0
      %2023 = vmatpush1.bf16.msra.mxu0 0
      %2024 = vmatprep.subr.bf16.mxu0 0
      %2025 = vmatpush1.bf16.msra.mxu0 0
      %2026 = vmatprep.subr.bf16.mxu0 0
      %2027 = vmatpush1.bf16.msra.mxu0 0
      %2028 = vmatprep.mubr.bf16.mxu0 0
      %2029 = vmatmul.mubr.bf16.gmra.mrb[0].mxu0 %v1885
      %v2030 = vpop.f32.mrb[0].mxu0
      %v2031 = vadd.f32 0.0, %v2030
      %v2032 = vpop.f32.mrb[0].mxu0
      %v2033 = vadd.f32 0.0, %v2032
      %v2034 = vpop.f32.mrb[0].mxu0
      %v2035 = vpop.f32.mrb[0].mxu0
      %2036 = vdwg.mxu0
      %2037 = vmatprep.subr.bf16.mxu0 %v1909
      %2038 = vmatpush1.bf16.msra.mxu0 %v1906
      %2039 = vmatprep.subr.bf16.mxu0 0
      %2040 = vmatpush1.bf16.msra.mxu0 0
      %2041 = vmatprep.subr.bf16.mxu0 0
      %2042 = vmatpush1.bf16.msra.mxu0 0
      %2043 = vmatprep.subr.bf16.mxu0 0
      %2044 = vmatpush1.bf16.msra.mxu0 0
      %2045 = vmatprep.subr.bf16.mxu0 0
      %2046 = vmatpush1.bf16.msra.mxu0 0
      %2047 = vmatprep.subr.bf16.mxu0 0
      %2048 = vmatpush1.bf16.msra.mxu0 0
      %2049 = vmatprep.subr.bf16.mxu0 0
      %2050 = vmatpush1.bf16.msra.mxu0 0
      %2051 = vmatprep.subr.bf16.mxu0 0
      %2052 = vmatpush1.bf16.msra.mxu0 0
      %2053 = vmatprep.subr.bf16.mxu0 0
      %2054 = vmatpush1.bf16.msra.mxu0 0
      %2055 = vmatprep.subr.bf16.mxu0 0
      %2056 = vmatpush1.bf16.msra.mxu0 0
      %2057 = vmatprep.subr.bf16.mxu0 0
      %2058 = vmatpush1.bf16.msra.mxu0 0
      %2059 = vmatprep.subr.bf16.mxu0 0
      %2060 = vmatpush1.bf16.msra.mxu0 0
      %2061 = vmatprep.subr.bf16.mxu0 0
      %2062 = vmatpush1.bf16.msra.mxu0 0
      %2063 = vmatprep.subr.bf16.mxu0 0
      %2064 = vmatpush1.bf16.msra.mxu0 0
      %2065 = vmatprep.subr.bf16.mxu0 0
      %2066 = vmatpush1.bf16.msra.mxu0 0
      %2067 = vmatprep.subr.bf16.mxu0 0
      %2068 = vmatpush1.bf16.msra.mxu0 0
      %2069 = vmatprep.mubr.bf16.mxu0 0
      %2070 = vmatmul.mubr.bf16.gmra.mrb[0].mxu0 %v1885
      %v2071 = vpop.f32.mrb[0].mxu0
      %v2072 = vadd.f32 0.0, %v2071
      %v2073 = vpop.f32.mrb[0].mxu0
      %v2074 = vadd.f32 0.0, %v2073
      %v2075 = vpop.f32.mrb[0].mxu0
      %v2076 = vpop.f32.mrb[0].mxu0
      %2077 = vdwg.mxu0
      %2078 = vmatprep.subr.bf16.mxu0 0
      %2079 = vmatpush1.bf16.msra.mxu0 %v1912
      %2080 = vmatprep.subr.bf16.mxu0 0
      %2081 = vmatpush1.bf16.msra.mxu0 0
      %2082 = vmatprep.subr.bf16.mxu0 0
      %2083 = vmatpush1.bf16.msra.mxu0 0
      %2084 = vmatprep.subr.bf16.mxu0 0
      %2085 = vmatpush1.bf16.msra.mxu0 0
      %2086 = vmatprep.subr.bf16.mxu0 0
      %2087 = vmatpush1.bf16.msra.mxu0 0
      %2088 = vmatprep.subr.bf16.mxu0 0
      %2089 = vmatpush1.bf16.msra.mxu0 0
      %2090 = vmatprep.subr.bf16.mxu0 0
      %2091 = vmatpush1.bf16.msra.mxu0 0
      %2092 = vmatprep.subr.bf16.mxu0 0
      %2093 = vmatpush1.bf16.msra.mxu0 0
      %2094 = vmatprep.subr.bf16.mxu0 0
      %2095 = vmatpush1.bf16.msra.mxu0 0
      %2096 = vmatprep.subr.bf16.mxu0 0
      %2097 = vmatpush1.bf16.msra.mxu0 0
      %2098 = vmatprep.subr.bf16.mxu0 0
      %2099 = vmatpush1.bf16.msra.mxu0 0
      %2100 = vmatprep.subr.bf16.mxu0 0
      %2101 = vmatpush1.bf16.msra.mxu0 0
      %2102 = vmatprep.subr.bf16.mxu0 0
      %2103 = vmatpush1.bf16.msra.mxu0 0
      %2104 = vmatprep.subr.bf16.mxu0 0
      %2105 = vmatpush1.bf16.msra.mxu0 0
      %2106 = vmatprep.subr.bf16.mxu0 0
      %2107 = vmatpush1.bf16.msra.mxu0 0
      %2108 = vmatprep.subr.bf16.mxu0 0
      %2109 = vmatpush1.bf16.msra.mxu0 0
      %2110 = vmatprep.mubr.bf16.mxu0 0
      %2111 = vmatmul.mubr.bf16.gmra.mrb[0].mxu0 %v1885
      %v2112 = vpop.f32.mrb[0].mxu0
      %v2113 = vadd.f32 0.0, %v2112
      %v2114 = vpop.f32.mrb[0].mxu0
      %v2115 = vpop.f32.mrb[0].mxu0
      %v2116 = vpop.f32.mrb[0].mxu0
      %2117 = vdwg.mxu0
      %v2118 = vadd.f32 %v1813, %v1949
      %v2119 = vadd.f32 %v1814, %v1951
      %v2120 = vadd.f32 %v1815, %v1990
      %v2121 = vadd.f32 %v1816, %v1992
      %v2122 = vadd.f32 %v1817, %v2031
      %v2123 = vadd.f32 %v1818, %v2033
      %v2124 = vadd.f32 %v1819, %v2072
      %v2125 = vadd.f32 %v1820, %v2074
      %v2126 = vadd.f32 %v1821, %v2113
      %s2127 = scalar_lea.vmem %s1, 28
      %v2128 = vld [vmem:[%s2127] sm:$0xf]
      %2129 = vrot.lane.b32.xlu0 %v1844, 59
      %v2130 = vpop.permute.xlu0 %2129
      %2131 = vrot.lane.b32.xlu0 %v1845, 59
      %v2132 = vpop.permute.xlu0 %2131
      %2133 = vrot.lane.b32.xlu0 %v1846, 59
      %v2134 = vpop.permute.xlu0 %2133
      %2135 = vrot.lane.b32.xlu0 %v1847, 59
      %v2136 = vpop.permute.xlu0 %2135
      %2137 = vrot.lane.b32.xlu0 %v1848, 59
      %v2138 = vpop.permute.xlu0 %2137
      %2139 = vrot.lane.b32.xlu0 %v1849, 59
      %v2140 = vpop.permute.xlu0 %2139
      %2141 = vrot.lane.b32.xlu0 %v1850, 59
      %v2142 = vpop.permute.xlu0 %2141
      %2143 = vrot.lane.b32.xlu0 %v1851, 59
      %v2144 = vpop.permute.xlu0 %2143
      %2145 = vrot.lane.b32.xlu0 %v1852, 59
      %v2146 = vpop.permute.xlu0 %2145
      %2147 = vrot.lane.b32.xlu0 %v1853, 59
      %v2148 = vpop.permute.xlu0 %2147
      %vm2149 = vcmask 482304
      %v2150 = vsel %vm2149, %v2130, %v2132
      %v2151 = vsel %vm2149, %v2132, %v2134
      %v2152 = vsel %vm2149, %v2134, %v2136
      %v2153 = vsel %vm2149, %v2136, %v2138
      %v2154 = vsel %vm2149, %v2138, %v2140
      %v2155 = vsel %vm2149, %v2140, %v2142
      %v2156 = vsel %vm2149, %v2142, %v2144
      %v2157 = vsel %vm2149, %v2144, %v2146
      %v2158 = vsel %vm2149, %v2146, %v2148
      %v2160 = vsel %vm264, %v2128, 0
      %v2163 = vsel %vm268, %v2150, 0
      %v2166 = vsel %vm268, %v2151, 0
      %v2169 = vsel %vm268, %v2152, 0
      %v2172 = vsel %vm268, %v2153, 0
      %v2175 = vsel %vm268, %v2154, 0
      %v2178 = vsel %vm268, %v2155, 0
      %v2181 = vsel %vm268, %v2156, 0
      %v2184 = vsel %vm268, %v2157, 0
      %v2187 = vsel %vm268, %v2158, 0
      %2189 = vmatprep.subr.bf16.mxu0 %v2166
      %2190 = vmatpush1.bf16.msra.mxu0 %v2163
      %2191 = vmatprep.subr.bf16.mxu0 0
      %2192 = vmatpush1.bf16.msra.mxu0 0
      %2193 = vmatprep.subr.bf16.mxu0 0
      %2194 = vmatpush1.bf16.msra.mxu0 0
      %2195 = vmatprep.subr.bf16.mxu0 0
      %2196 = vmatpush1.bf16.msra.mxu0 0
      %2197 = vmatprep.subr.bf16.mxu0 0
      %2198 = vmatpush1.bf16.msra.mxu0 0
      %2199 = vmatprep.subr.bf16.mxu0 0
      %2200 = vmatpush1.bf16.msra.mxu0 0
      %2201 = vmatprep.subr.bf16.mxu0 0
      %2202 = vmatpush1.bf16.msra.mxu0 0
      %2203 = vmatprep.subr.bf16.mxu0 0
      %2204 = vmatpush1.bf16.msra.mxu0 0
      %2205 = vmatprep.subr.bf16.mxu0 0
      %2206 = vmatpush1.bf16.msra.mxu0 0
      %2207 = vmatprep.subr.bf16.mxu0 0
      %2208 = vmatpush1.bf16.msra.mxu0 0
      %2209 = vmatprep.subr.bf16.mxu0 0
      %2210 = vmatpush1.bf16.msra.mxu0 0
      %2211 = vmatprep.subr.bf16.mxu0 0
      %2212 = vmatpush1.bf16.msra.mxu0 0
      %2213 = vmatprep.subr.bf16.mxu0 0
      %2214 = vmatpush1.bf16.msra.mxu0 0
      %2215 = vmatprep.subr.bf16.mxu0 0
      %2216 = vmatpush1.bf16.msra.mxu0 0
      %2217 = vmatprep.subr.bf16.mxu0 0
      %2218 = vmatpush1.bf16.msra.mxu0 0
      %2219 = vmatprep.subr.bf16.mxu0 0
      %2220 = vmatpush1.bf16.msra.mxu0 0
      %2221 = vmatprep.mubr.bf16.mxu0 0
      %2222 = vmatmul.mubr.bf16.gmra.mrb[0].mxu0 %v2160
      %v2223 = vpop.f32.mrb[0].mxu0
      %v2224 = vadd.f32 0.0, %v2223
      %v2225 = vpop.f32.mrb[0].mxu0
      %v2226 = vadd.f32 0.0, %v2225
      %v2227 = vpop.f32.mrb[0].mxu0
      %v2228 = vpop.f32.mrb[0].mxu0
      %2229 = vdwg.mxu0
      %2230 = vmatprep.subr.bf16.mxu0 %v2172
      %2231 = vmatpush1.bf16.msra.mxu0 %v2169
      %2232 = vmatprep.subr.bf16.mxu0 0
      %2233 = vmatpush1.bf16.msra.mxu0 0
      %2234 = vmatprep.subr.bf16.mxu0 0
      %2235 = vmatpush1.bf16.msra.mxu0 0
      %2236 = vmatprep.subr.bf16.mxu0 0
      %2237 = vmatpush1.bf16.msra.mxu0 0
      %2238 = vmatprep.subr.bf16.mxu0 0
      %2239 = vmatpush1.bf16.msra.mxu0 0
      %2240 = vmatprep.subr.bf16.mxu0 0
      %2241 = vmatpush1.bf16.msra.mxu0 0
      %2242 = vmatprep.subr.bf16.mxu0 0
      %2243 = vmatpush1.bf16.msra.mxu0 0
      %2244 = vmatprep.subr.bf16.mxu0 0
      %2245 = vmatpush1.bf16.msra.mxu0 0
      %2246 = vmatprep.subr.bf16.mxu0 0
      %2247 = vmatpush1.bf16.msra.mxu0 0
      %2248 = vmatprep.subr.bf16.mxu0 0
      %2249 = vmatpush1.bf16.msra.mxu0 0
      %2250 = vmatprep.subr.bf16.mxu0 0
      %2251 = vmatpush1.bf16.msra.mxu0 0
      %2252 = vmatprep.subr.bf16.mxu0 0
      %2253 = vmatpush1.bf16.msra.mxu0 0
      %2254 = vmatprep.subr.bf16.mxu0 0
      %2255 = vmatpush1.bf16.msra.mxu0 0
      %2256 = vmatprep.subr.bf16.mxu0 0
      %2257 = vmatpush1.bf16.msra.mxu0 0
      %2258 = vmatprep.subr.bf16.mxu0 0
      %2259 = vmatpush1.bf16.msra.mxu0 0
      %2260 = vmatprep.subr.bf16.mxu0 0
      %2261 = vmatpush1.bf16.msra.mxu0 0
      %2262 = vmatprep.mubr.bf16.mxu0 0
      %2263 = vmatmul.mubr.bf16.gmra.mrb[0].mxu0 %v2160
      %v2264 = vpop.f32.mrb[0].mxu0
      %v2265 = vadd.f32 0.0, %v2264
      %v2266 = vpop.f32.mrb[0].mxu0
      %v2267 = vadd.f32 0.0, %v2266
      %v2268 = vpop.f32.mrb[0].mxu0
      %v2269 = vpop.f32.mrb[0].mxu0
      %2270 = vdwg.mxu0
      %2271 = vmatprep.subr.bf16.mxu0 %v2178
      %2272 = vmatpush1.bf16.msra.mxu0 %v2175
      %2273 = vmatprep.subr.bf16.mxu0 0
      %2274 = vmatpush1.bf16.msra.mxu0 0
      %2275 = vmatprep.subr.bf16.mxu0 0
      %2276 = vmatpush1.bf16.msra.mxu0 0
      %2277 = vmatprep.subr.bf16.mxu0 0
      %2278 = vmatpush1.bf16.msra.mxu0 0
      %2279 = vmatprep.subr.bf16.mxu0 0
      %2280 = vmatpush1.bf16.msra.mxu0 0
      %2281 = vmatprep.subr.bf16.mxu0 0
      %2282 = vmatpush1.bf16.msra.mxu0 0
      %2283 = vmatprep.subr.bf16.mxu0 0
      %2284 = vmatpush1.bf16.msra.mxu0 0
      %2285 = vmatprep.subr.bf16.mxu0 0
      %2286 = vmatpush1.bf16.msra.mxu0 0
      %2287 = vmatprep.subr.bf16.mxu0 0
      %2288 = vmatpush1.bf16.msra.mxu0 0
      %2289 = vmatprep.subr.bf16.mxu0 0
      %2290 = vmatpush1.bf16.msra.mxu0 0
      %2291 = vmatprep.subr.bf16.mxu0 0
      %2292 = vmatpush1.bf16.msra.mxu0 0
      %2293 = vmatprep.subr.bf16.mxu0 0
      %2294 = vmatpush1.bf16.msra.mxu0 0
      %2295 = vmatprep.subr.bf16.mxu0 0
      %2296 = vmatpush1.bf16.msra.mxu0 0
      %2297 = vmatprep.subr.bf16.mxu0 0
      %2298 = vmatpush1.bf16.msra.mxu0 0
      %2299 = vmatprep.subr.bf16.mxu0 0
      %2300 = vmatpush1.bf16.msra.mxu0 0
      %2301 = vmatprep.subr.bf16.mxu0 0
      %2302 = vmatpush1.bf16.msra.mxu0 0
      %2303 = vmatprep.mubr.bf16.mxu0 0
      %2304 = vmatmul.mubr.bf16.gmra.mrb[0].mxu0 %v2160
      %v2305 = vpop.f32.mrb[0].mxu0
      %v2306 = vadd.f32 0.0, %v2305
      %v2307 = vpop.f32.mrb[0].mxu0
      %v2308 = vadd.f32 0.0, %v2307
      %v2309 = vpop.f32.mrb[0].mxu0
      %v2310 = vpop.f32.mrb[0].mxu0
      %2311 = vdwg.mxu0
      %2312 = vmatprep.subr.bf16.mxu0 %v2184
      %2313 = vmatpush1.bf16.msra.mxu0 %v2181
      %2314 = vmatprep.subr.bf16.mxu0 0
      %2315 = vmatpush1.bf16.msra.mxu0 0
      %2316 = vmatprep.subr.bf16.mxu0 0
      %2317 = vmatpush1.bf16.msra.mxu0 0
      %2318 = vmatprep.subr.bf16.mxu0 0
      %2319 = vmatpush1.bf16.msra.mxu0 0
      %2320 = vmatprep.subr.bf16.mxu0 0
      %2321 = vmatpush1.bf16.msra.mxu0 0
      %2322 = vmatprep.subr.bf16.mxu0 0
      %2323 = vmatpush1.bf16.msra.mxu0 0
      %2324 = vmatprep.subr.bf16.mxu0 0
      %2325 = vmatpush1.bf16.msra.mxu0 0
      %2326 = vmatprep.subr.bf16.mxu0 0
      %2327 = vmatpush1.bf16.msra.mxu0 0
      %2328 = vmatprep.subr.bf16.mxu0 0
      %2329 = vmatpush1.bf16.msra.mxu0 0
      %2330 = vmatprep.subr.bf16.mxu0 0
      %2331 = vmatpush1.bf16.msra.mxu0 0
      %2332 = vmatprep.subr.bf16.mxu0 0
      %2333 = vmatpush1.bf16.msra.mxu0 0
      %2334 = vmatprep.subr.bf16.mxu0 0
      %2335 = vmatpush1.bf16.msra.mxu0 0
      %2336 = vmatprep.subr.bf16.mxu0 0
      %2337 = vmatpush1.bf16.msra.mxu0 0
      %2338 = vmatprep.subr.bf16.mxu0 0
      %2339 = vmatpush1.bf16.msra.mxu0 0
      %2340 = vmatprep.subr.bf16.mxu0 0
      %2341 = vmatpush1.bf16.msra.mxu0 0
      %2342 = vmatprep.subr.bf16.mxu0 0
      %2343 = vmatpush1.bf16.msra.mxu0 0
      %2344 = vmatprep.mubr.bf16.mxu0 0
      %2345 = vmatmul.mubr.bf16.gmra.mrb[0].mxu0 %v2160
      %v2346 = vpop.f32.mrb[0].mxu0
      %v2347 = vadd.f32 0.0, %v2346
      %v2348 = vpop.f32.mrb[0].mxu0
      %v2349 = vadd.f32 0.0, %v2348
      %v2350 = vpop.f32.mrb[0].mxu0
      %v2351 = vpop.f32.mrb[0].mxu0
      %2352 = vdwg.mxu0
      %2353 = vmatprep.subr.bf16.mxu0 0
      %2354 = vmatpush1.bf16.msra.mxu0 %v2187
      %2355 = vmatprep.subr.bf16.mxu0 0
      %2356 = vmatpush1.bf16.msra.mxu0 0
      %2357 = vmatprep.subr.bf16.mxu0 0
      %2358 = vmatpush1.bf16.msra.mxu0 0
      %2359 = vmatprep.subr.bf16.mxu0 0
      %2360 = vmatpush1.bf16.msra.mxu0 0
      %2361 = vmatprep.subr.bf16.mxu0 0
      %2362 = vmatpush1.bf16.msra.mxu0 0
      %2363 = vmatprep.subr.bf16.mxu0 0
      %2364 = vmatpush1.bf16.msra.mxu0 0
      %2365 = vmatprep.subr.bf16.mxu0 0
      %2366 = vmatpush1.bf16.msra.mxu0 0
      %2367 = vmatprep.subr.bf16.mxu0 0
      %2368 = vmatpush1.bf16.msra.mxu0 0
      %2369 = vmatprep.subr.bf16.mxu0 0
      %2370 = vmatpush1.bf16.msra.mxu0 0
      %2371 = vmatprep.subr.bf16.mxu0 0
      %2372 = vmatpush1.bf16.msra.mxu0 0
      %2373 = vmatprep.subr.bf16.mxu0 0
      %2374 = vmatpush1.bf16.msra.mxu0 0
      %2375 = vmatprep.subr.bf16.mxu0 0
      %2376 = vmatpush1.bf16.msra.mxu0 0
      %2377 = vmatprep.subr.bf16.mxu0 0
      %2378 = vmatpush1.bf16.msra.mxu0 0
      %2379 = vmatprep.subr.bf16.mxu0 0
      %2380 = vmatpush1.bf16.msra.mxu0 0
      %2381 = vmatprep.subr.bf16.mxu0 0
      %2382 = vmatpush1.bf16.msra.mxu0 0
      %2383 = vmatprep.subr.bf16.mxu0 0
      %2384 = vmatpush1.bf16.msra.mxu0 0
      %2385 = vmatprep.mubr.bf16.mxu0 0
      %2386 = vmatmul.mubr.bf16.gmra.mrb[0].mxu0 %v2160
      %v2387 = vpop.f32.mrb[0].mxu0
      %v2388 = vadd.f32 0.0, %v2387
      %v2389 = vpop.f32.mrb[0].mxu0
      %v2390 = vpop.f32.mrb[0].mxu0
      %v2391 = vpop.f32.mrb[0].mxu0
      %2392 = vdwg.mxu0
      %v2393 = vadd.f32 %v2118, %v2224
      %v2394 = vadd.f32 %v2119, %v2226
      %v2395 = vadd.f32 %v2120, %v2265
      %v2396 = vadd.f32 %v2121, %v2267
      %v2397 = vadd.f32 %v2122, %v2306
      %v2398 = vadd.f32 %v2123, %v2308
      %v2399 = vadd.f32 %v2124, %v2347
      %v2400 = vadd.f32 %v2125, %v2349
      %v2401 = vadd.f32 %v2126, %v2388
      %s2402 = scalar_lea.vmem %s1, 32
      %v2403 = vld [vmem:[%s2402] sm:$0xf]
      %2404 = vrot.lane.b32.xlu0 %v1844, 58
      %v2405 = vpop.permute.xlu0 %2404
      %2406 = vrot.lane.b32.xlu0 %v1845, 58
      %v2407 = vpop.permute.xlu0 %2406
      %2408 = vrot.lane.b32.xlu0 %v1846, 58
      %v2409 = vpop.permute.xlu0 %2408
      %2410 = vrot.lane.b32.xlu0 %v1847, 58
      %v2411 = vpop.permute.xlu0 %2410
      %2412 = vrot.lane.b32.xlu0 %v1848, 58
      %v2413 = vpop.permute.xlu0 %2412
      %2414 = vrot.lane.b32.xlu0 %v1849, 58
      %v2415 = vpop.permute.xlu0 %2414
      %2416 = vrot.lane.b32.xlu0 %v1850, 58
      %v2417 = vpop.permute.xlu0 %2416
      %2418 = vrot.lane.b32.xlu0 %v1851, 58
      %v2419 = vpop.permute.xlu0 %2418
      %2420 = vrot.lane.b32.xlu0 %v1852, 58
      %v2421 = vpop.permute.xlu0 %2420
      %2422 = vrot.lane.b32.xlu0 %v1853, 58
      %v2423 = vpop.permute.xlu0 %2422
      %vm2424 = vcmask 474112
      %v2425 = vsel %vm2424, %v2405, %v2407
      %v2426 = vsel %vm2424, %v2407, %v2409
      %v2427 = vsel %vm2424, %v2409, %v2411
      %v2428 = vsel %vm2424, %v2411, %v2413
      %v2429 = vsel %vm2424, %v2413, %v2415
      %v2430 = vsel %vm2424, %v2415, %v2417
      %v2431 = vsel %vm2424, %v2417, %v2419
      %v2432 = vsel %vm2424, %v2419, %v2421
      %v2433 = vsel %vm2424, %v2421, %v2423
      %v2435 = vsel %vm264, %v2403, 0
      %v2438 = vsel %vm268, %v2425, 0
      %v2441 = vsel %vm268, %v2426, 0
      %v2444 = vsel %vm268, %v2427, 0
      %v2447 = vsel %vm268, %v2428, 0
      %v2450 = vsel %vm268, %v2429, 0
      %v2453 = vsel %vm268, %v2430, 0
      %v2456 = vsel %vm268, %v2431, 0
      %v2459 = vsel %vm268, %v2432, 0
      %v2462 = vsel %vm268, %v2433, 0
      %2464 = vmatprep.subr.bf16.mxu0 %v2441
      %2465 = vmatpush1.bf16.msra.mxu0 %v2438
      %2466 = vmatprep.subr.bf16.mxu0 0
      %2467 = vmatpush1.bf16.msra.mxu0 0
      %2468 = vmatprep.subr.bf16.mxu0 0
      %2469 = vmatpush1.bf16.msra.mxu0 0
      %2470 = vmatprep.subr.bf16.mxu0 0
      %2471 = vmatpush1.bf16.msra.mxu0 0
      %2472 = vmatprep.subr.bf16.mxu0 0
      %2473 = vmatpush1.bf16.msra.mxu0 0
      %2474 = vmatprep.subr.bf16.mxu0 0
      %2475 = vmatpush1.bf16.msra.mxu0 0
      %2476 = vmatprep.subr.bf16.mxu0 0
      %2477 = vmatpush1.bf16.msra.mxu0 0
      %2478 = vmatprep.subr.bf16.mxu0 0
      %2479 = vmatpush1.bf16.msra.mxu0 0
      %2480 = vmatprep.subr.bf16.mxu0 0
      %2481 = vmatpush1.bf16.msra.mxu0 0
      %2482 = vmatprep.subr.bf16.mxu0 0
      %2483 = vmatpush1.bf16.msra.mxu0 0
      %2484 = vmatprep.subr.bf16.mxu0 0
      %2485 = vmatpush1.bf16.msra.mxu0 0
      %2486 = vmatprep.subr.bf16.mxu0 0
      %2487 = vmatpush1.bf16.msra.mxu0 0
      %2488 = vmatprep.subr.bf16.mxu0 0
      %2489 = vmatpush1.bf16.msra.mxu0 0
      %2490 = vmatprep.subr.bf16.mxu0 0
      %2491 = vmatpush1.bf16.msra.mxu0 0
      %2492 = vmatprep.subr.bf16.mxu0 0
      %2493 = vmatpush1.bf16.msra.mxu0 0
      %2494 = vmatprep.subr.bf16.mxu0 0
      %2495 = vmatpush1.bf16.msra.mxu0 0
      %2496 = vmatprep.mubr.bf16.mxu0 0
      %2497 = vmatmul.mubr.bf16.gmra.mrb[0].mxu0 %v2435
      %v2498 = vpop.f32.mrb[0].mxu0
      %v2499 = vadd.f32 0.0, %v2498
      %v2500 = vpop.f32.mrb[0].mxu0
      %v2501 = vadd.f32 0.0, %v2500
      %v2502 = vpop.f32.mrb[0].mxu0
      %v2503 = vpop.f32.mrb[0].mxu0
      %2504 = vdwg.mxu0
      %2505 = vmatprep.subr.bf16.mxu0 %v2447
      %2506 = vmatpush1.bf16.msra.mxu0 %v2444
      %2507 = vmatprep.subr.bf16.mxu0 0
      %2508 = vmatpush1.bf16.msra.mxu0 0
      %2509 = vmatprep.subr.bf16.mxu0 0
      %2510 = vmatpush1.bf16.msra.mxu0 0
      %2511 = vmatprep.subr.bf16.mxu0 0
      %2512 = vmatpush1.bf16.msra.mxu0 0
      %2513 = vmatprep.subr.bf16.mxu0 0
      %2514 = vmatpush1.bf16.msra.mxu0 0
      %2515 = vmatprep.subr.bf16.mxu0 0
      %2516 = vmatpush1.bf16.msra.mxu0 0
      %2517 = vmatprep.subr.bf16.mxu0 0
      %2518 = vmatpush1.bf16.msra.mxu0 0
      %2519 = vmatprep.subr.bf16.mxu0 0
      %2520 = vmatpush1.bf16.msra.mxu0 0
      %2521 = vmatprep.subr.bf16.mxu0 0
      %2522 = vmatpush1.bf16.msra.mxu0 0
      %2523 = vmatprep.subr.bf16.mxu0 0
      %2524 = vmatpush1.bf16.msra.mxu0 0
      %2525 = vmatprep.subr.bf16.mxu0 0
      %2526 = vmatpush1.bf16.msra.mxu0 0
      %2527 = vmatprep.subr.bf16.mxu0 0
      %2528 = vmatpush1.bf16.msra.mxu0 0
      %2529 = vmatprep.subr.bf16.mxu0 0
      %2530 = vmatpush1.bf16.msra.mxu0 0
      %2531 = vmatprep.subr.bf16.mxu0 0
      %2532 = vmatpush1.bf16.msra.mxu0 0
      %2533 = vmatprep.subr.bf16.mxu0 0
      %2534 = vmatpush1.bf16.msra.mxu0 0
      %2535 = vmatprep.subr.bf16.mxu0 0
      %2536 = vmatpush1.bf16.msra.mxu0 0
      %2537 = vmatprep.mubr.bf16.mxu0 0
      %2538 = vmatmul.mubr.bf16.gmra.mrb[0].mxu0 %v2435
      %v2539 = vpop.f32.mrb[0].mxu0
      %v2540 = vadd.f32 0.0, %v2539
      %v2541 = vpop.f32.mrb[0].mxu0
      %v2542 = vadd.f32 0.0, %v2541
      %v2543 = vpop.f32.mrb[0].mxu0
      %v2544 = vpop.f32.mrb[0].mxu0
      %2545 = vdwg.mxu0
      %2546 = vmatprep.subr.bf16.mxu0 %v2453
      %2547 = vmatpush1.bf16.msra.mxu0 %v2450
      %2548 = vmatprep.subr.bf16.mxu0 0
      %2549 = vmatpush1.bf16.msra.mxu0 0
      %2550 = vmatprep.subr.bf16.mxu0 0
      %2551 = vmatpush1.bf16.msra.mxu0 0
      %2552 = vmatprep.subr.bf16.mxu0 0
      %2553 = vmatpush1.bf16.msra.mxu0 0
      %2554 = vmatprep.subr.bf16.mxu0 0
      %2555 = vmatpush1.bf16.msra.mxu0 0
      %2556 = vmatprep.subr.bf16.mxu0 0
      %2557 = vmatpush1.bf16.msra.mxu0 0
      %2558 = vmatprep.subr.bf16.mxu0 0
      %2559 = vmatpush1.bf16.msra.mxu0 0
      %2560 = vmatprep.subr.bf16.mxu0 0
      %2561 = vmatpush1.bf16.msra.mxu0 0
      %2562 = vmatprep.subr.bf16.mxu0 0
      %2563 = vmatpush1.bf16.msra.mxu0 0
      %2564 = vmatprep.subr.bf16.mxu0 0
      %2565 = vmatpush1.bf16.msra.mxu0 0
      %2566 = vmatprep.subr.bf16.mxu0 0
      %2567 = vmatpush1.bf16.msra.mxu0 0
      %2568 = vmatprep.subr.bf16.mxu0 0
      %2569 = vmatpush1.bf16.msra.mxu0 0
      %2570 = vmatprep.subr.bf16.mxu0 0
      %2571 = vmatpush1.bf16.msra.mxu0 0
      %2572 = vmatprep.subr.bf16.mxu0 0
      %2573 = vmatpush1.bf16.msra.mxu0 0
      %2574 = vmatprep.subr.bf16.mxu0 0
      %2575 = vmatpush1.bf16.msra.mxu0 0
      %2576 = vmatprep.subr.bf16.mxu0 0
      %2577 = vmatpush1.bf16.msra.mxu0 0
      %2578 = vmatprep.mubr.bf16.mxu0 0
      %2579 = vmatmul.mubr.bf16.gmra.mrb[0].mxu0 %v2435
      %v2580 = vpop.f32.mrb[0].mxu0
      %v2581 = vadd.f32 0.0, %v2580
      %v2582 = vpop.f32.mrb[0].mxu0
      %v2583 = vadd.f32 0.0, %v2582
      %v2584 = vpop.f32.mrb[0].mxu0
      %v2585 = vpop.f32.mrb[0].mxu0
      %2586 = vdwg.mxu0
      %2587 = vmatprep.subr.bf16.mxu0 %v2459
      %2588 = vmatpush1.bf16.msra.mxu0 %v2456
      %2589 = vmatprep.subr.bf16.mxu0 0
      %2590 = vmatpush1.bf16.msra.mxu0 0
      %2591 = vmatprep.subr.bf16.mxu0 0
      %2592 = vmatpush1.bf16.msra.mxu0 0
      %2593 = vmatprep.subr.bf16.mxu0 0
      %2594 = vmatpush1.bf16.msra.mxu0 0
      %2595 = vmatprep.subr.bf16.mxu0 0
      %2596 = vmatpush1.bf16.msra.mxu0 0
      %2597 = vmatprep.subr.bf16.mxu0 0
      %2598 = vmatpush1.bf16.msra.mxu0 0
      %2599 = vmatprep.subr.bf16.mxu0 0
      %2600 = vmatpush1.bf16.msra.mxu0 0
      %2601 = vmatprep.subr.bf16.mxu0 0
      %2602 = vmatpush1.bf16.msra.mxu0 0
      %2603 = vmatprep.subr.bf16.mxu0 0
      %2604 = vmatpush1.bf16.msra.mxu0 0
      %2605 = vmatprep.subr.bf16.mxu0 0
      %2606 = vmatpush1.bf16.msra.mxu0 0
      %2607 = vmatprep.subr.bf16.mxu0 0
      %2608 = vmatpush1.bf16.msra.mxu0 0
      %2609 = vmatprep.subr.bf16.mxu0 0
      %2610 = vmatpush1.bf16.msra.mxu0 0
      %2611 = vmatprep.subr.bf16.mxu0 0
      %2612 = vmatpush1.bf16.msra.mxu0 0
      %2613 = vmatprep.subr.bf16.mxu0 0
      %2614 = vmatpush1.bf16.msra.mxu0 0
      %2615 = vmatprep.subr.bf16.mxu0 0
      %2616 = vmatpush1.bf16.msra.mxu0 0
      %2617 = vmatprep.subr.bf16.mxu0 0
      %2618 = vmatpush1.bf16.msra.mxu0 0
      %2619 = vmatprep.mubr.bf16.mxu0 0
      %2620 = vmatmul.mubr.bf16.gmra.mrb[0].mxu0 %v2435
      %v2621 = vpop.f32.mrb[0].mxu0
      %v2622 = vadd.f32 0.0, %v2621
      %v2623 = vpop.f32.mrb[0].mxu0
      %v2624 = vadd.f32 0.0, %v2623
      %v2625 = vpop.f32.mrb[0].mxu0
      %v2626 = vpop.f32.mrb[0].mxu0
      %2627 = vdwg.mxu0
      %2628 = vmatprep.subr.bf16.mxu0 0
      %2629 = vmatpush1.bf16.msra.mxu0 %v2462
      %2630 = vmatprep.subr.bf16.mxu0 0
      %2631 = vmatpush1.bf16.msra.mxu0 0
      %2632 = vmatprep.subr.bf16.mxu0 0
      %2633 = vmatpush1.bf16.msra.mxu0 0
      %2634 = vmatprep.subr.bf16.mxu0 0
      %2635 = vmatpush1.bf16.msra.mxu0 0
      %2636 = vmatprep.subr.bf16.mxu0 0
      %2637 = vmatpush1.bf16.msra.mxu0 0
      %2638 = vmatprep.subr.bf16.mxu0 0
      %2639 = vmatpush1.bf16.msra.mxu0 0
      %2640 = vmatprep.subr.bf16.mxu0 0
      %2641 = vmatpush1.bf16.msra.mxu0 0
      %2642 = vmatprep.subr.bf16.mxu0 0
      %2643 = vmatpush1.bf16.msra.mxu0 0
      %2644 = vmatprep.subr.bf16.mxu0 0
      %2645 = vmatpush1.bf16.msra.mxu0 0
      %2646 = vmatprep.subr.bf16.mxu0 0
      %2647 = vmatpush1.bf16.msra.mxu0 0
      %2648 = vmatprep.subr.bf16.mxu0 0
      %2649 = vmatpush1.bf16.msra.mxu0 0
      %2650 = vmatprep.subr.bf16.mxu0 0
      %2651 = vmatpush1.bf16.msra.mxu0 0
      %2652 = vmatprep.subr.bf16.mxu0 0
      %2653 = vmatpush1.bf16.msra.mxu0 0
      %2654 = vmatprep.subr.bf16.mxu0 0
      %2655 = vmatpush1.bf16.msra.mxu0 0
      %2656 = vmatprep.subr.bf16.mxu0 0
      %2657 = vmatpush1.bf16.msra.mxu0 0
      %2658 = vmatprep.subr.bf16.mxu0 0
      %2659 = vmatpush1.bf16.msra.mxu0 0
      %2660 = vmatprep.mubr.bf16.mxu0 0
      %2661 = vmatmul.mubr.bf16.gmra.mrb[0].mxu0 %v2435
      %v2662 = vpop.f32.mrb[0].mxu0
      %v2663 = vadd.f32 0.0, %v2662
      %v2664 = vpop.f32.mrb[0].mxu0
      %v2665 = vpop.f32.mrb[0].mxu0
      %v2666 = vpop.f32.mrb[0].mxu0
      %2667 = vdwg.mxu0
      %v2668 = vadd.f32 %v2393, %v2499
      %v2669 = vadd.f32 %v2394, %v2501
      %v2670 = vadd.f32 %v2395, %v2540
      %v2671 = vadd.f32 %v2396, %v2542
      %v2672 = vadd.f32 %v2397, %v2581
      %v2673 = vadd.f32 %v2398, %v2583
      %v2674 = vadd.f32 %v2399, %v2622
      %v2675 = vadd.f32 %v2400, %v2624
      %v2676 = vadd.f32 %v2401, %v2663
      %v2677 = vld [vmem:[%s2] sm:$0xff]
      %2679 = vset.pattern.permute.xlu0 0
      %2680 = vperm.xlu0 %2679, %v2677
      %v2681 = vpop.permute.xlu0 %2680
      %v2683 = vadd.f32 %v2668, %v2681
      %v2684 = vadd.f32 %v2669, %v2681
      %v2685 = vadd.f32 %v2670, %v2681
      %v2686 = vadd.f32 %v2671, %v2681
      %v2687 = vadd.f32 %v2672, %v2681
      %v2688 = vadd.f32 %v2673, %v2681
      %v2689 = vadd.f32 %v2674, %v2681
      %v2690 = vadd.f32 %v2675, %v2681
      %v2691 = vadd.f32 %v2676, %v2681
      %v2692 = vsub.f32 0.0, %v2683
      %v2693 = vsub.f32 0.0, %v2684
      %v2694 = vsub.f32 0.0, %v2685
      %v2695 = vsub.f32 0.0, %v2686
      %v2696 = vsub.f32 0.0, %v2687
      %v2697 = vsub.f32 0.0, %v2688
      %v2698 = vsub.f32 0.0, %v2689
      %v2699 = vsub.f32 0.0, %v2690
      %v2700 = vsub.f32 0.0, %v2691
      %v2701 = vmul.f32 %v2692, 1.442695
      %v2702 = vpow.pop %v2701
      %v2703 = vmul.f32 %v2693, 1.442695
      %v2704 = vpow.pop %v2703
      %v2705 = vmul.f32 %v2694, 1.442695
      %v2706 = vpow.pop %v2705
      %v2707 = vmul.f32 %v2695, 1.442695
      %v2708 = vpow.pop %v2707
      %v2709 = vmul.f32 %v2696, 1.442695
      %v2710 = vpow.pop %v2709
      %v2711 = vmul.f32 %v2697, 1.442695
      %v2712 = vpow.pop %v2711
      %v2713 = vmul.f32 %v2698, 1.442695
      %v2714 = vpow.pop %v2713
      %v2715 = vmul.f32 %v2699, 1.442695
      %v2716 = vpow.pop %v2715
      %v2717 = vmul.f32 %v2700, 1.442695
      %v2718 = vpow.pop %v2717
      %v2719 = vadd.f32 %v2702, 1.0
      %v2720 = vadd.f32 %v2704, 1.0
      %v2721 = vadd.f32 %v2706, 1.0
      %v2722 = vadd.f32 %v2708, 1.0
      %v2723 = vadd.f32 %v2710, 1.0
      %v2724 = vadd.f32 %v2712, 1.0
      %v2725 = vadd.f32 %v2714, 1.0
      %v2726 = vadd.f32 %v2716, 1.0
      %v2727 = vadd.f32 %v2718, 1.0
      %v2728 = vrcp.pop %v2719
      %v2729 = vrcp.pop %v2720
      %v2730 = vrcp.pop %v2721
      %v2731 = vrcp.pop %v2722
      %v2732 = vrcp.pop %v2723
      %v2733 = vrcp.pop %v2724
      %v2734 = vrcp.pop %v2725
      %v2735 = vrcp.pop %v2726
      %v2736 = vrcp.pop %v2727
      %v2737 = vmin.f32 %v2728, 1.0
      %v2738 = vmin.f32 %v2729, 1.0
      %v2739 = vmin.f32 %v2730, 1.0
      %v2740 = vmin.f32 %v2731, 1.0
      %v2741 = vmin.f32 %v2732, 1.0
      %v2742 = vmin.f32 %v2733, 1.0
      %v2743 = vmin.f32 %v2734, 1.0
      %v2744 = vmin.f32 %v2735, 1.0
      %v2745 = vmin.f32 %v2736, 1.0
      %v2755 = vcombine.low %v2737, %v2738
      %v2756 = vcombine.low %v2739, %v2740
      %v2757 = vcombine.low %v2741, %v2742
      %v2758 = vcombine.low %v2743, %v2744
      %v2760 = vunpack.c.l.s4 1966171168
      %v2761 = vunpack.c.0.s8 %v2760
      %v2762 = vlaneseq
      %v2763 = vshrl.u32 %v2762, 7
      %v2764 = vsub.s32 %v2761, %v2763
      %v2765 = vrot.slane %v2755, %v2764
      %v2767 = vunpack.c.l.s4 1966171168
      %v2768 = vunpack.c.0.s8 %v2767
      %v2769 = vlaneseq
      %v2770 = vshrl.u32 %v2769, 7
      %v2771 = vsub.s32 %v2768, %v2770
      %v2772 = vrot.slane %v2756, %v2771
      %v2774 = vunpack.c.l.s4 1966171168
      %v2775 = vunpack.c.0.s8 %v2774
      %v2776 = vlaneseq
      %v2777 = vshrl.u32 %v2776, 7
      %v2778 = vsub.s32 %v2775, %v2777
      %v2779 = vrot.slane %v2757, %v2778
      %v2781 = vunpack.c.l.s4 1966171168
      %v2782 = vunpack.c.0.s8 %v2781
      %v2783 = vlaneseq
      %v2784 = vshrl.u32 %v2783, 7
      %v2785 = vsub.s32 %v2782, %v2784
      %v2786 = vrot.slane %v2758, %v2785
      %v2787 = vcombine.low %v2765, %v2772
      %v2788 = vcombine.low %v2779, %v2786
      %v2790 = vunpack.c.l.s4 1966171168
      %v2791 = vunpack.c.0.s8 %v2790
      %v2792 = vlaneseq
      %v2793 = vshrl.u32 %v2792, 7
      %v2794 = vsub.s32 %v2791, %v2793
      %v2795 = vrot.slane %v2787, %v2794
      %v2797 = vunpack.c.l.s4 1966171168
      %v2798 = vunpack.c.0.s8 %v2797
      %v2799 = vlaneseq
      %v2800 = vshrl.u32 %v2799, 7
      %v2801 = vsub.s32 %v2798, %v2800
      %v2802 = vrot.slane %v2788, %v2801
      %v2803 = vcombine.low %v2795, %v2802
      %v2805 = vunpack.c.l.s4 1966171168
      %v2806 = vunpack.c.0.s8 %v2805
      %v2807 = vlaneseq
      %v2808 = vshrl.u32 %v2807, 7
      %v2809 = vsub.s32 %v2806, %v2808
      %v2810 = vrot.slane %v2745, %v2809
      %v2812 = vunpack.c.l.s4 1966171168
      %v2813 = vunpack.c.0.s8 %v2812
      %v2814 = vlaneseq
      %v2815 = vshrl.u32 %v2814, 7
      %v2816 = vsub.s32 %v2813, %v2815
      %v2817 = vrot.slane %v2810, %v2816
      %2820 = vst [vmem:[%s204] sm:$0xff] %v2803
      %v2821 = vlaneseq
      %vm2822 = vcmp.ge.s32.totalorder %v2821, 0
      %vm2823 = vcmp.lt.s32.totalorder %v2821, 64
      %vm2824 = vmand %vm2822, %vm2823
      %2825 = vst.msk [vmem:[%s204 + $0x8] sm:$0x1] %vm2824, %v2817
      %p2826 = scmp.lt.s32.totalorder %s18, 1
      %s2827 = scalar_select %p2826, %s18, 1
      %p2828 = scmp.lt.s32.totalorder %s19, 0
      %s2829 = scalar_select %p2828, %s19, 0
      %s2830 = smul.addr %s2829, 9
      %s2831 = smul.addr %s2827, 9
      %s2832 = sadd.s32 %s2830, %s2831
      %s2833 = scalar_lea.vmem %s3, %s2832
      // Predicated region
      $region33: #{decoder_layer_forward.5} parent=31 // pred_check
        %p2834 = pneg %p116
      $region34: #{decoder_layer_forward.5} parent=31 // pred_check_branch
        %2836 = sbr.rel (%p2834) target = $region36
      $region35: #{decoder_layer_forward.5} parent=31 // pred_region
        _
      $region36: #{decoder_layer_forward.5} parent=31 // pred_fallthru
        _
    $region32: #{decoder_layer_forward.5} parent=5 // pred_fallthru
      _
    %p2837 = scmp.le.s32.totalorder 2, %s9
    // Predicated region
    $region37: #{decoder_layer_forward.5} parent=5 // pred_check
      %p2838 = pneg %p2837
    $region38: #{decoder_layer_forward.5} parent=5 // pred_check_branch
      %2840 = sbr.rel (%p2838) target = $region40
    $region39: #{decoder_layer_forward.5} parent=5 // pred_region
      %s2841 = ssub.s32 %s9, 2
      // Predicated region
      $region41: #{decoder_layer_forward.5} parent=39 // pred_check
        %p2842 = pneg %p122
      $region42: #{decoder_layer_forward.5} parent=39 // pred_check_branch
        %2844 = sbr.rel (%p2842) target = $region44
      $region43: #{decoder_layer_forward.5} parent=39 // pred_region
        %p2845 = scmp.lt.s32.totalorder %s20, 1
        %s2846 = scalar_select %p2845, %s20, 1
        %p2847 = scmp.lt.s32.totalorder %s21, 0
        %s2848 = scalar_select %p2847, %s21, 0
        %s2849 = smul.addr %s2848, 9
        %s2850 = smul.addr %s2846, 9
        %s2851 = sadd.s32 %s2849, %s2850
        %s2852 = scalar_lea.vmem %s3, %s2851
      $region44: #{decoder_layer_forward.5} parent=39 // pred_fallthru
        _
    $region40: #{decoder_layer_forward.5} parent=5 // pred_fallthru
      _
  $region6: #{decoder_layer_forward.5} parent=0 // loop_footer
    %s13 = sadd.s32 1, %s9
  $region7: #{decoder_layer_forward.5} parent=0 // loop_footer_branch
    %8 = sbr.rel target = $region3
  $region8: #{decoder_layer_forward.5} parent=0 // loop_exit
    _

// kernel: decoder_layer_forward.4
$region0: #{decoder_layer_forward.4}
  #allocation0 [shape = 'u32[]', space=smem, size = 0x4, offset = 0x4, fixed_abs, tag = 'smem constant byte address 0x4 - core index']
  #allocation1 [shape = 'u32[144,128]{1,0:T(1,128)}', space=vmem, size = 0x12000, scoped, tag = 'internal scratch']
  %s0 = inlined_call_operand.vmem [shape: bf16[2,1,8,1190], index: 0, kind: input, shape index: {}]
  %s1 = inlined_call_operand.vmem [shape: bf16[2,1,4,1190], index: 1, kind: input, shape index: {}]
  %s2 = inlined_call_operand.vmem [shape: bf16[9,8,8], index: 2, kind: input, shape index: {}]
  %s3 = inlined_call_operand.vmem [shape: bf16[9,8,4], index: 3, kind: input, shape index: {}]
  %s4 = inlined_call_operand.vmem [shape: f32[8,1], index: 4, kind: input, shape index: {}]
  %s5 = inlined_call_operand.vmem [shape: f32[2,1,8,1088], index: 5, kind: output, shape index: {}]
  %s6 = sld [smem:[#allocation0]]
  $region53: #{decoder_layer_forward.4} parent=0
    _
  %s8 = ssub.s32 1, %s6
  %s9 = scalar_select 0, %s8, %s6
  loop: start=0, step=1, limit=4
  $region2: #{decoder_layer_forward.4} parent=0 // loop_pre_header
    _
  $region3: #{decoder_layer_forward.4} parent=0 // loop_header
    %s11 = sphi 0, %s15
    %p12 = scmp.ge.s32.totalorder %s11, 4
    %s18 = sphi 0, %s30
    %s19 = sphi 0, %s26
    %s20 = sphi 0, %s18
    %s21 = sphi 0, %s19
    %s22 = sphi 0, %s20
    %s23 = sphi 0, %s21
    %s35 = sphi 0, %s37
    %s38 = sphi 0, %s35
    %s39 = sphi 0, %s38
    %s55 = sphi 0, %s39
    %s63 = sphi 0, %s65
    %s66 = sphi 0, %s63
    %s67 = sphi 0, %s66
    %s83 = sphi 0, %s67
    %s87 = sphi 0, %s87
    %s89 = sphi 0, %s87
    %s90 = sphi 0, %s89
    %s104 = sphi 0, %s90
    %s108 = sphi 0, %s108
    %s110 = sphi 0, %s108
    %s111 = sphi 0, %s110
    %s125 = sphi 0, %s111
    %s129 = sphi 0, %s129
    %s131 = sphi 0, %s129
    %s132 = sphi 0, %s131
    %s146 = sphi 0, %s132
    %s154 = sphi 0, %s156
    %s157 = sphi 0, %s154
    %s158 = sphi 0, %s157
    %s174 = sphi 0, %s158
  $region4: #{decoder_layer_forward.4} parent=0 // loop_header_branch
    %14 = sbr.rel (%p12) target = $region8
  $region5: #{decoder_layer_forward.4} parent=0 // loop_body
    %s16 = ssub.s32 %s11, 1
    %s17 = ssub.s32 %s11, 2
    %s24 = sadd.s32 1, %s19
    %p25 = scmp.ge.s32.totalorder %s24, 1
    %s26 = scalar_select %p25, 0, %s24
    %s27 = sadd.s32 1, %s18
    %s28 = scalar_select %p25, %s27, %s18
    %p29 = scmp.ge.s32.totalorder %s28, 2
    %s30 = scalar_select %p29, 0, %s28
    %s31 = ssub.s32 %s18, %s30
    %s32 = ssub.s32 %s19, %s26
    %s33 = sor.u32 %s31, %s32
    %p34 = scmp.eq.s32.totalorder %s33, 0
    %s36 = sadd.s32 %s35, 1
    %s37 = scalar_select %p34, %s35, %s36
    %p40 = pneg %p34
    %p41 = scmp.eq.s32.totalorder %s11, 1
    %p42 = por %p40, %p41
    %p43 = scmp.ne.s32.totalorder %s35, %s38
    %p44 = scmp.eq.s32.totalorder %s11, 0
    %p45 = por %p43, %p44
    %p46 = scmp.ne.s32.totalorder %s35, %s38
    %p47 = scmp.eq.s32.totalorder %s16, 1
    %p48 = por %p46, %p47
    %p49 = scmp.ne.s32.totalorder %s38, %s39
    %p50 = scmp.eq.s32.totalorder %s16, 0
    %p51 = por %p49, %p50
    %p52 = scmp.ne.s32.totalorder %s38, %s39
    %p53 = scmp.eq.s32.totalorder %s17, 1
    %p54 = por %p52, %p53
    %p56 = scmp.ne.s32.totalorder %s39, %s55
    %p57 = scmp.eq.s32.totalorder %s17, 0
    %p58 = por %p56, %p57
    %s59 = ssub.s32 %s18, %s30
    %s60 = ssub.s32 %s19, %s26
    %s61 = sor.u32 %s59, %s60
    %p62 = scmp.eq.s32.totalorder %s61, 0
    %s64 = sadd.s32 %s63, 1
    %s65 = scalar_select %p62, %s63, %s64
    %p68 = pneg %p62
    %p69 = scmp.eq.s32.totalorder %s11, 1
    %p70 = por %p68, %p69
    %p71 = scmp.ne.s32.totalorder %s63, %s66
    %p72 = scmp.eq.s32.totalorder %s11, 0
    %p73 = por %p71, %p72
    %p74 = scmp.ne.s32.totalorder %s63, %s66
    %p75 = scmp.eq.s32.totalorder %s16, 1
    %p76 = por %p74, %p75
    %p77 = scmp.ne.s32.totalorder %s66, %s67
    %p78 = scmp.eq.s32.totalorder %s16, 0
    %p79 = por %p77, %p78
    %p80 = scmp.ne.s32.totalorder %s66, %s67
    %p81 = scmp.eq.s32.totalorder %s17, 1
    %p82 = por %p80, %p81
    %p84 = scmp.ne.s32.totalorder %s67, %s83
    %p85 = scmp.eq.s32.totalorder %s17, 0
    %p86 = por %p84, %p85
    %s88 = sadd.s32 %s87, 1
    %p91 = scmp.eq.s32.totalorder %s11, 1
    %p92 = scmp.ne.s32.totalorder %s87, %s89
    %p93 = scmp.eq.s32.totalorder %s11, 0
    %p94 = por %p92, %p93
    %p95 = scmp.ne.s32.totalorder %s87, %s89
    %p96 = scmp.eq.s32.totalorder %s16, 1
    %p97 = por %p95, %p96
    %p98 = scmp.ne.s32.totalorder %s89, %s90
    %p99 = scmp.eq.s32.totalorder %s16, 0
    %p100 = por %p98, %p99
    %p101 = scmp.ne.s32.totalorder %s89, %s90
    %p102 = scmp.eq.s32.totalorder %s17, 1
    %p103 = por %p101, %p102
    %p105 = scmp.ne.s32.totalorder %s90, %s104
    %p106 = scmp.eq.s32.totalorder %s17, 0
    %p107 = por %p105, %p106
    %s109 = sadd.s32 %s108, 1
    %p112 = scmp.eq.s32.totalorder %s11, 1
    %p113 = scmp.ne.s32.totalorder %s108, %s110
    %p114 = scmp.eq.s32.totalorder %s11, 0
    %p115 = por %p113, %p114
    %p116 = scmp.ne.s32.totalorder %s108, %s110
    %p117 = scmp.eq.s32.totalorder %s16, 1
    %p118 = por %p116, %p117
    %p119 = scmp.ne.s32.totalorder %s110, %s111
    %p120 = scmp.eq.s32.totalorder %s16, 0
    %p121 = por %p119, %p120
    %p122 = scmp.ne.s32.totalorder %s110, %s111
    %p123 = scmp.eq.s32.totalorder %s17, 1
    %p124 = por %p122, %p123
    %p126 = scmp.ne.s32.totalorder %s111, %s125
    %p127 = scmp.eq.s32.totalorder %s17, 0
    %p128 = por %p126, %p127
    %s130 = sadd.s32 %s129, 1
    %p133 = scmp.eq.s32.totalorder %s11, 1
    %p134 = scmp.ne.s32.totalorder %s129, %s131
    %p135 = scmp.eq.s32.totalorder %s11, 0
    %p136 = por %p134, %p135
    %p137 = scmp.ne.s32.totalorder %s129, %s131
    %p138 = scmp.eq.s32.totalorder %s16, 1
    %p139 = por %p137, %p138
    %p140 = scmp.ne.s32.totalorder %s131, %s132
    %p141 = scmp.eq.s32.totalorder %s16, 0
    %p142 = por %p140, %p141
    %p143 = scmp.ne.s32.totalorder %s131, %s132
    %p144 = scmp.eq.s32.totalorder %s17, 1
    %p145 = por %p143, %p144
    %p147 = scmp.ne.s32.totalorder %s132, %s146
    %p148 = scmp.eq.s32.totalorder %s17, 0
    %p149 = por %p147, %p148
    %s150 = ssub.s32 %s18, %s30
    %s151 = ssub.s32 %s19, %s26
    %s152 = sor.u32 %s150, %s151
    %p153 = scmp.eq.s32.totalorder %s152, 0
    %s155 = sadd.s32 %s154, 1
    %s156 = scalar_select %p153, %s154, %s155
    %p159 = pneg %p153
    %p160 = scmp.eq.s32.totalorder %s11, 1
    %p161 = por %p159, %p160
    %p162 = scmp.ne.s32.totalorder %s154, %s157
    %p163 = scmp.eq.s32.totalorder %s11, 0
    %p164 = por %p162, %p163
    %p165 = scmp.ne.s32.totalorder %s154, %s157
    %p166 = scmp.eq.s32.totalorder %s16, 1
    %p167 = por %p165, %p166
    %p168 = scmp.ne.s32.totalorder %s157, %s158
    %p169 = scmp.eq.s32.totalorder %s16, 0
    %p170 = por %p168, %p169
    %p171 = scmp.ne.s32.totalorder %s157, %s158
    %p172 = scmp.eq.s32.totalorder %s17, 1
    %p173 = por %p171, %p172
    %p175 = scmp.ne.s32.totalorder %s158, %s174
    %p176 = scmp.eq.s32.totalorder %s17, 0
    %p177 = por %p175, %p176
    %p178 = scmp.le.s32.totalorder 1, %s11
    %p179 = scmp.lt.s32.totalorder %s11, 3
    %p180 = pnand %p178, %p179
    %p181 = pneg %p180
    // Predicated region
    $region9: #{decoder_layer_forward.4} parent=5 // pred_check
      _
    $region10: #{decoder_layer_forward.4} parent=5 // pred_check_branch
      %183 = sbr.rel (%p180) target = $region12
    $region11: #{decoder_layer_forward.4} parent=5 // pred_region
      %s184 = ssub.s32 %s11, 1
      // Predicated region
      $region13: #{decoder_layer_forward.4} parent=11 // pred_check
        %p185 = pneg %p100
      $region14: #{decoder_layer_forward.4} parent=11 // pred_check_branch
        %187 = sbr.rel (%p185) target = $region16
      $region15: #{decoder_layer_forward.4} parent=11 // pred_region
        _
      $region16: #{decoder_layer_forward.4} parent=11 // pred_fallthru
        _
      // Predicated region
      $region17: #{decoder_layer_forward.4} parent=11 // pred_check
        %p188 = pneg %p121
      $region18: #{decoder_layer_forward.4} parent=11 // pred_check_branch
        %190 = sbr.rel (%p188) target = $region20
      $region19: #{decoder_layer_forward.4} parent=11 // pred_region
        _
      $region20: #{decoder_layer_forward.4} parent=11 // pred_fallthru
        _
      // Predicated region
      $region21: #{decoder_layer_forward.4} parent=11 // pred_check
        %p191 = pneg %p142
      $region22: #{decoder_layer_forward.4} parent=11 // pred_check_branch
        %193 = sbr.rel (%p191) target = $region24
      $region23: #{decoder_layer_forward.4} parent=11 // pred_region
        _
      $region24: #{decoder_layer_forward.4} parent=11 // pred_fallthru
        _
    $region12: #{decoder_layer_forward.4} parent=5 // pred_fallthru
      _
    %p194 = scmp.lt.s32.totalorder %s11, 2
    // Predicated region
    $region25: #{decoder_layer_forward.4} parent=5 // pred_check
      %p195 = pneg %p194
    $region26: #{decoder_layer_forward.4} parent=5 // pred_check_branch
      %197 = sbr.rel (%p195) target = $region28
    $region27: #{decoder_layer_forward.4} parent=5 // pred_region
      // Predicated region
      $region29: #{decoder_layer_forward.4} parent=27 // pred_check
        %p198 = pneg %p45
      $region30: #{decoder_layer_forward.4} parent=27 // pred_check_branch
        %200 = sbr.rel (%p198) target = $region32
      $region31: #{decoder_layer_forward.4} parent=27 // pred_region
        %p201 = scmp.lt.s32.totalorder %s18, 1
        %s202 = scalar_select %p201, %s18, 1
        %p203 = scmp.lt.s32.totalorder %s19, 0
        %s204 = scalar_select %p203, %s19, 0
        %s205 = smul.addr %s204, 10
        %s206 = smul.addr %s202, 10
        %s207 = sadd.s32 %s205, %s206
        %s208 = smul.addr %s207, 4
        %s209 = scalar_lea.vmem %s0, %s208
      $region32: #{decoder_layer_forward.4} parent=27 // pred_fallthru
        _
      // Predicated region
      $region33: #{decoder_layer_forward.4} parent=27 // pred_check
        %p210 = pneg %p73
      $region34: #{decoder_layer_forward.4} parent=27 // pred_check_branch
        %212 = sbr.rel (%p210) target = $region36
      $region35: #{decoder_layer_forward.4} parent=27 // pred_region
        %p213 = scmp.lt.s32.totalorder %s18, 1
        %s214 = scalar_select %p213, %s18, 1
        %p215 = scmp.lt.s32.totalorder %s19, 0
        %s216 = scalar_select %p215, %s19, 0
        %s217 = smul.addr %s216, 10
        %s218 = smul.addr %s214, 10
        %s219 = sadd.s32 %s217, %s218
        %s220 = smul.addr %s219, 2
        %s221 = scalar_lea.vmem %s1, %s220
      $region36: #{decoder_layer_forward.4} parent=27 // pred_fallthru
        _
    $region28: #{decoder_layer_forward.4} parent=5 // pred_fallthru
      _
    %p222 = scmp.le.s32.totalorder 1, %s11
    %p223 = scmp.lt.s32.totalorder %s11, 3
    %p224 = pnand %p222, %p223
    %p225 = pneg %p224
    // Predicated region
    $region37: #{decoder_layer_forward.4} parent=5 // pred_check
      _
    $region38: #{decoder_layer_forward.4} parent=5 // pred_check_branch
      %227 = sbr.rel (%p224) target = $region40
    $region39: #{decoder_layer_forward.4} parent=5 // pred_region
      %s228 = ssub.s32 %s11, 1
      %p229 = scmp.lt.s32.totalorder %s20, 1
      %s230 = scalar_select %p229, %s20, 1
      %p231 = scmp.lt.s32.totalorder %s21, 0
      %s232 = scalar_select %p231, %s21, 0
      %s233 = smul.addr %s232, 10
      %s234 = smul.addr %s230, 10
      %s235 = sadd.s32 %s233, %s234
      %s236 = smul.addr %s235, 4
      %s237 = scalar_lea.vmem %s0, %s236
      %p238 = pneg %p51
      %p239 = pneg %p48
      %p240 = scmp.lt.s32.totalorder %s20, 1
      %s241 = scalar_select %p240, %s20, 1
      %p242 = scmp.lt.s32.totalorder %s21, 0
      %s243 = scalar_select %p242, %s21, 0
      %s244 = smul.addr %s243, 10
      %s245 = smul.addr %s241, 10
      %s246 = sadd.s32 %s244, %s245
      %s247 = smul.addr %s246, 2
      %s248 = scalar_lea.vmem %s1, %s247
      %p249 = pneg %p79
      %p250 = pneg %p76
      %p251 = pneg %p100
      %p252 = pneg %p97
      %p253 = pneg %p121
      %p254 = pneg %p118
      %p255 = pneg %p142
      %p256 = pneg %p139
      %p257 = pneg %p170
      %p258 = pneg %p167
      %p259 = scmp.lt.s32.totalorder %s20, 1
      %s260 = scalar_select %p259, %s20, 1
      %p261 = scmp.lt.s32.totalorder %s21, 0
      %s262 = scalar_select %p261, %s21, 0
      %s263 = smul.addr %s262, 9
      %s264 = smul.addr %s260, 9
      %s265 = sadd.s32 %s263, %s264
      %s266 = smul.addr %s265, 8
      %s267 = scalar_lea.vmem %s5, %s266
      %p268 = scmp.lt.s32.totalorder %s20, 1
      %s269 = scalar_select %p268, %s20, 1
      %p270 = scmp.lt.s32.totalorder %s21, 0
      %s271 = scalar_select %p270, %s21, 0
      %s272 = smul.addr %s271, 10
      %s273 = smul.addr %s269, 10
      %s274 = sadd.s32 %s272, %s273
      %s275 = smul.addr %s274, 4
      %s276 = scalar_lea.vmem %s0, %s275
      %p277 = scmp.lt.s32.totalorder %s20, 1
      %s278 = scalar_select %p277, %s20, 1
      %p279 = scmp.lt.s32.totalorder %s21, 0
      %s280 = scalar_select %p279, %s21, 0
      %s281 = smul.addr %s280, 10
      %s282 = smul.addr %s278, 10
      %s283 = sadd.s32 %s281, %s282
      %s284 = smul.addr %s283, 2
      %s285 = scalar_lea.vmem %s1, %s284
      %p286 = scmp.lt.s32.totalorder %s20, 1
      %s287 = scalar_select %p286, %s20, 1
      %p288 = scmp.lt.s32.totalorder %s21, 0
      %s289 = scalar_select %p288, %s21, 0
      %s290 = smul.addr %s289, 9
      %s291 = smul.addr %s287, 9
      %s292 = sadd.s32 %s290, %s291
      %s293 = smul.addr %s292, 8
      %s294 = scalar_lea.vmem %s5, %s293
      %v296 = vld [vmem:[%s276] sm:$0xff]
      %v297 = vld [vmem:[%s276 + $0x8] sm:$0xff]
      %v298 = vld [vmem:[%s276 + $0x10] sm:$0xff]
      %v299 = vld [vmem:[%s276 + $0x18] sm:$0xff]
      %v300 = vld [vmem:[%s276 + $0x20] sm:$0xf]
      %v301 = vld [vmem:[%s2] sm:$0xf]
      %s302 = scalar_lea.vmem %s2, 4
      %v303 = vld [vmem:[%s302] sm:$0xf]
      %v309 = vunpack.c.l.b16 %v296
      %v310 = vunpack.c.h.b16 %v296
      %v311 = vunpack.c.l.b16 %v297
      %v312 = vunpack.c.h.b16 %v297
      %v313 = vunpack.c.l.b16 %v298
      %v314 = vunpack.c.h.b16 %v298
      %v315 = vunpack.c.l.b16 %v299
      %v316 = vunpack.c.h.b16 %v299
      %v317 = vunpack.c.l.b16 %v300
      %v318 = vpack.c.b16 %v309, %v309
      %v319 = vpack.c.b16 %v310, %v310
      %v320 = vpack.c.b16 %v311, %v311
      %v321 = vpack.c.b16 %v312, %v312
      %v322 = vpack.c.b16 %v313, %v313
      %v323 = vpack.c.b16 %v314, %v314
      %v324 = vpack.c.b16 %v315, %v315
      %v325 = vpack.c.b16 %v316, %v316
      %v326 = vpack.c.b16 %v317, %v317
      %327 = vrot.lane.b32.xlu0 %v318, 127
      %v328 = vpop.permute.xlu0 %327
      %329 = vrot.lane.b32.xlu0 %v319, 127
      %v330 = vpop.permute.xlu0 %329
      %331 = vrot.lane.b32.xlu0 %v320, 127
      %v332 = vpop.permute.xlu0 %331
      %333 = vrot.lane.b32.xlu0 %v321, 127
      %v334 = vpop.permute.xlu0 %333
      %335 = vrot.lane.b32.xlu0 %v322, 127
      %v336 = vpop.permute.xlu0 %335
      %337 = vrot.lane.b32.xlu0 %v323, 127
      %v338 = vpop.permute.xlu0 %337
      %339 = vrot.lane.b32.xlu0 %v324, 127
      %v340 = vpop.permute.xlu0 %339
      %341 = vrot.lane.b32.xlu0 %v325, 127
      %v342 = vpop.permute.xlu0 %341
      %343 = vrot.lane.b32.xlu0 %v326, 127
      %v344 = vpop.permute.xlu0 %343
      %vm345 = vcmask 1039360
      %v346 = vsel %vm345, %v328, %v330
      %v347 = vsel %vm345, %v330, %v332
      %v348 = vsel %vm345, %v332, %v334
      %v349 = vsel %vm345, %v334, %v336
      %v350 = vsel %vm345, %v336, %v338
      %v351 = vsel %vm345, %v338, %v340
      %v352 = vsel %vm345, %v340, %v342
      %v353 = vsel %vm345, %v342, %v344
      %vm354 = vcmask 64512
      %v356 = vsel %vm354, %v303, 0
      %vm358 = vcmask 1043456
      %v360 = vsel %vm358, %v346, 0
      %v363 = vsel %vm358, %v347, 0
      %v366 = vsel %vm358, %v348, 0
      %v369 = vsel %vm358, %v349, 0
      %v372 = vsel %vm358, %v350, 0
      %v375 = vsel %vm358, %v351, 0
      %v378 = vsel %vm358, %v352, 0
      %v381 = vsel %vm358, %v353, 0
      %v384 = vsel %vm358, %v344, 0
      %386 = vmatprep.subr.bf16.mxu0 %v363
      %387 = vmatpush1.bf16.msra.mxu0 %v360
      %388 = vmatprep.subr.bf16.mxu0 0
      %389 = vmatpush1.bf16.msra.mxu0 0
      %390 = vmatprep.subr.bf16.mxu0 0
      %391 = vmatpush1.bf16.msra.mxu0 0
      %392 = vmatprep.subr.bf16.mxu0 0
      %393 = vmatpush1.bf16.msra.mxu0 0
      %394 = vmatprep.subr.bf16.mxu0 0
      %395 = vmatpush1.bf16.msra.mxu0 0
      %396 = vmatprep.subr.bf16.mxu0 0
      %397 = vmatpush1.bf16.msra.mxu0 0
      %398 = vmatprep.subr.bf16.mxu0 0
      %399 = vmatpush1.bf16.msra.mxu0 0
      %400 = vmatprep.subr.bf16.mxu0 0
      %401 = vmatpush1.bf16.msra.mxu0 0
      %402 = vmatprep.subr.bf16.mxu0 0
      %403 = vmatpush1.bf16.msra.mxu0 0
      %404 = vmatprep.subr.bf16.mxu0 0
      %405 = vmatpush1.bf16.msra.mxu0 0
      %406 = vmatprep.subr.bf16.mxu0 0
      %407 = vmatpush1.bf16.msra.mxu0 0
      %408 = vmatprep.subr.bf16.mxu0 0
      %409 = vmatpush1.bf16.msra.mxu0 0
      %410 = vmatprep.subr.bf16.mxu0 0
      %411 = vmatpush1.bf16.msra.mxu0 0
      %412 = vmatprep.subr.bf16.mxu0 0
      %413 = vmatpush1.bf16.msra.mxu0 0
      %414 = vmatprep.subr.bf16.mxu0 0
      %415 = vmatpush1.bf16.msra.mxu0 0
      %416 = vmatprep.subr.bf16.mxu0 0
      %417 = vmatpush1.bf16.msra.mxu0 0
      %418 = vmatprep.mubr.bf16.mxu0 0
      %419 = vmatmul.mubr.bf16.gmra.mrb[0].mxu0 %v356
      %v420 = vpop.f32.mrb[0].mxu0
      %v421 = vadd.f32 0.0, %v420
      %v422 = vpop.f32.mrb[0].mxu0
      %v423 = vadd.f32 0.0, %v422
      %v424 = vpop.f32.mrb[0].mxu0
      %v425 = vpop.f32.mrb[0].mxu0
      %426 = vdwg.mxu0
      %427 = vmatprep.subr.bf16.mxu0 %v369
      %428 = vmatpush1.bf16.msra.mxu0 %v366
      %429 = vmatprep.subr.bf16.mxu0 0
      %430 = vmatpush1.bf16.msra.mxu0 0
      %431 = vmatprep.subr.bf16.mxu0 0
      %432 = vmatpush1.bf16.msra.mxu0 0
      %433 = vmatprep.subr.bf16.mxu0 0
      %434 = vmatpush1.bf16.msra.mxu0 0
      %435 = vmatprep.subr.bf16.mxu0 0
      %436 = vmatpush1.bf16.msra.mxu0 0
      %437 = vmatprep.subr.bf16.mxu0 0
      %438 = vmatpush1.bf16.msra.mxu0 0
      %439 = vmatprep.subr.bf16.mxu0 0
      %440 = vmatpush1.bf16.msra.mxu0 0
      %441 = vmatprep.subr.bf16.mxu0 0
      %442 = vmatpush1.bf16.msra.mxu0 0
      %443 = vmatprep.subr.bf16.mxu0 0
      %444 = vmatpush1.bf16.msra.mxu0 0
      %445 = vmatprep.subr.bf16.mxu0 0
      %446 = vmatpush1.bf16.msra.mxu0 0
      %447 = vmatprep.subr.bf16.mxu0 0
      %448 = vmatpush1.bf16.msra.mxu0 0
      %449 = vmatprep.subr.bf16.mxu0 0
      %450 = vmatpush1.bf16.msra.mxu0 0
      %451 = vmatprep.subr.bf16.mxu0 0
      %452 = vmatpush1.bf16.msra.mxu0 0
      %453 = vmatprep.subr.bf16.mxu0 0
      %454 = vmatpush1.bf16.msra.mxu0 0
      %455 = vmatprep.subr.bf16.mxu0 0
      %456 = vmatpush1.bf16.msra.mxu0 0
      %457 = vmatprep.subr.bf16.mxu0 0
      %458 = vmatpush1.bf16.msra.mxu0 0
      %459 = vmatprep.mubr.bf16.mxu0 0
      %460 = vmatmul.mubr.bf16.gmra.mrb[0].mxu0 %v356
      %v461 = vpop.f32.mrb[0].mxu0
      %v462 = vadd.f32 0.0, %v461
      %v463 = vpop.f32.mrb[0].mxu0
      %v464 = vadd.f32 0.0, %v463
      %v465 = vpop.f32.mrb[0].mxu0
      %v466 = vpop.f32.mrb[0].mxu0
      %467 = vdwg.mxu0
      %468 = vmatprep.subr.bf16.mxu0 %v375
      %469 = vmatpush1.bf16.msra.mxu0 %v372
      %470 = vmatprep.subr.bf16.mxu0 0
      %471 = vmatpush1.bf16.msra.mxu0 0
      %472 = vmatprep.subr.bf16.mxu0 0
      %473 = vmatpush1.bf16.msra.mxu0 0
      %474 = vmatprep.subr.bf16.mxu0 0
      %475 = vmatpush1.bf16.msra.mxu0 0
      %476 = vmatprep.subr.bf16.mxu0 0
      %477 = vmatpush1.bf16.msra.mxu0 0
      %478 = vmatprep.subr.bf16.mxu0 0
      %479 = vmatpush1.bf16.msra.mxu0 0
      %480 = vmatprep.subr.bf16.mxu0 0
      %481 = vmatpush1.bf16.msra.mxu0 0
      %482 = vmatprep.subr.bf16.mxu0 0
      %483 = vmatpush1.bf16.msra.mxu0 0
      %484 = vmatprep.subr.bf16.mxu0 0
      %485 = vmatpush1.bf16.msra.mxu0 0
      %486 = vmatprep.subr.bf16.mxu0 0
      %487 = vmatpush1.bf16.msra.mxu0 0
      %488 = vmatprep.subr.bf16.mxu0 0
      %489 = vmatpush1.bf16.msra.mxu0 0
      %490 = vmatprep.subr.bf16.mxu0 0
      %491 = vmatpush1.bf16.msra.mxu0 0
      %492 = vmatprep.subr.bf16.mxu0 0
      %493 = vmatpush1.bf16.msra.mxu0 0
      %494 = vmatprep.subr.bf16.mxu0 0
      %495 = vmatpush1.bf16.msra.mxu0 0
      %496 = vmatprep.subr.bf16.mxu0 0
      %497 = vmatpush1.bf16.msra.mxu0 0
      %498 = vmatprep.subr.bf16.mxu0 0
      %499 = vmatpush1.bf16.msra.mxu0 0
      %500 = vmatprep.mubr.bf16.mxu0 0
      %501 = vmatmul.mubr.bf16.gmra.mrb[0].mxu0 %v356
      %v502 = vpop.f32.mrb[0].mxu0
      %v503 = vadd.f32 0.0, %v502
      %v504 = vpop.f32.mrb[0].mxu0
      %v505 = vadd.f32 0.0, %v504
      %v506 = vpop.f32.mrb[0].mxu0
      %v507 = vpop.f32.mrb[0].mxu0
      %508 = vdwg.mxu0
      %509 = vmatprep.subr.bf16.mxu0 %v381
      %510 = vmatpush1.bf16.msra.mxu0 %v378
      %511 = vmatprep.subr.bf16.mxu0 0
      %512 = vmatpush1.bf16.msra.mxu0 0
      %513 = vmatprep.subr.bf16.mxu0 0
      %514 = vmatpush1.bf16.msra.mxu0 0
      %515 = vmatprep.subr.bf16.mxu0 0
      %516 = vmatpush1.bf16.msra.mxu0 0
      %517 = vmatprep.subr.bf16.mxu0 0
      %518 = vmatpush1.bf16.msra.mxu0 0
      %519 = vmatprep.subr.bf16.mxu0 0
      %520 = vmatpush1.bf16.msra.mxu0 0
      %521 = vmatprep.subr.bf16.mxu0 0
      %522 = vmatpush1.bf16.msra.mxu0 0
      %523 = vmatprep.subr.bf16.mxu0 0
      %524 = vmatpush1.bf16.msra.mxu0 0
      %525 = vmatprep.subr.bf16.mxu0 0
      %526 = vmatpush1.bf16.msra.mxu0 0
      %527 = vmatprep.subr.bf16.mxu0 0
      %528 = vmatpush1.bf16.msra.mxu0 0
      %529 = vmatprep.subr.bf16.mxu0 0
      %530 = vmatpush1.bf16.msra.mxu0 0
      %531 = vmatprep.subr.bf16.mxu0 0
      %532 = vmatpush1.bf16.msra.mxu0 0
      %533 = vmatprep.subr.bf16.mxu0 0
      %534 = vmatpush1.bf16.msra.mxu0 0
      %535 = vmatprep.subr.bf16.mxu0 0
      %536 = vmatpush1.bf16.msra.mxu0 0
      %537 = vmatprep.subr.bf16.mxu0 0
      %538 = vmatpush1.bf16.msra.mxu0 0
      %539 = vmatprep.subr.bf16.mxu0 0
      %540 = vmatpush1.bf16.msra.mxu0 0
      %541 = vmatprep.mubr.bf16.mxu0 0
      %542 = vmatmul.mubr.bf16.gmra.mrb[0].mxu0 %v356
      %v543 = vpop.f32.mrb[0].mxu0
      %v544 = vadd.f32 0.0, %v543
      %v545 = vpop.f32.mrb[0].mxu0
      %v546 = vadd.f32 0.0, %v545
      %v547 = vpop.f32.mrb[0].mxu0
      %v548 = vpop.f32.mrb[0].mxu0
      %549 = vdwg.mxu0
      %550 = vmatprep.subr.bf16.mxu0 0
      %551 = vmatpush1.bf16.msra.mxu0 %v384
      %552 = vmatprep.subr.bf16.mxu0 0
      %553 = vmatpush1.bf16.msra.mxu0 0
      %554 = vmatprep.subr.bf16.mxu0 0
      %555 = vmatpush1.bf16.msra.mxu0 0
      %556 = vmatprep.subr.bf16.mxu0 0
      %557 = vmatpush1.bf16.msra.mxu0 0
      %558 = vmatprep.subr.bf16.mxu0 0
      %559 = vmatpush1.bf16.msra.mxu0 0
      %560 = vmatprep.subr.bf16.mxu0 0
      %561 = vmatpush1.bf16.msra.mxu0 0
      %562 = vmatprep.subr.bf16.mxu0 0
      %563 = vmatpush1.bf16.msra.mxu0 0
      %564 = vmatprep.subr.bf16.mxu0 0
      %565 = vmatpush1.bf16.msra.mxu0 0
      %566 = vmatprep.subr.bf16.mxu0 0
      %567 = vmatpush1.bf16.msra.mxu0 0
      %568 = vmatprep.subr.bf16.mxu0 0
      %569 = vmatpush1.bf16.msra.mxu0 0
      %570 = vmatprep.subr.bf16.mxu0 0
      %571 = vmatpush1.bf16.msra.mxu0 0
      %572 = vmatprep.subr.bf16.mxu0 0
      %573 = vmatpush1.bf16.msra.mxu0 0
      %574 = vmatprep.subr.bf16.mxu0 0
      %575 = vmatpush1.bf16.msra.mxu0 0
      %576 = vmatprep.subr.bf16.mxu0 0
      %577 = vmatpush1.bf16.msra.mxu0 0
      %578 = vmatprep.subr.bf16.mxu0 0
      %579 = vmatpush1.bf16.msra.mxu0 0
      %580 = vmatprep.subr.bf16.mxu0 0
      %581 = vmatpush1.bf16.msra.mxu0 0
      %582 = vmatprep.mubr.bf16.mxu0 0
      %583 = vmatmul.mubr.bf16.gmra.mrb[0].mxu0 %v356
      %v584 = vpop.f32.mrb[0].mxu0
      %v585 = vadd.f32 0.0, %v584
      %v586 = vpop.f32.mrb[0].mxu0
      %v587 = vpop.f32.mrb[0].mxu0
      %v588 = vpop.f32.mrb[0].mxu0
      %589 = vdwg.mxu0
      %v591 = vsel %vm354, %v301, 0
      %v594 = vsel %vm358, %v318, 0
      %v597 = vsel %vm358, %v319, 0
      %v600 = vsel %vm358, %v320, 0
      %v603 = vsel %vm358, %v321, 0
      %v606 = vsel %vm358, %v322, 0
      %v609 = vsel %vm358, %v323, 0
      %v612 = vsel %vm358, %v324, 0
      %v615 = vsel %vm358, %v325, 0
      %v618 = vsel %vm358, %v326, 0
      %620 = vmatprep.subr.bf16.mxu0 %v597
      %621 = vmatpush1.bf16.msra.mxu0 %v594
      %622 = vmatprep.subr.bf16.mxu0 0
      %623 = vmatpush1.bf16.msra.mxu0 0
      %624 = vmatprep.subr.bf16.mxu0 0
      %625 = vmatpush1.bf16.msra.mxu0 0
      %626 = vmatprep.subr.bf16.mxu0 0
      %627 = vmatpush1.bf16.msra.mxu0 0
      %628 = vmatprep.subr.bf16.mxu0 0
      %629 = vmatpush1.bf16.msra.mxu0 0
      %630 = vmatprep.subr.bf16.mxu0 0
      %631 = vmatpush1.bf16.msra.mxu0 0
      %632 = vmatprep.subr.bf16.mxu0 0
      %633 = vmatpush1.bf16.msra.mxu0 0
      %634 = vmatprep.subr.bf16.mxu0 0
      %635 = vmatpush1.bf16.msra.mxu0 0
      %636 = vmatprep.subr.bf16.mxu0 0
      %637 = vmatpush1.bf16.msra.mxu0 0
      %638 = vmatprep.subr.bf16.mxu0 0
      %639 = vmatpush1.bf16.msra.mxu0 0
      %640 = vmatprep.subr.bf16.mxu0 0
      %641 = vmatpush1.bf16.msra.mxu0 0
      %642 = vmatprep.subr.bf16.mxu0 0
      %643 = vmatpush1.bf16.msra.mxu0 0
      %644 = vmatprep.subr.bf16.mxu0 0
      %645 = vmatpush1.bf16.msra.mxu0 0
      %646 = vmatprep.subr.bf16.mxu0 0
      %647 = vmatpush1.bf16.msra.mxu0 0
      %648 = vmatprep.subr.bf16.mxu0 0
      %649 = vmatpush1.bf16.msra.mxu0 0
      %650 = vmatprep.subr.bf16.mxu0 0
      %651 = vmatpush1.bf16.msra.mxu0 0
      %652 = vmatprep.mubr.bf16.mxu0 0
      %653 = vmatmul.mubr.bf16.gmra.mrb[0].mxu0 %v591
      %v654 = vpop.f32.mrb[0].mxu0
      %v655 = vadd.f32 %v421, %v654
      %v656 = vpop.f32.mrb[0].mxu0
      %v657 = vadd.f32 %v423, %v656
      %v658 = vpop.f32.mrb[0].mxu0
      %v659 = vpop.f32.mrb[0].mxu0
      %660 = vdwg.mxu0
      %661 = vmatprep.subr.bf16.mxu0 %v603
      %662 = vmatpush1.bf16.msra.mxu0 %v600
      %663 = vmatprep.subr.bf16.mxu0 0
      %664 = vmatpush1.bf16.msra.mxu0 0
      %665 = vmatprep.subr.bf16.mxu0 0
      %666 = vmatpush1.bf16.msra.mxu0 0
      %667 = vmatprep.subr.bf16.mxu0 0
      %668 = vmatpush1.bf16.msra.mxu0 0
      %669 = vmatprep.subr.bf16.mxu0 0
      %670 = vmatpush1.bf16.msra.mxu0 0
      %671 = vmatprep.subr.bf16.mxu0 0
      %672 = vmatpush1.bf16.msra.mxu0 0
      %673 = vmatprep.subr.bf16.mxu0 0
      %674 = vmatpush1.bf16.msra.mxu0 0
      %675 = vmatprep.subr.bf16.mxu0 0
      %676 = vmatpush1.bf16.msra.mxu0 0
      %677 = vmatprep.subr.bf16.mxu0 0
      %678 = vmatpush1.bf16.msra.mxu0 0
      %679 = vmatprep.subr.bf16.mxu0 0
      %680 = vmatpush1.bf16.msra.mxu0 0
      %681 = vmatprep.subr.bf16.mxu0 0
      %682 = vmatpush1.bf16.msra.mxu0 0
      %683 = vmatprep.subr.bf16.mxu0 0
      %684 = vmatpush1.bf16.msra.mxu0 0
      %685 = vmatprep.subr.bf16.mxu0 0
      %686 = vmatpush1.bf16.msra.mxu0 0
      %687 = vmatprep.subr.bf16.mxu0 0
      %688 = vmatpush1.bf16.msra.mxu0 0
      %689 = vmatprep.subr.bf16.mxu0 0
      %690 = vmatpush1.bf16.msra.mxu0 0
      %691 = vmatprep.subr.bf16.mxu0 0
      %692 = vmatpush1.bf16.msra.mxu0 0
      %693 = vmatprep.mubr.bf16.mxu0 0
      %694 = vmatmul.mubr.bf16.gmra.mrb[0].mxu0 %v591
      %v695 = vpop.f32.mrb[0].mxu0
      %v696 = vadd.f32 %v462, %v695
      %v697 = vpop.f32.mrb[0].mxu0
      %v698 = vadd.f32 %v464, %v697
      %v699 = vpop.f32.mrb[0].mxu0
      %v700 = vpop.f32.mrb[0].mxu0
      %701 = vdwg.mxu0
      %702 = vmatprep.subr.bf16.mxu0 %v609
      %703 = vmatpush1.bf16.msra.mxu0 %v606
      %704 = vmatprep.subr.bf16.mxu0 0
      %705 = vmatpush1.bf16.msra.mxu0 0
      %706 = vmatprep.subr.bf16.mxu0 0
      %707 = vmatpush1.bf16.msra.mxu0 0
      %708 = vmatprep.subr.bf16.mxu0 0
      %709 = vmatpush1.bf16.msra.mxu0 0
      %710 = vmatprep.subr.bf16.mxu0 0
      %711 = vmatpush1.bf16.msra.mxu0 0
      %712 = vmatprep.subr.bf16.mxu0 0
      %713 = vmatpush1.bf16.msra.mxu0 0
      %714 = vmatprep.subr.bf16.mxu0 0
      %715 = vmatpush1.bf16.msra.mxu0 0
      %716 = vmatprep.subr.bf16.mxu0 0
      %717 = vmatpush1.bf16.msra.mxu0 0
      %718 = vmatprep.subr.bf16.mxu0 0
      %719 = vmatpush1.bf16.msra.mxu0 0
      %720 = vmatprep.subr.bf16.mxu0 0
      %721 = vmatpush1.bf16.msra.mxu0 0
      %722 = vmatprep.subr.bf16.mxu0 0
      %723 = vmatpush1.bf16.msra.mxu0 0
      %724 = vmatprep.subr.bf16.mxu0 0
      %725 = vmatpush1.bf16.msra.mxu0 0
      %726 = vmatprep.subr.bf16.mxu0 0
      %727 = vmatpush1.bf16.msra.mxu0 0
      %728 = vmatprep.subr.bf16.mxu0 0
      %729 = vmatpush1.bf16.msra.mxu0 0
      %730 = vmatprep.subr.bf16.mxu0 0
      %731 = vmatpush1.bf16.msra.mxu0 0
      %732 = vmatprep.subr.bf16.mxu0 0
      %733 = vmatpush1.bf16.msra.mxu0 0
      %734 = vmatprep.mubr.bf16.mxu0 0
      %735 = vmatmul.mubr.bf16.gmra.mrb[0].mxu0 %v591
      %v736 = vpop.f32.mrb[0].mxu0
      %v737 = vadd.f32 %v503, %v736
      %v738 = vpop.f32.mrb[0].mxu0
      %v739 = vadd.f32 %v505, %v738
      %v740 = vpop.f32.mrb[0].mxu0
      %v741 = vpop.f32.mrb[0].mxu0
      %742 = vdwg.mxu0
      %743 = vmatprep.subr.bf16.mxu0 %v615
      %744 = vmatpush1.bf16.msra.mxu0 %v612
      %745 = vmatprep.subr.bf16.mxu0 0
      %746 = vmatpush1.bf16.msra.mxu0 0
      %747 = vmatprep.subr.bf16.mxu0 0
      %748 = vmatpush1.bf16.msra.mxu0 0
      %749 = vmatprep.subr.bf16.mxu0 0
      %750 = vmatpush1.bf16.msra.mxu0 0
      %751 = vmatprep.subr.bf16.mxu0 0
      %752 = vmatpush1.bf16.msra.mxu0 0
      %753 = vmatprep.subr.bf16.mxu0 0
      %754 = vmatpush1.bf16.msra.mxu0 0
      %755 = vmatprep.subr.bf16.mxu0 0
      %756 = vmatpush1.bf16.msra.mxu0 0
      %757 = vmatprep.subr.bf16.mxu0 0
      %758 = vmatpush1.bf16.msra.mxu0 0
      %759 = vmatprep.subr.bf16.mxu0 0
      %760 = vmatpush1.bf16.msra.mxu0 0
      %761 = vmatprep.subr.bf16.mxu0 0
      %762 = vmatpush1.bf16.msra.mxu0 0
      %763 = vmatprep.subr.bf16.mxu0 0
      %764 = vmatpush1.bf16.msra.mxu0 0
      %765 = vmatprep.subr.bf16.mxu0 0
      %766 = vmatpush1.bf16.msra.mxu0 0
      %767 = vmatprep.subr.bf16.mxu0 0
      %768 = vmatpush1.bf16.msra.mxu0 0
      %769 = vmatprep.subr.bf16.mxu0 0
      %770 = vmatpush1.bf16.msra.mxu0 0
      %771 = vmatprep.subr.bf16.mxu0 0
      %772 = vmatpush1.bf16.msra.mxu0 0
      %773 = vmatprep.subr.bf16.mxu0 0
      %774 = vmatpush1.bf16.msra.mxu0 0
      %775 = vmatprep.mubr.bf16.mxu0 0
      %776 = vmatmul.mubr.bf16.gmra.mrb[0].mxu0 %v591
      %v777 = vpop.f32.mrb[0].mxu0
      %v778 = vadd.f32 %v544, %v777
      %v779 = vpop.f32.mrb[0].mxu0
      %v780 = vadd.f32 %v546, %v779
      %v781 = vpop.f32.mrb[0].mxu0
      %v782 = vpop.f32.mrb[0].mxu0
      %783 = vdwg.mxu0
      %784 = vmatprep.subr.bf16.mxu0 0
      %785 = vmatpush1.bf16.msra.mxu0 %v618
      %786 = vmatprep.subr.bf16.mxu0 0
      %787 = vmatpush1.bf16.msra.mxu0 0
      %788 = vmatprep.subr.bf16.mxu0 0
      %789 = vmatpush1.bf16.msra.mxu0 0
      %790 = vmatprep.subr.bf16.mxu0 0
      %791 = vmatpush1.bf16.msra.mxu0 0
      %792 = vmatprep.subr.bf16.mxu0 0
      %793 = vmatpush1.bf16.msra.mxu0 0
      %794 = vmatprep.subr.bf16.mxu0 0
      %795 = vmatpush1.bf16.msra.mxu0 0
      %796 = vmatprep.subr.bf16.mxu0 0
      %797 = vmatpush1.bf16.msra.mxu0 0
      %798 = vmatprep.subr.bf16.mxu0 0
      %799 = vmatpush1.bf16.msra.mxu0 0
      %800 = vmatprep.subr.bf16.mxu0 0
      %801 = vmatpush1.bf16.msra.mxu0 0
      %802 = vmatprep.subr.bf16.mxu0 0
      %803 = vmatpush1.bf16.msra.mxu0 0
      %804 = vmatprep.subr.bf16.mxu0 0
      %805 = vmatpush1.bf16.msra.mxu0 0
      %806 = vmatprep.subr.bf16.mxu0 0
      %807 = vmatpush1.bf16.msra.mxu0 0
      %808 = vmatprep.subr.bf16.mxu0 0
      %809 = vmatpush1.bf16.msra.mxu0 0
      %810 = vmatprep.subr.bf16.mxu0 0
      %811 = vmatpush1.bf16.msra.mxu0 0
      %812 = vmatprep.subr.bf16.mxu0 0
      %813 = vmatpush1.bf16.msra.mxu0 0
      %814 = vmatprep.subr.bf16.mxu0 0
      %815 = vmatpush1.bf16.msra.mxu0 0
      %816 = vmatprep.mubr.bf16.mxu0 0
      %817 = vmatmul.mubr.bf16.gmra.mrb[0].mxu0 %v591
      %v818 = vpop.f32.mrb[0].mxu0
      %v819 = vadd.f32 %v585, %v818
      %v820 = vpop.f32.mrb[0].mxu0
      %v821 = vpop.f32.mrb[0].mxu0
      %v822 = vpop.f32.mrb[0].mxu0
      %823 = vdwg.mxu0
      %s824 = scalar_lea.vmem %s2, 8
      %v825 = vld [vmem:[%s824] sm:$0xf]
      %826 = vrot.lane.b32.xlu0 %v318, 126
      %v827 = vpop.permute.xlu0 %826
      %828 = vrot.lane.b32.xlu0 %v319, 126
      %v829 = vpop.permute.xlu0 %828
      %830 = vrot.lane.b32.xlu0 %v320, 126
      %v831 = vpop.permute.xlu0 %830
      %832 = vrot.lane.b32.xlu0 %v321, 126
      %v833 = vpop.permute.xlu0 %832
      %834 = vrot.lane.b32.xlu0 %v322, 126
      %v835 = vpop.permute.xlu0 %834
      %836 = vrot.lane.b32.xlu0 %v323, 126
      %v837 = vpop.permute.xlu0 %836
      %838 = vrot.lane.b32.xlu0 %v324, 126
      %v839 = vpop.permute.xlu0 %838
      %840 = vrot.lane.b32.xlu0 %v325, 126
      %v841 = vpop.permute.xlu0 %840
      %842 = vrot.lane.b32.xlu0 %v326, 126
      %v843 = vpop.permute.xlu0 %842
      %vm844 = vcmask 1031168
      %v845 = vsel %vm844, %v827, %v829
      %v846 = vsel %vm844, %v829, %v831
      %v847 = vsel %vm844, %v831, %v833
      %v848 = vsel %vm844, %v833, %v835
      %v849 = vsel %vm844, %v835, %v837
      %v850 = vsel %vm844, %v837, %v839
      %v851 = vsel %vm844, %v839, %v841
      %v852 = vsel %vm844, %v841, %v843
      %v854 = vsel %vm354, %v825, 0
      %v857 = vsel %vm358, %v845, 0
      %v860 = vsel %vm358, %v846, 0
      %v863 = vsel %vm358, %v847, 0
      %v866 = vsel %vm358, %v848, 0
      %v869 = vsel %vm358, %v849, 0
      %v872 = vsel %vm358, %v850, 0
      %v875 = vsel %vm358, %v851, 0
      %v878 = vsel %vm358, %v852, 0
      %v881 = vsel %vm358, %v843, 0
      %883 = vmatprep.subr.bf16.mxu0 %v860
      %884 = vmatpush1.bf16.msra.mxu0 %v857
      %885 = vmatprep.subr.bf16.mxu0 0
      %886 = vmatpush1.bf16.msra.mxu0 0
      %887 = vmatprep.subr.bf16.mxu0 0
      %888 = vmatpush1.bf16.msra.mxu0 0
      %889 = vmatprep.subr.bf16.mxu0 0
      %890 = vmatpush1.bf16.msra.mxu0 0
      %891 = vmatprep.subr.bf16.mxu0 0
      %892 = vmatpush1.bf16.msra.mxu0 0
      %893 = vmatprep.subr.bf16.mxu0 0
      %894 = vmatpush1.bf16.msra.mxu0 0
      %895 = vmatprep.subr.bf16.mxu0 0
      %896 = vmatpush1.bf16.msra.mxu0 0
      %897 = vmatprep.subr.bf16.mxu0 0
      %898 = vmatpush1.bf16.msra.mxu0 0
      %899 = vmatprep.subr.bf16.mxu0 0
      %900 = vmatpush1.bf16.msra.mxu0 0
      %901 = vmatprep.subr.bf16.mxu0 0
      %902 = vmatpush1.bf16.msra.mxu0 0
      %903 = vmatprep.subr.bf16.mxu0 0
      %904 = vmatpush1.bf16.msra.mxu0 0
      %905 = vmatprep.subr.bf16.mxu0 0
      %906 = vmatpush1.bf16.msra.mxu0 0
      %907 = vmatprep.subr.bf16.mxu0 0
      %908 = vmatpush1.bf16.msra.mxu0 0
      %909 = vmatprep.subr.bf16.mxu0 0
      %910 = vmatpush1.bf16.msra.mxu0 0
      %911 = vmatprep.subr.bf16.mxu0 0
      %912 = vmatpush1.bf16.msra.mxu0 0
      %913 = vmatprep.subr.bf16.mxu0 0
      %914 = vmatpush1.bf16.msra.mxu0 0
      %915 = vmatprep.mubr.bf16.mxu0 0
      %916 = vmatmul.mubr.bf16.gmra.mrb[0].mxu0 %v854
      %v917 = vpop.f32.mrb[0].mxu0
      %v918 = vadd.f32 0.0, %v917
      %v919 = vpop.f32.mrb[0].mxu0
      %v920 = vadd.f32 0.0, %v919
      %v921 = vpop.f32.mrb[0].mxu0
      %v922 = vpop.f32.mrb[0].mxu0
      %923 = vdwg.mxu0
      %924 = vmatprep.subr.bf16.mxu0 %v866
      %925 = vmatpush1.bf16.msra.mxu0 %v863
      %926 = vmatprep.subr.bf16.mxu0 0
      %927 = vmatpush1.bf16.msra.mxu0 0
      %928 = vmatprep.subr.bf16.mxu0 0
      %929 = vmatpush1.bf16.msra.mxu0 0
      %930 = vmatprep.subr.bf16.mxu0 0
      %931 = vmatpush1.bf16.msra.mxu0 0
      %932 = vmatprep.subr.bf16.mxu0 0
      %933 = vmatpush1.bf16.msra.mxu0 0
      %934 = vmatprep.subr.bf16.mxu0 0
      %935 = vmatpush1.bf16.msra.mxu0 0
      %936 = vmatprep.subr.bf16.mxu0 0
      %937 = vmatpush1.bf16.msra.mxu0 0
      %938 = vmatprep.subr.bf16.mxu0 0
      %939 = vmatpush1.bf16.msra.mxu0 0
      %940 = vmatprep.subr.bf16.mxu0 0
      %941 = vmatpush1.bf16.msra.mxu0 0
      %942 = vmatprep.subr.bf16.mxu0 0
      %943 = vmatpush1.bf16.msra.mxu0 0
      %944 = vmatprep.subr.bf16.mxu0 0
      %945 = vmatpush1.bf16.msra.mxu0 0
      %946 = vmatprep.subr.bf16.mxu0 0
      %947 = vmatpush1.bf16.msra.mxu0 0
      %948 = vmatprep.subr.bf16.mxu0 0
      %949 = vmatpush1.bf16.msra.mxu0 0
      %950 = vmatprep.subr.bf16.mxu0 0
      %951 = vmatpush1.bf16.msra.mxu0 0
      %952 = vmatprep.subr.bf16.mxu0 0
      %953 = vmatpush1.bf16.msra.mxu0 0
      %954 = vmatprep.subr.bf16.mxu0 0
      %955 = vmatpush1.bf16.msra.mxu0 0
      %956 = vmatprep.mubr.bf16.mxu0 0
      %957 = vmatmul.mubr.bf16.gmra.mrb[0].mxu0 %v854
      %v958 = vpop.f32.mrb[0].mxu0
      %v959 = vadd.f32 0.0, %v958
      %v960 = vpop.f32.mrb[0].mxu0
      %v961 = vadd.f32 0.0, %v960
      %v962 = vpop.f32.mrb[0].mxu0
      %v963 = vpop.f32.mrb[0].mxu0
      %964 = vdwg.mxu0
      %965 = vmatprep.subr.bf16.mxu0 %v872
      %966 = vmatpush1.bf16.msra.mxu0 %v869
      %967 = vmatprep.subr.bf16.mxu0 0
      %968 = vmatpush1.bf16.msra.mxu0 0
      %969 = vmatprep.subr.bf16.mxu0 0
      %970 = vmatpush1.bf16.msra.mxu0 0
      %971 = vmatprep.subr.bf16.mxu0 0
      %972 = vmatpush1.bf16.msra.mxu0 0
      %973 = vmatprep.subr.bf16.mxu0 0
      %974 = vmatpush1.bf16.msra.mxu0 0
      %975 = vmatprep.subr.bf16.mxu0 0
      %976 = vmatpush1.bf16.msra.mxu0 0
      %977 = vmatprep.subr.bf16.mxu0 0
      %978 = vmatpush1.bf16.msra.mxu0 0
      %979 = vmatprep.subr.bf16.mxu0 0
      %980 = vmatpush1.bf16.msra.mxu0 0
      %981 = vmatprep.subr.bf16.mxu0 0
      %982 = vmatpush1.bf16.msra.mxu0 0
      %983 = vmatprep.subr.bf16.mxu0 0
      %984 = vmatpush1.bf16.msra.mxu0 0
      %985 = vmatprep.subr.bf16.mxu0 0
      %986 = vmatpush1.bf16.msra.mxu0 0
      %987 = vmatprep.subr.bf16.mxu0 0
      %988 = vmatpush1.bf16.msra.mxu0 0
      %989 = vmatprep.subr.bf16.mxu0 0
      %990 = vmatpush1.bf16.msra.mxu0 0
      %991 = vmatprep.subr.bf16.mxu0 0
      %992 = vmatpush1.bf16.msra.mxu0 0
      %993 = vmatprep.subr.bf16.mxu0 0
      %994 = vmatpush1.bf16.msra.mxu0 0
      %995 = vmatprep.subr.bf16.mxu0 0
      %996 = vmatpush1.bf16.msra.mxu0 0
      %997 = vmatprep.mubr.bf16.mxu0 0
      %998 = vmatmul.mubr.bf16.gmra.mrb[0].mxu0 %v854
      %v999 = vpop.f32.mrb[0].mxu0
      %v1000 = vadd.f32 0.0, %v999
      %v1001 = vpop.f32.mrb[0].mxu0
      %v1002 = vadd.f32 0.0, %v1001
      %v1003 = vpop.f32.mrb[0].mxu0
      %v1004 = vpop.f32.mrb[0].mxu0
      %1005 = vdwg.mxu0
      %1006 = vmatprep.subr.bf16.mxu0 %v878
      %1007 = vmatpush1.bf16.msra.mxu0 %v875
      %1008 = vmatprep.subr.bf16.mxu0 0
      %1009 = vmatpush1.bf16.msra.mxu0 0
      %1010 = vmatprep.subr.bf16.mxu0 0
      %1011 = vmatpush1.bf16.msra.mxu0 0
      %1012 = vmatprep.subr.bf16.mxu0 0
      %1013 = vmatpush1.bf16.msra.mxu0 0
      %1014 = vmatprep.subr.bf16.mxu0 0
      %1015 = vmatpush1.bf16.msra.mxu0 0
      %1016 = vmatprep.subr.bf16.mxu0 0
      %1017 = vmatpush1.bf16.msra.mxu0 0
      %1018 = vmatprep.subr.bf16.mxu0 0
      %1019 = vmatpush1.bf16.msra.mxu0 0
      %1020 = vmatprep.subr.bf16.mxu0 0
      %1021 = vmatpush1.bf16.msra.mxu0 0
      %1022 = vmatprep.subr.bf16.mxu0 0
      %1023 = vmatpush1.bf16.msra.mxu0 0
      %1024 = vmatprep.subr.bf16.mxu0 0
      %1025 = vmatpush1.bf16.msra.mxu0 0
      %1026 = vmatprep.subr.bf16.mxu0 0
      %1027 = vmatpush1.bf16.msra.mxu0 0
      %1028 = vmatprep.subr.bf16.mxu0 0
      %1029 = vmatpush1.bf16.msra.mxu0 0
      %1030 = vmatprep.subr.bf16.mxu0 0
      %1031 = vmatpush1.bf16.msra.mxu0 0
      %1032 = vmatprep.subr.bf16.mxu0 0
      %1033 = vmatpush1.bf16.msra.mxu0 0
      %1034 = vmatprep.subr.bf16.mxu0 0
      %1035 = vmatpush1.bf16.msra.mxu0 0
      %1036 = vmatprep.subr.bf16.mxu0 0
      %1037 = vmatpush1.bf16.msra.mxu0 0
      %1038 = vmatprep.mubr.bf16.mxu0 0
      %1039 = vmatmul.mubr.bf16.gmra.mrb[0].mxu0 %v854
      %v1040 = vpop.f32.mrb[0].mxu0
      %v1041 = vadd.f32 0.0, %v1040
      %v1042 = vpop.f32.mrb[0].mxu0
      %v1043 = vadd.f32 0.0, %v1042
      %v1044 = vpop.f32.mrb[0].mxu0
      %v1045 = vpop.f32.mrb[0].mxu0
      %1046 = vdwg.mxu0
      %1047 = vmatprep.subr.bf16.mxu0 0
      %1048 = vmatpush1.bf16.msra.mxu0 %v881
      %1049 = vmatprep.subr.bf16.mxu0 0
      %1050 = vmatpush1.bf16.msra.mxu0 0
      %1051 = vmatprep.subr.bf16.mxu0 0
      %1052 = vmatpush1.bf16.msra.mxu0 0
      %1053 = vmatprep.subr.bf16.mxu0 0
      %1054 = vmatpush1.bf16.msra.mxu0 0
      %1055 = vmatprep.subr.bf16.mxu0 0
      %1056 = vmatpush1.bf16.msra.mxu0 0
      %1057 = vmatprep.subr.bf16.mxu0 0
      %1058 = vmatpush1.bf16.msra.mxu0 0
      %1059 = vmatprep.subr.bf16.mxu0 0
      %1060 = vmatpush1.bf16.msra.mxu0 0
      %1061 = vmatprep.subr.bf16.mxu0 0
      %1062 = vmatpush1.bf16.msra.mxu0 0
      %1063 = vmatprep.subr.bf16.mxu0 0
      %1064 = vmatpush1.bf16.msra.mxu0 0
      %1065 = vmatprep.subr.bf16.mxu0 0
      %1066 = vmatpush1.bf16.msra.mxu0 0
      %1067 = vmatprep.subr.bf16.mxu0 0
      %1068 = vmatpush1.bf16.msra.mxu0 0
      %1069 = vmatprep.subr.bf16.mxu0 0
      %1070 = vmatpush1.bf16.msra.mxu0 0
      %1071 = vmatprep.subr.bf16.mxu0 0
      %1072 = vmatpush1.bf16.msra.mxu0 0
      %1073 = vmatprep.subr.bf16.mxu0 0
      %1074 = vmatpush1.bf16.msra.mxu0 0
      %1075 = vmatprep.subr.bf16.mxu0 0
      %1076 = vmatpush1.bf16.msra.mxu0 0
      %1077 = vmatprep.subr.bf16.mxu0 0
      %1078 = vmatpush1.bf16.msra.mxu0 0
      %1079 = vmatprep.mubr.bf16.mxu0 0
      %1080 = vmatmul.mubr.bf16.gmra.mrb[0].mxu0 %v854
      %v1081 = vpop.f32.mrb[0].mxu0
      %v1082 = vadd.f32 0.0, %v1081
      %v1083 = vpop.f32.mrb[0].mxu0
      %v1084 = vpop.f32.mrb[0].mxu0
      %v1085 = vpop.f32.mrb[0].mxu0
      %1086 = vdwg.mxu0
      %v1087 = vadd.f32 %v655, %v918
      %v1088 = vadd.f32 %v657, %v920
      %v1089 = vadd.f32 %v696, %v959
      %v1090 = vadd.f32 %v698, %v961
      %v1091 = vadd.f32 %v737, %v1000
      %v1092 = vadd.f32 %v739, %v1002
      %v1093 = vadd.f32 %v778, %v1041
      %v1094 = vadd.f32 %v780, %v1043
      %v1095 = vadd.f32 %v819, %v1082
      %s1096 = scalar_lea.vmem %s2, 12
      %v1097 = vld [vmem:[%s1096] sm:$0xf]
      %1098 = vrot.lane.b32.xlu0 %v318, 94
      %v1099 = vpop.permute.xlu0 %1098
      %1100 = vrot.lane.b32.xlu0 %v319, 94
      %v1101 = vpop.permute.xlu0 %1100
      %1102 = vrot.lane.b32.xlu0 %v320, 94
      %v1103 = vpop.permute.xlu0 %1102
      %1104 = vrot.lane.b32.xlu0 %v321, 94
      %v1105 = vpop.permute.xlu0 %1104
      %1106 = vrot.lane.b32.xlu0 %v322, 94
      %v1107 = vpop.permute.xlu0 %1106
      %1108 = vrot.lane.b32.xlu0 %v323, 94
      %v1109 = vpop.permute.xlu0 %1108
      %1110 = vrot.lane.b32.xlu0 %v324, 94
      %v1111 = vpop.permute.xlu0 %1110
      %1112 = vrot.lane.b32.xlu0 %v325, 94
      %v1113 = vpop.permute.xlu0 %1112
      %1114 = vrot.lane.b32.xlu0 %v326, 94
      %v1115 = vpop.permute.xlu0 %1114
      %vm1116 = vcmask 769024
      %v1117 = vsel %vm1116, %v1099, %v1101
      %v1118 = vsel %vm1116, %v1101, %v1103
      %v1119 = vsel %vm1116, %v1103, %v1105
      %v1120 = vsel %vm1116, %v1105, %v1107
      %v1121 = vsel %vm1116, %v1107, %v1109
      %v1122 = vsel %vm1116, %v1109, %v1111
      %v1123 = vsel %vm1116, %v1111, %v1113
      %v1124 = vsel %vm1116, %v1113, %v1115
      %v1126 = vsel %vm354, %v1097, 0
      %v1129 = vsel %vm358, %v1117, 0
      %v1132 = vsel %vm358, %v1118, 0
      %v1135 = vsel %vm358, %v1119, 0
      %v1138 = vsel %vm358, %v1120, 0
      %v1141 = vsel %vm358, %v1121, 0
      %v1144 = vsel %vm358, %v1122, 0
      %v1147 = vsel %vm358, %v1123, 0
      %v1150 = vsel %vm358, %v1124, 0
      %v1153 = vsel %vm358, %v1115, 0
      %1155 = vmatprep.subr.bf16.mxu0 %v1132
      %1156 = vmatpush1.bf16.msra.mxu0 %v1129
      %1157 = vmatprep.subr.bf16.mxu0 0
      %1158 = vmatpush1.bf16.msra.mxu0 0
      %1159 = vmatprep.subr.bf16.mxu0 0
      %1160 = vmatpush1.bf16.msra.mxu0 0
      %1161 = vmatprep.subr.bf16.mxu0 0
      %1162 = vmatpush1.bf16.msra.mxu0 0
      %1163 = vmatprep.subr.bf16.mxu0 0
      %1164 = vmatpush1.bf16.msra.mxu0 0
      %1165 = vmatprep.subr.bf16.mxu0 0
      %1166 = vmatpush1.bf16.msra.mxu0 0
      %1167 = vmatprep.subr.bf16.mxu0 0
      %1168 = vmatpush1.bf16.msra.mxu0 0
      %1169 = vmatprep.subr.bf16.mxu0 0
      %1170 = vmatpush1.bf16.msra.mxu0 0
      %1171 = vmatprep.subr.bf16.mxu0 0
      %1172 = vmatpush1.bf16.msra.mxu0 0
      %1173 = vmatprep.subr.bf16.mxu0 0
      %1174 = vmatpush1.bf16.msra.mxu0 0
      %1175 = vmatprep.subr.bf16.mxu0 0
      %1176 = vmatpush1.bf16.msra.mxu0 0
      %1177 = vmatprep.subr.bf16.mxu0 0
      %1178 = vmatpush1.bf16.msra.mxu0 0
      %1179 = vmatprep.subr.bf16.mxu0 0
      %1180 = vmatpush1.bf16.msra.mxu0 0
      %1181 = vmatprep.subr.bf16.mxu0 0
      %1182 = vmatpush1.bf16.msra.mxu0 0
      %1183 = vmatprep.subr.bf16.mxu0 0
      %1184 = vmatpush1.bf16.msra.mxu0 0
      %1185 = vmatprep.subr.bf16.mxu0 0
      %1186 = vmatpush1.bf16.msra.mxu0 0
      %1187 = vmatprep.mubr.bf16.mxu0 0
      %1188 = vmatmul.mubr.bf16.gmra.mrb[0].mxu0 %v1126
      %v1189 = vpop.f32.mrb[0].mxu0
      %v1190 = vadd.f32 0.0, %v1189
      %v1191 = vpop.f32.mrb[0].mxu0
      %v1192 = vadd.f32 0.0, %v1191
      %v1193 = vpop.f32.mrb[0].mxu0
      %v1194 = vpop.f32.mrb[0].mxu0
      %1195 = vdwg.mxu0
      %1196 = vmatprep.subr.bf16.mxu0 %v1138
      %1197 = vmatpush1.bf16.msra.mxu0 %v1135
      %1198 = vmatprep.subr.bf16.mxu0 0
      %1199 = vmatpush1.bf16.msra.mxu0 0
      %1200 = vmatprep.subr.bf16.mxu0 0
      %1201 = vmatpush1.bf16.msra.mxu0 0
      %1202 = vmatprep.subr.bf16.mxu0 0
      %1203 = vmatpush1.bf16.msra.mxu0 0
      %1204 = vmatprep.subr.bf16.mxu0 0
      %1205 = vmatpush1.bf16.msra.mxu0 0
      %1206 = vmatprep.subr.bf16.mxu0 0
      %1207 = vmatpush1.bf16.msra.mxu0 0
      %1208 = vmatprep.subr.bf16.mxu0 0
      %1209 = vmatpush1.bf16.msra.mxu0 0
      %1210 = vmatprep.subr.bf16.mxu0 0
      %1211 = vmatpush1.bf16.msra.mxu0 0
      %1212 = vmatprep.subr.bf16.mxu0 0
      %1213 = vmatpush1.bf16.msra.mxu0 0
      %1214 = vmatprep.subr.bf16.mxu0 0
      %1215 = vmatpush1.bf16.msra.mxu0 0
      %1216 = vmatprep.subr.bf16.mxu0 0
      %1217 = vmatpush1.bf16.msra.mxu0 0
      %1218 = vmatprep.subr.bf16.mxu0 0
      %1219 = vmatpush1.bf16.msra.mxu0 0
      %1220 = vmatprep.subr.bf16.mxu0 0
      %1221 = vmatpush1.bf16.msra.mxu0 0
      %1222 = vmatprep.subr.bf16.mxu0 0
      %1223 = vmatpush1.bf16.msra.mxu0 0
      %1224 = vmatprep.subr.bf16.mxu0 0
      %1225 = vmatpush1.bf16.msra.mxu0 0
      %1226 = vmatprep.subr.bf16.mxu0 0
      %1227 = vmatpush1.bf16.msra.mxu0 0
      %1228 = vmatprep.mubr.bf16.mxu0 0
      %1229 = vmatmul.mubr.bf16.gmra.mrb[0].mxu0 %v1126
      %v1230 = vpop.f32.mrb[0].mxu0
      %v1231 = vadd.f32 0.0, %v1230
      %v1232 = vpop.f32.mrb[0].mxu0
      %v1233 = vadd.f32 0.0, %v1232
      %v1234 = vpop.f32.mrb[0].mxu0
      %v1235 = vpop.f32.mrb[0].mxu0
      %1236 = vdwg.mxu0
      %1237 = vmatprep.subr.bf16.mxu0 %v1144
      %1238 = vmatpush1.bf16.msra.mxu0 %v1141
      %1239 = vmatprep.subr.bf16.mxu0 0
      %1240 = vmatpush1.bf16.msra.mxu0 0
      %1241 = vmatprep.subr.bf16.mxu0 0
      %1242 = vmatpush1.bf16.msra.mxu0 0
      %1243 = vmatprep.subr.bf16.mxu0 0
      %1244 = vmatpush1.bf16.msra.mxu0 0
      %1245 = vmatprep.subr.bf16.mxu0 0
      %1246 = vmatpush1.bf16.msra.mxu0 0
      %1247 = vmatprep.subr.bf16.mxu0 0
      %1248 = vmatpush1.bf16.msra.mxu0 0
      %1249 = vmatprep.subr.bf16.mxu0 0
      %1250 = vmatpush1.bf16.msra.mxu0 0
      %1251 = vmatprep.subr.bf16.mxu0 0
      %1252 = vmatpush1.bf16.msra.mxu0 0
      %1253 = vmatprep.subr.bf16.mxu0 0
      %1254 = vmatpush1.bf16.msra.mxu0 0
      %1255 = vmatprep.subr.bf16.mxu0 0
      %1256 = vmatpush1.bf16.msra.mxu0 0
      %1257 = vmatprep.subr.bf16.mxu0 0
      %1258 = vmatpush1.bf16.msra.mxu0 0
      %1259 = vmatprep.subr.bf16.mxu0 0
      %1260 = vmatpush1.bf16.msra.mxu0 0
      %1261 = vmatprep.subr.bf16.mxu0 0
      %1262 = vmatpush1.bf16.msra.mxu0 0
      %1263 = vmatprep.subr.bf16.mxu0 0
      %1264 = vmatpush1.bf16.msra.mxu0 0
      %1265 = vmatprep.subr.bf16.mxu0 0
      %1266 = vmatpush1.bf16.msra.mxu0 0
      %1267 = vmatprep.subr.bf16.mxu0 0
      %1268 = vmatpush1.bf16.msra.mxu0 0
      %1269 = vmatprep.mubr.bf16.mxu0 0
      %1270 = vmatmul.mubr.bf16.gmra.mrb[0].mxu0 %v1126
      %v1271 = vpop.f32.mrb[0].mxu0
      %v1272 = vadd.f32 0.0, %v1271
      %v1273 = vpop.f32.mrb[0].mxu0
      %v1274 = vadd.f32 0.0, %v1273
      %v1275 = vpop.f32.mrb[0].mxu0
      %v1276 = vpop.f32.mrb[0].mxu0
      %1277 = vdwg.mxu0
      %1278 = vmatprep.subr.bf16.mxu0 %v1150
      %1279 = vmatpush1.bf16.msra.mxu0 %v1147
      %1280 = vmatprep.subr.bf16.mxu0 0
      %1281 = vmatpush1.bf16.msra.mxu0 0
      %1282 = vmatprep.subr.bf16.mxu0 0
      %1283 = vmatpush1.bf16.msra.mxu0 0
      %1284 = vmatprep.subr.bf16.mxu0 0
      %1285 = vmatpush1.bf16.msra.mxu0 0
      %1286 = vmatprep.subr.bf16.mxu0 0
      %1287 = vmatpush1.bf16.msra.mxu0 0
      %1288 = vmatprep.subr.bf16.mxu0 0
      %1289 = vmatpush1.bf16.msra.mxu0 0
      %1290 = vmatprep.subr.bf16.mxu0 0
      %1291 = vmatpush1.bf16.msra.mxu0 0
      %1292 = vmatprep.subr.bf16.mxu0 0
      %1293 = vmatpush1.bf16.msra.mxu0 0
      %1294 = vmatprep.subr.bf16.mxu0 0
      %1295 = vmatpush1.bf16.msra.mxu0 0
      %1296 = vmatprep.subr.bf16.mxu0 0
      %1297 = vmatpush1.bf16.msra.mxu0 0
      %1298 = vmatprep.subr.bf16.mxu0 0
      %1299 = vmatpush1.bf16.msra.mxu0 0
      %1300 = vmatprep.subr.bf16.mxu0 0
      %1301 = vmatpush1.bf16.msra.mxu0 0
      %1302 = vmatprep.subr.bf16.mxu0 0
      %1303 = vmatpush1.bf16.msra.mxu0 0
      %1304 = vmatprep.subr.bf16.mxu0 0
      %1305 = vmatpush1.bf16.msra.mxu0 0
      %1306 = vmatprep.subr.bf16.mxu0 0
      %1307 = vmatpush1.bf16.msra.mxu0 0
      %1308 = vmatprep.subr.bf16.mxu0 0
      %1309 = vmatpush1.bf16.msra.mxu0 0
      %1310 = vmatprep.mubr.bf16.mxu0 0
      %1311 = vmatmul.mubr.bf16.gmra.mrb[0].mxu0 %v1126
      %v1312 = vpop.f32.mrb[0].mxu0
      %v1313 = vadd.f32 0.0, %v1312
      %v1314 = vpop.f32.mrb[0].mxu0
      %v1315 = vadd.f32 0.0, %v1314
      %v1316 = vpop.f32.mrb[0].mxu0
      %v1317 = vpop.f32.mrb[0].mxu0
      %1318 = vdwg.mxu0
      %1319 = vmatprep.subr.bf16.mxu0 0
      %1320 = vmatpush1.bf16.msra.mxu0 %v1153
      %1321 = vmatprep.subr.bf16.mxu0 0
      %1322 = vmatpush1.bf16.msra.mxu0 0
      %1323 = vmatprep.subr.bf16.mxu0 0
      %1324 = vmatpush1.bf16.msra.mxu0 0
      %1325 = vmatprep.subr.bf16.mxu0 0
      %1326 = vmatpush1.bf16.msra.mxu0 0
      %1327 = vmatprep.subr.bf16.mxu0 0
      %1328 = vmatpush1.bf16.msra.mxu0 0
      %1329 = vmatprep.subr.bf16.mxu0 0
      %1330 = vmatpush1.bf16.msra.mxu0 0
      %1331 = vmatprep.subr.bf16.mxu0 0
      %1332 = vmatpush1.bf16.msra.mxu0 0
      %1333 = vmatprep.subr.bf16.mxu0 0
      %1334 = vmatpush1.bf16.msra.mxu0 0
      %1335 = vmatprep.subr.bf16.mxu0 0
      %1336 = vmatpush1.bf16.msra.mxu0 0
      %1337 = vmatprep.subr.bf16.mxu0 0
      %1338 = vmatpush1.bf16.msra.mxu0 0
      %1339 = vmatprep.subr.bf16.mxu0 0
      %1340 = vmatpush1.bf16.msra.mxu0 0
      %1341 = vmatprep.subr.bf16.mxu0 0
      %1342 = vmatpush1.bf16.msra.mxu0 0
      %1343 = vmatprep.subr.bf16.mxu0 0
      %1344 = vmatpush1.bf16.msra.mxu0 0
      %1345 = vmatprep.subr.bf16.mxu0 0
      %1346 = vmatpush1.bf16.msra.mxu0 0
      %1347 = vmatprep.subr.bf16.mxu0 0
      %1348 = vmatpush1.bf16.msra.mxu0 0
      %1349 = vmatprep.subr.bf16.mxu0 0
      %1350 = vmatpush1.bf16.msra.mxu0 0
      %1351 = vmatprep.mubr.bf16.mxu0 0
      %1352 = vmatmul.mubr.bf16.gmra.mrb[0].mxu0 %v1126
      %v1353 = vpop.f32.mrb[0].mxu0
      %v1354 = vadd.f32 0.0, %v1353
      %v1355 = vpop.f32.mrb[0].mxu0
      %v1356 = vpop.f32.mrb[0].mxu0
      %v1357 = vpop.f32.mrb[0].mxu0
      %1358 = vdwg.mxu0
      %v1359 = vadd.f32 %v1087, %v1190
      %v1360 = vadd.f32 %v1088, %v1192
      %v1361 = vadd.f32 %v1089, %v1231
      %v1362 = vadd.f32 %v1090, %v1233
      %v1363 = vadd.f32 %v1091, %v1272
      %v1364 = vadd.f32 %v1092, %v1274
      %v1365 = vadd.f32 %v1093, %v1313
      %v1366 = vadd.f32 %v1094, %v1315
      %v1367 = vadd.f32 %v1095, %v1354
      %s1368 = scalar_lea.vmem %s2, 16
      %v1369 = vld [vmem:[%s1368] sm:$0xf]
      %1370 = vrot.lane.b32.xlu0 %v318, 93
      %v1371 = vpop.permute.xlu0 %1370
      %1372 = vrot.lane.b32.xlu0 %v319, 93
      %v1373 = vpop.permute.xlu0 %1372
      %1374 = vrot.lane.b32.xlu0 %v320, 93
      %v1375 = vpop.permute.xlu0 %1374
      %1376 = vrot.lane.b32.xlu0 %v321, 93
      %v1377 = vpop.permute.xlu0 %1376
      %1378 = vrot.lane.b32.xlu0 %v322, 93
      %v1379 = vpop.permute.xlu0 %1378
      %1380 = vrot.lane.b32.xlu0 %v323, 93
      %v1381 = vpop.permute.xlu0 %1380
      %1382 = vrot.lane.b32.xlu0 %v324, 93
      %v1383 = vpop.permute.xlu0 %1382
      %1384 = vrot.lane.b32.xlu0 %v325, 93
      %v1385 = vpop.permute.xlu0 %1384
      %1386 = vrot.lane.b32.xlu0 %v326, 93
      %v1387 = vpop.permute.xlu0 %1386
      %vm1388 = vcmask 760832
      %v1389 = vsel %vm1388, %v1371, %v1373
      %v1390 = vsel %vm1388, %v1373, %v1375
      %v1391 = vsel %vm1388, %v1375, %v1377
      %v1392 = vsel %vm1388, %v1377, %v1379
      %v1393 = vsel %vm1388, %v1379, %v1381
      %v1394 = vsel %vm1388, %v1381, %v1383
      %v1395 = vsel %vm1388, %v1383, %v1385
      %v1396 = vsel %vm1388, %v1385, %v1387
      %v1398 = vsel %vm354, %v1369, 0
      %v1401 = vsel %vm358, %v1389, 0
      %v1404 = vsel %vm358, %v1390, 0
      %v1407 = vsel %vm358, %v1391, 0
      %v1410 = vsel %vm358, %v1392, 0
      %v1413 = vsel %vm358, %v1393, 0
      %v1416 = vsel %vm358, %v1394, 0
      %v1419 = vsel %vm358, %v1395, 0
      %v1422 = vsel %vm358, %v1396, 0
      %v1425 = vsel %vm358, %v1387, 0
      %1427 = vmatprep.subr.bf16.mxu0 %v1404
      %1428 = vmatpush1.bf16.msra.mxu0 %v1401
      %1429 = vmatprep.subr.bf16.mxu0 0
      %1430 = vmatpush1.bf16.msra.mxu0 0
      %1431 = vmatprep.subr.bf16.mxu0 0
      %1432 = vmatpush1.bf16.msra.mxu0 0
      %1433 = vmatprep.subr.bf16.mxu0 0
      %1434 = vmatpush1.bf16.msra.mxu0 0
      %1435 = vmatprep.subr.bf16.mxu0 0
      %1436 = vmatpush1.bf16.msra.mxu0 0
      %1437 = vmatprep.subr.bf16.mxu0 0
      %1438 = vmatpush1.bf16.msra.mxu0 0
      %1439 = vmatprep.subr.bf16.mxu0 0
      %1440 = vmatpush1.bf16.msra.mxu0 0
      %1441 = vmatprep.subr.bf16.mxu0 0
      %1442 = vmatpush1.bf16.msra.mxu0 0
      %1443 = vmatprep.subr.bf16.mxu0 0
      %1444 = vmatpush1.bf16.msra.mxu0 0
      %1445 = vmatprep.subr.bf16.mxu0 0
      %1446 = vmatpush1.bf16.msra.mxu0 0
      %1447 = vmatprep.subr.bf16.mxu0 0
      %1448 = vmatpush1.bf16.msra.mxu0 0
      %1449 = vmatprep.subr.bf16.mxu0 0
      %1450 = vmatpush1.bf16.msra.mxu0 0
      %1451 = vmatprep.subr.bf16.mxu0 0
      %1452 = vmatpush1.bf16.msra.mxu0 0
      %1453 = vmatprep.subr.bf16.mxu0 0
      %1454 = vmatpush1.bf16.msra.mxu0 0
      %1455 = vmatprep.subr.bf16.mxu0 0
      %1456 = vmatpush1.bf16.msra.mxu0 0
      %1457 = vmatprep.subr.bf16.mxu0 0
      %1458 = vmatpush1.bf16.msra.mxu0 0
      %1459 = vmatprep.mubr.bf16.mxu0 0
      %1460 = vmatmul.mubr.bf16.gmra.mrb[0].mxu0 %v1398
      %v1461 = vpop.f32.mrb[0].mxu0
      %v1462 = vadd.f32 0.0, %v1461
      %v1463 = vpop.f32.mrb[0].mxu0
      %v1464 = vadd.f32 0.0, %v1463
      %v1465 = vpop.f32.mrb[0].mxu0
      %v1466 = vpop.f32.mrb[0].mxu0
      %1467 = vdwg.mxu0
      %1468 = vmatprep.subr.bf16.mxu0 %v1410
      %1469 = vmatpush1.bf16.msra.mxu0 %v1407
      %1470 = vmatprep.subr.bf16.mxu0 0
      %1471 = vmatpush1.bf16.msra.mxu0 0
      %1472 = vmatprep.subr.bf16.mxu0 0
      %1473 = vmatpush1.bf16.msra.mxu0 0
      %1474 = vmatprep.subr.bf16.mxu0 0
      %1475 = vmatpush1.bf16.msra.mxu0 0
      %1476 = vmatprep.subr.bf16.mxu0 0
      %1477 = vmatpush1.bf16.msra.mxu0 0
      %1478 = vmatprep.subr.bf16.mxu0 0
      %1479 = vmatpush1.bf16.msra.mxu0 0
      %1480 = vmatprep.subr.bf16.mxu0 0
      %1481 = vmatpush1.bf16.msra.mxu0 0
      %1482 = vmatprep.subr.bf16.mxu0 0
      %1483 = vmatpush1.bf16.msra.mxu0 0
      %1484 = vmatprep.subr.bf16.mxu0 0
      %1485 = vmatpush1.bf16.msra.mxu0 0
      %1486 = vmatprep.subr.bf16.mxu0 0
      %1487 = vmatpush1.bf16.msra.mxu0 0
      %1488 = vmatprep.subr.bf16.mxu0 0
      %1489 = vmatpush1.bf16.msra.mxu0 0
      %1490 = vmatprep.subr.bf16.mxu0 0
      %1491 = vmatpush1.bf16.msra.mxu0 0
      %1492 = vmatprep.subr.bf16.mxu0 0
      %1493 = vmatpush1.bf16.msra.mxu0 0
      %1494 = vmatprep.subr.bf16.mxu0 0
      %1495 = vmatpush1.bf16.msra.mxu0 0
      %1496 = vmatprep.subr.bf16.mxu0 0
      %1497 = vmatpush1.bf16.msra.mxu0 0
      %1498 = vmatprep.subr.bf16.mxu0 0
      %1499 = vmatpush1.bf16.msra.mxu0 0
      %1500 = vmatprep.mubr.bf16.mxu0 0
      %1501 = vmatmul.mubr.bf16.gmra.mrb[0].mxu0 %v1398
      %v1502 = vpop.f32.mrb[0].mxu0
      %v1503 = vadd.f32 0.0, %v1502
      %v1504 = vpop.f32.mrb[0].mxu0
      %v1505 = vadd.f32 0.0, %v1504
      %v1506 = vpop.f32.mrb[0].mxu0
      %v1507 = vpop.f32.mrb[0].mxu0
      %1508 = vdwg.mxu0
      %1509 = vmatprep.subr.bf16.mxu0 %v1416
      %1510 = vmatpush1.bf16.msra.mxu0 %v1413
      %1511 = vmatprep.subr.bf16.mxu0 0
      %1512 = vmatpush1.bf16.msra.mxu0 0
      %1513 = vmatprep.subr.bf16.mxu0 0
      %1514 = vmatpush1.bf16.msra.mxu0 0
      %1515 = vmatprep.subr.bf16.mxu0 0
      %1516 = vmatpush1.bf16.msra.mxu0 0
      %1517 = vmatprep.subr.bf16.mxu0 0
      %1518 = vmatpush1.bf16.msra.mxu0 0
      %1519 = vmatprep.subr.bf16.mxu0 0
      %1520 = vmatpush1.bf16.msra.mxu0 0
      %1521 = vmatprep.subr.bf16.mxu0 0
      %1522 = vmatpush1.bf16.msra.mxu0 0
      %1523 = vmatprep.subr.bf16.mxu0 0
      %1524 = vmatpush1.bf16.msra.mxu0 0
      %1525 = vmatprep.subr.bf16.mxu0 0
      %1526 = vmatpush1.bf16.msra.mxu0 0
      %1527 = vmatprep.subr.bf16.mxu0 0
      %1528 = vmatpush1.bf16.msra.mxu0 0
      %1529 = vmatprep.subr.bf16.mxu0 0
      %1530 = vmatpush1.bf16.msra.mxu0 0
      %1531 = vmatprep.subr.bf16.mxu0 0
      %1532 = vmatpush1.bf16.msra.mxu0 0
      %1533 = vmatprep.subr.bf16.mxu0 0
      %1534 = vmatpush1.bf16.msra.mxu0 0
      %1535 = vmatprep.subr.bf16.mxu0 0
      %1536 = vmatpush1.bf16.msra.mxu0 0
      %1537 = vmatprep.subr.bf16.mxu0 0
      %1538 = vmatpush1.bf16.msra.mxu0 0
      %1539 = vmatprep.subr.bf16.mxu0 0
      %1540 = vmatpush1.bf16.msra.mxu0 0
      %1541 = vmatprep.mubr.bf16.mxu0 0
      %1542 = vmatmul.mubr.bf16.gmra.mrb[0].mxu0 %v1398
      %v1543 = vpop.f32.mrb[0].mxu0
      %v1544 = vadd.f32 0.0, %v1543
      %v1545 = vpop.f32.mrb[0].mxu0
      %v1546 = vadd.f32 0.0, %v1545
      %v1547 = vpop.f32.mrb[0].mxu0
      %v1548 = vpop.f32.mrb[0].mxu0
      %1549 = vdwg.mxu0
      %1550 = vmatprep.subr.bf16.mxu0 %v1422
      %1551 = vmatpush1.bf16.msra.mxu0 %v1419
      %1552 = vmatprep.subr.bf16.mxu0 0
      %1553 = vmatpush1.bf16.msra.mxu0 0
      %1554 = vmatprep.subr.bf16.mxu0 0
      %1555 = vmatpush1.bf16.msra.mxu0 0
      %1556 = vmatprep.subr.bf16.mxu0 0
      %1557 = vmatpush1.bf16.msra.mxu0 0
      %1558 = vmatprep.subr.bf16.mxu0 0
      %1559 = vmatpush1.bf16.msra.mxu0 0
      %1560 = vmatprep.subr.bf16.mxu0 0
      %1561 = vmatpush1.bf16.msra.mxu0 0
      %1562 = vmatprep.subr.bf16.mxu0 0
      %1563 = vmatpush1.bf16.msra.mxu0 0
      %1564 = vmatprep.subr.bf16.mxu0 0
      %1565 = vmatpush1.bf16.msra.mxu0 0
      %1566 = vmatprep.subr.bf16.mxu0 0
      %1567 = vmatpush1.bf16.msra.mxu0 0
      %1568 = vmatprep.subr.bf16.mxu0 0
      %1569 = vmatpush1.bf16.msra.mxu0 0
      %1570 = vmatprep.subr.bf16.mxu0 0
      %1571 = vmatpush1.bf16.msra.mxu0 0
      %1572 = vmatprep.subr.bf16.mxu0 0
      %1573 = vmatpush1.bf16.msra.mxu0 0
      %1574 = vmatprep.subr.bf16.mxu0 0
      %1575 = vmatpush1.bf16.msra.mxu0 0
      %1576 = vmatprep.subr.bf16.mxu0 0
      %1577 = vmatpush1.bf16.msra.mxu0 0
      %1578 = vmatprep.subr.bf16.mxu0 0
      %1579 = vmatpush1.bf16.msra.mxu0 0
      %1580 = vmatprep.subr.bf16.mxu0 0
      %1581 = vmatpush1.bf16.msra.mxu0 0
      %1582 = vmatprep.mubr.bf16.mxu0 0
      %1583 = vmatmul.mubr.bf16.gmra.mrb[0].mxu0 %v1398
      %v1584 = vpop.f32.mrb[0].mxu0
      %v1585 = vadd.f32 0.0, %v1584
      %v1586 = vpop.f32.mrb[0].mxu0
      %v1587 = vadd.f32 0.0, %v1586
      %v1588 = vpop.f32.mrb[0].mxu0
      %v1589 = vpop.f32.mrb[0].mxu0
      %1590 = vdwg.mxu0
      %1591 = vmatprep.subr.bf16.mxu0 0
      %1592 = vmatpush1.bf16.msra.mxu0 %v1425
      %1593 = vmatprep.subr.bf16.mxu0 0
      %1594 = vmatpush1.bf16.msra.mxu0 0
      %1595 = vmatprep.subr.bf16.mxu0 0
      %1596 = vmatpush1.bf16.msra.mxu0 0
      %1597 = vmatprep.subr.bf16.mxu0 0
      %1598 = vmatpush1.bf16.msra.mxu0 0
      %1599 = vmatprep.subr.bf16.mxu0 0
      %1600 = vmatpush1.bf16.msra.mxu0 0
      %1601 = vmatprep.subr.bf16.mxu0 0
      %1602 = vmatpush1.bf16.msra.mxu0 0
      %1603 = vmatprep.subr.bf16.mxu0 0
      %1604 = vmatpush1.bf16.msra.mxu0 0
      %1605 = vmatprep.subr.bf16.mxu0 0
      %1606 = vmatpush1.bf16.msra.mxu0 0
      %1607 = vmatprep.subr.bf16.mxu0 0
      %1608 = vmatpush1.bf16.msra.mxu0 0
      %1609 = vmatprep.subr.bf16.mxu0 0
      %1610 = vmatpush1.bf16.msra.mxu0 0
      %1611 = vmatprep.subr.bf16.mxu0 0
      %1612 = vmatpush1.bf16.msra.mxu0 0
      %1613 = vmatprep.subr.bf16.mxu0 0
      %1614 = vmatpush1.bf16.msra.mxu0 0
      %1615 = vmatprep.subr.bf16.mxu0 0
      %1616 = vmatpush1.bf16.msra.mxu0 0
      %1617 = vmatprep.subr.bf16.mxu0 0
      %1618 = vmatpush1.bf16.msra.mxu0 0
      %1619 = vmatprep.subr.bf16.mxu0 0
      %1620 = vmatpush1.bf16.msra.mxu0 0
      %1621 = vmatprep.subr.bf16.mxu0 0
      %1622 = vmatpush1.bf16.msra.mxu0 0
      %1623 = vmatprep.mubr.bf16.mxu0 0
      %1624 = vmatmul.mubr.bf16.gmra.mrb[0].mxu0 %v1398
      %v1625 = vpop.f32.mrb[0].mxu0
      %v1626 = vadd.f32 0.0, %v1625
      %v1627 = vpop.f32.mrb[0].mxu0
      %v1628 = vpop.f32.mrb[0].mxu0
      %v1629 = vpop.f32.mrb[0].mxu0
      %1630 = vdwg.mxu0
      %v1631 = vadd.f32 %v1359, %v1462
      %v1632 = vadd.f32 %v1360, %v1464
      %v1633 = vadd.f32 %v1361, %v1503
      %v1634 = vadd.f32 %v1362, %v1505
      %v1635 = vadd.f32 %v1363, %v1544
      %v1636 = vadd.f32 %v1364, %v1546
      %v1637 = vadd.f32 %v1365, %v1585
      %v1638 = vadd.f32 %v1366, %v1587
      %v1639 = vadd.f32 %v1367, %v1626
      %s1640 = scalar_lea.vmem %s2, 20
      %v1641 = vld [vmem:[%s1640] sm:$0xf]
      %1642 = vrot.lane.b32.xlu0 %v318, 92
      %v1643 = vpop.permute.xlu0 %1642
      %1644 = vrot.lane.b32.xlu0 %v319, 92
      %v1645 = vpop.permute.xlu0 %1644
      %1646 = vrot.lane.b32.xlu0 %v320, 92
      %v1647 = vpop.permute.xlu0 %1646
      %1648 = vrot.lane.b32.xlu0 %v321, 92
      %v1649 = vpop.permute.xlu0 %1648
      %1650 = vrot.lane.b32.xlu0 %v322, 92
      %v1651 = vpop.permute.xlu0 %1650
      %1652 = vrot.lane.b32.xlu0 %v323, 92
      %v1653 = vpop.permute.xlu0 %1652
      %1654 = vrot.lane.b32.xlu0 %v324, 92
      %v1655 = vpop.permute.xlu0 %1654
      %1656 = vrot.lane.b32.xlu0 %v325, 92
      %v1657 = vpop.permute.xlu0 %1656
      %1658 = vrot.lane.b32.xlu0 %v326, 92
      %v1659 = vpop.permute.xlu0 %1658
      %vm1660 = vcmask 752640
      %v1661 = vsel %vm1660, %v1643, %v1645
      %v1662 = vsel %vm1660, %v1645, %v1647
      %v1663 = vsel %vm1660, %v1647, %v1649
      %v1664 = vsel %vm1660, %v1649, %v1651
      %v1665 = vsel %vm1660, %v1651, %v1653
      %v1666 = vsel %vm1660, %v1653, %v1655
      %v1667 = vsel %vm1660, %v1655, %v1657
      %v1668 = vsel %vm1660, %v1657, %v1659
      %v1670 = vsel %vm354, %v1641, 0
      %v1673 = vsel %vm358, %v1661, 0
      %v1676 = vsel %vm358, %v1662, 0
      %v1679 = vsel %vm358, %v1663, 0
      %v1682 = vsel %vm358, %v1664, 0
      %v1685 = vsel %vm358, %v1665, 0
      %v1688 = vsel %vm358, %v1666, 0
      %v1691 = vsel %vm358, %v1667, 0
      %v1694 = vsel %vm358, %v1668, 0
      %v1697 = vsel %vm358, %v1659, 0
      %1699 = vmatprep.subr.bf16.mxu0 %v1676
      %1700 = vmatpush1.bf16.msra.mxu0 %v1673
      %1701 = vmatprep.subr.bf16.mxu0 0
      %1702 = vmatpush1.bf16.msra.mxu0 0
      %1703 = vmatprep.subr.bf16.mxu0 0
      %1704 = vmatpush1.bf16.msra.mxu0 0
      %1705 = vmatprep.subr.bf16.mxu0 0
      %1706 = vmatpush1.bf16.msra.mxu0 0
      %1707 = vmatprep.subr.bf16.mxu0 0
      %1708 = vmatpush1.bf16.msra.mxu0 0
      %1709 = vmatprep.subr.bf16.mxu0 0
      %1710 = vmatpush1.bf16.msra.mxu0 0
      %1711 = vmatprep.subr.bf16.mxu0 0
      %1712 = vmatpush1.bf16.msra.mxu0 0
      %1713 = vmatprep.subr.bf16.mxu0 0
      %1714 = vmatpush1.bf16.msra.mxu0 0
      %1715 = vmatprep.subr.bf16.mxu0 0
      %1716 = vmatpush1.bf16.msra.mxu0 0
      %1717 = vmatprep.subr.bf16.mxu0 0
      %1718 = vmatpush1.bf16.msra.mxu0 0
      %1719 = vmatprep.subr.bf16.mxu0 0
      %1720 = vmatpush1.bf16.msra.mxu0 0
      %1721 = vmatprep.subr.bf16.mxu0 0
      %1722 = vmatpush1.bf16.msra.mxu0 0
      %1723 = vmatprep.subr.bf16.mxu0 0
      %1724 = vmatpush1.bf16.msra.mxu0 0
      %1725 = vmatprep.subr.bf16.mxu0 0
      %1726 = vmatpush1.bf16.msra.mxu0 0
      %1727 = vmatprep.subr.bf16.mxu0 0
      %1728 = vmatpush1.bf16.msra.mxu0 0
      %1729 = vmatprep.subr.bf16.mxu0 0
      %1730 = vmatpush1.bf16.msra.mxu0 0
      %1731 = vmatprep.mubr.bf16.mxu0 0
      %1732 = vmatmul.mubr.bf16.gmra.mrb[0].mxu0 %v1670
      %v1733 = vpop.f32.mrb[0].mxu0
      %v1734 = vadd.f32 0.0, %v1733
      %v1735 = vpop.f32.mrb[0].mxu0
      %v1736 = vadd.f32 0.0, %v1735
      %v1737 = vpop.f32.mrb[0].mxu0
      %v1738 = vpop.f32.mrb[0].mxu0
      %1739 = vdwg.mxu0
      %1740 = vmatprep.subr.bf16.mxu0 %v1682
      %1741 = vmatpush1.bf16.msra.mxu0 %v1679
      %1742 = vmatprep.subr.bf16.mxu0 0
      %1743 = vmatpush1.bf16.msra.mxu0 0
      %1744 = vmatprep.subr.bf16.mxu0 0
      %1745 = vmatpush1.bf16.msra.mxu0 0
      %1746 = vmatprep.subr.bf16.mxu0 0
      %1747 = vmatpush1.bf16.msra.mxu0 0
      %1748 = vmatprep.subr.bf16.mxu0 0
      %1749 = vmatpush1.bf16.msra.mxu0 0
      %1750 = vmatprep.subr.bf16.mxu0 0
      %1751 = vmatpush1.bf16.msra.mxu0 0
      %1752 = vmatprep.subr.bf16.mxu0 0
      %1753 = vmatpush1.bf16.msra.mxu0 0
      %1754 = vmatprep.subr.bf16.mxu0 0
      %1755 = vmatpush1.bf16.msra.mxu0 0
      %1756 = vmatprep.subr.bf16.mxu0 0
      %1757 = vmatpush1.bf16.msra.mxu0 0
      %1758 = vmatprep.subr.bf16.mxu0 0
      %1759 = vmatpush1.bf16.msra.mxu0 0
      %1760 = vmatprep.subr.bf16.mxu0 0
      %1761 = vmatpush1.bf16.msra.mxu0 0
      %1762 = vmatprep.subr.bf16.mxu0 0
      %1763 = vmatpush1.bf16.msra.mxu0 0
      %1764 = vmatprep.subr.bf16.mxu0 0
      %1765 = vmatpush1.bf16.msra.mxu0 0
      %1766 = vmatprep.subr.bf16.mxu0 0
      %1767 = vmatpush1.bf16.msra.mxu0 0
      %1768 = vmatprep.subr.bf16.mxu0 0
      %1769 = vmatpush1.bf16.msra.mxu0 0
      %1770 = vmatprep.subr.bf16.mxu0 0
      %1771 = vmatpush1.bf16.msra.mxu0 0
      %1772 = vmatprep.mubr.bf16.mxu0 0
      %1773 = vmatmul.mubr.bf16.gmra.mrb[0].mxu0 %v1670
      %v1774 = vpop.f32.mrb[0].mxu0
      %v1775 = vadd.f32 0.0, %v1774
      %v1776 = vpop.f32.mrb[0].mxu0
      %v1777 = vadd.f32 0.0, %v1776
      %v1778 = vpop.f32.mrb[0].mxu0
      %v1779 = vpop.f32.mrb[0].mxu0
      %1780 = vdwg.mxu0
      %1781 = vmatprep.subr.bf16.mxu0 %v1688
      %1782 = vmatpush1.bf16.msra.mxu0 %v1685
      %1783 = vmatprep.subr.bf16.mxu0 0
      %1784 = vmatpush1.bf16.msra.mxu0 0
      %1785 = vmatprep.subr.bf16.mxu0 0
      %1786 = vmatpush1.bf16.msra.mxu0 0
      %1787 = vmatprep.subr.bf16.mxu0 0
      %1788 = vmatpush1.bf16.msra.mxu0 0
      %1789 = vmatprep.subr.bf16.mxu0 0
      %1790 = vmatpush1.bf16.msra.mxu0 0
      %1791 = vmatprep.subr.bf16.mxu0 0
      %1792 = vmatpush1.bf16.msra.mxu0 0
      %1793 = vmatprep.subr.bf16.mxu0 0
      %1794 = vmatpush1.bf16.msra.mxu0 0
      %1795 = vmatprep.subr.bf16.mxu0 0
      %1796 = vmatpush1.bf16.msra.mxu0 0
      %1797 = vmatprep.subr.bf16.mxu0 0
      %1798 = vmatpush1.bf16.msra.mxu0 0
      %1799 = vmatprep.subr.bf16.mxu0 0
      %1800 = vmatpush1.bf16.msra.mxu0 0
      %1801 = vmatprep.subr.bf16.mxu0 0
      %1802 = vmatpush1.bf16.msra.mxu0 0
      %1803 = vmatprep.subr.bf16.mxu0 0
      %1804 = vmatpush1.bf16.msra.mxu0 0
      %1805 = vmatprep.subr.bf16.mxu0 0
      %1806 = vmatpush1.bf16.msra.mxu0 0
      %1807 = vmatprep.subr.bf16.mxu0 0
      %1808 = vmatpush1.bf16.msra.mxu0 0
      %1809 = vmatprep.subr.bf16.mxu0 0
      %1810 = vmatpush1.bf16.msra.mxu0 0
      %1811 = vmatprep.subr.bf16.mxu0 0
      %1812 = vmatpush1.bf16.msra.mxu0 0
      %1813 = vmatprep.mubr.bf16.mxu0 0
      %1814 = vmatmul.mubr.bf16.gmra.mrb[0].mxu0 %v1670
      %v1815 = vpop.f32.mrb[0].mxu0
      %v1816 = vadd.f32 0.0, %v1815
      %v1817 = vpop.f32.mrb[0].mxu0
      %v1818 = vadd.f32 0.0, %v1817
      %v1819 = vpop.f32.mrb[0].mxu0
      %v1820 = vpop.f32.mrb[0].mxu0
      %1821 = vdwg.mxu0
      %1822 = vmatprep.subr.bf16.mxu0 %v1694
      %1823 = vmatpush1.bf16.msra.mxu0 %v1691
      %1824 = vmatprep.subr.bf16.mxu0 0
      %1825 = vmatpush1.bf16.msra.mxu0 0
      %1826 = vmatprep.subr.bf16.mxu0 0
      %1827 = vmatpush1.bf16.msra.mxu0 0
      %1828 = vmatprep.subr.bf16.mxu0 0
      %1829 = vmatpush1.bf16.msra.mxu0 0
      %1830 = vmatprep.subr.bf16.mxu0 0
      %1831 = vmatpush1.bf16.msra.mxu0 0
      %1832 = vmatprep.subr.bf16.mxu0 0
      %1833 = vmatpush1.bf16.msra.mxu0 0
      %1834 = vmatprep.subr.bf16.mxu0 0
      %1835 = vmatpush1.bf16.msra.mxu0 0
      %1836 = vmatprep.subr.bf16.mxu0 0
      %1837 = vmatpush1.bf16.msra.mxu0 0
      %1838 = vmatprep.subr.bf16.mxu0 0
      %1839 = vmatpush1.bf16.msra.mxu0 0
      %1840 = vmatprep.subr.bf16.mxu0 0
      %1841 = vmatpush1.bf16.msra.mxu0 0
      %1842 = vmatprep.subr.bf16.mxu0 0
      %1843 = vmatpush1.bf16.msra.mxu0 0
      %1844 = vmatprep.subr.bf16.mxu0 0
      %1845 = vmatpush1.bf16.msra.mxu0 0
      %1846 = vmatprep.subr.bf16.mxu0 0
      %1847 = vmatpush1.bf16.msra.mxu0 0
      %1848 = vmatprep.subr.bf16.mxu0 0
      %1849 = vmatpush1.bf16.msra.mxu0 0
      %1850 = vmatprep.subr.bf16.mxu0 0
      %1851 = vmatpush1.bf16.msra.mxu0 0
      %1852 = vmatprep.subr.bf16.mxu0 0
      %1853 = vmatpush1.bf16.msra.mxu0 0
      %1854 = vmatprep.mubr.bf16.mxu0 0
      %1855 = vmatmul.mubr.bf16.gmra.mrb[0].mxu0 %v1670
      %v1856 = vpop.f32.mrb[0].mxu0
      %v1857 = vadd.f32 0.0, %v1856
      %v1858 = vpop.f32.mrb[0].mxu0
      %v1859 = vadd.f32 0.0, %v1858
      %v1860 = vpop.f32.mrb[0].mxu0
      %v1861 = vpop.f32.mrb[0].mxu0
      %1862 = vdwg.mxu0
      %1863 = vmatprep.subr.bf16.mxu0 0
      %1864 = vmatpush1.bf16.msra.mxu0 %v1697
      %1865 = vmatprep.subr.bf16.mxu0 0
      %1866 = vmatpush1.bf16.msra.mxu0 0
      %1867 = vmatprep.subr.bf16.mxu0 0
      %1868 = vmatpush1.bf16.msra.mxu0 0
      %1869 = vmatprep.subr.bf16.mxu0 0
      %1870 = vmatpush1.bf16.msra.mxu0 0
      %1871 = vmatprep.subr.bf16.mxu0 0
      %1872 = vmatpush1.bf16.msra.mxu0 0
      %1873 = vmatprep.subr.bf16.mxu0 0
      %1874 = vmatpush1.bf16.msra.mxu0 0
      %1875 = vmatprep.subr.bf16.mxu0 0
      %1876 = vmatpush1.bf16.msra.mxu0 0
      %1877 = vmatprep.subr.bf16.mxu0 0
      %1878 = vmatpush1.bf16.msra.mxu0 0
      %1879 = vmatprep.subr.bf16.mxu0 0
      %1880 = vmatpush1.bf16.msra.mxu0 0
      %1881 = vmatprep.subr.bf16.mxu0 0
      %1882 = vmatpush1.bf16.msra.mxu0 0
      %1883 = vmatprep.subr.bf16.mxu0 0
      %1884 = vmatpush1.bf16.msra.mxu0 0
      %1885 = vmatprep.subr.bf16.mxu0 0
      %1886 = vmatpush1.bf16.msra.mxu0 0
      %1887 = vmatprep.subr.bf16.mxu0 0
      %1888 = vmatpush1.bf16.msra.mxu0 0
      %1889 = vmatprep.subr.bf16.mxu0 0
      %1890 = vmatpush1.bf16.msra.mxu0 0
      %1891 = vmatprep.subr.bf16.mxu0 0
      %1892 = vmatpush1.bf16.msra.mxu0 0
      %1893 = vmatprep.subr.bf16.mxu0 0
      %1894 = vmatpush1.bf16.msra.mxu0 0
      %1895 = vmatprep.mubr.bf16.mxu0 0
      %1896 = vmatmul.mubr.bf16.gmra.mrb[0].mxu0 %v1670
      %v1897 = vpop.f32.mrb[0].mxu0
      %v1898 = vadd.f32 0.0, %v1897
      %v1899 = vpop.f32.mrb[0].mxu0
      %v1900 = vpop.f32.mrb[0].mxu0
      %v1901 = vpop.f32.mrb[0].mxu0
      %1902 = vdwg.mxu0
      %v1903 = vadd.f32 %v1631, %v1734
      %v1904 = vadd.f32 %v1632, %v1736
      %v1905 = vadd.f32 %v1633, %v1775
      %v1906 = vadd.f32 %v1634, %v1777
      %v1907 = vadd.f32 %v1635, %v1816
      %v1908 = vadd.f32 %v1636, %v1818
      %v1909 = vadd.f32 %v1637, %v1857
      %v1910 = vadd.f32 %v1638, %v1859
      %v1911 = vadd.f32 %v1639, %v1898
      %v1912 = vld [vmem:[%s276] sm:$0xff]
      %v1913 = vld [vmem:[%s276 + $0x8] sm:$0xff]
      %v1914 = vld [vmem:[%s276 + $0x10] sm:$0xff]
      %v1915 = vld [vmem:[%s276 + $0x18] sm:$0xff]
      %v1916 = vld [vmem:[%s276 + $0x20] sm:$0xff]
      %s1917 = scalar_lea.vmem %s2, 24
      %v1918 = vld [vmem:[%s1917] sm:$0xf]
      %v1924 = vunpack.c.l.b16 %v1912
      %v1925 = vunpack.c.h.b16 %v1912
      %v1926 = vunpack.c.l.b16 %v1913
      %v1927 = vunpack.c.h.b16 %v1913
      %v1928 = vunpack.c.l.b16 %v1914
      %v1929 = vunpack.c.h.b16 %v1914
      %v1930 = vunpack.c.l.b16 %v1915
      %v1931 = vunpack.c.h.b16 %v1915
      %v1932 = vunpack.c.l.b16 %v1916
      %v1933 = vunpack.c.h.b16 %v1916
      %v1934 = vpack.c.b16 %v1924, %v1924
      %v1935 = vpack.c.b16 %v1925, %v1925
      %v1936 = vpack.c.b16 %v1926, %v1926
      %v1937 = vpack.c.b16 %v1927, %v1927
      %v1938 = vpack.c.b16 %v1928, %v1928
      %v1939 = vpack.c.b16 %v1929, %v1929
      %v1940 = vpack.c.b16 %v1930, %v1930
      %v1941 = vpack.c.b16 %v1931, %v1931
      %v1942 = vpack.c.b16 %v1932, %v1932
      %v1943 = vpack.c.b16 %v1933, %v1933
      %1944 = vrot.lane.b32.xlu0 %v1934, 60
      %v1945 = vpop.permute.xlu0 %1944
      %1946 = vrot.lane.b32.xlu0 %v1935, 60
      %v1947 = vpop.permute.xlu0 %1946
      %1948 = vrot.lane.b32.xlu0 %v1936, 60
      %v1949 = vpop.permute.xlu0 %1948
      %1950 = vrot.lane.b32.xlu0 %v1937, 60
      %v1951 = vpop.permute.xlu0 %1950
      %1952 = vrot.lane.b32.xlu0 %v1938, 60
      %v1953 = vpop.permute.xlu0 %1952
      %1954 = vrot.lane.b32.xlu0 %v1939, 60
      %v1955 = vpop.permute.xlu0 %1954
      %1956 = vrot.lane.b32.xlu0 %v1940, 60
      %v1957 = vpop.permute.xlu0 %1956
      %1958 = vrot.lane.b32.xlu0 %v1941, 60
      %v1959 = vpop.permute.xlu0 %1958
      %1960 = vrot.lane.b32.xlu0 %v1942, 60
      %v1961 = vpop.permute.xlu0 %1960
      %1962 = vrot.lane.b32.xlu0 %v1943, 60
      %v1963 = vpop.permute.xlu0 %1962
      %vm1964 = vcmask 490496
      %v1965 = vsel %vm1964, %v1945, %v1947
      %v1966 = vsel %vm1964, %v1947, %v1949
      %v1967 = vsel %vm1964, %v1949, %v1951
      %v1968 = vsel %vm1964, %v1951, %v1953
      %v1969 = vsel %vm1964, %v1953, %v1955
      %v1970 = vsel %vm1964, %v1955, %v1957
      %v1971 = vsel %vm1964, %v1957, %v1959
      %v1972 = vsel %vm1964, %v1959, %v1961
      %v1973 = vsel %vm1964, %v1961, %v1963
      %v1975 = vsel %vm354, %v1918, 0
      %v1978 = vsel %vm358, %v1965, 0
      %v1981 = vsel %vm358, %v1966, 0
      %v1984 = vsel %vm358, %v1967, 0
      %v1987 = vsel %vm358, %v1968, 0
      %v1990 = vsel %vm358, %v1969, 0
      %v1993 = vsel %vm358, %v1970, 0
      %v1996 = vsel %vm358, %v1971, 0
      %v1999 = vsel %vm358, %v1972, 0
      %v2002 = vsel %vm358, %v1973, 0
      %2004 = vmatprep.subr.bf16.mxu0 %v1981
      %2005 = vmatpush1.bf16.msra.mxu0 %v1978
      %2006 = vmatprep.subr.bf16.mxu0 0
      %2007 = vmatpush1.bf16.msra.mxu0 0
      %2008 = vmatprep.subr.bf16.mxu0 0
      %2009 = vmatpush1.bf16.msra.mxu0 0
      %2010 = vmatprep.subr.bf16.mxu0 0
      %2011 = vmatpush1.bf16.msra.mxu0 0
      %2012 = vmatprep.subr.bf16.mxu0 0
      %2013 = vmatpush1.bf16.msra.mxu0 0
      %2014 = vmatprep.subr.bf16.mxu0 0
      %2015 = vmatpush1.bf16.msra.mxu0 0
      %2016 = vmatprep.subr.bf16.mxu0 0
      %2017 = vmatpush1.bf16.msra.mxu0 0
      %2018 = vmatprep.subr.bf16.mxu0 0
      %2019 = vmatpush1.bf16.msra.mxu0 0
      %2020 = vmatprep.subr.bf16.mxu0 0
      %2021 = vmatpush1.bf16.msra.mxu0 0
      %2022 = vmatprep.subr.bf16.mxu0 0
      %2023 = vmatpush1.bf16.msra.mxu0 0
      %2024 = vmatprep.subr.bf16.mxu0 0
      %2025 = vmatpush1.bf16.msra.mxu0 0
      %2026 = vmatprep.subr.bf16.mxu0 0
      %2027 = vmatpush1.bf16.msra.mxu0 0
      %2028 = vmatprep.subr.bf16.mxu0 0
      %2029 = vmatpush1.bf16.msra.mxu0 0
      %2030 = vmatprep.subr.bf16.mxu0 0
      %2031 = vmatpush1.bf16.msra.mxu0 0
      %2032 = vmatprep.subr.bf16.mxu0 0
      %2033 = vmatpush1.bf16.msra.mxu0 0
      %2034 = vmatprep.subr.bf16.mxu0 0
      %2035 = vmatpush1.bf16.msra.mxu0 0
      %2036 = vmatprep.mubr.bf16.mxu0 0
      %2037 = vmatmul.mubr.bf16.gmra.mrb[0].mxu0 %v1975
      %v2038 = vpop.f32.mrb[0].mxu0
      %v2039 = vadd.f32 0.0, %v2038
      %v2040 = vpop.f32.mrb[0].mxu0
      %v2041 = vadd.f32 0.0, %v2040
      %v2042 = vpop.f32.mrb[0].mxu0
      %v2043 = vpop.f32.mrb[0].mxu0
      %2044 = vdwg.mxu0
      %2045 = vmatprep.subr.bf16.mxu0 %v1987
      %2046 = vmatpush1.bf16.msra.mxu0 %v1984
      %2047 = vmatprep.subr.bf16.mxu0 0
      %2048 = vmatpush1.bf16.msra.mxu0 0
      %2049 = vmatprep.subr.bf16.mxu0 0
      %2050 = vmatpush1.bf16.msra.mxu0 0
      %2051 = vmatprep.subr.bf16.mxu0 0
      %2052 = vmatpush1.bf16.msra.mxu0 0
      %2053 = vmatprep.subr.bf16.mxu0 0
      %2054 = vmatpush1.bf16.msra.mxu0 0
      %2055 = vmatprep.subr.bf16.mxu0 0
      %2056 = vmatpush1.bf16.msra.mxu0 0
      %2057 = vmatprep.subr.bf16.mxu0 0
      %2058 = vmatpush1.bf16.msra.mxu0 0
      %2059 = vmatprep.subr.bf16.mxu0 0
      %2060 = vmatpush1.bf16.msra.mxu0 0
      %2061 = vmatprep.subr.bf16.mxu0 0
      %2062 = vmatpush1.bf16.msra.mxu0 0
      %2063 = vmatprep.subr.bf16.mxu0 0
      %2064 = vmatpush1.bf16.msra.mxu0 0
      %2065 = vmatprep.subr.bf16.mxu0 0
      %2066 = vmatpush1.bf16.msra.mxu0 0
      %2067 = vmatprep.subr.bf16.mxu0 0
      %2068 = vmatpush1.bf16.msra.mxu0 0
      %2069 = vmatprep.subr.bf16.mxu0 0
      %2070 = vmatpush1.bf16.msra.mxu0 0
      %2071 = vmatprep.subr.bf16.mxu0 0
      %2072 = vmatpush1.bf16.msra.mxu0 0
      %2073 = vmatprep.subr.bf16.mxu0 0
      %2074 = vmatpush1.bf16.msra.mxu0 0
      %2075 = vmatprep.subr.bf16.mxu0 0
      %2076 = vmatpush1.bf16.msra.mxu0 0
      %2077 = vmatprep.mubr.bf16.mxu0 0
      %2078 = vmatmul.mubr.bf16.gmra.mrb[0].mxu0 %v1975
      %v2079 = vpop.f32.mrb[0].mxu0
      %v2080 = vadd.f32 0.0, %v2079
      %v2081 = vpop.f32.mrb[0].mxu0
      %v2082 = vadd.f32 0.0, %v2081
      %v2083 = vpop.f32.mrb[0].mxu0
      %v2084 = vpop.f32.mrb[0].mxu0
      %2085 = vdwg.mxu0
      %2086 = vmatprep.subr.bf16.mxu0 %v1993
      %2087 = vmatpush1.bf16.msra.mxu0 %v1990
      %2088 = vmatprep.subr.bf16.mxu0 0
      %2089 = vmatpush1.bf16.msra.mxu0 0
      %2090 = vmatprep.subr.bf16.mxu0 0
      %2091 = vmatpush1.bf16.msra.mxu0 0
      %2092 = vmatprep.subr.bf16.mxu0 0
      %2093 = vmatpush1.bf16.msra.mxu0 0
      %2094 = vmatprep.subr.bf16.mxu0 0
      %2095 = vmatpush1.bf16.msra.mxu0 0
      %2096 = vmatprep.subr.bf16.mxu0 0
      %2097 = vmatpush1.bf16.msra.mxu0 0
      %2098 = vmatprep.subr.bf16.mxu0 0
      %2099 = vmatpush1.bf16.msra.mxu0 0
      %2100 = vmatprep.subr.bf16.mxu0 0
      %2101 = vmatpush1.bf16.msra.mxu0 0
      %2102 = vmatprep.subr.bf16.mxu0 0
      %2103 = vmatpush1.bf16.msra.mxu0 0
      %2104 = vmatprep.subr.bf16.mxu0 0
      %2105 = vmatpush1.bf16.msra.mxu0 0
      %2106 = vmatprep.subr.bf16.mxu0 0
      %2107 = vmatpush1.bf16.msra.mxu0 0
      %2108 = vmatprep.subr.bf16.mxu0 0
      %2109 = vmatpush1.bf16.msra.mxu0 0
      %2110 = vmatprep.subr.bf16.mxu0 0
      %2111 = vmatpush1.bf16.msra.mxu0 0
      %2112 = vmatprep.subr.bf16.mxu0 0
      %2113 = vmatpush1.bf16.msra.mxu0 0
      %2114 = vmatprep.subr.bf16.mxu0 0
      %2115 = vmatpush1.bf16.msra.mxu0 0
      %2116 = vmatprep.subr.bf16.mxu0 0
      %2117 = vmatpush1.bf16.msra.mxu0 0
      %2118 = vmatprep.mubr.bf16.mxu0 0
      %2119 = vmatmul.mubr.bf16.gmra.mrb[0].mxu0 %v1975
      %v2120 = vpop.f32.mrb[0].mxu0
      %v2121 = vadd.f32 0.0, %v2120
      %v2122 = vpop.f32.mrb[0].mxu0
      %v2123 = vadd.f32 0.0, %v2122
      %v2124 = vpop.f32.mrb[0].mxu0
      %v2125 = vpop.f32.mrb[0].mxu0
      %2126 = vdwg.mxu0
      %2127 = vmatprep.subr.bf16.mxu0 %v1999
      %2128 = vmatpush1.bf16.msra.mxu0 %v1996
      %2129 = vmatprep.subr.bf16.mxu0 0
      %2130 = vmatpush1.bf16.msra.mxu0 0
      %2131 = vmatprep.subr.bf16.mxu0 0
      %2132 = vmatpush1.bf16.msra.mxu0 0
      %2133 = vmatprep.subr.bf16.mxu0 0
      %2134 = vmatpush1.bf16.msra.mxu0 0
      %2135 = vmatprep.subr.bf16.mxu0 0
      %2136 = vmatpush1.bf16.msra.mxu0 0
      %2137 = vmatprep.subr.bf16.mxu0 0
      %2138 = vmatpush1.bf16.msra.mxu0 0
      %2139 = vmatprep.subr.bf16.mxu0 0
      %2140 = vmatpush1.bf16.msra.mxu0 0
      %2141 = vmatprep.subr.bf16.mxu0 0
      %2142 = vmatpush1.bf16.msra.mxu0 0
      %2143 = vmatprep.subr.bf16.mxu0 0
      %2144 = vmatpush1.bf16.msra.mxu0 0
      %2145 = vmatprep.subr.bf16.mxu0 0
      %2146 = vmatpush1.bf16.msra.mxu0 0
      %2147 = vmatprep.subr.bf16.mxu0 0
      %2148 = vmatpush1.bf16.msra.mxu0 0
      %2149 = vmatprep.subr.bf16.mxu0 0
      %2150 = vmatpush1.bf16.msra.mxu0 0
      %2151 = vmatprep.subr.bf16.mxu0 0
      %2152 = vmatpush1.bf16.msra.mxu0 0
      %2153 = vmatprep.subr.bf16.mxu0 0
      %2154 = vmatpush1.bf16.msra.mxu0 0
      %2155 = vmatprep.subr.bf16.mxu0 0
      %2156 = vmatpush1.bf16.msra.mxu0 0
      %2157 = vmatprep.subr.bf16.mxu0 0
      %2158 = vmatpush1.bf16.msra.mxu0 0
      %2159 = vmatprep.mubr.bf16.mxu0 0
      %2160 = vmatmul.mubr.bf16.gmra.mrb[0].mxu0 %v1975
      %v2161 = vpop.f32.mrb[0].mxu0
      %v2162 = vadd.f32 0.0, %v2161
      %v2163 = vpop.f32.mrb[0].mxu0
      %v2164 = vadd.f32 0.0, %v2163
      %v2165 = vpop.f32.mrb[0].mxu0
      %v2166 = vpop.f32.mrb[0].mxu0
      %2167 = vdwg.mxu0
      %2168 = vmatprep.subr.bf16.mxu0 0
      %2169 = vmatpush1.bf16.msra.mxu0 %v2002
      %2170 = vmatprep.subr.bf16.mxu0 0
      %2171 = vmatpush1.bf16.msra.mxu0 0
      %2172 = vmatprep.subr.bf16.mxu0 0
      %2173 = vmatpush1.bf16.msra.mxu0 0
      %2174 = vmatprep.subr.bf16.mxu0 0
      %2175 = vmatpush1.bf16.msra.mxu0 0
      %2176 = vmatprep.subr.bf16.mxu0 0
      %2177 = vmatpush1.bf16.msra.mxu0 0
      %2178 = vmatprep.subr.bf16.mxu0 0
      %2179 = vmatpush1.bf16.msra.mxu0 0
      %2180 = vmatprep.subr.bf16.mxu0 0
      %2181 = vmatpush1.bf16.msra.mxu0 0
      %2182 = vmatprep.subr.bf16.mxu0 0
      %2183 = vmatpush1.bf16.msra.mxu0 0
      %2184 = vmatprep.subr.bf16.mxu0 0
      %2185 = vmatpush1.bf16.msra.mxu0 0
      %2186 = vmatprep.subr.bf16.mxu0 0
      %2187 = vmatpush1.bf16.msra.mxu0 0
      %2188 = vmatprep.subr.bf16.mxu0 0
      %2189 = vmatpush1.bf16.msra.mxu0 0
      %2190 = vmatprep.subr.bf16.mxu0 0
      %2191 = vmatpush1.bf16.msra.mxu0 0
      %2192 = vmatprep.subr.bf16.mxu0 0
      %2193 = vmatpush1.bf16.msra.mxu0 0
      %2194 = vmatprep.subr.bf16.mxu0 0
      %2195 = vmatpush1.bf16.msra.mxu0 0
      %2196 = vmatprep.subr.bf16.mxu0 0
      %2197 = vmatpush1.bf16.msra.mxu0 0
      %2198 = vmatprep.subr.bf16.mxu0 0
      %2199 = vmatpush1.bf16.msra.mxu0 0
      %2200 = vmatprep.mubr.bf16.mxu0 0
      %2201 = vmatmul.mubr.bf16.gmra.mrb[0].mxu0 %v1975
      %v2202 = vpop.f32.mrb[0].mxu0
      %v2203 = vadd.f32 0.0, %v2202
      %v2204 = vpop.f32.mrb[0].mxu0
      %v2205 = vpop.f32.mrb[0].mxu0
      %v2206 = vpop.f32.mrb[0].mxu0
      %2207 = vdwg.mxu0
      %v2208 = vadd.f32 %v1903, %v2039
      %v2209 = vadd.f32 %v1904, %v2041
      %v2210 = vadd.f32 %v1905, %v2080
      %v2211 = vadd.f32 %v1906, %v2082
      %v2212 = vadd.f32 %v1907, %v2121
      %v2213 = vadd.f32 %v1908, %v2123
      %v2214 = vadd.f32 %v1909, %v2162
      %v2215 = vadd.f32 %v1910, %v2164
      %v2216 = vadd.f32 %v1911, %v2203
      %s2217 = scalar_lea.vmem %s2, 28
      %v2218 = vld [vmem:[%s2217] sm:$0xf]
      %2219 = vrot.lane.b32.xlu0 %v1934, 59
      %v2220 = vpop.permute.xlu0 %2219
      %2221 = vrot.lane.b32.xlu0 %v1935, 59
      %v2222 = vpop.permute.xlu0 %2221
      %2223 = vrot.lane.b32.xlu0 %v1936, 59
      %v2224 = vpop.permute.xlu0 %2223
      %2225 = vrot.lane.b32.xlu0 %v1937, 59
      %v2226 = vpop.permute.xlu0 %2225
      %2227 = vrot.lane.b32.xlu0 %v1938, 59
      %v2228 = vpop.permute.xlu0 %2227
      %2229 = vrot.lane.b32.xlu0 %v1939, 59
      %v2230 = vpop.permute.xlu0 %2229
      %2231 = vrot.lane.b32.xlu0 %v1940, 59
      %v2232 = vpop.permute.xlu0 %2231
      %2233 = vrot.lane.b32.xlu0 %v1941, 59
      %v2234 = vpop.permute.xlu0 %2233
      %2235 = vrot.lane.b32.xlu0 %v1942, 59
      %v2236 = vpop.permute.xlu0 %2235
      %2237 = vrot.lane.b32.xlu0 %v1943, 59
      %v2238 = vpop.permute.xlu0 %2237
      %vm2239 = vcmask 482304
      %v2240 = vsel %vm2239, %v2220, %v2222
      %v2241 = vsel %vm2239, %v2222, %v2224
      %v2242 = vsel %vm2239, %v2224, %v2226
      %v2243 = vsel %vm2239, %v2226, %v2228
      %v2244 = vsel %vm2239, %v2228, %v2230
      %v2245 = vsel %vm2239, %v2230, %v2232
      %v2246 = vsel %vm2239, %v2232, %v2234
      %v2247 = vsel %vm2239, %v2234, %v2236
      %v2248 = vsel %vm2239, %v2236, %v2238
      %v2250 = vsel %vm354, %v2218, 0
      %v2253 = vsel %vm358, %v2240, 0
      %v2256 = vsel %vm358, %v2241, 0
      %v2259 = vsel %vm358, %v2242, 0
      %v2262 = vsel %vm358, %v2243, 0
      %v2265 = vsel %vm358, %v2244, 0
      %v2268 = vsel %vm358, %v2245, 0
      %v2271 = vsel %vm358, %v2246, 0
      %v2274 = vsel %vm358, %v2247, 0
      %v2277 = vsel %vm358, %v2248, 0
      %2279 = vmatprep.subr.bf16.mxu0 %v2256
      %2280 = vmatpush1.bf16.msra.mxu0 %v2253
      %2281 = vmatprep.subr.bf16.mxu0 0
      %2282 = vmatpush1.bf16.msra.mxu0 0
      %2283 = vmatprep.subr.bf16.mxu0 0
      %2284 = vmatpush1.bf16.msra.mxu0 0
      %2285 = vmatprep.subr.bf16.mxu0 0
      %2286 = vmatpush1.bf16.msra.mxu0 0
      %2287 = vmatprep.subr.bf16.mxu0 0
      %2288 = vmatpush1.bf16.msra.mxu0 0
      %2289 = vmatprep.subr.bf16.mxu0 0
      %2290 = vmatpush1.bf16.msra.mxu0 0
      %2291 = vmatprep.subr.bf16.mxu0 0
      %2292 = vmatpush1.bf16.msra.mxu0 0
      %2293 = vmatprep.subr.bf16.mxu0 0
      %2294 = vmatpush1.bf16.msra.mxu0 0
      %2295 = vmatprep.subr.bf16.mxu0 0
      %2296 = vmatpush1.bf16.msra.mxu0 0
      %2297 = vmatprep.subr.bf16.mxu0 0
      %2298 = vmatpush1.bf16.msra.mxu0 0
      %2299 = vmatprep.subr.bf16.mxu0 0
      %2300 = vmatpush1.bf16.msra.mxu0 0
      %2301 = vmatprep.subr.bf16.mxu0 0
      %2302 = vmatpush1.bf16.msra.mxu0 0
      %2303 = vmatprep.subr.bf16.mxu0 0
      %2304 = vmatpush1.bf16.msra.mxu0 0
      %2305 = vmatprep.subr.bf16.mxu0 0
      %2306 = vmatpush1.bf16.msra.mxu0 0
      %2307 = vmatprep.subr.bf16.mxu0 0
      %2308 = vmatpush1.bf16.msra.mxu0 0
      %2309 = vmatprep.subr.bf16.mxu0 0
      %2310 = vmatpush1.bf16.msra.mxu0 0
      %2311 = vmatprep.mubr.bf16.mxu0 0
      %2312 = vmatmul.mubr.bf16.gmra.mrb[0].mxu0 %v2250
      %v2313 = vpop.f32.mrb[0].mxu0
      %v2314 = vadd.f32 0.0, %v2313
      %v2315 = vpop.f32.mrb[0].mxu0
      %v2316 = vadd.f32 0.0, %v2315
      %v2317 = vpop.f32.mrb[0].mxu0
      %v2318 = vpop.f32.mrb[0].mxu0
      %2319 = vdwg.mxu0
      %2320 = vmatprep.subr.bf16.mxu0 %v2262
      %2321 = vmatpush1.bf16.msra.mxu0 %v2259
      %2322 = vmatprep.subr.bf16.mxu0 0
      %2323 = vmatpush1.bf16.msra.mxu0 0
      %2324 = vmatprep.subr.bf16.mxu0 0
      %2325 = vmatpush1.bf16.msra.mxu0 0
      %2326 = vmatprep.subr.bf16.mxu0 0
      %2327 = vmatpush1.bf16.msra.mxu0 0
      %2328 = vmatprep.subr.bf16.mxu0 0
      %2329 = vmatpush1.bf16.msra.mxu0 0
      %2330 = vmatprep.subr.bf16.mxu0 0
      %2331 = vmatpush1.bf16.msra.mxu0 0
      %2332 = vmatprep.subr.bf16.mxu0 0
      %2333 = vmatpush1.bf16.msra.mxu0 0
      %2334 = vmatprep.subr.bf16.mxu0 0
      %2335 = vmatpush1.bf16.msra.mxu0 0
      %2336 = vmatprep.subr.bf16.mxu0 0
      %2337 = vmatpush1.bf16.msra.mxu0 0
      %2338 = vmatprep.subr.bf16.mxu0 0
      %2339 = vmatpush1.bf16.msra.mxu0 0
      %2340 = vmatprep.subr.bf16.mxu0 0
      %2341 = vmatpush1.bf16.msra.mxu0 0
      %2342 = vmatprep.subr.bf16.mxu0 0
      %2343 = vmatpush1.bf16.msra.mxu0 0
      %2344 = vmatprep.subr.bf16.mxu0 0
      %2345 = vmatpush1.bf16.msra.mxu0 0
      %2346 = vmatprep.subr.bf16.mxu0 0
      %2347 = vmatpush1.bf16.msra.mxu0 0
      %2348 = vmatprep.subr.bf16.mxu0 0
      %2349 = vmatpush1.bf16.msra.mxu0 0
      %2350 = vmatprep.subr.bf16.mxu0 0
      %2351 = vmatpush1.bf16.msra.mxu0 0
      %2352 = vmatprep.mubr.bf16.mxu0 0
      %2353 = vmatmul.mubr.bf16.gmra.mrb[0].mxu0 %v2250
      %v2354 = vpop.f32.mrb[0].mxu0
      %v2355 = vadd.f32 0.0, %v2354
      %v2356 = vpop.f32.mrb[0].mxu0
      %v2357 = vadd.f32 0.0, %v2356
      %v2358 = vpop.f32.mrb[0].mxu0
      %v2359 = vpop.f32.mrb[0].mxu0
      %2360 = vdwg.mxu0
      %2361 = vmatprep.subr.bf16.mxu0 %v2268
      %2362 = vmatpush1.bf16.msra.mxu0 %v2265
      %2363 = vmatprep.subr.bf16.mxu0 0
      %2364 = vmatpush1.bf16.msra.mxu0 0
      %2365 = vmatprep.subr.bf16.mxu0 0
      %2366 = vmatpush1.bf16.msra.mxu0 0
      %2367 = vmatprep.subr.bf16.mxu0 0
      %2368 = vmatpush1.bf16.msra.mxu0 0
      %2369 = vmatprep.subr.bf16.mxu0 0
      %2370 = vmatpush1.bf16.msra.mxu0 0
      %2371 = vmatprep.subr.bf16.mxu0 0
      %2372 = vmatpush1.bf16.msra.mxu0 0
      %2373 = vmatprep.subr.bf16.mxu0 0
      %2374 = vmatpush1.bf16.msra.mxu0 0
      %2375 = vmatprep.subr.bf16.mxu0 0
      %2376 = vmatpush1.bf16.msra.mxu0 0
      %2377 = vmatprep.subr.bf16.mxu0 0
      %2378 = vmatpush1.bf16.msra.mxu0 0
      %2379 = vmatprep.subr.bf16.mxu0 0
      %2380 = vmatpush1.bf16.msra.mxu0 0
      %2381 = vmatprep.subr.bf16.mxu0 0
      %2382 = vmatpush1.bf16.msra.mxu0 0
      %2383 = vmatprep.subr.bf16.mxu0 0
      %2384 = vmatpush1.bf16.msra.mxu0 0
      %2385 = vmatprep.subr.bf16.mxu0 0
      %2386 = vmatpush1.bf16.msra.mxu0 0
      %2387 = vmatprep.subr.bf16.mxu0 0
      %2388 = vmatpush1.bf16.msra.mxu0 0
      %2389 = vmatprep.subr.bf16.mxu0 0
      %2390 = vmatpush1.bf16.msra.mxu0 0
      %2391 = vmatprep.subr.bf16.mxu0 0
      %2392 = vmatpush1.bf16.msra.mxu0 0
      %2393 = vmatprep.mubr.bf16.mxu0 0
      %2394 = vmatmul.mubr.bf16.gmra.mrb[0].mxu0 %v2250
      %v2395 = vpop.f32.mrb[0].mxu0
      %v2396 = vadd.f32 0.0, %v2395
      %v2397 = vpop.f32.mrb[0].mxu0
      %v2398 = vadd.f32 0.0, %v2397
      %v2399 = vpop.f32.mrb[0].mxu0
      %v2400 = vpop.f32.mrb[0].mxu0
      %2401 = vdwg.mxu0
      %2402 = vmatprep.subr.bf16.mxu0 %v2274
      %2403 = vmatpush1.bf16.msra.mxu0 %v2271
      %2404 = vmatprep.subr.bf16.mxu0 0
      %2405 = vmatpush1.bf16.msra.mxu0 0
      %2406 = vmatprep.subr.bf16.mxu0 0
      %2407 = vmatpush1.bf16.msra.mxu0 0
      %2408 = vmatprep.subr.bf16.mxu0 0
      %2409 = vmatpush1.bf16.msra.mxu0 0
      %2410 = vmatprep.subr.bf16.mxu0 0
      %2411 = vmatpush1.bf16.msra.mxu0 0
      %2412 = vmatprep.subr.bf16.mxu0 0
      %2413 = vmatpush1.bf16.msra.mxu0 0
      %2414 = vmatprep.subr.bf16.mxu0 0
      %2415 = vmatpush1.bf16.msra.mxu0 0
      %2416 = vmatprep.subr.bf16.mxu0 0
      %2417 = vmatpush1.bf16.msra.mxu0 0
      %2418 = vmatprep.subr.bf16.mxu0 0
      %2419 = vmatpush1.bf16.msra.mxu0 0
      %2420 = vmatprep.subr.bf16.mxu0 0
      %2421 = vmatpush1.bf16.msra.mxu0 0
      %2422 = vmatprep.subr.bf16.mxu0 0
      %2423 = vmatpush1.bf16.msra.mxu0 0
      %2424 = vmatprep.subr.bf16.mxu0 0
      %2425 = vmatpush1.bf16.msra.mxu0 0
      %2426 = vmatprep.subr.bf16.mxu0 0
      %2427 = vmatpush1.bf16.msra.mxu0 0
      %2428 = vmatprep.subr.bf16.mxu0 0
      %2429 = vmatpush1.bf16.msra.mxu0 0
      %2430 = vmatprep.subr.bf16.mxu0 0
      %2431 = vmatpush1.bf16.msra.mxu0 0
      %2432 = vmatprep.subr.bf16.mxu0 0
      %2433 = vmatpush1.bf16.msra.mxu0 0
      %2434 = vmatprep.mubr.bf16.mxu0 0
      %2435 = vmatmul.mubr.bf16.gmra.mrb[0].mxu0 %v2250
      %v2436 = vpop.f32.mrb[0].mxu0
      %v2437 = vadd.f32 0.0, %v2436
      %v2438 = vpop.f32.mrb[0].mxu0
      %v2439 = vadd.f32 0.0, %v2438
      %v2440 = vpop.f32.mrb[0].mxu0
      %v2441 = vpop.f32.mrb[0].mxu0
      %2442 = vdwg.mxu0
      %2443 = vmatprep.subr.bf16.mxu0 0
      %2444 = vmatpush1.bf16.msra.mxu0 %v2277
      %2445 = vmatprep.subr.bf16.mxu0 0
      %2446 = vmatpush1.bf16.msra.mxu0 0
      %2447 = vmatprep.subr.bf16.mxu0 0
      %2448 = vmatpush1.bf16.msra.mxu0 0
      %2449 = vmatprep.subr.bf16.mxu0 0
      %2450 = vmatpush1.bf16.msra.mxu0 0
      %2451 = vmatprep.subr.bf16.mxu0 0
      %2452 = vmatpush1.bf16.msra.mxu0 0
      %2453 = vmatprep.subr.bf16.mxu0 0
      %2454 = vmatpush1.bf16.msra.mxu0 0
      %2455 = vmatprep.subr.bf16.mxu0 0
      %2456 = vmatpush1.bf16.msra.mxu0 0
      %2457 = vmatprep.subr.bf16.mxu0 0
      %2458 = vmatpush1.bf16.msra.mxu0 0
      %2459 = vmatprep.subr.bf16.mxu0 0
      %2460 = vmatpush1.bf16.msra.mxu0 0
      %2461 = vmatprep.subr.bf16.mxu0 0
      %2462 = vmatpush1.bf16.msra.mxu0 0
      %2463 = vmatprep.subr.bf16.mxu0 0
      %2464 = vmatpush1.bf16.msra.mxu0 0
      %2465 = vmatprep.subr.bf16.mxu0 0
      %2466 = vmatpush1.bf16.msra.mxu0 0
      %2467 = vmatprep.subr.bf16.mxu0 0
      %2468 = vmatpush1.bf16.msra.mxu0 0
      %2469 = vmatprep.subr.bf16.mxu0 0
      %2470 = vmatpush1.bf16.msra.mxu0 0
      %2471 = vmatprep.subr.bf16.mxu0 0
      %2472 = vmatpush1.bf16.msra.mxu0 0
      %2473 = vmatprep.subr.bf16.mxu0 0
      %2474 = vmatpush1.bf16.msra.mxu0 0
      %2475 = vmatprep.mubr.bf16.mxu0 0
      %2476 = vmatmul.mubr.bf16.gmra.mrb[0].mxu0 %v2250
      %v2477 = vpop.f32.mrb[0].mxu0
      %v2478 = vadd.f32 0.0, %v2477
      %v2479 = vpop.f32.mrb[0].mxu0
      %v2480 = vpop.f32.mrb[0].mxu0
      %v2481 = vpop.f32.mrb[0].mxu0
      %2482 = vdwg.mxu0
      %v2483 = vadd.f32 %v2208, %v2314
      %v2484 = vadd.f32 %v2209, %v2316
      %v2485 = vadd.f32 %v2210, %v2355
      %v2486 = vadd.f32 %v2211, %v2357
      %v2487 = vadd.f32 %v2212, %v2396
      %v2488 = vadd.f32 %v2213, %v2398
      %v2489 = vadd.f32 %v2214, %v2437
      %v2490 = vadd.f32 %v2215, %v2439
      %v2491 = vadd.f32 %v2216, %v2478
      %s2492 = scalar_lea.vmem %s2, 32
      %v2493 = vld [vmem:[%s2492] sm:$0xf]
      %2494 = vrot.lane.b32.xlu0 %v1934, 58
      %v2495 = vpop.permute.xlu0 %2494
      %2496 = vrot.lane.b32.xlu0 %v1935, 58
      %v2497 = vpop.permute.xlu0 %2496
      %2498 = vrot.lane.b32.xlu0 %v1936, 58
      %v2499 = vpop.permute.xlu0 %2498
      %2500 = vrot.lane.b32.xlu0 %v1937, 58
      %v2501 = vpop.permute.xlu0 %2500
      %2502 = vrot.lane.b32.xlu0 %v1938, 58
      %v2503 = vpop.permute.xlu0 %2502
      %2504 = vrot.lane.b32.xlu0 %v1939, 58
      %v2505 = vpop.permute.xlu0 %2504
      %2506 = vrot.lane.b32.xlu0 %v1940, 58
      %v2507 = vpop.permute.xlu0 %2506
      %2508 = vrot.lane.b32.xlu0 %v1941, 58
      %v2509 = vpop.permute.xlu0 %2508
      %2510 = vrot.lane.b32.xlu0 %v1942, 58
      %v2511 = vpop.permute.xlu0 %2510
      %2512 = vrot.lane.b32.xlu0 %v1943, 58
      %v2513 = vpop.permute.xlu0 %2512
      %vm2514 = vcmask 474112
      %v2515 = vsel %vm2514, %v2495, %v2497
      %v2516 = vsel %vm2514, %v2497, %v2499
      %v2517 = vsel %vm2514, %v2499, %v2501
      %v2518 = vsel %vm2514, %v2501, %v2503
      %v2519 = vsel %vm2514, %v2503, %v2505
      %v2520 = vsel %vm2514, %v2505, %v2507
      %v2521 = vsel %vm2514, %v2507, %v2509
      %v2522 = vsel %vm2514, %v2509, %v2511
      %v2523 = vsel %vm2514, %v2511, %v2513
      %v2525 = vsel %vm354, %v2493, 0
      %v2528 = vsel %vm358, %v2515, 0
      %v2531 = vsel %vm358, %v2516, 0
      %v2534 = vsel %vm358, %v2517, 0
      %v2537 = vsel %vm358, %v2518, 0
      %v2540 = vsel %vm358, %v2519, 0
      %v2543 = vsel %vm358, %v2520, 0
      %v2546 = vsel %vm358, %v2521, 0
      %v2549 = vsel %vm358, %v2522, 0
      %v2552 = vsel %vm358, %v2523, 0
      %2554 = vmatprep.subr.bf16.mxu0 %v2531
      %2555 = vmatpush1.bf16.msra.mxu0 %v2528
      %2556 = vmatprep.subr.bf16.mxu0 0
      %2557 = vmatpush1.bf16.msra.mxu0 0
      %2558 = vmatprep.subr.bf16.mxu0 0
      %2559 = vmatpush1.bf16.msra.mxu0 0
      %2560 = vmatprep.subr.bf16.mxu0 0
      %2561 = vmatpush1.bf16.msra.mxu0 0
      %2562 = vmatprep.subr.bf16.mxu0 0
      %2563 = vmatpush1.bf16.msra.mxu0 0
      %2564 = vmatprep.subr.bf16.mxu0 0
      %2565 = vmatpush1.bf16.msra.mxu0 0
      %2566 = vmatprep.subr.bf16.mxu0 0
      %2567 = vmatpush1.bf16.msra.mxu0 0
      %2568 = vmatprep.subr.bf16.mxu0 0
      %2569 = vmatpush1.bf16.msra.mxu0 0
      %2570 = vmatprep.subr.bf16.mxu0 0
      %2571 = vmatpush1.bf16.msra.mxu0 0
      %2572 = vmatprep.subr.bf16.mxu0 0
      %2573 = vmatpush1.bf16.msra.mxu0 0
      %2574 = vmatprep.subr.bf16.mxu0 0
      %2575 = vmatpush1.bf16.msra.mxu0 0
      %2576 = vmatprep.subr.bf16.mxu0 0
      %2577 = vmatpush1.bf16.msra.mxu0 0
      %2578 = vmatprep.subr.bf16.mxu0 0
      %2579 = vmatpush1.bf16.msra.mxu0 0
      %2580 = vmatprep.subr.bf16.mxu0 0
      %2581 = vmatpush1.bf16.msra.mxu0 0
      %2582 = vmatprep.subr.bf16.mxu0 0
      %2583 = vmatpush1.bf16.msra.mxu0 0
      %2584 = vmatprep.subr.bf16.mxu0 0
      %2585 = vmatpush1.bf16.msra.mxu0 0
      %2586 = vmatprep.mubr.bf16.mxu0 0
      %2587 = vmatmul.mubr.bf16.gmra.mrb[0].mxu0 %v2525
      %v2588 = vpop.f32.mrb[0].mxu0
      %v2589 = vadd.f32 0.0, %v2588
      %v2590 = vpop.f32.mrb[0].mxu0
      %v2591 = vadd.f32 0.0, %v2590
      %v2592 = vpop.f32.mrb[0].mxu0
      %v2593 = vpop.f32.mrb[0].mxu0
      %2594 = vdwg.mxu0
      %2595 = vmatprep.subr.bf16.mxu0 %v2537
      %2596 = vmatpush1.bf16.msra.mxu0 %v2534
      %2597 = vmatprep.subr.bf16.mxu0 0
      %2598 = vmatpush1.bf16.msra.mxu0 0
      %2599 = vmatprep.subr.bf16.mxu0 0
      %2600 = vmatpush1.bf16.msra.mxu0 0
      %2601 = vmatprep.subr.bf16.mxu0 0
      %2602 = vmatpush1.bf16.msra.mxu0 0
      %2603 = vmatprep.subr.bf16.mxu0 0
      %2604 = vmatpush1.bf16.msra.mxu0 0
      %2605 = vmatprep.subr.bf16.mxu0 0
      %2606 = vmatpush1.bf16.msra.mxu0 0
      %2607 = vmatprep.subr.bf16.mxu0 0
      %2608 = vmatpush1.bf16.msra.mxu0 0
      %2609 = vmatprep.subr.bf16.mxu0 0
      %2610 = vmatpush1.bf16.msra.mxu0 0
      %2611 = vmatprep.subr.bf16.mxu0 0
      %2612 = vmatpush1.bf16.msra.mxu0 0
      %2613 = vmatprep.subr.bf16.mxu0 0
      %2614 = vmatpush1.bf16.msra.mxu0 0
      %2615 = vmatprep.subr.bf16.mxu0 0
      %2616 = vmatpush1.bf16.msra.mxu0 0
      %2617 = vmatprep.subr.bf16.mxu0 0
      %2618 = vmatpush1.bf16.msra.mxu0 0
      %2619 = vmatprep.subr.bf16.mxu0 0
      %2620 = vmatpush1.bf16.msra.mxu0 0
      %2621 = vmatprep.subr.bf16.mxu0 0
      %2622 = vmatpush1.bf16.msra.mxu0 0
      %2623 = vmatprep.subr.bf16.mxu0 0
      %2624 = vmatpush1.bf16.msra.mxu0 0
      %2625 = vmatprep.subr.bf16.mxu0 0
      %2626 = vmatpush1.bf16.msra.mxu0 0
      %2627 = vmatprep.mubr.bf16.mxu0 0
      %2628 = vmatmul.mubr.bf16.gmra.mrb[0].mxu0 %v2525
      %v2629 = vpop.f32.mrb[0].mxu0
      %v2630 = vadd.f32 0.0, %v2629
      %v2631 = vpop.f32.mrb[0].mxu0
      %v2632 = vadd.f32 0.0, %v2631
      %v2633 = vpop.f32.mrb[0].mxu0
      %v2634 = vpop.f32.mrb[0].mxu0
      %2635 = vdwg.mxu0
      %2636 = vmatprep.subr.bf16.mxu0 %v2543
      %2637 = vmatpush1.bf16.msra.mxu0 %v2540
      %2638 = vmatprep.subr.bf16.mxu0 0
      %2639 = vmatpush1.bf16.msra.mxu0 0
      %2640 = vmatprep.subr.bf16.mxu0 0
      %2641 = vmatpush1.bf16.msra.mxu0 0
      %2642 = vmatprep.subr.bf16.mxu0 0
      %2643 = vmatpush1.bf16.msra.mxu0 0
      %2644 = vmatprep.subr.bf16.mxu0 0
      %2645 = vmatpush1.bf16.msra.mxu0 0
      %2646 = vmatprep.subr.bf16.mxu0 0
      %2647 = vmatpush1.bf16.msra.mxu0 0
      %2648 = vmatprep.subr.bf16.mxu0 0
      %2649 = vmatpush1.bf16.msra.mxu0 0
      %2650 = vmatprep.subr.bf16.mxu0 0
      %2651 = vmatpush1.bf16.msra.mxu0 0
      %2652 = vmatprep.subr.bf16.mxu0 0
      %2653 = vmatpush1.bf16.msra.mxu0 0
      %2654 = vmatprep.subr.bf16.mxu0 0
      %2655 = vmatpush1.bf16.msra.mxu0 0
      %2656 = vmatprep.subr.bf16.mxu0 0
      %2657 = vmatpush1.bf16.msra.mxu0 0
      %2658 = vmatprep.subr.bf16.mxu0 0
      %2659 = vmatpush1.bf16.msra.mxu0 0
      %2660 = vmatprep.subr.bf16.mxu0 0
      %2661 = vmatpush1.bf16.msra.mxu0 0
      %2662 = vmatprep.subr.bf16.mxu0 0
      %2663 = vmatpush1.bf16.msra.mxu0 0
      %2664 = vmatprep.subr.bf16.mxu0 0
      %2665 = vmatpush1.bf16.msra.mxu0 0
      %2666 = vmatprep.subr.bf16.mxu0 0
      %2667 = vmatpush1.bf16.msra.mxu0 0
      %2668 = vmatprep.mubr.bf16.mxu0 0
      %2669 = vmatmul.mubr.bf16.gmra.mrb[0].mxu0 %v2525
      %v2670 = vpop.f32.mrb[0].mxu0
      %v2671 = vadd.f32 0.0, %v2670
      %v2672 = vpop.f32.mrb[0].mxu0
      %v2673 = vadd.f32 0.0, %v2672
      %v2674 = vpop.f32.mrb[0].mxu0
      %v2675 = vpop.f32.mrb[0].mxu0
      %2676 = vdwg.mxu0
      %2677 = vmatprep.subr.bf16.mxu0 %v2549
      %2678 = vmatpush1.bf16.msra.mxu0 %v2546
      %2679 = vmatprep.subr.bf16.mxu0 0
      %2680 = vmatpush1.bf16.msra.mxu0 0
      %2681 = vmatprep.subr.bf16.mxu0 0
      %2682 = vmatpush1.bf16.msra.mxu0 0
      %2683 = vmatprep.subr.bf16.mxu0 0
      %2684 = vmatpush1.bf16.msra.mxu0 0
      %2685 = vmatprep.subr.bf16.mxu0 0
      %2686 = vmatpush1.bf16.msra.mxu0 0
      %2687 = vmatprep.subr.bf16.mxu0 0
      %2688 = vmatpush1.bf16.msra.mxu0 0
      %2689 = vmatprep.subr.bf16.mxu0 0
      %2690 = vmatpush1.bf16.msra.mxu0 0
      %2691 = vmatprep.subr.bf16.mxu0 0
      %2692 = vmatpush1.bf16.msra.mxu0 0
      %2693 = vmatprep.subr.bf16.mxu0 0
      %2694 = vmatpush1.bf16.msra.mxu0 0
      %2695 = vmatprep.subr.bf16.mxu0 0
      %2696 = vmatpush1.bf16.msra.mxu0 0
      %2697 = vmatprep.subr.bf16.mxu0 0
      %2698 = vmatpush1.bf16.msra.mxu0 0
      %2699 = vmatprep.subr.bf16.mxu0 0
      %2700 = vmatpush1.bf16.msra.mxu0 0
      %2701 = vmatprep.subr.bf16.mxu0 0
      %2702 = vmatpush1.bf16.msra.mxu0 0
      %2703 = vmatprep.subr.bf16.mxu0 0
      %2704 = vmatpush1.bf16.msra.mxu0 0
      %2705 = vmatprep.subr.bf16.mxu0 0
      %2706 = vmatpush1.bf16.msra.mxu0 0
      %2707 = vmatprep.subr.bf16.mxu0 0
      %2708 = vmatpush1.bf16.msra.mxu0 0
      %2709 = vmatprep.mubr.bf16.mxu0 0
      %2710 = vmatmul.mubr.bf16.gmra.mrb[0].mxu0 %v2525
      %v2711 = vpop.f32.mrb[0].mxu0
      %v2712 = vadd.f32 0.0, %v2711
      %v2713 = vpop.f32.mrb[0].mxu0
      %v2714 = vadd.f32 0.0, %v2713
      %v2715 = vpop.f32.mrb[0].mxu0
      %v2716 = vpop.f32.mrb[0].mxu0
      %2717 = vdwg.mxu0
      %2718 = vmatprep.subr.bf16.mxu0 0
      %2719 = vmatpush1.bf16.msra.mxu0 %v2552
      %2720 = vmatprep.subr.bf16.mxu0 0
      %2721 = vmatpush1.bf16.msra.mxu0 0
      %2722 = vmatprep.subr.bf16.mxu0 0
      %2723 = vmatpush1.bf16.msra.mxu0 0
      %2724 = vmatprep.subr.bf16.mxu0 0
      %2725 = vmatpush1.bf16.msra.mxu0 0
      %2726 = vmatprep.subr.bf16.mxu0 0
      %2727 = vmatpush1.bf16.msra.mxu0 0
      %2728 = vmatprep.subr.bf16.mxu0 0
      %2729 = vmatpush1.bf16.msra.mxu0 0
      %2730 = vmatprep.subr.bf16.mxu0 0
      %2731 = vmatpush1.bf16.msra.mxu0 0
      %2732 = vmatprep.subr.bf16.mxu0 0
      %2733 = vmatpush1.bf16.msra.mxu0 0
      %2734 = vmatprep.subr.bf16.mxu0 0
      %2735 = vmatpush1.bf16.msra.mxu0 0
      %2736 = vmatprep.subr.bf16.mxu0 0
      %2737 = vmatpush1.bf16.msra.mxu0 0
      %2738 = vmatprep.subr.bf16.mxu0 0
      %2739 = vmatpush1.bf16.msra.mxu0 0
      %2740 = vmatprep.subr.bf16.mxu0 0
      %2741 = vmatpush1.bf16.msra.mxu0 0
      %2742 = vmatprep.subr.bf16.mxu0 0
      %2743 = vmatpush1.bf16.msra.mxu0 0
      %2744 = vmatprep.subr.bf16.mxu0 0
      %2745 = vmatpush1.bf16.msra.mxu0 0
      %2746 = vmatprep.subr.bf16.mxu0 0
      %2747 = vmatpush1.bf16.msra.mxu0 0
      %2748 = vmatprep.subr.bf16.mxu0 0
      %2749 = vmatpush1.bf16.msra.mxu0 0
      %2750 = vmatprep.mubr.bf16.mxu0 0
      %2751 = vmatmul.mubr.bf16.gmra.mrb[0].mxu0 %v2525
      %v2752 = vpop.f32.mrb[0].mxu0
      %v2753 = vadd.f32 0.0, %v2752
      %v2754 = vpop.f32.mrb[0].mxu0
      %v2755 = vpop.f32.mrb[0].mxu0
      %v2756 = vpop.f32.mrb[0].mxu0
      %2757 = vdwg.mxu0
      %v2758 = vadd.f32 %v2483, %v2589
      %v2759 = vadd.f32 %v2484, %v2591
      %v2760 = vadd.f32 %v2485, %v2630
      %v2761 = vadd.f32 %v2486, %v2632
      %v2762 = vadd.f32 %v2487, %v2671
      %v2763 = vadd.f32 %v2488, %v2673
      %v2764 = vadd.f32 %v2489, %v2712
      %v2765 = vadd.f32 %v2490, %v2714
      %v2766 = vadd.f32 %v2491, %v2753
      %v2767 = vld [vmem:[%s285] sm:$0xff]
      %v2768 = vld [vmem:[%s285 + $0x8] sm:$0xff]
      %v2769 = vld [vmem:[%s285 + $0x10] sm:$0x3]
      %v2770 = vld [vmem:[%s3] sm:$0xf]
      %v2774 = vcombine.high %v2767, %v2767
      %v2776 = vunpack.c.l.s4 1983009808
      %v2777 = vunpack.c.0.s8 %v2776
      %v2778 = vlaneseq
      %v2779 = vshrl.u32 %v2778, 7
      %v2780 = vsub.s32 %v2777, %v2779
      %v2781 = vrot.slane %v2767, %v2780
      %v2783 = vunpack.c.l.s4 1983009808
      %v2784 = vunpack.c.0.s8 %v2783
      %v2785 = vlaneseq
      %v2786 = vshrl.u32 %v2785, 7
      %v2787 = vsub.s32 %v2784, %v2786
      %v2788 = vrot.slane %v2774, %v2787
      %v2789 = vcombine.high %v2781, %v2781
      %v2790 = vcombine.high %v2788, %v2788
      %v2791 = vcombine.high %v2768, %v2768
      %v2793 = vunpack.c.l.s4 1983009808
      %v2794 = vunpack.c.0.s8 %v2793
      %v2795 = vlaneseq
      %v2796 = vshrl.u32 %v2795, 7
      %v2797 = vsub.s32 %v2794, %v2796
      %v2798 = vrot.slane %v2768, %v2797
      %v2800 = vunpack.c.l.s4 1983009808
      %v2801 = vunpack.c.0.s8 %v2800
      %v2802 = vlaneseq
      %v2803 = vshrl.u32 %v2802, 7
      %v2804 = vsub.s32 %v2801, %v2803
      %v2805 = vrot.slane %v2791, %v2804
      %v2806 = vcombine.high %v2798, %v2798
      %v2807 = vcombine.high %v2805, %v2805
      %v2809 = vunpack.c.l.s4 1983009808
      %v2810 = vunpack.c.0.s8 %v2809
      %v2811 = vlaneseq
      %v2812 = vshrl.u32 %v2811, 7
      %v2813 = vsub.s32 %v2810, %v2812
      %v2814 = vrot.slane %v2769, %v2813
      %vm2815 = vcmask 31744
      %v2817 = vsel %vm2815, %v2770, 0
      %vm2819 = vcmask 1041408
      %v2821 = vsel %vm2819, %v2781, 0
      %v2824 = vsel %vm2819, %v2789, 0
      %v2827 = vsel %vm2819, %v2788, 0
      %v2830 = vsel %vm2819, %v2790, 0
      %v2833 = vsel %vm2819, %v2798, 0
      %v2836 = vsel %vm2819, %v2806, 0
      %v2839 = vsel %vm2819, %v2805, 0
      %v2842 = vsel %vm2819, %v2807, 0
      %v2845 = vsel %vm2819, %v2814, 0
      %2847 = vmatprep.subr.bf16.mxu0 %v2824
      %2848 = vmatpush1.bf16.msra.mxu0 %v2821
      %2849 = vmatprep.subr.bf16.mxu0 0
      %2850 = vmatpush1.bf16.msra.mxu0 0
      %2851 = vmatprep.subr.bf16.mxu0 0
      %2852 = vmatpush1.bf16.msra.mxu0 0
      %2853 = vmatprep.subr.bf16.mxu0 0
      %2854 = vmatpush1.bf16.msra.mxu0 0
      %2855 = vmatprep.subr.bf16.mxu0 0
      %2856 = vmatpush1.bf16.msra.mxu0 0
      %2857 = vmatprep.subr.bf16.mxu0 0
      %2858 = vmatpush1.bf16.msra.mxu0 0
      %2859 = vmatprep.subr.bf16.mxu0 0
      %2860 = vmatpush1.bf16.msra.mxu0 0
      %2861 = vmatprep.subr.bf16.mxu0 0
      %2862 = vmatpush1.bf16.msra.mxu0 0
      %2863 = vmatprep.subr.bf16.mxu0 0
      %2864 = vmatpush1.bf16.msra.mxu0 0
      %2865 = vmatprep.subr.bf16.mxu0 0
      %2866 = vmatpush1.bf16.msra.mxu0 0
      %2867 = vmatprep.subr.bf16.mxu0 0
      %2868 = vmatpush1.bf16.msra.mxu0 0
      %2869 = vmatprep.subr.bf16.mxu0 0
      %2870 = vmatpush1.bf16.msra.mxu0 0
      %2871 = vmatprep.subr.bf16.mxu0 0
      %2872 = vmatpush1.bf16.msra.mxu0 0
      %2873 = vmatprep.subr.bf16.mxu0 0
      %2874 = vmatpush1.bf16.msra.mxu0 0
      %2875 = vmatprep.subr.bf16.mxu0 0
      %2876 = vmatpush1.bf16.msra.mxu0 0
      %2877 = vmatprep.subr.bf16.mxu0 0
      %2878 = vmatpush1.bf16.msra.mxu0 0
      %2879 = vmatprep.mubr.bf16.mxu0 0
      %2880 = vmatmul.mubr.bf16.gmra.mrb[0].mxu0 %v2817
      %v2881 = vpop.f32.mrb[0].mxu0
      %v2882 = vadd.f32 0.0, %v2881
      %v2883 = vpop.f32.mrb[0].mxu0
      %v2884 = vadd.f32 0.0, %v2883
      %v2885 = vpop.f32.mrb[0].mxu0
      %v2886 = vpop.f32.mrb[0].mxu0
      %2887 = vdwg.mxu0
      %2888 = vmatprep.subr.bf16.mxu0 %v2830
      %2889 = vmatpush1.bf16.msra.mxu0 %v2827
      %2890 = vmatprep.subr.bf16.mxu0 0
      %2891 = vmatpush1.bf16.msra.mxu0 0
      %2892 = vmatprep.subr.bf16.mxu0 0
      %2893 = vmatpush1.bf16.msra.mxu0 0
      %2894 = vmatprep.subr.bf16.mxu0 0
      %2895 = vmatpush1.bf16.msra.mxu0 0
      %2896 = vmatprep.subr.bf16.mxu0 0
      %2897 = vmatpush1.bf16.msra.mxu0 0
      %2898 = vmatprep.subr.bf16.mxu0 0
      %2899 = vmatpush1.bf16.msra.mxu0 0
      %2900 = vmatprep.subr.bf16.mxu0 0
      %2901 = vmatpush1.bf16.msra.mxu0 0
      %2902 = vmatprep.subr.bf16.mxu0 0
      %2903 = vmatpush1.bf16.msra.mxu0 0
      %2904 = vmatprep.subr.bf16.mxu0 0
      %2905 = vmatpush1.bf16.msra.mxu0 0
      %2906 = vmatprep.subr.bf16.mxu0 0
      %2907 = vmatpush1.bf16.msra.mxu0 0
      %2908 = vmatprep.subr.bf16.mxu0 0
      %2909 = vmatpush1.bf16.msra.mxu0 0
      %2910 = vmatprep.subr.bf16.mxu0 0
      %2911 = vmatpush1.bf16.msra.mxu0 0
      %2912 = vmatprep.subr.bf16.mxu0 0
      %2913 = vmatpush1.bf16.msra.mxu0 0
      %2914 = vmatprep.subr.bf16.mxu0 0
      %2915 = vmatpush1.bf16.msra.mxu0 0
      %2916 = vmatprep.subr.bf16.mxu0 0
      %2917 = vmatpush1.bf16.msra.mxu0 0
      %2918 = vmatprep.subr.bf16.mxu0 0
      %2919 = vmatpush1.bf16.msra.mxu0 0
      %2920 = vmatprep.mubr.bf16.mxu0 0
      %2921 = vmatmul.mubr.bf16.gmra.mrb[0].mxu0 %v2817
      %v2922 = vpop.f32.mrb[0].mxu0
      %v2923 = vadd.f32 0.0, %v2922
      %v2924 = vpop.f32.mrb[0].mxu0
      %v2925 = vadd.f32 0.0, %v2924
      %v2926 = vpop.f32.mrb[0].mxu0
      %v2927 = vpop.f32.mrb[0].mxu0
      %2928 = vdwg.mxu0
      %2929 = vmatprep.subr.bf16.mxu0 %v2836
      %2930 = vmatpush1.bf16.msra.mxu0 %v2833
      %2931 = vmatprep.subr.bf16.mxu0 0
      %2932 = vmatpush1.bf16.msra.mxu0 0
      %2933 = vmatprep.subr.bf16.mxu0 0
      %2934 = vmatpush1.bf16.msra.mxu0 0
      %2935 = vmatprep.subr.bf16.mxu0 0
      %2936 = vmatpush1.bf16.msra.mxu0 0
      %2937 = vmatprep.subr.bf16.mxu0 0
      %2938 = vmatpush1.bf16.msra.mxu0 0
      %2939 = vmatprep.subr.bf16.mxu0 0
      %2940 = vmatpush1.bf16.msra.mxu0 0
      %2941 = vmatprep.subr.bf16.mxu0 0
      %2942 = vmatpush1.bf16.msra.mxu0 0
      %2943 = vmatprep.subr.bf16.mxu0 0
      %2944 = vmatpush1.bf16.msra.mxu0 0
      %2945 = vmatprep.subr.bf16.mxu0 0
      %2946 = vmatpush1.bf16.msra.mxu0 0
      %2947 = vmatprep.subr.bf16.mxu0 0
      %2948 = vmatpush1.bf16.msra.mxu0 0
      %2949 = vmatprep.subr.bf16.mxu0 0
      %2950 = vmatpush1.bf16.msra.mxu0 0
      %2951 = vmatprep.subr.bf16.mxu0 0
      %2952 = vmatpush1.bf16.msra.mxu0 0
      %2953 = vmatprep.subr.bf16.mxu0 0
      %2954 = vmatpush1.bf16.msra.mxu0 0
      %2955 = vmatprep.subr.bf16.mxu0 0
      %2956 = vmatpush1.bf16.msra.mxu0 0
      %2957 = vmatprep.subr.bf16.mxu0 0
      %2958 = vmatpush1.bf16.msra.mxu0 0
      %2959 = vmatprep.subr.bf16.mxu0 0
      %2960 = vmatpush1.bf16.msra.mxu0 0
      %2961 = vmatprep.mubr.bf16.mxu0 0
      %2962 = vmatmul.mubr.bf16.gmra.mrb[0].mxu0 %v2817
      %v2963 = vpop.f32.mrb[0].mxu0
      %v2964 = vadd.f32 0.0, %v2963
      %v2965 = vpop.f32.mrb[0].mxu0
      %v2966 = vadd.f32 0.0, %v2965
      %v2967 = vpop.f32.mrb[0].mxu0
      %v2968 = vpop.f32.mrb[0].mxu0
      %2969 = vdwg.mxu0
      %2970 = vmatprep.subr.bf16.mxu0 %v2842
      %2971 = vmatpush1.bf16.msra.mxu0 %v2839
      %2972 = vmatprep.subr.bf16.mxu0 0
      %2973 = vmatpush1.bf16.msra.mxu0 0
      %2974 = vmatprep.subr.bf16.mxu0 0
      %2975 = vmatpush1.bf16.msra.mxu0 0
      %2976 = vmatprep.subr.bf16.mxu0 0
      %2977 = vmatpush1.bf16.msra.mxu0 0
      %2978 = vmatprep.subr.bf16.mxu0 0
      %2979 = vmatpush1.bf16.msra.mxu0 0
      %2980 = vmatprep.subr.bf16.mxu0 0
      %2981 = vmatpush1.bf16.msra.mxu0 0
      %2982 = vmatprep.subr.bf16.mxu0 0
      %2983 = vmatpush1.bf16.msra.mxu0 0
      %2984 = vmatprep.subr.bf16.mxu0 0
      %2985 = vmatpush1.bf16.msra.mxu0 0
      %2986 = vmatprep.subr.bf16.mxu0 0
      %2987 = vmatpush1.bf16.msra.mxu0 0
      %2988 = vmatprep.subr.bf16.mxu0 0
      %2989 = vmatpush1.bf16.msra.mxu0 0
      %2990 = vmatprep.subr.bf16.mxu0 0
      %2991 = vmatpush1.bf16.msra.mxu0 0
      %2992 = vmatprep.subr.bf16.mxu0 0
      %2993 = vmatpush1.bf16.msra.mxu0 0
      %2994 = vmatprep.subr.bf16.mxu0 0
      %2995 = vmatpush1.bf16.msra.mxu0 0
      %2996 = vmatprep.subr.bf16.mxu0 0
      %2997 = vmatpush1.bf16.msra.mxu0 0
      %2998 = vmatprep.subr.bf16.mxu0 0
      %2999 = vmatpush1.bf16.msra.mxu0 0
      %3000 = vmatprep.subr.bf16.mxu0 0
      %3001 = vmatpush1.bf16.msra.mxu0 0
      %3002 = vmatprep.mubr.bf16.mxu0 0
      %3003 = vmatmul.mubr.bf16.gmra.mrb[0].mxu0 %v2817
      %v3004 = vpop.f32.mrb[0].mxu0
      %v3005 = vadd.f32 0.0, %v3004
      %v3006 = vpop.f32.mrb[0].mxu0
      %v3007 = vadd.f32 0.0, %v3006
      %v3008 = vpop.f32.mrb[0].mxu0
      %v3009 = vpop.f32.mrb[0].mxu0
      %3010 = vdwg.mxu0
      %3011 = vmatprep.subr.bf16.mxu0 0
      %3012 = vmatpush1.bf16.msra.mxu0 %v2845
      %3013 = vmatprep.subr.bf16.mxu0 0
      %3014 = vmatpush1.bf16.msra.mxu0 0
      %3015 = vmatprep.subr.bf16.mxu0 0
      %3016 = vmatpush1.bf16.msra.mxu0 0
      %3017 = vmatprep.subr.bf16.mxu0 0
      %3018 = vmatpush1.bf16.msra.mxu0 0
      %3019 = vmatprep.subr.bf16.mxu0 0
      %3020 = vmatpush1.bf16.msra.mxu0 0
      %3021 = vmatprep.subr.bf16.mxu0 0
      %3022 = vmatpush1.bf16.msra.mxu0 0
      %3023 = vmatprep.subr.bf16.mxu0 0
      %3024 = vmatpush1.bf16.msra.mxu0 0
      %3025 = vmatprep.subr.bf16.mxu0 0
      %3026 = vmatpush1.bf16.msra.mxu0 0
      %3027 = vmatprep.subr.bf16.mxu0 0
      %3028 = vmatpush1.bf16.msra.mxu0 0
      %3029 = vmatprep.subr.bf16.mxu0 0
      %3030 = vmatpush1.bf16.msra.mxu0 0
      %3031 = vmatprep.subr.bf16.mxu0 0
      %3032 = vmatpush1.bf16.msra.mxu0 0
      %3033 = vmatprep.subr.bf16.mxu0 0
      %3034 = vmatpush1.bf16.msra.mxu0 0
      %3035 = vmatprep.subr.bf16.mxu0 0
      %3036 = vmatpush1.bf16.msra.mxu0 0
      %3037 = vmatprep.subr.bf16.mxu0 0
      %3038 = vmatpush1.bf16.msra.mxu0 0
      %3039 = vmatprep.subr.bf16.mxu0 0
      %3040 = vmatpush1.bf16.msra.mxu0 0
      %3041 = vmatprep.subr.bf16.mxu0 0
      %3042 = vmatpush1.bf16.msra.mxu0 0
      %3043 = vmatprep.mubr.bf16.mxu0 0
      %3044 = vmatmul.mubr.bf16.gmra.mrb[0].mxu0 %v2817
      %v3045 = vpop.f32.mrb[0].mxu0
      %v3046 = vadd.f32 0.0, %v3045
      %v3047 = vpop.f32.mrb[0].mxu0
      %v3048 = vpop.f32.mrb[0].mxu0
      %v3049 = vpop.f32.mrb[0].mxu0
      %3050 = vdwg.mxu0
      %v3051 = vadd.f32 %v2758, %v2882
      %v3052 = vadd.f32 %v2759, %v2884
      %v3053 = vadd.f32 %v2760, %v2923
      %v3054 = vadd.f32 %v2761, %v2925
      %v3055 = vadd.f32 %v2762, %v2964
      %v3056 = vadd.f32 %v2763, %v2966
      %v3057 = vadd.f32 %v2764, %v3005
      %v3058 = vadd.f32 %v2765, %v3007
      %v3059 = vadd.f32 %v2766, %v3046
      %v3060 = vld [vmem:[%s285] sm:$0xff]
      %v3061 = vld [vmem:[%s285 + $0x8] sm:$0xff]
      %v3062 = vld [vmem:[%s285 + $0x10] sm:$0x3]
      %s3063 = scalar_lea.vmem %s3, 4
      %v3064 = vld [vmem:[%s3063] sm:$0xf]
      %v3068 = vcombine.high %v3060, %v3060
      %v3070 = vunpack.c.l.s4 1983009808
      %v3071 = vunpack.c.0.s8 %v3070
      %v3072 = vlaneseq
      %v3073 = vshrl.u32 %v3072, 7
      %v3074 = vsub.s32 %v3071, %v3073
      %v3075 = vrot.slane %v3060, %v3074
      %v3077 = vunpack.c.l.s4 1983009808
      %v3078 = vunpack.c.0.s8 %v3077
      %v3079 = vlaneseq
      %v3080 = vshrl.u32 %v3079, 7
      %v3081 = vsub.s32 %v3078, %v3080
      %v3082 = vrot.slane %v3068, %v3081
      %v3083 = vcombine.high %v3075, %v3075
      %v3084 = vcombine.high %v3082, %v3082
      %v3085 = vcombine.high %v3061, %v3061
      %v3087 = vunpack.c.l.s4 1983009808
      %v3088 = vunpack.c.0.s8 %v3087
      %v3089 = vlaneseq
      %v3090 = vshrl.u32 %v3089, 7
      %v3091 = vsub.s32 %v3088, %v3090
      %v3092 = vrot.slane %v3061, %v3091
      %v3094 = vunpack.c.l.s4 1983009808
      %v3095 = vunpack.c.0.s8 %v3094
      %v3096 = vlaneseq
      %v3097 = vshrl.u32 %v3096, 7
      %v3098 = vsub.s32 %v3095, %v3097
      %v3099 = vrot.slane %v3085, %v3098
      %v3100 = vcombine.high %v3092, %v3092
      %v3101 = vcombine.high %v3099, %v3099
      %v3103 = vunpack.c.l.s4 1983009808
      %v3104 = vunpack.c.0.s8 %v3103
      %v3105 = vlaneseq
      %v3106 = vshrl.u32 %v3105, 7
      %v3107 = vsub.s32 %v3104, %v3106
      %v3108 = vrot.slane %v3062, %v3107
      %3109 = vrot.lane.b32.xlu0 %v3075, 127
      %v3110 = vpop.permute.xlu0 %3109
      %3111 = vrot.lane.b32.xlu0 %v3083, 127
      %v3112 = vpop.permute.xlu0 %3111
      %3113 = vrot.lane.b32.xlu0 %v3082, 127
      %v3114 = vpop.permute.xlu0 %3113
      %3115 = vrot.lane.b32.xlu0 %v3084, 127
      %v3116 = vpop.permute.xlu0 %3115
      %3117 = vrot.lane.b32.xlu0 %v3092, 127
      %v3118 = vpop.permute.xlu0 %3117
      %3119 = vrot.lane.b32.xlu0 %v3100, 127
      %v3120 = vpop.permute.xlu0 %3119
      %3121 = vrot.lane.b32.xlu0 %v3099, 127
      %v3122 = vpop.permute.xlu0 %3121
      %3123 = vrot.lane.b32.xlu0 %v3101, 127
      %v3124 = vpop.permute.xlu0 %3123
      %3125 = vrot.lane.b32.xlu0 %v3108, 127
      %v3126 = vpop.permute.xlu0 %3125
      %v3127 = vsel %vm345, %v3110, %v3112
      %v3128 = vsel %vm345, %v3112, %v3114
      %v3129 = vsel %vm345, %v3114, %v3116
      %v3130 = vsel %vm345, %v3116, %v3118
      %v3131 = vsel %vm345, %v3118, %v3120
      %v3132 = vsel %vm345, %v3120, %v3122
      %v3133 = vsel %vm345, %v3122, %v3124
      %v3134 = vsel %vm345, %v3124, %v3126
      %v3136 = vsel %vm2815, %v3064, 0
      %v3139 = vsel %vm2819, %v3127, 0
      %v3142 = vsel %vm2819, %v3128, 0
      %v3145 = vsel %vm2819, %v3129, 0
      %v3148 = vsel %vm2819, %v3130, 0
      %v3151 = vsel %vm2819, %v3131, 0
      %v3154 = vsel %vm2819, %v3132, 0
      %v3157 = vsel %vm2819, %v3133, 0
      %v3160 = vsel %vm2819, %v3134, 0
      %v3163 = vsel %vm2819, %v3126, 0
      %3165 = vmatprep.subr.bf16.mxu0 %v3142
      %3166 = vmatpush1.bf16.msra.mxu0 %v3139
      %3167 = vmatprep.subr.bf16.mxu0 0
      %3168 = vmatpush1.bf16.msra.mxu0 0
      %3169 = vmatprep.subr.bf16.mxu0 0
      %3170 = vmatpush1.bf16.msra.mxu0 0
      %3171 = vmatprep.subr.bf16.mxu0 0
      %3172 = vmatpush1.bf16.msra.mxu0 0
      %3173 = vmatprep.subr.bf16.mxu0 0
      %3174 = vmatpush1.bf16.msra.mxu0 0
      %3175 = vmatprep.subr.bf16.mxu0 0
      %3176 = vmatpush1.bf16.msra.mxu0 0
      %3177 = vmatprep.subr.bf16.mxu0 0
      %3178 = vmatpush1.bf16.msra.mxu0 0
      %3179 = vmatprep.subr.bf16.mxu0 0
      %3180 = vmatpush1.bf16.msra.mxu0 0
      %3181 = vmatprep.subr.bf16.mxu0 0
      %3182 = vmatpush1.bf16.msra.mxu0 0
      %3183 = vmatprep.subr.bf16.mxu0 0
      %3184 = vmatpush1.bf16.msra.mxu0 0
      %3185 = vmatprep.subr.bf16.mxu0 0
      %3186 = vmatpush1.bf16.msra.mxu0 0
      %3187 = vmatprep.subr.bf16.mxu0 0
      %3188 = vmatpush1.bf16.msra.mxu0 0
      %3189 = vmatprep.subr.bf16.mxu0 0
      %3190 = vmatpush1.bf16.msra.mxu0 0
      %3191 = vmatprep.subr.bf16.mxu0 0
      %3192 = vmatpush1.bf16.msra.mxu0 0
      %3193 = vmatprep.subr.bf16.mxu0 0
      %3194 = vmatpush1.bf16.msra.mxu0 0
      %3195 = vmatprep.subr.bf16.mxu0 0
      %3196 = vmatpush1.bf16.msra.mxu0 0
      %3197 = vmatprep.mubr.bf16.mxu0 0
      %3198 = vmatmul.mubr.bf16.gmra.mrb[0].mxu0 %v3136
      %v3199 = vpop.f32.mrb[0].mxu0
      %v3200 = vadd.f32 0.0, %v3199
      %v3201 = vpop.f32.mrb[0].mxu0
      %v3202 = vadd.f32 0.0, %v3201
      %v3203 = vpop.f32.mrb[0].mxu0
      %v3204 = vpop.f32.mrb[0].mxu0
      %3205 = vdwg.mxu0
      %3206 = vmatprep.subr.bf16.mxu0 %v3148
      %3207 = vmatpush1.bf16.msra.mxu0 %v3145
      %3208 = vmatprep.subr.bf16.mxu0 0
      %3209 = vmatpush1.bf16.msra.mxu0 0
      %3210 = vmatprep.subr.bf16.mxu0 0
      %3211 = vmatpush1.bf16.msra.mxu0 0
      %3212 = vmatprep.subr.bf16.mxu0 0
      %3213 = vmatpush1.bf16.msra.mxu0 0
      %3214 = vmatprep.subr.bf16.mxu0 0
      %3215 = vmatpush1.bf16.msra.mxu0 0
      %3216 = vmatprep.subr.bf16.mxu0 0
      %3217 = vmatpush1.bf16.msra.mxu0 0
      %3218 = vmatprep.subr.bf16.mxu0 0
      %3219 = vmatpush1.bf16.msra.mxu0 0
      %3220 = vmatprep.subr.bf16.mxu0 0
      %3221 = vmatpush1.bf16.msra.mxu0 0
      %3222 = vmatprep.subr.bf16.mxu0 0
      %3223 = vmatpush1.bf16.msra.mxu0 0
      %3224 = vmatprep.subr.bf16.mxu0 0
      %3225 = vmatpush1.bf16.msra.mxu0 0
      %3226 = vmatprep.subr.bf16.mxu0 0
      %3227 = vmatpush1.bf16.msra.mxu0 0
      %3228 = vmatprep.subr.bf16.mxu0 0
      %3229 = vmatpush1.bf16.msra.mxu0 0
      %3230 = vmatprep.subr.bf16.mxu0 0
      %3231 = vmatpush1.bf16.msra.mxu0 0
      %3232 = vmatprep.subr.bf16.mxu0 0
      %3233 = vmatpush1.bf16.msra.mxu0 0
      %3234 = vmatprep.subr.bf16.mxu0 0
      %3235 = vmatpush1.bf16.msra.mxu0 0
      %3236 = vmatprep.subr.bf16.mxu0 0
      %3237 = vmatpush1.bf16.msra.mxu0 0
      %3238 = vmatprep.mubr.bf16.mxu0 0
      %3239 = vmatmul.mubr.bf16.gmra.mrb[0].mxu0 %v3136
      %v3240 = vpop.f32.mrb[0].mxu0
      %v3241 = vadd.f32 0.0, %v3240
      %v3242 = vpop.f32.mrb[0].mxu0
      %v3243 = vadd.f32 0.0, %v3242
      %v3244 = vpop.f32.mrb[0].mxu0
      %v3245 = vpop.f32.mrb[0].mxu0
      %3246 = vdwg.mxu0
      %3247 = vmatprep.subr.bf16.mxu0 %v3154
      %3248 = vmatpush1.bf16.msra.mxu0 %v3151
      %3249 = vmatprep.subr.bf16.mxu0 0
      %3250 = vmatpush1.bf16.msra.mxu0 0
      %3251 = vmatprep.subr.bf16.mxu0 0
      %3252 = vmatpush1.bf16.msra.mxu0 0
      %3253 = vmatprep.subr.bf16.mxu0 0
      %3254 = vmatpush1.bf16.msra.mxu0 0
      %3255 = vmatprep.subr.bf16.mxu0 0
      %3256 = vmatpush1.bf16.msra.mxu0 0
      %3257 = vmatprep.subr.bf16.mxu0 0
      %3258 = vmatpush1.bf16.msra.mxu0 0
      %3259 = vmatprep.subr.bf16.mxu0 0
      %3260 = vmatpush1.bf16.msra.mxu0 0
      %3261 = vmatprep.subr.bf16.mxu0 0
      %3262 = vmatpush1.bf16.msra.mxu0 0
      %3263 = vmatprep.subr.bf16.mxu0 0
      %3264 = vmatpush1.bf16.msra.mxu0 0
      %3265 = vmatprep.subr.bf16.mxu0 0
      %3266 = vmatpush1.bf16.msra.mxu0 0
      %3267 = vmatprep.subr.bf16.mxu0 0
      %3268 = vmatpush1.bf16.msra.mxu0 0
      %3269 = vmatprep.subr.bf16.mxu0 0
      %3270 = vmatpush1.bf16.msra.mxu0 0
      %3271 = vmatprep.subr.bf16.mxu0 0
      %3272 = vmatpush1.bf16.msra.mxu0 0
      %3273 = vmatprep.subr.bf16.mxu0 0
      %3274 = vmatpush1.bf16.msra.mxu0 0
      %3275 = vmatprep.subr.bf16.mxu0 0
      %3276 = vmatpush1.bf16.msra.mxu0 0
      %3277 = vmatprep.subr.bf16.mxu0 0
      %3278 = vmatpush1.bf16.msra.mxu0 0
      %3279 = vmatprep.mubr.bf16.mxu0 0
      %3280 = vmatmul.mubr.bf16.gmra.mrb[0].mxu0 %v3136
      %v3281 = vpop.f32.mrb[0].mxu0
      %v3282 = vadd.f32 0.0, %v3281
      %v3283 = vpop.f32.mrb[0].mxu0
      %v3284 = vadd.f32 0.0, %v3283
      %v3285 = vpop.f32.mrb[0].mxu0
      %v3286 = vpop.f32.mrb[0].mxu0
      %3287 = vdwg.mxu0
      %3288 = vmatprep.subr.bf16.mxu0 %v3160
      %3289 = vmatpush1.bf16.msra.mxu0 %v3157
      %3290 = vmatprep.subr.bf16.mxu0 0
      %3291 = vmatpush1.bf16.msra.mxu0 0
      %3292 = vmatprep.subr.bf16.mxu0 0
      %3293 = vmatpush1.bf16.msra.mxu0 0
      %3294 = vmatprep.subr.bf16.mxu0 0
      %3295 = vmatpush1.bf16.msra.mxu0 0
      %3296 = vmatprep.subr.bf16.mxu0 0
      %3297 = vmatpush1.bf16.msra.mxu0 0
      %3298 = vmatprep.subr.bf16.mxu0 0
      %3299 = vmatpush1.bf16.msra.mxu0 0
      %3300 = vmatprep.subr.bf16.mxu0 0
      %3301 = vmatpush1.bf16.msra.mxu0 0
      %3302 = vmatprep.subr.bf16.mxu0 0
      %3303 = vmatpush1.bf16.msra.mxu0 0
      %3304 = vmatprep.subr.bf16.mxu0 0
      %3305 = vmatpush1.bf16.msra.mxu0 0
      %3306 = vmatprep.subr.bf16.mxu0 0
      %3307 = vmatpush1.bf16.msra.mxu0 0
      %3308 = vmatprep.subr.bf16.mxu0 0
      %3309 = vmatpush1.bf16.msra.mxu0 0
      %3310 = vmatprep.subr.bf16.mxu0 0
      %3311 = vmatpush1.bf16.msra.mxu0 0
      %3312 = vmatprep.subr.bf16.mxu0 0
      %3313 = vmatpush1.bf16.msra.mxu0 0
      %3314 = vmatprep.subr.bf16.mxu0 0
      %3315 = vmatpush1.bf16.msra.mxu0 0
      %3316 = vmatprep.subr.bf16.mxu0 0
      %3317 = vmatpush1.bf16.msra.mxu0 0
      %3318 = vmatprep.subr.bf16.mxu0 0
      %3319 = vmatpush1.bf16.msra.mxu0 0
      %3320 = vmatprep.mubr.bf16.mxu0 0
      %3321 = vmatmul.mubr.bf16.gmra.mrb[0].mxu0 %v3136
      %v3322 = vpop.f32.mrb[0].mxu0
      %v3323 = vadd.f32 0.0, %v3322
      %v3324 = vpop.f32.mrb[0].mxu0
      %v3325 = vadd.f32 0.0, %v3324
      %v3326 = vpop.f32.mrb[0].mxu0
      %v3327 = vpop.f32.mrb[0].mxu0
      %3328 = vdwg.mxu0
      %3329 = vmatprep.subr.bf16.mxu0 0
      %3330 = vmatpush1.bf16.msra.mxu0 %v3163
      %3331 = vmatprep.subr.bf16.mxu0 0
      %3332 = vmatpush1.bf16.msra.mxu0 0
      %3333 = vmatprep.subr.bf16.mxu0 0
      %3334 = vmatpush1.bf16.msra.mxu0 0
      %3335 = vmatprep.subr.bf16.mxu0 0
      %3336 = vmatpush1.bf16.msra.mxu0 0
      %3337 = vmatprep.subr.bf16.mxu0 0
      %3338 = vmatpush1.bf16.msra.mxu0 0
      %3339 = vmatprep.subr.bf16.mxu0 0
      %3340 = vmatpush1.bf16.msra.mxu0 0
      %3341 = vmatprep.subr.bf16.mxu0 0
      %3342 = vmatpush1.bf16.msra.mxu0 0
      %3343 = vmatprep.subr.bf16.mxu0 0
      %3344 = vmatpush1.bf16.msra.mxu0 0
      %3345 = vmatprep.subr.bf16.mxu0 0
      %3346 = vmatpush1.bf16.msra.mxu0 0
      %3347 = vmatprep.subr.bf16.mxu0 0
      %3348 = vmatpush1.bf16.msra.mxu0 0
      %3349 = vmatprep.subr.bf16.mxu0 0
      %3350 = vmatpush1.bf16.msra.mxu0 0
      %3351 = vmatprep.subr.bf16.mxu0 0
      %3352 = vmatpush1.bf16.msra.mxu0 0
      %3353 = vmatprep.subr.bf16.mxu0 0
      %3354 = vmatpush1.bf16.msra.mxu0 0
      %3355 = vmatprep.subr.bf16.mxu0 0
      %3356 = vmatpush1.bf16.msra.mxu0 0
      %3357 = vmatprep.subr.bf16.mxu0 0
      %3358 = vmatpush1.bf16.msra.mxu0 0
      %3359 = vmatprep.subr.bf16.mxu0 0
      %3360 = vmatpush1.bf16.msra.mxu0 0
      %3361 = vmatprep.mubr.bf16.mxu0 0
      %3362 = vmatmul.mubr.bf16.gmra.mrb[0].mxu0 %v3136
      %v3363 = vpop.f32.mrb[0].mxu0
      %v3364 = vadd.f32 0.0, %v3363
      %v3365 = vpop.f32.mrb[0].mxu0
      %v3366 = vpop.f32.mrb[0].mxu0
      %v3367 = vpop.f32.mrb[0].mxu0
      %3368 = vdwg.mxu0
      %v3369 = vadd.f32 %v3051, %v3200
      %v3370 = vadd.f32 %v3052, %v3202
      %v3371 = vadd.f32 %v3053, %v3241
      %v3372 = vadd.f32 %v3054, %v3243
      %v3373 = vadd.f32 %v3055, %v3282
      %v3374 = vadd.f32 %v3056, %v3284
      %v3375 = vadd.f32 %v3057, %v3323
      %v3376 = vadd.f32 %v3058, %v3325
      %v3377 = vadd.f32 %v3059, %v3364
      %v3378 = vld [vmem:[%s285] sm:$0xff]
      %v3379 = vld [vmem:[%s285 + $0x8] sm:$0xff]
      %v3380 = vld [vmem:[%s285 + $0x10] sm:$0x3]
      %s3381 = scalar_lea.vmem %s3, 8
      %v3382 = vld [vmem:[%s3381] sm:$0xf]
      %v3386 = vcombine.high %v3378, %v3378
      %v3388 = vunpack.c.l.s4 1983009808
      %v3389 = vunpack.c.0.s8 %v3388
      %v3390 = vlaneseq
      %v3391 = vshrl.u32 %v3390, 7
      %v3392 = vsub.s32 %v3389, %v3391
      %v3393 = vrot.slane %v3378, %v3392
      %v3395 = vunpack.c.l.s4 1983009808
      %v3396 = vunpack.c.0.s8 %v3395
      %v3397 = vlaneseq
      %v3398 = vshrl.u32 %v3397, 7
      %v3399 = vsub.s32 %v3396, %v3398
      %v3400 = vrot.slane %v3386, %v3399
      %v3401 = vcombine.high %v3393, %v3393
      %v3402 = vcombine.high %v3400, %v3400
      %v3403 = vcombine.high %v3379, %v3379
      %v3405 = vunpack.c.l.s4 1983009808
      %v3406 = vunpack.c.0.s8 %v3405
      %v3407 = vlaneseq
      %v3408 = vshrl.u32 %v3407, 7
      %v3409 = vsub.s32 %v3406, %v3408
      %v3410 = vrot.slane %v3379, %v3409
      %v3412 = vunpack.c.l.s4 1983009808
      %v3413 = vunpack.c.0.s8 %v3412
      %v3414 = vlaneseq
      %v3415 = vshrl.u32 %v3414, 7
      %v3416 = vsub.s32 %v3413, %v3415
      %v3417 = vrot.slane %v3403, %v3416
      %v3418 = vcombine.high %v3410, %v3410
      %v3419 = vcombine.high %v3417, %v3417
      %v3421 = vunpack.c.l.s4 1983009808
      %v3422 = vunpack.c.0.s8 %v3421
      %v3423 = vlaneseq
      %v3424 = vshrl.u32 %v3423, 7
      %v3425 = vsub.s32 %v3422, %v3424
      %v3426 = vrot.slane %v3380, %v3425
      %3427 = vrot.lane.b32.xlu0 %v3393, 126
      %v3428 = vpop.permute.xlu0 %3427
      %3429 = vrot.lane.b32.xlu0 %v3401, 126
      %v3430 = vpop.permute.xlu0 %3429
      %3431 = vrot.lane.b32.xlu0 %v3400, 126
      %v3432 = vpop.permute.xlu0 %3431
      %3433 = vrot.lane.b32.xlu0 %v3402, 126
      %v3434 = vpop.permute.xlu0 %3433
      %3435 = vrot.lane.b32.xlu0 %v3410, 126
      %v3436 = vpop.permute.xlu0 %3435
      %3437 = vrot.lane.b32.xlu0 %v3418, 126
      %v3438 = vpop.permute.xlu0 %3437
      %3439 = vrot.lane.b32.xlu0 %v3417, 126
      %v3440 = vpop.permute.xlu0 %3439
      %3441 = vrot.lane.b32.xlu0 %v3419, 126
      %v3442 = vpop.permute.xlu0 %3441
      %3443 = vrot.lane.b32.xlu0 %v3426, 126
      %v3444 = vpop.permute.xlu0 %3443
      %v3445 = vsel %vm844, %v3428, %v3430
      %v3446 = vsel %vm844, %v3430, %v3432
      %v3447 = vsel %vm844, %v3432, %v3434
      %v3448 = vsel %vm844, %v3434, %v3436
      %v3449 = vsel %vm844, %v3436, %v3438
      %v3450 = vsel %vm844, %v3438, %v3440
      %v3451 = vsel %vm844, %v3440, %v3442
      %v3452 = vsel %vm844, %v3442, %v3444
      %v3454 = vsel %vm2815, %v3382, 0
      %v3457 = vsel %vm2819, %v3445, 0
      %v3460 = vsel %vm2819, %v3446, 0
      %v3463 = vsel %vm2819, %v3447, 0
      %v3466 = vsel %vm2819, %v3448, 0
      %v3469 = vsel %vm2819, %v3449, 0
      %v3472 = vsel %vm2819, %v3450, 0
      %v3475 = vsel %vm2819, %v3451, 0
      %v3478 = vsel %vm2819, %v3452, 0
      %v3481 = vsel %vm2819, %v3444, 0
      %3483 = vmatprep.subr.bf16.mxu0 %v3460
      %3484 = vmatpush1.bf16.msra.mxu0 %v3457
      %3485 = vmatprep.subr.bf16.mxu0 0
      %3486 = vmatpush1.bf16.msra.mxu0 0
      %3487 = vmatprep.subr.bf16.mxu0 0
      %3488 = vmatpush1.bf16.msra.mxu0 0
      %3489 = vmatprep.subr.bf16.mxu0 0
      %3490 = vmatpush1.bf16.msra.mxu0 0
      %3491 = vmatprep.subr.bf16.mxu0 0
      %3492 = vmatpush1.bf16.msra.mxu0 0
      %3493 = vmatprep.subr.bf16.mxu0 0
      %3494 = vmatpush1.bf16.msra.mxu0 0
      %3495 = vmatprep.subr.bf16.mxu0 0
      %3496 = vmatpush1.bf16.msra.mxu0 0
      %3497 = vmatprep.subr.bf16.mxu0 0
      %3498 = vmatpush1.bf16.msra.mxu0 0
      %3499 = vmatprep.subr.bf16.mxu0 0
      %3500 = vmatpush1.bf16.msra.mxu0 0
      %3501 = vmatprep.subr.bf16.mxu0 0
      %3502 = vmatpush1.bf16.msra.mxu0 0
      %3503 = vmatprep.subr.bf16.mxu0 0
      %3504 = vmatpush1.bf16.msra.mxu0 0
      %3505 = vmatprep.subr.bf16.mxu0 0
      %3506 = vmatpush1.bf16.msra.mxu0 0
      %3507 = vmatprep.subr.bf16.mxu0 0
      %3508 = vmatpush1.bf16.msra.mxu0 0
      %3509 = vmatprep.subr.bf16.mxu0 0
      %3510 = vmatpush1.bf16.msra.mxu0 0
      %3511 = vmatprep.subr.bf16.mxu0 0
      %3512 = vmatpush1.bf16.msra.mxu0 0
      %3513 = vmatprep.subr.bf16.mxu0 0
      %3514 = vmatpush1.bf16.msra.mxu0 0
      %3515 = vmatprep.mubr.bf16.mxu0 0
      %3516 = vmatmul.mubr.bf16.gmra.mrb[0].mxu0 %v3454
      %v3517 = vpop.f32.mrb[0].mxu0
      %v3518 = vadd.f32 0.0, %v3517
      %v3519 = vpop.f32.mrb[0].mxu0
      %v3520 = vadd.f32 0.0, %v3519
      %v3521 = vpop.f32.mrb[0].mxu0
      %v3522 = vpop.f32.mrb[0].mxu0
      %3523 = vdwg.mxu0
      %3524 = vmatprep.subr.bf16.mxu0 %v3466
      %3525 = vmatpush1.bf16.msra.mxu0 %v3463
      %3526 = vmatprep.subr.bf16.mxu0 0
      %3527 = vmatpush1.bf16.msra.mxu0 0
      %3528 = vmatprep.subr.bf16.mxu0 0
      %3529 = vmatpush1.bf16.msra.mxu0 0
      %3530 = vmatprep.subr.bf16.mxu0 0
      %3531 = vmatpush1.bf16.msra.mxu0 0
      %3532 = vmatprep.subr.bf16.mxu0 0
      %3533 = vmatpush1.bf16.msra.mxu0 0
      %3534 = vmatprep.subr.bf16.mxu0 0
      %3535 = vmatpush1.bf16.msra.mxu0 0
      %3536 = vmatprep.subr.bf16.mxu0 0
      %3537 = vmatpush1.bf16.msra.mxu0 0
      %3538 = vmatprep.subr.bf16.mxu0 0
      %3539 = vmatpush1.bf16.msra.mxu0 0
      %3540 = vmatprep.subr.bf16.mxu0 0
      %3541 = vmatpush1.bf16.msra.mxu0 0
      %3542 = vmatprep.subr.bf16.mxu0 0
      %3543 = vmatpush1.bf16.msra.mxu0 0
      %3544 = vmatprep.subr.bf16.mxu0 0
      %3545 = vmatpush1.bf16.msra.mxu0 0
      %3546 = vmatprep.subr.bf16.mxu0 0
      %3547 = vmatpush1.bf16.msra.mxu0 0
      %3548 = vmatprep.subr.bf16.mxu0 0
      %3549 = vmatpush1.bf16.msra.mxu0 0
      %3550 = vmatprep.subr.bf16.mxu0 0
      %3551 = vmatpush1.bf16.msra.mxu0 0
      %3552 = vmatprep.subr.bf16.mxu0 0
      %3553 = vmatpush1.bf16.msra.mxu0 0
      %3554 = vmatprep.subr.bf16.mxu0 0
      %3555 = vmatpush1.bf16.msra.mxu0 0
      %3556 = vmatprep.mubr.bf16.mxu0 0
      %3557 = vmatmul.mubr.bf16.gmra.mrb[0].mxu0 %v3454
      %v3558 = vpop.f32.mrb[0].mxu0
      %v3559 = vadd.f32 0.0, %v3558
      %v3560 = vpop.f32.mrb[0].mxu0
      %v3561 = vadd.f32 0.0, %v3560
      %v3562 = vpop.f32.mrb[0].mxu0
      %v3563 = vpop.f32.mrb[0].mxu0
      %3564 = vdwg.mxu0
      %3565 = vmatprep.subr.bf16.mxu0 %v3472
      %3566 = vmatpush1.bf16.msra.mxu0 %v3469
      %3567 = vmatprep.subr.bf16.mxu0 0
      %3568 = vmatpush1.bf16.msra.mxu0 0
      %3569 = vmatprep.subr.bf16.mxu0 0
      %3570 = vmatpush1.bf16.msra.mxu0 0
      %3571 = vmatprep.subr.bf16.mxu0 0
      %3572 = vmatpush1.bf16.msra.mxu0 0
      %3573 = vmatprep.subr.bf16.mxu0 0
      %3574 = vmatpush1.bf16.msra.mxu0 0
      %3575 = vmatprep.subr.bf16.mxu0 0
      %3576 = vmatpush1.bf16.msra.mxu0 0
      %3577 = vmatprep.subr.bf16.mxu0 0
      %3578 = vmatpush1.bf16.msra.mxu0 0
      %3579 = vmatprep.subr.bf16.mxu0 0
      %3580 = vmatpush1.bf16.msra.mxu0 0
      %3581 = vmatprep.subr.bf16.mxu0 0
      %3582 = vmatpush1.bf16.msra.mxu0 0
      %3583 = vmatprep.subr.bf16.mxu0 0
      %3584 = vmatpush1.bf16.msra.mxu0 0
      %3585 = vmatprep.subr.bf16.mxu0 0
      %3586 = vmatpush1.bf16.msra.mxu0 0
      %3587 = vmatprep.subr.bf16.mxu0 0
      %3588 = vmatpush1.bf16.msra.mxu0 0
      %3589 = vmatprep.subr.bf16.mxu0 0
      %3590 = vmatpush1.bf16.msra.mxu0 0
      %3591 = vmatprep.subr.bf16.mxu0 0
      %3592 = vmatpush1.bf16.msra.mxu0 0
      %3593 = vmatprep.subr.bf16.mxu0 0
      %3594 = vmatpush1.bf16.msra.mxu0 0
      %3595 = vmatprep.subr.bf16.mxu0 0
      %3596 = vmatpush1.bf16.msra.mxu0 0
      %3597 = vmatprep.mubr.bf16.mxu0 0
      %3598 = vmatmul.mubr.bf16.gmra.mrb[0].mxu0 %v3454
      %v3599 = vpop.f32.mrb[0].mxu0
      %v3600 = vadd.f32 0.0, %v3599
      %v3601 = vpop.f32.mrb[0].mxu0
      %v3602 = vadd.f32 0.0, %v3601
      %v3603 = vpop.f32.mrb[0].mxu0
      %v3604 = vpop.f32.mrb[0].mxu0
      %3605 = vdwg.mxu0
      %3606 = vmatprep.subr.bf16.mxu0 %v3478
      %3607 = vmatpush1.bf16.msra.mxu0 %v3475
      %3608 = vmatprep.subr.bf16.mxu0 0
      %3609 = vmatpush1.bf16.msra.mxu0 0
      %3610 = vmatprep.subr.bf16.mxu0 0
      %3611 = vmatpush1.bf16.msra.mxu0 0
      %3612 = vmatprep.subr.bf16.mxu0 0
      %3613 = vmatpush1.bf16.msra.mxu0 0
      %3614 = vmatprep.subr.bf16.mxu0 0
      %3615 = vmatpush1.bf16.msra.mxu0 0
      %3616 = vmatprep.subr.bf16.mxu0 0
      %3617 = vmatpush1.bf16.msra.mxu0 0
      %3618 = vmatprep.subr.bf16.mxu0 0
      %3619 = vmatpush1.bf16.msra.mxu0 0
      %3620 = vmatprep.subr.bf16.mxu0 0
      %3621 = vmatpush1.bf16.msra.mxu0 0
      %3622 = vmatprep.subr.bf16.mxu0 0
      %3623 = vmatpush1.bf16.msra.mxu0 0
      %3624 = vmatprep.subr.bf16.mxu0 0
      %3625 = vmatpush1.bf16.msra.mxu0 0
      %3626 = vmatprep.subr.bf16.mxu0 0
      %3627 = vmatpush1.bf16.msra.mxu0 0
      %3628 = vmatprep.subr.bf16.mxu0 0
      %3629 = vmatpush1.bf16.msra.mxu0 0
      %3630 = vmatprep.subr.bf16.mxu0 0
      %3631 = vmatpush1.bf16.msra.mxu0 0
      %3632 = vmatprep.subr.bf16.mxu0 0
      %3633 = vmatpush1.bf16.msra.mxu0 0
      %3634 = vmatprep.subr.bf16.mxu0 0
      %3635 = vmatpush1.bf16.msra.mxu0 0
      %3636 = vmatprep.subr.bf16.mxu0 0
      %3637 = vmatpush1.bf16.msra.mxu0 0
      %3638 = vmatprep.mubr.bf16.mxu0 0
      %3639 = vmatmul.mubr.bf16.gmra.mrb[0].mxu0 %v3454
      %v3640 = vpop.f32.mrb[0].mxu0
      %v3641 = vadd.f32 0.0, %v3640
      %v3642 = vpop.f32.mrb[0].mxu0
      %v3643 = vadd.f32 0.0, %v3642
      %v3644 = vpop.f32.mrb[0].mxu0
      %v3645 = vpop.f32.mrb[0].mxu0
      %3646 = vdwg.mxu0
      %3647 = vmatprep.subr.bf16.mxu0 0
      %3648 = vmatpush1.bf16.msra.mxu0 %v3481
      %3649 = vmatprep.subr.bf16.mxu0 0
      %3650 = vmatpush1.bf16.msra.mxu0 0
      %3651 = vmatprep.subr.bf16.mxu0 0
      %3652 = vmatpush1.bf16.msra.mxu0 0
      %3653 = vmatprep.subr.bf16.mxu0 0
      %3654 = vmatpush1.bf16.msra.mxu0 0
      %3655 = vmatprep.subr.bf16.mxu0 0
      %3656 = vmatpush1.bf16.msra.mxu0 0
      %3657 = vmatprep.subr.bf16.mxu0 0
      %3658 = vmatpush1.bf16.msra.mxu0 0
      %3659 = vmatprep.subr.bf16.mxu0 0
      %3660 = vmatpush1.bf16.msra.mxu0 0
      %3661 = vmatprep.subr.bf16.mxu0 0
      %3662 = vmatpush1.bf16.msra.mxu0 0
      %3663 = vmatprep.subr.bf16.mxu0 0
      %3664 = vmatpush1.bf16.msra.mxu0 0
      %3665 = vmatprep.subr.bf16.mxu0 0
      %3666 = vmatpush1.bf16.msra.mxu0 0
      %3667 = vmatprep.subr.bf16.mxu0 0
      %3668 = vmatpush1.bf16.msra.mxu0 0
      %3669 = vmatprep.subr.bf16.mxu0 0
      %3670 = vmatpush1.bf16.msra.mxu0 0
      %3671 = vmatprep.subr.bf16.mxu0 0
      %3672 = vmatpush1.bf16.msra.mxu0 0
      %3673 = vmatprep.subr.bf16.mxu0 0
      %3674 = vmatpush1.bf16.msra.mxu0 0
      %3675 = vmatprep.subr.bf16.mxu0 0
      %3676 = vmatpush1.bf16.msra.mxu0 0
      %3677 = vmatprep.subr.bf16.mxu0 0
      %3678 = vmatpush1.bf16.msra.mxu0 0
      %3679 = vmatprep.mubr.bf16.mxu0 0
      %3680 = vmatmul.mubr.bf16.gmra.mrb[0].mxu0 %v3454
      %v3681 = vpop.f32.mrb[0].mxu0
      %v3682 = vadd.f32 0.0, %v3681
      %v3683 = vpop.f32.mrb[0].mxu0
      %v3684 = vpop.f32.mrb[0].mxu0
      %v3685 = vpop.f32.mrb[0].mxu0
      %3686 = vdwg.mxu0
      %v3687 = vadd.f32 %v3369, %v3518
      %v3688 = vadd.f32 %v3370, %v3520
      %v3689 = vadd.f32 %v3371, %v3559
      %v3690 = vadd.f32 %v3372, %v3561
      %v3691 = vadd.f32 %v3373, %v3600
      %v3692 = vadd.f32 %v3374, %v3602
      %v3693 = vadd.f32 %v3375, %v3641
      %v3694 = vadd.f32 %v3376, %v3643
      %v3695 = vadd.f32 %v3377, %v3682
      %v3696 = vld [vmem:[%s285] sm:$0xff]
      %v3697 = vld [vmem:[%s285 + $0x8] sm:$0xff]
      %v3698 = vld [vmem:[%s285 + $0x10] sm:$0x3]
      %s3699 = scalar_lea.vmem %s3, 12
      %v3700 = vld [vmem:[%s3699] sm:$0xf]
      %v3704 = vcombine.high %v3696, %v3696
      %v3706 = vunpack.c.l.s4 1983009808
      %v3707 = vunpack.c.0.s8 %v3706
      %v3708 = vlaneseq
      %v3709 = vshrl.u32 %v3708, 7
      %v3710 = vsub.s32 %v3707, %v3709
      %v3711 = vrot.slane %v3696, %v3710
      %v3713 = vunpack.c.l.s4 1983009808
      %v3714 = vunpack.c.0.s8 %v3713
      %v3715 = vlaneseq
      %v3716 = vshrl.u32 %v3715, 7
      %v3717 = vsub.s32 %v3714, %v3716
      %v3718 = vrot.slane %v3704, %v3717
      %v3719 = vcombine.high %v3711, %v3711
      %v3720 = vcombine.high %v3718, %v3718
      %v3721 = vcombine.high %v3697, %v3697
      %v3723 = vunpack.c.l.s4 1983009808
      %v3724 = vunpack.c.0.s8 %v3723
      %v3725 = vlaneseq
      %v3726 = vshrl.u32 %v3725, 7
      %v3727 = vsub.s32 %v3724, %v3726
      %v3728 = vrot.slane %v3697, %v3727
      %v3730 = vunpack.c.l.s4 1983009808
      %v3731 = vunpack.c.0.s8 %v3730
      %v3732 = vlaneseq
      %v3733 = vshrl.u32 %v3732, 7
      %v3734 = vsub.s32 %v3731, %v3733
      %v3735 = vrot.slane %v3721, %v3734
      %v3736 = vcombine.high %v3728, %v3728
      %v3737 = vcombine.high %v3735, %v3735
      %v3739 = vunpack.c.l.s4 1983009808
      %v3740 = vunpack.c.0.s8 %v3739
      %v3741 = vlaneseq
      %v3742 = vshrl.u32 %v3741, 7
      %v3743 = vsub.s32 %v3740, %v3742
      %v3744 = vrot.slane %v3698, %v3743
      %3745 = vrot.lane.b32.xlu0 %v3711, 94
      %v3746 = vpop.permute.xlu0 %3745
      %3747 = vrot.lane.b32.xlu0 %v3719, 94
      %v3748 = vpop.permute.xlu0 %3747
      %3749 = vrot.lane.b32.xlu0 %v3718, 94
      %v3750 = vpop.permute.xlu0 %3749
      %3751 = vrot.lane.b32.xlu0 %v3720, 94
      %v3752 = vpop.permute.xlu0 %3751
      %3753 = vrot.lane.b32.xlu0 %v3728, 94
      %v3754 = vpop.permute.xlu0 %3753
      %3755 = vrot.lane.b32.xlu0 %v3736, 94
      %v3756 = vpop.permute.xlu0 %3755
      %3757 = vrot.lane.b32.xlu0 %v3735, 94
      %v3758 = vpop.permute.xlu0 %3757
      %3759 = vrot.lane.b32.xlu0 %v3737, 94
      %v3760 = vpop.permute.xlu0 %3759
      %3761 = vrot.lane.b32.xlu0 %v3744, 94
      %v3762 = vpop.permute.xlu0 %3761
      %v3763 = vsel %vm1116, %v3746, %v3748
      %v3764 = vsel %vm1116, %v3748, %v3750
      %v3765 = vsel %vm1116, %v3750, %v3752
      %v3766 = vsel %vm1116, %v3752, %v3754
      %v3767 = vsel %vm1116, %v3754, %v3756
      %v3768 = vsel %vm1116, %v3756, %v3758
      %v3769 = vsel %vm1116, %v3758, %v3760
      %v3770 = vsel %vm1116, %v3760, %v3762
      %v3772 = vsel %vm2815, %v3700, 0
      %v3775 = vsel %vm2819, %v3763, 0
      %v3778 = vsel %vm2819, %v3764, 0
      %v3781 = vsel %vm2819, %v3765, 0
      %v3784 = vsel %vm2819, %v3766, 0
      %v3787 = vsel %vm2819, %v3767, 0
      %v3790 = vsel %vm2819, %v3768, 0
      %v3793 = vsel %vm2819, %v3769, 0
      %v3796 = vsel %vm2819, %v3770, 0
      %v3799 = vsel %vm2819, %v3762, 0
      %3801 = vmatprep.subr.bf16.mxu0 %v3778
      %3802 = vmatpush1.bf16.msra.mxu0 %v3775
      %3803 = vmatprep.subr.bf16.mxu0 0
      %3804 = vmatpush1.bf16.msra.mxu0 0
      %3805 = vmatprep.subr.bf16.mxu0 0
      %3806 = vmatpush1.bf16.msra.mxu0 0
      %3807 = vmatprep.subr.bf16.mxu0 0
      %3808 = vmatpush1.bf16.msra.mxu0 0
      %3809 = vmatprep.subr.bf16.mxu0 0
      %3810 = vmatpush1.bf16.msra.mxu0 0
      %3811 = vmatprep.subr.bf16.mxu0 0
      %3812 = vmatpush1.bf16.msra.mxu0 0
      %3813 = vmatprep.subr.bf16.mxu0 0
      %3814 = vmatpush1.bf16.msra.mxu0 0
      %3815 = vmatprep.subr.bf16.mxu0 0
      %3816 = vmatpush1.bf16.msra.mxu0 0
      %3817 = vmatprep.subr.bf16.mxu0 0
      %3818 = vmatpush1.bf16.msra.mxu0 0
      %3819 = vmatprep.subr.bf16.mxu0 0
      %3820 = vmatpush1.bf16.msra.mxu0 0
      %3821 = vmatprep.subr.bf16.mxu0 0
      %3822 = vmatpush1.bf16.msra.mxu0 0
      %3823 = vmatprep.subr.bf16.mxu0 0
      %3824 = vmatpush1.bf16.msra.mxu0 0
      %3825 = vmatprep.subr.bf16.mxu0 0
      %3826 = vmatpush1.bf16.msra.mxu0 0
      %3827 = vmatprep.subr.bf16.mxu0 0
      %3828 = vmatpush1.bf16.msra.mxu0 0
      %3829 = vmatprep.subr.bf16.mxu0 0
      %3830 = vmatpush1.bf16.msra.mxu0 0
      %3831 = vmatprep.subr.bf16.mxu0 0
      %3832 = vmatpush1.bf16.msra.mxu0 0
      %3833 = vmatprep.mubr.bf16.mxu0 0
      %3834 = vmatmul.mubr.bf16.gmra.mrb[0].mxu0 %v3772
      %v3835 = vpop.f32.mrb[0].mxu0
      %v3836 = vadd.f32 0.0, %v3835
      %v3837 = vpop.f32.mrb[0].mxu0
      %v3838 = vadd.f32 0.0, %v3837
      %v3839 = vpop.f32.mrb[0].mxu0
      %v3840 = vpop.f32.mrb[0].mxu0
      %3841 = vdwg.mxu0
      %3842 = vmatprep.subr.bf16.mxu0 %v3784
      %3843 = vmatpush1.bf16.msra.mxu0 %v3781
      %3844 = vmatprep.subr.bf16.mxu0 0
      %3845 = vmatpush1.bf16.msra.mxu0 0
      %3846 = vmatprep.subr.bf16.mxu0 0
      %3847 = vmatpush1.bf16.msra.mxu0 0
      %3848 = vmatprep.subr.bf16.mxu0 0
      %3849 = vmatpush1.bf16.msra.mxu0 0
      %3850 = vmatprep.subr.bf16.mxu0 0
      %3851 = vmatpush1.bf16.msra.mxu0 0
      %3852 = vmatprep.subr.bf16.mxu0 0
      %3853 = vmatpush1.bf16.msra.mxu0 0
      %3854 = vmatprep.subr.bf16.mxu0 0
      %3855 = vmatpush1.bf16.msra.mxu0 0
      %3856 = vmatprep.subr.bf16.mxu0 0
      %3857 = vmatpush1.bf16.msra.mxu0 0
      %3858 = vmatprep.subr.bf16.mxu0 0
      %3859 = vmatpush1.bf16.msra.mxu0 0
      %3860 = vmatprep.subr.bf16.mxu0 0
      %3861 = vmatpush1.bf16.msra.mxu0 0
      %3862 = vmatprep.subr.bf16.mxu0 0
      %3863 = vmatpush1.bf16.msra.mxu0 0
      %3864 = vmatprep.subr.bf16.mxu0 0
      %3865 = vmatpush1.bf16.msra.mxu0 0
      %3866 = vmatprep.subr.bf16.mxu0 0
      %3867 = vmatpush1.bf16.msra.mxu0 0
      %3868 = vmatprep.subr.bf16.mxu0 0
      %3869 = vmatpush1.bf16.msra.mxu0 0
      %3870 = vmatprep.subr.bf16.mxu0 0
      %3871 = vmatpush1.bf16.msra.mxu0 0
      %3872 = vmatprep.subr.bf16.mxu0 0
      %3873 = vmatpush1.bf16.msra.mxu0 0
      %3874 = vmatprep.mubr.bf16.mxu0 0
      %3875 = vmatmul.mubr.bf16.gmra.mrb[0].mxu0 %v3772
      %v3876 = vpop.f32.mrb[0].mxu0
      %v3877 = vadd.f32 0.0, %v3876
      %v3878 = vpop.f32.mrb[0].mxu0
      %v3879 = vadd.f32 0.0, %v3878
      %v3880 = vpop.f32.mrb[0].mxu0
      %v3881 = vpop.f32.mrb[0].mxu0
      %3882 = vdwg.mxu0
      %3883 = vmatprep.subr.bf16.mxu0 %v3790
      %3884 = vmatpush1.bf16.msra.mxu0 %v3787
      %3885 = vmatprep.subr.bf16.mxu0 0
      %3886 = vmatpush1.bf16.msra.mxu0 0
      %3887 = vmatprep.subr.bf16.mxu0 0
      %3888 = vmatpush1.bf16.msra.mxu0 0
      %3889 = vmatprep.subr.bf16.mxu0 0
      %3890 = vmatpush1.bf16.msra.mxu0 0
      %3891 = vmatprep.subr.bf16.mxu0 0
      %3892 = vmatpush1.bf16.msra.mxu0 0
      %3893 = vmatprep.subr.bf16.mxu0 0
      %3894 = vmatpush1.bf16.msra.mxu0 0
      %3895 = vmatprep.subr.bf16.mxu0 0
      %3896 = vmatpush1.bf16.msra.mxu0 0
      %3897 = vmatprep.subr.bf16.mxu0 0
      %3898 = vmatpush1.bf16.msra.mxu0 0
      %3899 = vmatprep.subr.bf16.mxu0 0
      %3900 = vmatpush1.bf16.msra.mxu0 0
      %3901 = vmatprep.subr.bf16.mxu0 0
      %3902 = vmatpush1.bf16.msra.mxu0 0
      %3903 = vmatprep.subr.bf16.mxu0 0
      %3904 = vmatpush1.bf16.msra.mxu0 0
      %3905 = vmatprep.subr.bf16.mxu0 0
      %3906 = vmatpush1.bf16.msra.mxu0 0
      %3907 = vmatprep.subr.bf16.mxu0 0
      %3908 = vmatpush1.bf16.msra.mxu0 0
      %3909 = vmatprep.subr.bf16.mxu0 0
      %3910 = vmatpush1.bf16.msra.mxu0 0
      %3911 = vmatprep.subr.bf16.mxu0 0
      %3912 = vmatpush1.bf16.msra.mxu0 0
      %3913 = vmatprep.subr.bf16.mxu0 0
      %3914 = vmatpush1.bf16.msra.mxu0 0
      %3915 = vmatprep.mubr.bf16.mxu0 0
      %3916 = vmatmul.mubr.bf16.gmra.mrb[0].mxu0 %v3772
      %v3917 = vpop.f32.mrb[0].mxu0
      %v3918 = vadd.f32 0.0, %v3917
      %v3919 = vpop.f32.mrb[0].mxu0
      %v3920 = vadd.f32 0.0, %v3919
      %v3921 = vpop.f32.mrb[0].mxu0
      %v3922 = vpop.f32.mrb[0].mxu0
      %3923 = vdwg.mxu0
      %3924 = vmatprep.subr.bf16.mxu0 %v3796
      %3925 = vmatpush1.bf16.msra.mxu0 %v3793
      %3926 = vmatprep.subr.bf16.mxu0 0
      %3927 = vmatpush1.bf16.msra.mxu0 0
      %3928 = vmatprep.subr.bf16.mxu0 0
      %3929 = vmatpush1.bf16.msra.mxu0 0
      %3930 = vmatprep.subr.bf16.mxu0 0
      %3931 = vmatpush1.bf16.msra.mxu0 0
      %3932 = vmatprep.subr.bf16.mxu0 0
      %3933 = vmatpush1.bf16.msra.mxu0 0
      %3934 = vmatprep.subr.bf16.mxu0 0
      %3935 = vmatpush1.bf16.msra.mxu0 0
      %3936 = vmatprep.subr.bf16.mxu0 0
      %3937 = vmatpush1.bf16.msra.mxu0 0
      %3938 = vmatprep.subr.bf16.mxu0 0
      %3939 = vmatpush1.bf16.msra.mxu0 0
      %3940 = vmatprep.subr.bf16.mxu0 0
      %3941 = vmatpush1.bf16.msra.mxu0 0
      %3942 = vmatprep.subr.bf16.mxu0 0
      %3943 = vmatpush1.bf16.msra.mxu0 0
      %3944 = vmatprep.subr.bf16.mxu0 0
      %3945 = vmatpush1.bf16.msra.mxu0 0
      %3946 = vmatprep.subr.bf16.mxu0 0
      %3947 = vmatpush1.bf16.msra.mxu0 0
      %3948 = vmatprep.subr.bf16.mxu0 0
      %3949 = vmatpush1.bf16.msra.mxu0 0
      %3950 = vmatprep.subr.bf16.mxu0 0
      %3951 = vmatpush1.bf16.msra.mxu0 0
      %3952 = vmatprep.subr.bf16.mxu0 0
      %3953 = vmatpush1.bf16.msra.mxu0 0
      %3954 = vmatprep.subr.bf16.mxu0 0
      %3955 = vmatpush1.bf16.msra.mxu0 0
      %3956 = vmatprep.mubr.bf16.mxu0 0
      %3957 = vmatmul.mubr.bf16.gmra.mrb[0].mxu0 %v3772
      %v3958 = vpop.f32.mrb[0].mxu0
      %v3959 = vadd.f32 0.0, %v3958
      %v3960 = vpop.f32.mrb[0].mxu0
      %v3961 = vadd.f32 0.0, %v3960
      %v3962 = vpop.f32.mrb[0].mxu0
      %v3963 = vpop.f32.mrb[0].mxu0
      %3964 = vdwg.mxu0
      %3965 = vmatprep.subr.bf16.mxu0 0
      %3966 = vmatpush1.bf16.msra.mxu0 %v3799
      %3967 = vmatprep.subr.bf16.mxu0 0
      %3968 = vmatpush1.bf16.msra.mxu0 0
      %3969 = vmatprep.subr.bf16.mxu0 0
      %3970 = vmatpush1.bf16.msra.mxu0 0
      %3971 = vmatprep.subr.bf16.mxu0 0
      %3972 = vmatpush1.bf16.msra.mxu0 0
      %3973 = vmatprep.subr.bf16.mxu0 0
      %3974 = vmatpush1.bf16.msra.mxu0 0
      %3975 = vmatprep.subr.bf16.mxu0 0
      %3976 = vmatpush1.bf16.msra.mxu0 0
      %3977 = vmatprep.subr.bf16.mxu0 0
      %3978 = vmatpush1.bf16.msra.mxu0 0
      %3979 = vmatprep.subr.bf16.mxu0 0
      %3980 = vmatpush1.bf16.msra.mxu0 0
      %3981 = vmatprep.subr.bf16.mxu0 0
      %3982 = vmatpush1.bf16.msra.mxu0 0
      %3983 = vmatprep.subr.bf16.mxu0 0
      %3984 = vmatpush1.bf16.msra.mxu0 0
      %3985 = vmatprep.subr.bf16.mxu0 0
      %3986 = vmatpush1.bf16.msra.mxu0 0
      %3987 = vmatprep.subr.bf16.mxu0 0
      %3988 = vmatpush1.bf16.msra.mxu0 0
      %3989 = vmatprep.subr.bf16.mxu0 0
      %3990 = vmatpush1.bf16.msra.mxu0 0
      %3991 = vmatprep.subr.bf16.mxu0 0
      %3992 = vmatpush1.bf16.msra.mxu0 0
      %3993 = vmatprep.subr.bf16.mxu0 0
      %3994 = vmatpush1.bf16.msra.mxu0 0
      %3995 = vmatprep.subr.bf16.mxu0 0
      %3996 = vmatpush1.bf16.msra.mxu0 0
      %3997 = vmatprep.mubr.bf16.mxu0 0
      %3998 = vmatmul.mubr.bf16.gmra.mrb[0].mxu0 %v3772
      %v3999 = vpop.f32.mrb[0].mxu0
      %v4000 = vadd.f32 0.0, %v3999
      %v4001 = vpop.f32.mrb[0].mxu0
      %v4002 = vpop.f32.mrb[0].mxu0
      %v4003 = vpop.f32.mrb[0].mxu0
      %4004 = vdwg.mxu0
      %v4005 = vadd.f32 %v3687, %v3836
      %v4006 = vadd.f32 %v3688, %v3838
      %v4007 = vadd.f32 %v3689, %v3877
      %v4008 = vadd.f32 %v3690, %v3879
      %v4009 = vadd.f32 %v3691, %v3918
      %v4010 = vadd.f32 %v3692, %v3920
      %v4011 = vadd.f32 %v3693, %v3959
      %v4012 = vadd.f32 %v3694, %v3961
      %v4013 = vadd.f32 %v3695, %v4000
      %v4014 = vld [vmem:[%s285] sm:$0xff]
      %v4015 = vld [vmem:[%s285 + $0x8] sm:$0xff]
      %v4016 = vld [vmem:[%s285 + $0x10] sm:$0x3]
      %s4017 = scalar_lea.vmem %s3, 16
      %v4018 = vld [vmem:[%s4017] sm:$0xf]
      %v4022 = vcombine.high %v4014, %v4014
      %v4024 = vunpack.c.l.s4 1983009808
      %v4025 = vunpack.c.0.s8 %v4024
      %v4026 = vlaneseq
      %v4027 = vshrl.u32 %v4026, 7
      %v4028 = vsub.s32 %v4025, %v4027
      %v4029 = vrot.slane %v4014, %v4028
      %v4031 = vunpack.c.l.s4 1983009808
      %v4032 = vunpack.c.0.s8 %v4031
      %v4033 = vlaneseq
      %v4034 = vshrl.u32 %v4033, 7
      %v4035 = vsub.s32 %v4032, %v4034
      %v4036 = vrot.slane %v4022, %v4035
      %v4037 = vcombine.high %v4029, %v4029
      %v4038 = vcombine.high %v4036, %v4036
      %v4039 = vcombine.high %v4015, %v4015
      %v4041 = vunpack.c.l.s4 1983009808
      %v4042 = vunpack.c.0.s8 %v4041
      %v4043 = vlaneseq
      %v4044 = vshrl.u32 %v4043, 7
      %v4045 = vsub.s32 %v4042, %v4044
      %v4046 = vrot.slane %v4015, %v4045
      %v4048 = vunpack.c.l.s4 1983009808
      %v4049 = vunpack.c.0.s8 %v4048
      %v4050 = vlaneseq
      %v4051 = vshrl.u32 %v4050, 7
      %v4052 = vsub.s32 %v4049, %v4051
      %v4053 = vrot.slane %v4039, %v4052
      %v4054 = vcombine.high %v4046, %v4046
      %v4055 = vcombine.high %v4053, %v4053
      %v4057 = vunpack.c.l.s4 1983009808
      %v4058 = vunpack.c.0.s8 %v4057
      %v4059 = vlaneseq
      %v4060 = vshrl.u32 %v4059, 7
      %v4061 = vsub.s32 %v4058, %v4060
      %v4062 = vrot.slane %v4016, %v4061
      %4063 = vrot.lane.b32.xlu0 %v4029, 93
      %v4064 = vpop.permute.xlu0 %4063
      %4065 = vrot.lane.b32.xlu0 %v4037, 93
      %v4066 = vpop.permute.xlu0 %4065
      %4067 = vrot.lane.b32.xlu0 %v4036, 93
      %v4068 = vpop.permute.xlu0 %4067
      %4069 = vrot.lane.b32.xlu0 %v4038, 93
      %v4070 = vpop.permute.xlu0 %4069
      %4071 = vrot.lane.b32.xlu0 %v4046, 93
      %v4072 = vpop.permute.xlu0 %4071
      %4073 = vrot.lane.b32.xlu0 %v4054, 93
      %v4074 = vpop.permute.xlu0 %4073
      %4075 = vrot.lane.b32.xlu0 %v4053, 93
      %v4076 = vpop.permute.xlu0 %4075
      %4077 = vrot.lane.b32.xlu0 %v4055, 93
      %v4078 = vpop.permute.xlu0 %4077
      %4079 = vrot.lane.b32.xlu0 %v4062, 93
      %v4080 = vpop.permute.xlu0 %4079
      %v4081 = vsel %vm1388, %v4064, %v4066
      %v4082 = vsel %vm1388, %v4066, %v4068
      %v4083 = vsel %vm1388, %v4068, %v4070
      %v4084 = vsel %vm1388, %v4070, %v4072
      %v4085 = vsel %vm1388, %v4072, %v4074
      %v4086 = vsel %vm1388, %v4074, %v4076
      %v4087 = vsel %vm1388, %v4076, %v4078
      %v4088 = vsel %vm1388, %v4078, %v4080
      %v4090 = vsel %vm2815, %v4018, 0
      %v4093 = vsel %vm2819, %v4081, 0
      %v4096 = vsel %vm2819, %v4082, 0
      %v4099 = vsel %vm2819, %v4083, 0
      %v4102 = vsel %vm2819, %v4084, 0
      %v4105 = vsel %vm2819, %v4085, 0
      %v4108 = vsel %vm2819, %v4086, 0
      %v4111 = vsel %vm2819, %v4087, 0
      %v4114 = vsel %vm2819, %v4088, 0
      %v4117 = vsel %vm2819, %v4080, 0
      %4119 = vmatprep.subr.bf16.mxu0 %v4096
      %4120 = vmatpush1.bf16.msra.mxu0 %v4093
      %4121 = vmatprep.subr.bf16.mxu0 0
      %4122 = vmatpush1.bf16.msra.mxu0 0
      %4123 = vmatprep.subr.bf16.mxu0 0
      %4124 = vmatpush1.bf16.msra.mxu0 0
      %4125 = vmatprep.subr.bf16.mxu0 0
      %4126 = vmatpush1.bf16.msra.mxu0 0
      %4127 = vmatprep.subr.bf16.mxu0 0
      %4128 = vmatpush1.bf16.msra.mxu0 0
      %4129 = vmatprep.subr.bf16.mxu0 0
      %4130 = vmatpush1.bf16.msra.mxu0 0
      %4131 = vmatprep.subr.bf16.mxu0 0
      %4132 = vmatpush1.bf16.msra.mxu0 0
      %4133 = vmatprep.subr.bf16.mxu0 0
      %4134 = vmatpush1.bf16.msra.mxu0 0
      %4135 = vmatprep.subr.bf16.mxu0 0
      %4136 = vmatpush1.bf16.msra.mxu0 0
      %4137 = vmatprep.subr.bf16.mxu0 0
      %4138 = vmatpush1.bf16.msra.mxu0 0
      %4139 = vmatprep.subr.bf16.mxu0 0
      %4140 = vmatpush1.bf16.msra.mxu0 0
      %4141 = vmatprep.subr.bf16.mxu0 0
      %4142 = vmatpush1.bf16.msra.mxu0 0
      %4143 = vmatprep.subr.bf16.mxu0 0
      %4144 = vmatpush1.bf16.msra.mxu0 0
      %4145 = vmatprep.subr.bf16.mxu0 0
      %4146 = vmatpush1.bf16.msra.mxu0 0
      %4147 = vmatprep.subr.bf16.mxu0 0
      %4148 = vmatpush1.bf16.msra.mxu0 0
      %4149 = vmatprep.subr.bf16.mxu0 0
      %4150 = vmatpush1.bf16.msra.mxu0 0
      %4151 = vmatprep.mubr.bf16.mxu0 0
      %4152 = vmatmul.mubr.bf16.gmra.mrb[0].mxu0 %v4090
      %v4153 = vpop.f32.mrb[0].mxu0
      %v4154 = vadd.f32 0.0, %v4153
      %v4155 = vpop.f32.mrb[0].mxu0
      %v4156 = vadd.f32 0.0, %v4155
      %v4157 = vpop.f32.mrb[0].mxu0
      %v4158 = vpop.f32.mrb[0].mxu0
      %4159 = vdwg.mxu0
      %4160 = vmatprep.subr.bf16.mxu0 %v4102
      %4161 = vmatpush1.bf16.msra.mxu0 %v4099
      %4162 = vmatprep.subr.bf16.mxu0 0
      %4163 = vmatpush1.bf16.msra.mxu0 0
      %4164 = vmatprep.subr.bf16.mxu0 0
      %4165 = vmatpush1.bf16.msra.mxu0 0
      %4166 = vmatprep.subr.bf16.mxu0 0
      %4167 = vmatpush1.bf16.msra.mxu0 0
      %4168 = vmatprep.subr.bf16.mxu0 0
      %4169 = vmatpush1.bf16.msra.mxu0 0
      %4170 = vmatprep.subr.bf16.mxu0 0
      %4171 = vmatpush1.bf16.msra.mxu0 0
      %4172 = vmatprep.subr.bf16.mxu0 0
      %4173 = vmatpush1.bf16.msra.mxu0 0
      %4174 = vmatprep.subr.bf16.mxu0 0
      %4175 = vmatpush1.bf16.msra.mxu0 0
      %4176 = vmatprep.subr.bf16.mxu0 0
      %4177 = vmatpush1.bf16.msra.mxu0 0
      %4178 = vmatprep.subr.bf16.mxu0 0
      %4179 = vmatpush1.bf16.msra.mxu0 0
      %4180 = vmatprep.subr.bf16.mxu0 0
      %4181 = vmatpush1.bf16.msra.mxu0 0
      %4182 = vmatprep.subr.bf16.mxu0 0
      %4183 = vmatpush1.bf16.msra.mxu0 0
      %4184 = vmatprep.subr.bf16.mxu0 0
      %4185 = vmatpush1.bf16.msra.mxu0 0
      %4186 = vmatprep.subr.bf16.mxu0 0
      %4187 = vmatpush1.bf16.msra.mxu0 0
      %4188 = vmatprep.subr.bf16.mxu0 0
      %4189 = vmatpush1.bf16.msra.mxu0 0
      %4190 = vmatprep.subr.bf16.mxu0 0
      %4191 = vmatpush1.bf16.msra.mxu0 0
      %4192 = vmatprep.mubr.bf16.mxu0 0
      %4193 = vmatmul.mubr.bf16.gmra.mrb[0].mxu0 %v4090
      %v4194 = vpop.f32.mrb[0].mxu0
      %v4195 = vadd.f32 0.0, %v4194
      %v4196 = vpop.f32.mrb[0].mxu0
      %v4197 = vadd.f32 0.0, %v4196
      %v4198 = vpop.f32.mrb[0].mxu0
      %v4199 = vpop.f32.mrb[0].mxu0
      %4200 = vdwg.mxu0
      %4201 = vmatprep.subr.bf16.mxu0 %v4108
      %4202 = vmatpush1.bf16.msra.mxu0 %v4105
      %4203 = vmatprep.subr.bf16.mxu0 0
      %4204 = vmatpush1.bf16.msra.mxu0 0
      %4205 = vmatprep.subr.bf16.mxu0 0
      %4206 = vmatpush1.bf16.msra.mxu0 0
      %4207 = vmatprep.subr.bf16.mxu0 0
      %4208 = vmatpush1.bf16.msra.mxu0 0
      %4209 = vmatprep.subr.bf16.mxu0 0
      %4210 = vmatpush1.bf16.msra.mxu0 0
      %4211 = vmatprep.subr.bf16.mxu0 0
      %4212 = vmatpush1.bf16.msra.mxu0 0
      %4213 = vmatprep.subr.bf16.mxu0 0
      %4214 = vmatpush1.bf16.msra.mxu0 0
      %4215 = vmatprep.subr.bf16.mxu0 0
      %4216 = vmatpush1.bf16.msra.mxu0 0
      %4217 = vmatprep.subr.bf16.mxu0 0
      %4218 = vmatpush1.bf16.msra.mxu0 0
      %4219 = vmatprep.subr.bf16.mxu0 0
      %4220 = vmatpush1.bf16.msra.mxu0 0
      %4221 = vmatprep.subr.bf16.mxu0 0
      %4222 = vmatpush1.bf16.msra.mxu0 0
      %4223 = vmatprep.subr.bf16.mxu0 0
      %4224 = vmatpush1.bf16.msra.mxu0 0
      %4225 = vmatprep.subr.bf16.mxu0 0
      %4226 = vmatpush1.bf16.msra.mxu0 0
      %4227 = vmatprep.subr.bf16.mxu0 0
      %4228 = vmatpush1.bf16.msra.mxu0 0
      %4229 = vmatprep.subr.bf16.mxu0 0
      %4230 = vmatpush1.bf16.msra.mxu0 0
      %4231 = vmatprep.subr.bf16.mxu0 0
      %4232 = vmatpush1.bf16.msra.mxu0 0
      %4233 = vmatprep.mubr.bf16.mxu0 0
      %4234 = vmatmul.mubr.bf16.gmra.mrb[0].mxu0 %v4090
      %v4235 = vpop.f32.mrb[0].mxu0
      %v4236 = vadd.f32 0.0, %v4235
      %v4237 = vpop.f32.mrb[0].mxu0
      %v4238 = vadd.f32 0.0, %v4237
      %v4239 = vpop.f32.mrb[0].mxu0
      %v4240 = vpop.f32.mrb[0].mxu0
      %4241 = vdwg.mxu0
      %4242 = vmatprep.subr.bf16.mxu0 %v4114
      %4243 = vmatpush1.bf16.msra.mxu0 %v4111
      %4244 = vmatprep.subr.bf16.mxu0 0
      %4245 = vmatpush1.bf16.msra.mxu0 0
      %4246 = vmatprep.subr.bf16.mxu0 0
      %4247 = vmatpush1.bf16.msra.mxu0 0
      %4248 = vmatprep.subr.bf16.mxu0 0
      %4249 = vmatpush1.bf16.msra.mxu0 0
      %4250 = vmatprep.subr.bf16.mxu0 0
      %4251 = vmatpush1.bf16.msra.mxu0 0
      %4252 = vmatprep.subr.bf16.mxu0 0
      %4253 = vmatpush1.bf16.msra.mxu0 0
      %4254 = vmatprep.subr.bf16.mxu0 0
      %4255 = vmatpush1.bf16.msra.mxu0 0
      %4256 = vmatprep.subr.bf16.mxu0 0
      %4257 = vmatpush1.bf16.msra.mxu0 0
      %4258 = vmatprep.subr.bf16.mxu0 0
      %4259 = vmatpush1.bf16.msra.mxu0 0
      %4260 = vmatprep.subr.bf16.mxu0 0
      %4261 = vmatpush1.bf16.msra.mxu0 0
      %4262 = vmatprep.subr.bf16.mxu0 0
      %4263 = vmatpush1.bf16.msra.mxu0 0
      %4264 = vmatprep.subr.bf16.mxu0 0
      %4265 = vmatpush1.bf16.msra.mxu0 0
      %4266 = vmatprep.subr.bf16.mxu0 0
      %4267 = vmatpush1.bf16.msra.mxu0 0
      %4268 = vmatprep.subr.bf16.mxu0 0
      %4269 = vmatpush1.bf16.msra.mxu0 0
      %4270 = vmatprep.subr.bf16.mxu0 0
      %4271 = vmatpush1.bf16.msra.mxu0 0
      %4272 = vmatprep.subr.bf16.mxu0 0
      %4273 = vmatpush1.bf16.msra.mxu0 0
      %4274 = vmatprep.mubr.bf16.mxu0 0
      %4275 = vmatmul.mubr.bf16.gmra.mrb[0].mxu0 %v4090
      %v4276 = vpop.f32.mrb[0].mxu0
      %v4277 = vadd.f32 0.0, %v4276
      %v4278 = vpop.f32.mrb[0].mxu0
      %v4279 = vadd.f32 0.0, %v4278
      %v4280 = vpop.f32.mrb[0].mxu0
      %v4281 = vpop.f32.mrb[0].mxu0
      %4282 = vdwg.mxu0
      %4283 = vmatprep.subr.bf16.mxu0 0
      %4284 = vmatpush1.bf16.msra.mxu0 %v4117
      %4285 = vmatprep.subr.bf16.mxu0 0
      %4286 = vmatpush1.bf16.msra.mxu0 0
      %4287 = vmatprep.subr.bf16.mxu0 0
      %4288 = vmatpush1.bf16.msra.mxu0 0
      %4289 = vmatprep.subr.bf16.mxu0 0
      %4290 = vmatpush1.bf16.msra.mxu0 0
      %4291 = vmatprep.subr.bf16.mxu0 0
      %4292 = vmatpush1.bf16.msra.mxu0 0
      %4293 = vmatprep.subr.bf16.mxu0 0
      %4294 = vmatpush1.bf16.msra.mxu0 0
      %4295 = vmatprep.subr.bf16.mxu0 0
      %4296 = vmatpush1.bf16.msra.mxu0 0
      %4297 = vmatprep.subr.bf16.mxu0 0
      %4298 = vmatpush1.bf16.msra.mxu0 0
      %4299 = vmatprep.subr.bf16.mxu0 0
      %4300 = vmatpush1.bf16.msra.mxu0 0
      %4301 = vmatprep.subr.bf16.mxu0 0
      %4302 = vmatpush1.bf16.msra.mxu0 0
      %4303 = vmatprep.subr.bf16.mxu0 0
      %4304 = vmatpush1.bf16.msra.mxu0 0
      %4305 = vmatprep.subr.bf16.mxu0 0
      %4306 = vmatpush1.bf16.msra.mxu0 0
      %4307 = vmatprep.subr.bf16.mxu0 0
      %4308 = vmatpush1.bf16.msra.mxu0 0
      %4309 = vmatprep.subr.bf16.mxu0 0
      %4310 = vmatpush1.bf16.msra.mxu0 0
      %4311 = vmatprep.subr.bf16.mxu0 0
      %4312 = vmatpush1.bf16.msra.mxu0 0
      %4313 = vmatprep.subr.bf16.mxu0 0
      %4314 = vmatpush1.bf16.msra.mxu0 0
      %4315 = vmatprep.mubr.bf16.mxu0 0
      %4316 = vmatmul.mubr.bf16.gmra.mrb[0].mxu0 %v4090
      %v4317 = vpop.f32.mrb[0].mxu0
      %v4318 = vadd.f32 0.0, %v4317
      %v4319 = vpop.f32.mrb[0].mxu0
      %v4320 = vpop.f32.mrb[0].mxu0
      %v4321 = vpop.f32.mrb[0].mxu0
      %4322 = vdwg.mxu0
      %v4323 = vadd.f32 %v4005, %v4154
      %v4324 = vadd.f32 %v4006, %v4156
      %v4325 = vadd.f32 %v4007, %v4195
      %v4326 = vadd.f32 %v4008, %v4197
      %v4327 = vadd.f32 %v4009, %v4236
      %v4328 = vadd.f32 %v4010, %v4238
      %v4329 = vadd.f32 %v4011, %v4277
      %v4330 = vadd.f32 %v4012, %v4279
      %v4331 = vadd.f32 %v4013, %v4318
      %v4332 = vld [vmem:[%s285] sm:$0xff]
      %v4333 = vld [vmem:[%s285 + $0x8] sm:$0xff]
      %v4334 = vld [vmem:[%s285 + $0x10] sm:$0x3]
      %s4335 = scalar_lea.vmem %s3, 20
      %v4336 = vld [vmem:[%s4335] sm:$0xf]
      %v4340 = vcombine.high %v4332, %v4332
      %v4342 = vunpack.c.l.s4 1983009808
      %v4343 = vunpack.c.0.s8 %v4342
      %v4344 = vlaneseq
      %v4345 = vshrl.u32 %v4344, 7
      %v4346 = vsub.s32 %v4343, %v4345
      %v4347 = vrot.slane %v4332, %v4346
      %v4349 = vunpack.c.l.s4 1983009808
      %v4350 = vunpack.c.0.s8 %v4349
      %v4351 = vlaneseq
      %v4352 = vshrl.u32 %v4351, 7
      %v4353 = vsub.s32 %v4350, %v4352
      %v4354 = vrot.slane %v4340, %v4353
      %v4355 = vcombine.high %v4347, %v4347
      %v4356 = vcombine.high %v4354, %v4354
      %v4357 = vcombine.high %v4333, %v4333
      %v4359 = vunpack.c.l.s4 1983009808
      %v4360 = vunpack.c.0.s8 %v4359
      %v4361 = vlaneseq
      %v4362 = vshrl.u32 %v4361, 7
      %v4363 = vsub.s32 %v4360, %v4362
      %v4364 = vrot.slane %v4333, %v4363
      %v4366 = vunpack.c.l.s4 1983009808
      %v4367 = vunpack.c.0.s8 %v4366
      %v4368 = vlaneseq
      %v4369 = vshrl.u32 %v4368, 7
      %v4370 = vsub.s32 %v4367, %v4369
      %v4371 = vrot.slane %v4357, %v4370
      %v4372 = vcombine.high %v4364, %v4364
      %v4373 = vcombine.high %v4371, %v4371
      %v4375 = vunpack.c.l.s4 1983009808
      %v4376 = vunpack.c.0.s8 %v4375
      %v4377 = vlaneseq
      %v4378 = vshrl.u32 %v4377, 7
      %v4379 = vsub.s32 %v4376, %v4378
      %v4380 = vrot.slane %v4334, %v4379
      %4381 = vrot.lane.b32.xlu0 %v4347, 92
      %v4382 = vpop.permute.xlu0 %4381
      %4383 = vrot.lane.b32.xlu0 %v4355, 92
      %v4384 = vpop.permute.xlu0 %4383
      %4385 = vrot.lane.b32.xlu0 %v4354, 92
      %v4386 = vpop.permute.xlu0 %4385
      %4387 = vrot.lane.b32.xlu0 %v4356, 92
      %v4388 = vpop.permute.xlu0 %4387
      %4389 = vrot.lane.b32.xlu0 %v4364, 92
      %v4390 = vpop.permute.xlu0 %4389
      %4391 = vrot.lane.b32.xlu0 %v4372, 92
      %v4392 = vpop.permute.xlu0 %4391
      %4393 = vrot.lane.b32.xlu0 %v4371, 92
      %v4394 = vpop.permute.xlu0 %4393
      %4395 = vrot.lane.b32.xlu0 %v4373, 92
      %v4396 = vpop.permute.xlu0 %4395
      %4397 = vrot.lane.b32.xlu0 %v4380, 92
      %v4398 = vpop.permute.xlu0 %4397
      %v4399 = vsel %vm1660, %v4382, %v4384
      %v4400 = vsel %vm1660, %v4384, %v4386
      %v4401 = vsel %vm1660, %v4386, %v4388
      %v4402 = vsel %vm1660, %v4388, %v4390
      %v4403 = vsel %vm1660, %v4390, %v4392
      %v4404 = vsel %vm1660, %v4392, %v4394
      %v4405 = vsel %vm1660, %v4394, %v4396
      %v4406 = vsel %vm1660, %v4396, %v4398
      %v4408 = vsel %vm2815, %v4336, 0
      %v4411 = vsel %vm2819, %v4399, 0
      %v4414 = vsel %vm2819, %v4400, 0
      %v4417 = vsel %vm2819, %v4401, 0
      %v4420 = vsel %vm2819, %v4402, 0
      %v4423 = vsel %vm2819, %v4403, 0
      %v4426 = vsel %vm2819, %v4404, 0
      %v4429 = vsel %vm2819, %v4405, 0
      %v4432 = vsel %vm2819, %v4406, 0
      %v4435 = vsel %vm2819, %v4398, 0
      %4437 = vmatprep.subr.bf16.mxu0 %v4414
      %4438 = vmatpush1.bf16.msra.mxu0 %v4411
      %4439 = vmatprep.subr.bf16.mxu0 0
      %4440 = vmatpush1.bf16.msra.mxu0 0
      %4441 = vmatprep.subr.bf16.mxu0 0
      %4442 = vmatpush1.bf16.msra.mxu0 0
      %4443 = vmatprep.subr.bf16.mxu0 0
      %4444 = vmatpush1.bf16.msra.mxu0 0
      %4445 = vmatprep.subr.bf16.mxu0 0
      %4446 = vmatpush1.bf16.msra.mxu0 0
      %4447 = vmatprep.subr.bf16.mxu0 0
      %4448 = vmatpush1.bf16.msra.mxu0 0
      %4449 = vmatprep.subr.bf16.mxu0 0
      %4450 = vmatpush1.bf16.msra.mxu0 0
      %4451 = vmatprep.subr.bf16.mxu0 0
      %4452 = vmatpush1.bf16.msra.mxu0 0
      %4453 = vmatprep.subr.bf16.mxu0 0
      %4454 = vmatpush1.bf16.msra.mxu0 0
      %4455 = vmatprep.subr.bf16.mxu0 0
      %4456 = vmatpush1.bf16.msra.mxu0 0
      %4457 = vmatprep.subr.bf16.mxu0 0
      %4458 = vmatpush1.bf16.msra.mxu0 0
      %4459 = vmatprep.subr.bf16.mxu0 0
      %4460 = vmatpush1.bf16.msra.mxu0 0
      %4461 = vmatprep.subr.bf16.mxu0 0
      %4462 = vmatpush1.bf16.msra.mxu0 0
      %4463 = vmatprep.subr.bf16.mxu0 0
      %4464 = vmatpush1.bf16.msra.mxu0 0
      %4465 = vmatprep.subr.bf16.mxu0 0
      %4466 = vmatpush1.bf16.msra.mxu0 0
      %4467 = vmatprep.subr.bf16.mxu0 0
      %4468 = vmatpush1.bf16.msra.mxu0 0
      %4469 = vmatprep.mubr.bf16.mxu0 0
      %4470 = vmatmul.mubr.bf16.gmra.mrb[0].mxu0 %v4408
      %v4471 = vpop.f32.mrb[0].mxu0
      %v4472 = vadd.f32 0.0, %v4471
      %v4473 = vpop.f32.mrb[0].mxu0
      %v4474 = vadd.f32 0.0, %v4473
      %v4475 = vpop.f32.mrb[0].mxu0
      %v4476 = vpop.f32.mrb[0].mxu0
      %4477 = vdwg.mxu0
      %4478 = vmatprep.subr.bf16.mxu0 %v4420
      %4479 = vmatpush1.bf16.msra.mxu0 %v4417
      %4480 = vmatprep.subr.bf16.mxu0 0
      %4481 = vmatpush1.bf16.msra.mxu0 0
      %4482 = vmatprep.subr.bf16.mxu0 0
      %4483 = vmatpush1.bf16.msra.mxu0 0
      %4484 = vmatprep.subr.bf16.mxu0 0
      %4485 = vmatpush1.bf16.msra.mxu0 0
      %4486 = vmatprep.subr.bf16.mxu0 0
      %4487 = vmatpush1.bf16.msra.mxu0 0
      %4488 = vmatprep.subr.bf16.mxu0 0
      %4489 = vmatpush1.bf16.msra.mxu0 0
      %4490 = vmatprep.subr.bf16.mxu0 0
      %4491 = vmatpush1.bf16.msra.mxu0 0
      %4492 = vmatprep.subr.bf16.mxu0 0
      %4493 = vmatpush1.bf16.msra.mxu0 0
      %4494 = vmatprep.subr.bf16.mxu0 0
      %4495 = vmatpush1.bf16.msra.mxu0 0
      %4496 = vmatprep.subr.bf16.mxu0 0
      %4497 = vmatpush1.bf16.msra.mxu0 0
      %4498 = vmatprep.subr.bf16.mxu0 0
      %4499 = vmatpush1.bf16.msra.mxu0 0
      %4500 = vmatprep.subr.bf16.mxu0 0
      %4501 = vmatpush1.bf16.msra.mxu0 0
      %4502 = vmatprep.subr.bf16.mxu0 0
      %4503 = vmatpush1.bf16.msra.mxu0 0
      %4504 = vmatprep.subr.bf16.mxu0 0
      %4505 = vmatpush1.bf16.msra.mxu0 0
      %4506 = vmatprep.subr.bf16.mxu0 0
      %4507 = vmatpush1.bf16.msra.mxu0 0
      %4508 = vmatprep.subr.bf16.mxu0 0
      %4509 = vmatpush1.bf16.msra.mxu0 0
      %4510 = vmatprep.mubr.bf16.mxu0 0
      %4511 = vmatmul.mubr.bf16.gmra.mrb[0].mxu0 %v4408
      %v4512 = vpop.f32.mrb[0].mxu0
      %v4513 = vadd.f32 0.0, %v4512
      %v4514 = vpop.f32.mrb[0].mxu0
      %v4515 = vadd.f32 0.0, %v4514
      %v4516 = vpop.f32.mrb[0].mxu0
      %v4517 = vpop.f32.mrb[0].mxu0
      %4518 = vdwg.mxu0
      %4519 = vmatprep.subr.bf16.mxu0 %v4426
      %4520 = vmatpush1.bf16.msra.mxu0 %v4423
      %4521 = vmatprep.subr.bf16.mxu0 0
      %4522 = vmatpush1.bf16.msra.mxu0 0
      %4523 = vmatprep.subr.bf16.mxu0 0
      %4524 = vmatpush1.bf16.msra.mxu0 0
      %4525 = vmatprep.subr.bf16.mxu0 0
      %4526 = vmatpush1.bf16.msra.mxu0 0
      %4527 = vmatprep.subr.bf16.mxu0 0
      %4528 = vmatpush1.bf16.msra.mxu0 0
      %4529 = vmatprep.subr.bf16.mxu0 0
      %4530 = vmatpush1.bf16.msra.mxu0 0
      %4531 = vmatprep.subr.bf16.mxu0 0
      %4532 = vmatpush1.bf16.msra.mxu0 0
      %4533 = vmatprep.subr.bf16.mxu0 0
      %4534 = vmatpush1.bf16.msra.mxu0 0
      %4535 = vmatprep.subr.bf16.mxu0 0
      %4536 = vmatpush1.bf16.msra.mxu0 0
      %4537 = vmatprep.subr.bf16.mxu0 0
      %4538 = vmatpush1.bf16.msra.mxu0 0
      %4539 = vmatprep.subr.bf16.mxu0 0
      %4540 = vmatpush1.bf16.msra.mxu0 0
      %4541 = vmatprep.subr.bf16.mxu0 0
      %4542 = vmatpush1.bf16.msra.mxu0 0
      %4543 = vmatprep.subr.bf16.mxu0 0
      %4544 = vmatpush1.bf16.msra.mxu0 0
      %4545 = vmatprep.subr.bf16.mxu0 0
      %4546 = vmatpush1.bf16.msra.mxu0 0
      %4547 = vmatprep.subr.bf16.mxu0 0
      %4548 = vmatpush1.bf16.msra.mxu0 0
      %4549 = vmatprep.subr.bf16.mxu0 0
      %4550 = vmatpush1.bf16.msra.mxu0 0
      %4551 = vmatprep.mubr.bf16.mxu0 0
      %4552 = vmatmul.mubr.bf16.gmra.mrb[0].mxu0 %v4408
      %v4553 = vpop.f32.mrb[0].mxu0
      %v4554 = vadd.f32 0.0, %v4553
      %v4555 = vpop.f32.mrb[0].mxu0
      %v4556 = vadd.f32 0.0, %v4555
      %v4557 = vpop.f32.mrb[0].mxu0
      %v4558 = vpop.f32.mrb[0].mxu0
      %4559 = vdwg.mxu0
      %4560 = vmatprep.subr.bf16.mxu0 %v4432
      %4561 = vmatpush1.bf16.msra.mxu0 %v4429
      %4562 = vmatprep.subr.bf16.mxu0 0
      %4563 = vmatpush1.bf16.msra.mxu0 0
      %4564 = vmatprep.subr.bf16.mxu0 0
      %4565 = vmatpush1.bf16.msra.mxu0 0
      %4566 = vmatprep.subr.bf16.mxu0 0
      %4567 = vmatpush1.bf16.msra.mxu0 0
      %4568 = vmatprep.subr.bf16.mxu0 0
      %4569 = vmatpush1.bf16.msra.mxu0 0
      %4570 = vmatprep.subr.bf16.mxu0 0
      %4571 = vmatpush1.bf16.msra.mxu0 0
      %4572 = vmatprep.subr.bf16.mxu0 0
      %4573 = vmatpush1.bf16.msra.mxu0 0
      %4574 = vmatprep.subr.bf16.mxu0 0
      %4575 = vmatpush1.bf16.msra.mxu0 0
      %4576 = vmatprep.subr.bf16.mxu0 0
      %4577 = vmatpush1.bf16.msra.mxu0 0
      %4578 = vmatprep.subr.bf16.mxu0 0
      %4579 = vmatpush1.bf16.msra.mxu0 0
      %4580 = vmatprep.subr.bf16.mxu0 0
      %4581 = vmatpush1.bf16.msra.mxu0 0
      %4582 = vmatprep.subr.bf16.mxu0 0
      %4583 = vmatpush1.bf16.msra.mxu0 0
      %4584 = vmatprep.subr.bf16.mxu0 0
      %4585 = vmatpush1.bf16.msra.mxu0 0
      %4586 = vmatprep.subr.bf16.mxu0 0
      %4587 = vmatpush1.bf16.msra.mxu0 0
      %4588 = vmatprep.subr.bf16.mxu0 0
      %4589 = vmatpush1.bf16.msra.mxu0 0
      %4590 = vmatprep.subr.bf16.mxu0 0
      %4591 = vmatpush1.bf16.msra.mxu0 0
      %4592 = vmatprep.mubr.bf16.mxu0 0
      %4593 = vmatmul.mubr.bf16.gmra.mrb[0].mxu0 %v4408
      %v4594 = vpop.f32.mrb[0].mxu0
      %v4595 = vadd.f32 0.0, %v4594
      %v4596 = vpop.f32.mrb[0].mxu0
      %v4597 = vadd.f32 0.0, %v4596
      %v4598 = vpop.f32.mrb[0].mxu0
      %v4599 = vpop.f32.mrb[0].mxu0
      %4600 = vdwg.mxu0
      %4601 = vmatprep.subr.bf16.mxu0 0
      %4602 = vmatpush1.bf16.msra.mxu0 %v4435
      %4603 = vmatprep.subr.bf16.mxu0 0
      %4604 = vmatpush1.bf16.msra.mxu0 0
      %4605 = vmatprep.subr.bf16.mxu0 0
      %4606 = vmatpush1.bf16.msra.mxu0 0
      %4607 = vmatprep.subr.bf16.mxu0 0
      %4608 = vmatpush1.bf16.msra.mxu0 0
      %4609 = vmatprep.subr.bf16.mxu0 0
      %4610 = vmatpush1.bf16.msra.mxu0 0
      %4611 = vmatprep.subr.bf16.mxu0 0
      %4612 = vmatpush1.bf16.msra.mxu0 0
      %4613 = vmatprep.subr.bf16.mxu0 0
      %4614 = vmatpush1.bf16.msra.mxu0 0
      %4615 = vmatprep.subr.bf16.mxu0 0
      %4616 = vmatpush1.bf16.msra.mxu0 0
      %4617 = vmatprep.subr.bf16.mxu0 0
      %4618 = vmatpush1.bf16.msra.mxu0 0
      %4619 = vmatprep.subr.bf16.mxu0 0
      %4620 = vmatpush1.bf16.msra.mxu0 0
      %4621 = vmatprep.subr.bf16.mxu0 0
      %4622 = vmatpush1.bf16.msra.mxu0 0
      %4623 = vmatprep.subr.bf16.mxu0 0
      %4624 = vmatpush1.bf16.msra.mxu0 0
      %4625 = vmatprep.subr.bf16.mxu0 0
      %4626 = vmatpush1.bf16.msra.mxu0 0
      %4627 = vmatprep.subr.bf16.mxu0 0
      %4628 = vmatpush1.bf16.msra.mxu0 0
      %4629 = vmatprep.subr.bf16.mxu0 0
      %4630 = vmatpush1.bf16.msra.mxu0 0
      %4631 = vmatprep.subr.bf16.mxu0 0
      %4632 = vmatpush1.bf16.msra.mxu0 0
      %4633 = vmatprep.mubr.bf16.mxu0 0
      %4634 = vmatmul.mubr.bf16.gmra.mrb[0].mxu0 %v4408
      %v4635 = vpop.f32.mrb[0].mxu0
      %v4636 = vadd.f32 0.0, %v4635
      %v4637 = vpop.f32.mrb[0].mxu0
      %v4638 = vpop.f32.mrb[0].mxu0
      %v4639 = vpop.f32.mrb[0].mxu0
      %4640 = vdwg.mxu0
      %v4641 = vadd.f32 %v4323, %v4472
      %v4642 = vadd.f32 %v4324, %v4474
      %v4643 = vadd.f32 %v4325, %v4513
      %v4644 = vadd.f32 %v4326, %v4515
      %v4645 = vadd.f32 %v4327, %v4554
      %v4646 = vadd.f32 %v4328, %v4556
      %v4647 = vadd.f32 %v4329, %v4595
      %v4648 = vadd.f32 %v4330, %v4597
      %v4649 = vadd.f32 %v4331, %v4636
      %v4650 = vld [vmem:[%s285] sm:$0xff]
      %v4651 = vld [vmem:[%s285 + $0x8] sm:$0xff]
      %v4652 = vld [vmem:[%s285 + $0x10] sm:$0xf]
      %s4653 = scalar_lea.vmem %s3, 24
      %v4654 = vld [vmem:[%s4653] sm:$0xf]
      %v4658 = vcombine.high %v4650, %v4650
      %v4660 = vunpack.c.l.s4 1983009808
      %v4661 = vunpack.c.0.s8 %v4660
      %v4662 = vlaneseq
      %v4663 = vshrl.u32 %v4662, 7
      %v4664 = vsub.s32 %v4661, %v4663
      %v4665 = vrot.slane %v4650, %v4664
      %v4667 = vunpack.c.l.s4 1983009808
      %v4668 = vunpack.c.0.s8 %v4667
      %v4669 = vlaneseq
      %v4670 = vshrl.u32 %v4669, 7
      %v4671 = vsub.s32 %v4668, %v4670
      %v4672 = vrot.slane %v4658, %v4671
      %v4673 = vcombine.high %v4665, %v4665
      %v4674 = vcombine.high %v4672, %v4672
      %v4675 = vcombine.high %v4651, %v4651
      %v4677 = vunpack.c.l.s4 1983009808
      %v4678 = vunpack.c.0.s8 %v4677
      %v4679 = vlaneseq
      %v4680 = vshrl.u32 %v4679, 7
      %v4681 = vsub.s32 %v4678, %v4680
      %v4682 = vrot.slane %v4651, %v4681
      %v4684 = vunpack.c.l.s4 1983009808
      %v4685 = vunpack.c.0.s8 %v4684
      %v4686 = vlaneseq
      %v4687 = vshrl.u32 %v4686, 7
      %v4688 = vsub.s32 %v4685, %v4687
      %v4689 = vrot.slane %v4675, %v4688
      %v4690 = vcombine.high %v4682, %v4682
      %v4691 = vcombine.high %v4689, %v4689
      %v4693 = vunpack.c.l.s4 1983009808
      %v4694 = vunpack.c.0.s8 %v4693
      %v4695 = vlaneseq
      %v4696 = vshrl.u32 %v4695, 7
      %v4697 = vsub.s32 %v4694, %v4696
      %v4698 = vrot.slane %v4652, %v4697
      %v4699 = vcombine.high %v4698, %v4698
      %4700 = vrot.lane.b32.xlu0 %v4665, 60
      %v4701 = vpop.permute.xlu0 %4700
      %4702 = vrot.lane.b32.xlu0 %v4673, 60
      %v4703 = vpop.permute.xlu0 %4702
      %4704 = vrot.lane.b32.xlu0 %v4672, 60
      %v4705 = vpop.permute.xlu0 %4704
      %4706 = vrot.lane.b32.xlu0 %v4674, 60
      %v4707 = vpop.permute.xlu0 %4706
      %4708 = vrot.lane.b32.xlu0 %v4682, 60
      %v4709 = vpop.permute.xlu0 %4708
      %4710 = vrot.lane.b32.xlu0 %v4690, 60
      %v4711 = vpop.permute.xlu0 %4710
      %4712 = vrot.lane.b32.xlu0 %v4689, 60
      %v4713 = vpop.permute.xlu0 %4712
      %4714 = vrot.lane.b32.xlu0 %v4691, 60
      %v4715 = vpop.permute.xlu0 %4714
      %4716 = vrot.lane.b32.xlu0 %v4698, 60
      %v4717 = vpop.permute.xlu0 %4716
      %4718 = vrot.lane.b32.xlu0 %v4699, 60
      %v4719 = vpop.permute.xlu0 %4718
      %v4720 = vsel %vm1964, %v4701, %v4703
      %v4721 = vsel %vm1964, %v4703, %v4705
      %v4722 = vsel %vm1964, %v4705, %v4707
      %v4723 = vsel %vm1964, %v4707, %v4709
      %v4724 = vsel %vm1964, %v4709, %v4711
      %v4725 = vsel %vm1964, %v4711, %v4713
      %v4726 = vsel %vm1964, %v4713, %v4715
      %v4727 = vsel %vm1964, %v4715, %v4717
      %v4728 = vsel %vm1964, %v4717, %v4719
      %v4730 = vsel %vm2815, %v4654, 0
      %v4733 = vsel %vm2819, %v4720, 0
      %v4736 = vsel %vm2819, %v4721, 0
      %v4739 = vsel %vm2819, %v4722, 0
      %v4742 = vsel %vm2819, %v4723, 0
      %v4745 = vsel %vm2819, %v4724, 0
      %v4748 = vsel %vm2819, %v4725, 0
      %v4751 = vsel %vm2819, %v4726, 0
      %v4754 = vsel %vm2819, %v4727, 0
      %v4757 = vsel %vm2819, %v4728, 0
      %4759 = vmatprep.subr.bf16.mxu0 %v4736
      %4760 = vmatpush1.bf16.msra.mxu0 %v4733
      %4761 = vmatprep.subr.bf16.mxu0 0
      %4762 = vmatpush1.bf16.msra.mxu0 0
      %4763 = vmatprep.subr.bf16.mxu0 0
      %4764 = vmatpush1.bf16.msra.mxu0 0
      %4765 = vmatprep.subr.bf16.mxu0 0
      %4766 = vmatpush1.bf16.msra.mxu0 0
      %4767 = vmatprep.subr.bf16.mxu0 0
      %4768 = vmatpush1.bf16.msra.mxu0 0
      %4769 = vmatprep.subr.bf16.mxu0 0
      %4770 = vmatpush1.bf16.msra.mxu0 0
      %4771 = vmatprep.subr.bf16.mxu0 0
      %4772 = vmatpush1.bf16.msra.mxu0 0
      %4773 = vmatprep.subr.bf16.mxu0 0
      %4774 = vmatpush1.bf16.msra.mxu0 0
      %4775 = vmatprep.subr.bf16.mxu0 0
      %4776 = vmatpush1.bf16.msra.mxu0 0
      %4777 = vmatprep.subr.bf16.mxu0 0
      %4778 = vmatpush1.bf16.msra.mxu0 0
      %4779 = vmatprep.subr.bf16.mxu0 0
      %4780 = vmatpush1.bf16.msra.mxu0 0
      %4781 = vmatprep.subr.bf16.mxu0 0
      %4782 = vmatpush1.bf16.msra.mxu0 0
      %4783 = vmatprep.subr.bf16.mxu0 0
      %4784 = vmatpush1.bf16.msra.mxu0 0
      %4785 = vmatprep.subr.bf16.mxu0 0
      %4786 = vmatpush1.bf16.msra.mxu0 0
      %4787 = vmatprep.subr.bf16.mxu0 0
      %4788 = vmatpush1.bf16.msra.mxu0 0
      %4789 = vmatprep.subr.bf16.mxu0 0
      %4790 = vmatpush1.bf16.msra.mxu0 0
      %4791 = vmatprep.mubr.bf16.mxu0 0
      %4792 = vmatmul.mubr.bf16.gmra.mrb[0].mxu0 %v4730
      %v4793 = vpop.f32.mrb[0].mxu0
      %v4794 = vadd.f32 0.0, %v4793
      %v4795 = vpop.f32.mrb[0].mxu0
      %v4796 = vadd.f32 0.0, %v4795
      %v4797 = vpop.f32.mrb[0].mxu0
      %v4798 = vpop.f32.mrb[0].mxu0
      %4799 = vdwg.mxu0
      %4800 = vmatprep.subr.bf16.mxu0 %v4742
      %4801 = vmatpush1.bf16.msra.mxu0 %v4739
      %4802 = vmatprep.subr.bf16.mxu0 0
      %4803 = vmatpush1.bf16.msra.mxu0 0
      %4804 = vmatprep.subr.bf16.mxu0 0
      %4805 = vmatpush1.bf16.msra.mxu0 0
      %4806 = vmatprep.subr.bf16.mxu0 0
      %4807 = vmatpush1.bf16.msra.mxu0 0
      %4808 = vmatprep.subr.bf16.mxu0 0
      %4809 = vmatpush1.bf16.msra.mxu0 0
      %4810 = vmatprep.subr.bf16.mxu0 0
      %4811 = vmatpush1.bf16.msra.mxu0 0
      %4812 = vmatprep.subr.bf16.mxu0 0
      %4813 = vmatpush1.bf16.msra.mxu0 0
      %4814 = vmatprep.subr.bf16.mxu0 0
      %4815 = vmatpush1.bf16.msra.mxu0 0
      %4816 = vmatprep.subr.bf16.mxu0 0
      %4817 = vmatpush1.bf16.msra.mxu0 0
      %4818 = vmatprep.subr.bf16.mxu0 0
      %4819 = vmatpush1.bf16.msra.mxu0 0
      %4820 = vmatprep.subr.bf16.mxu0 0
      %4821 = vmatpush1.bf16.msra.mxu0 0
      %4822 = vmatprep.subr.bf16.mxu0 0
      %4823 = vmatpush1.bf16.msra.mxu0 0
      %4824 = vmatprep.subr.bf16.mxu0 0
      %4825 = vmatpush1.bf16.msra.mxu0 0
      %4826 = vmatprep.subr.bf16.mxu0 0
      %4827 = vmatpush1.bf16.msra.mxu0 0
      %4828 = vmatprep.subr.bf16.mxu0 0
      %4829 = vmatpush1.bf16.msra.mxu0 0
      %4830 = vmatprep.subr.bf16.mxu0 0
      %4831 = vmatpush1.bf16.msra.mxu0 0
      %4832 = vmatprep.mubr.bf16.mxu0 0
      %4833 = vmatmul.mubr.bf16.gmra.mrb[0].mxu0 %v4730
      %v4834 = vpop.f32.mrb[0].mxu0
      %v4835 = vadd.f32 0.0, %v4834
      %v4836 = vpop.f32.mrb[0].mxu0
      %v4837 = vadd.f32 0.0, %v4836
      %v4838 = vpop.f32.mrb[0].mxu0
      %v4839 = vpop.f32.mrb[0].mxu0
      %4840 = vdwg.mxu0
      %4841 = vmatprep.subr.bf16.mxu0 %v4748
      %4842 = vmatpush1.bf16.msra.mxu0 %v4745
      %4843 = vmatprep.subr.bf16.mxu0 0
      %4844 = vmatpush1.bf16.msra.mxu0 0
      %4845 = vmatprep.subr.bf16.mxu0 0
      %4846 = vmatpush1.bf16.msra.mxu0 0
      %4847 = vmatprep.subr.bf16.mxu0 0
      %4848 = vmatpush1.bf16.msra.mxu0 0
      %4849 = vmatprep.subr.bf16.mxu0 0
      %4850 = vmatpush1.bf16.msra.mxu0 0
      %4851 = vmatprep.subr.bf16.mxu0 0
      %4852 = vmatpush1.bf16.msra.mxu0 0
      %4853 = vmatprep.subr.bf16.mxu0 0
      %4854 = vmatpush1.bf16.msra.mxu0 0
      %4855 = vmatprep.subr.bf16.mxu0 0
      %4856 = vmatpush1.bf16.msra.mxu0 0
      %4857 = vmatprep.subr.bf16.mxu0 0
      %4858 = vmatpush1.bf16.msra.mxu0 0
      %4859 = vmatprep.subr.bf16.mxu0 0
      %4860 = vmatpush1.bf16.msra.mxu0 0
      %4861 = vmatprep.subr.bf16.mxu0 0
      %4862 = vmatpush1.bf16.msra.mxu0 0
      %4863 = vmatprep.subr.bf16.mxu0 0
      %4864 = vmatpush1.bf16.msra.mxu0 0
      %4865 = vmatprep.subr.bf16.mxu0 0
      %4866 = vmatpush1.bf16.msra.mxu0 0
      %4867 = vmatprep.subr.bf16.mxu0 0
      %4868 = vmatpush1.bf16.msra.mxu0 0
      %4869 = vmatprep.subr.bf16.mxu0 0
      %4870 = vmatpush1.bf16.msra.mxu0 0
      %4871 = vmatprep.subr.bf16.mxu0 0
      %4872 = vmatpush1.bf16.msra.mxu0 0
      %4873 = vmatprep.mubr.bf16.mxu0 0
      %4874 = vmatmul.mubr.bf16.gmra.mrb[0].mxu0 %v4730
      %v4875 = vpop.f32.mrb[0].mxu0
      %v4876 = vadd.f32 0.0, %v4875
      %v4877 = vpop.f32.mrb[0].mxu0
      %v4878 = vadd.f32 0.0, %v4877
      %v4879 = vpop.f32.mrb[0].mxu0
      %v4880 = vpop.f32.mrb[0].mxu0
      %4881 = vdwg.mxu0
      %4882 = vmatprep.subr.bf16.mxu0 %v4754
      %4883 = vmatpush1.bf16.msra.mxu0 %v4751
      %4884 = vmatprep.subr.bf16.mxu0 0
      %4885 = vmatpush1.bf16.msra.mxu0 0
      %4886 = vmatprep.subr.bf16.mxu0 0
      %4887 = vmatpush1.bf16.msra.mxu0 0
      %4888 = vmatprep.subr.bf16.mxu0 0
      %4889 = vmatpush1.bf16.msra.mxu0 0
      %4890 = vmatprep.subr.bf16.mxu0 0
      %4891 = vmatpush1.bf16.msra.mxu0 0
      %4892 = vmatprep.subr.bf16.mxu0 0
      %4893 = vmatpush1.bf16.msra.mxu0 0
      %4894 = vmatprep.subr.bf16.mxu0 0
      %4895 = vmatpush1.bf16.msra.mxu0 0
      %4896 = vmatprep.subr.bf16.mxu0 0
      %4897 = vmatpush1.bf16.msra.mxu0 0
      %4898 = vmatprep.subr.bf16.mxu0 0
      %4899 = vmatpush1.bf16.msra.mxu0 0
      %4900 = vmatprep.subr.bf16.mxu0 0
      %4901 = vmatpush1.bf16.msra.mxu0 0
      %4902 = vmatprep.subr.bf16.mxu0 0
      %4903 = vmatpush1.bf16.msra.mxu0 0
      %4904 = vmatprep.subr.bf16.mxu0 0
      %4905 = vmatpush1.bf16.msra.mxu0 0
      %4906 = vmatprep.subr.bf16.mxu0 0
      %4907 = vmatpush1.bf16.msra.mxu0 0
      %4908 = vmatprep.subr.bf16.mxu0 0
      %4909 = vmatpush1.bf16.msra.mxu0 0
      %4910 = vmatprep.subr.bf16.mxu0 0
      %4911 = vmatpush1.bf16.msra.mxu0 0
      %4912 = vmatprep.subr.bf16.mxu0 0
      %4913 = vmatpush1.bf16.msra.mxu0 0
      %4914 = vmatprep.mubr.bf16.mxu0 0
      %4915 = vmatmul.mubr.bf16.gmra.mrb[0].mxu0 %v4730
      %v4916 = vpop.f32.mrb[0].mxu0
      %v4917 = vadd.f32 0.0, %v4916
      %v4918 = vpop.f32.mrb[0].mxu0
      %v4919 = vadd.f32 0.0, %v4918
      %v4920 = vpop.f32.mrb[0].mxu0
      %v4921 = vpop.f32.mrb[0].mxu0
      %4922 = vdwg.mxu0
      %4923 = vmatprep.subr.bf16.mxu0 0
      %4924 = vmatpush1.bf16.msra.mxu0 %v4757
      %4925 = vmatprep.subr.bf16.mxu0 0
      %4926 = vmatpush1.bf16.msra.mxu0 0
      %4927 = vmatprep.subr.bf16.mxu0 0
      %4928 = vmatpush1.bf16.msra.mxu0 0
      %4929 = vmatprep.subr.bf16.mxu0 0
      %4930 = vmatpush1.bf16.msra.mxu0 0
      %4931 = vmatprep.subr.bf16.mxu0 0
      %4932 = vmatpush1.bf16.msra.mxu0 0
      %4933 = vmatprep.subr.bf16.mxu0 0
      %4934 = vmatpush1.bf16.msra.mxu0 0
      %4935 = vmatprep.subr.bf16.mxu0 0
      %4936 = vmatpush1.bf16.msra.mxu0 0
      %4937 = vmatprep.subr.bf16.mxu0 0
      %4938 = vmatpush1.bf16.msra.mxu0 0
      %4939 = vmatprep.subr.bf16.mxu0 0
      %4940 = vmatpush1.bf16.msra.mxu0 0
      %4941 = vmatprep.subr.bf16.mxu0 0
      %4942 = vmatpush1.bf16.msra.mxu0 0
      %4943 = vmatprep.subr.bf16.mxu0 0
      %4944 = vmatpush1.bf16.msra.mxu0 0
      %4945 = vmatprep.subr.bf16.mxu0 0
      %4946 = vmatpush1.bf16.msra.mxu0 0
      %4947 = vmatprep.subr.bf16.mxu0 0
      %4948 = vmatpush1.bf16.msra.mxu0 0
      %4949 = vmatprep.subr.bf16.mxu0 0
      %4950 = vmatpush1.bf16.msra.mxu0 0
      %4951 = vmatprep.subr.bf16.mxu0 0
      %4952 = vmatpush1.bf16.msra.mxu0 0
      %4953 = vmatprep.subr.bf16.mxu0 0
      %4954 = vmatpush1.bf16.msra.mxu0 0
      %4955 = vmatprep.mubr.bf16.mxu0 0
      %4956 = vmatmul.mubr.bf16.gmra.mrb[0].mxu0 %v4730
      %v4957 = vpop.f32.mrb[0].mxu0
      %v4958 = vadd.f32 0.0, %v4957
      %v4959 = vpop.f32.mrb[0].mxu0
      %v4960 = vpop.f32.mrb[0].mxu0
      %v4961 = vpop.f32.mrb[0].mxu0
      %4962 = vdwg.mxu0
      %v4963 = vadd.f32 %v4641, %v4794
      %v4964 = vadd.f32 %v4642, %v4796
      %v4965 = vadd.f32 %v4643, %v4835
      %v4966 = vadd.f32 %v4644, %v4837
      %v4967 = vadd.f32 %v4645, %v4876
      %v4968 = vadd.f32 %v4646, %v4878
      %v4969 = vadd.f32 %v4647, %v4917
      %v4970 = vadd.f32 %v4648, %v4919
      %v4971 = vadd.f32 %v4649, %v4958
      %v4972 = vld [vmem:[%s285] sm:$0xff]
      %v4973 = vld [vmem:[%s285 + $0x8] sm:$0xff]
      %v4974 = vld [vmem:[%s285 + $0x10] sm:$0xf]
      %s4975 = scalar_lea.vmem %s3, 28
      %v4976 = vld [vmem:[%s4975] sm:$0xf]
      %v4980 = vcombine.high %v4972, %v4972
      %v4982 = vunpack.c.l.s4 1983009808
      %v4983 = vunpack.c.0.s8 %v4982
      %v4984 = vlaneseq
      %v4985 = vshrl.u32 %v4984, 7
      %v4986 = vsub.s32 %v4983, %v4985
      %v4987 = vrot.slane %v4972, %v4986
      %v4989 = vunpack.c.l.s4 1983009808
      %v4990 = vunpack.c.0.s8 %v4989
      %v4991 = vlaneseq
      %v4992 = vshrl.u32 %v4991, 7
      %v4993 = vsub.s32 %v4990, %v4992
      %v4994 = vrot.slane %v4980, %v4993
      %v4995 = vcombine.high %v4987, %v4987
      %v4996 = vcombine.high %v4994, %v4994
      %v4997 = vcombine.high %v4973, %v4973
      %v4999 = vunpack.c.l.s4 1983009808
      %v5000 = vunpack.c.0.s8 %v4999
      %v5001 = vlaneseq
      %v5002 = vshrl.u32 %v5001, 7
      %v5003 = vsub.s32 %v5000, %v5002
      %v5004 = vrot.slane %v4973, %v5003
      %v5006 = vunpack.c.l.s4 1983009808
      %v5007 = vunpack.c.0.s8 %v5006
      %v5008 = vlaneseq
      %v5009 = vshrl.u32 %v5008, 7
      %v5010 = vsub.s32 %v5007, %v5009
      %v5011 = vrot.slane %v4997, %v5010
      %v5012 = vcombine.high %v5004, %v5004
      %v5013 = vcombine.high %v5011, %v5011
      %v5015 = vunpack.c.l.s4 1983009808
      %v5016 = vunpack.c.0.s8 %v5015
      %v5017 = vlaneseq
      %v5018 = vshrl.u32 %v5017, 7
      %v5019 = vsub.s32 %v5016, %v5018
      %v5020 = vrot.slane %v4974, %v5019
      %v5021 = vcombine.high %v5020, %v5020
      %5022 = vrot.lane.b32.xlu0 %v4987, 59
      %v5023 = vpop.permute.xlu0 %5022
      %5024 = vrot.lane.b32.xlu0 %v4995, 59
      %v5025 = vpop.permute.xlu0 %5024
      %5026 = vrot.lane.b32.xlu0 %v4994, 59
      %v5027 = vpop.permute.xlu0 %5026
      %5028 = vrot.lane.b32.xlu0 %v4996, 59
      %v5029 = vpop.permute.xlu0 %5028
      %5030 = vrot.lane.b32.xlu0 %v5004, 59
      %v5031 = vpop.permute.xlu0 %5030
      %5032 = vrot.lane.b32.xlu0 %v5012, 59
      %v5033 = vpop.permute.xlu0 %5032
      %5034 = vrot.lane.b32.xlu0 %v5011, 59
      %v5035 = vpop.permute.xlu0 %5034
      %5036 = vrot.lane.b32.xlu0 %v5013, 59
      %v5037 = vpop.permute.xlu0 %5036
      %5038 = vrot.lane.b32.xlu0 %v5020, 59
      %v5039 = vpop.permute.xlu0 %5038
      %5040 = vrot.lane.b32.xlu0 %v5021, 59
      %v5041 = vpop.permute.xlu0 %5040
      %v5042 = vsel %vm2239, %v5023, %v5025
      %v5043 = vsel %vm2239, %v5025, %v5027
      %v5044 = vsel %vm2239, %v5027, %v5029
      %v5045 = vsel %vm2239, %v5029, %v5031
      %v5046 = vsel %vm2239, %v5031, %v5033
      %v5047 = vsel %vm2239, %v5033, %v5035
      %v5048 = vsel %vm2239, %v5035, %v5037
      %v5049 = vsel %vm2239, %v5037, %v5039
      %v5050 = vsel %vm2239, %v5039, %v5041
      %v5052 = vsel %vm2815, %v4976, 0
      %v5055 = vsel %vm2819, %v5042, 0
      %v5058 = vsel %vm2819, %v5043, 0
      %v5061 = vsel %vm2819, %v5044, 0
      %v5064 = vsel %vm2819, %v5045, 0
      %v5067 = vsel %vm2819, %v5046, 0
      %v5070 = vsel %vm2819, %v5047, 0
      %v5073 = vsel %vm2819, %v5048, 0
      %v5076 = vsel %vm2819, %v5049, 0
      %v5079 = vsel %vm2819, %v5050, 0
      %5081 = vmatprep.subr.bf16.mxu0 %v5058
      %5082 = vmatpush1.bf16.msra.mxu0 %v5055
      %5083 = vmatprep.subr.bf16.mxu0 0
      %5084 = vmatpush1.bf16.msra.mxu0 0
      %5085 = vmatprep.subr.bf16.mxu0 0
      %5086 = vmatpush1.bf16.msra.mxu0 0
      %5087 = vmatprep.subr.bf16.mxu0 0
      %5088 = vmatpush1.bf16.msra.mxu0 0
      %5089 = vmatprep.subr.bf16.mxu0 0
      %5090 = vmatpush1.bf16.msra.mxu0 0
      %5091 = vmatprep.subr.bf16.mxu0 0
      %5092 = vmatpush1.bf16.msra.mxu0 0
      %5093 = vmatprep.subr.bf16.mxu0 0
      %5094 = vmatpush1.bf16.msra.mxu0 0
      %5095 = vmatprep.subr.bf16.mxu0 0
      %5096 = vmatpush1.bf16.msra.mxu0 0
      %5097 = vmatprep.subr.bf16.mxu0 0
      %5098 = vmatpush1.bf16.msra.mxu0 0
      %5099 = vmatprep.subr.bf16.mxu0 0
      %5100 = vmatpush1.bf16.msra.mxu0 0
      %5101 = vmatprep.subr.bf16.mxu0 0
      %5102 = vmatpush1.bf16.msra.mxu0 0
      %5103 = vmatprep.subr.bf16.mxu0 0
      %5104 = vmatpush1.bf16.msra.mxu0 0
      %5105 = vmatprep.subr.bf16.mxu0 0
      %5106 = vmatpush1.bf16.msra.mxu0 0
      %5107 = vmatprep.subr.bf16.mxu0 0
      %5108 = vmatpush1.bf16.msra.mxu0 0
      %5109 = vmatprep.subr.bf16.mxu0 0
      %5110 = vmatpush1.bf16.msra.mxu0 0
      %5111 = vmatprep.subr.bf16.mxu0 0
      %5112 = vmatpush1.bf16.msra.mxu0 0
      %5113 = vmatprep.mubr.bf16.mxu0 0
      %5114 = vmatmul.mubr.bf16.gmra.mrb[0].mxu0 %v5052
      %v5115 = vpop.f32.mrb[0].mxu0
      %v5116 = vadd.f32 0.0, %v5115
      %v5117 = vpop.f32.mrb[0].mxu0
      %v5118 = vadd.f32 0.0, %v5117
      %v5119 = vpop.f32.mrb[0].mxu0
      %v5120 = vpop.f32.mrb[0].mxu0
      %5121 = vdwg.mxu0
      %5122 = vmatprep.subr.bf16.mxu0 %v5064
      %5123 = vmatpush1.bf16.msra.mxu0 %v5061
      %5124 = vmatprep.subr.bf16.mxu0 0
      %5125 = vmatpush1.bf16.msra.mxu0 0
      %5126 = vmatprep.subr.bf16.mxu0 0
      %5127 = vmatpush1.bf16.msra.mxu0 0
      %5128 = vmatprep.subr.bf16.mxu0 0
      %5129 = vmatpush1.bf16.msra.mxu0 0
      %5130 = vmatprep.subr.bf16.mxu0 0
      %5131 = vmatpush1.bf16.msra.mxu0 0
      %5132 = vmatprep.subr.bf16.mxu0 0
      %5133 = vmatpush1.bf16.msra.mxu0 0
      %5134 = vmatprep.subr.bf16.mxu0 0
      %5135 = vmatpush1.bf16.msra.mxu0 0
      %5136 = vmatprep.subr.bf16.mxu0 0
      %5137 = vmatpush1.bf16.msra.mxu0 0
      %5138 = vmatprep.subr.bf16.mxu0 0
      %5139 = vmatpush1.bf16.msra.mxu0 0
      %5140 = vmatprep.subr.bf16.mxu0 0
      %5141 = vmatpush1.bf16.msra.mxu0 0
      %5142 = vmatprep.subr.bf16.mxu0 0
      %5143 = vmatpush1.bf16.msra.mxu0 0
      %5144 = vmatprep.subr.bf16.mxu0 0
      %5145 = vmatpush1.bf16.msra.mxu0 0
      %5146 = vmatprep.subr.bf16.mxu0 0
      %5147 = vmatpush1.bf16.msra.mxu0 0
      %5148 = vmatprep.subr.bf16.mxu0 0
      %5149 = vmatpush1.bf16.msra.mxu0 0
      %5150 = vmatprep.subr.bf16.mxu0 0
      %5151 = vmatpush1.bf16.msra.mxu0 0
      %5152 = vmatprep.subr.bf16.mxu0 0
      %5153 = vmatpush1.bf16.msra.mxu0 0
      %5154 = vmatprep.mubr.bf16.mxu0 0
      %5155 = vmatmul.mubr.bf16.gmra.mrb[0].mxu0 %v5052
      %v5156 = vpop.f32.mrb[0].mxu0
      %v5157 = vadd.f32 0.0, %v5156
      %v5158 = vpop.f32.mrb[0].mxu0
      %v5159 = vadd.f32 0.0, %v5158
      %v5160 = vpop.f32.mrb[0].mxu0
      %v5161 = vpop.f32.mrb[0].mxu0
      %5162 = vdwg.mxu0
      %5163 = vmatprep.subr.bf16.mxu0 %v5070
      %5164 = vmatpush1.bf16.msra.mxu0 %v5067
      %5165 = vmatprep.subr.bf16.mxu0 0
      %5166 = vmatpush1.bf16.msra.mxu0 0
      %5167 = vmatprep.subr.bf16.mxu0 0
      %5168 = vmatpush1.bf16.msra.mxu0 0
      %5169 = vmatprep.subr.bf16.mxu0 0
      %5170 = vmatpush1.bf16.msra.mxu0 0
      %5171 = vmatprep.subr.bf16.mxu0 0
      %5172 = vmatpush1.bf16.msra.mxu0 0
      %5173 = vmatprep.subr.bf16.mxu0 0
      %5174 = vmatpush1.bf16.msra.mxu0 0
      %5175 = vmatprep.subr.bf16.mxu0 0
      %5176 = vmatpush1.bf16.msra.mxu0 0
      %5177 = vmatprep.subr.bf16.mxu0 0
      %5178 = vmatpush1.bf16.msra.mxu0 0
      %5179 = vmatprep.subr.bf16.mxu0 0
      %5180 = vmatpush1.bf16.msra.mxu0 0
      %5181 = vmatprep.subr.bf16.mxu0 0
      %5182 = vmatpush1.bf16.msra.mxu0 0
      %5183 = vmatprep.subr.bf16.mxu0 0
      %5184 = vmatpush1.bf16.msra.mxu0 0
      %5185 = vmatprep.subr.bf16.mxu0 0
      %5186 = vmatpush1.bf16.msra.mxu0 0
      %5187 = vmatprep.subr.bf16.mxu0 0
      %5188 = vmatpush1.bf16.msra.mxu0 0
      %5189 = vmatprep.subr.bf16.mxu0 0
      %5190 = vmatpush1.bf16.msra.mxu0 0
      %5191 = vmatprep.subr.bf16.mxu0 0
      %5192 = vmatpush1.bf16.msra.mxu0 0
      %5193 = vmatprep.subr.bf16.mxu0 0
      %5194 = vmatpush1.bf16.msra.mxu0 0
      %5195 = vmatprep.mubr.bf16.mxu0 0
      %5196 = vmatmul.mubr.bf16.gmra.mrb[0].mxu0 %v5052
      %v5197 = vpop.f32.mrb[0].mxu0
      %v5198 = vadd.f32 0.0, %v5197
      %v5199 = vpop.f32.mrb[0].mxu0
      %v5200 = vadd.f32 0.0, %v5199
      %v5201 = vpop.f32.mrb[0].mxu0
      %v5202 = vpop.f32.mrb[0].mxu0
      %5203 = vdwg.mxu0
      %5204 = vmatprep.subr.bf16.mxu0 %v5076
      %5205 = vmatpush1.bf16.msra.mxu0 %v5073
      %5206 = vmatprep.subr.bf16.mxu0 0
      %5207 = vmatpush1.bf16.msra.mxu0 0
      %5208 = vmatprep.subr.bf16.mxu0 0
      %5209 = vmatpush1.bf16.msra.mxu0 0
      %5210 = vmatprep.subr.bf16.mxu0 0
      %5211 = vmatpush1.bf16.msra.mxu0 0
      %5212 = vmatprep.subr.bf16.mxu0 0
      %5213 = vmatpush1.bf16.msra.mxu0 0
      %5214 = vmatprep.subr.bf16.mxu0 0
      %5215 = vmatpush1.bf16.msra.mxu0 0
      %5216 = vmatprep.subr.bf16.mxu0 0
      %5217 = vmatpush1.bf16.msra.mxu0 0
      %5218 = vmatprep.subr.bf16.mxu0 0
      %5219 = vmatpush1.bf16.msra.mxu0 0
      %5220 = vmatprep.subr.bf16.mxu0 0
      %5221 = vmatpush1.bf16.msra.mxu0 0
      %5222 = vmatprep.subr.bf16.mxu0 0
      %5223 = vmatpush1.bf16.msra.mxu0 0
      %5224 = vmatprep.subr.bf16.mxu0 0
      %5225 = vmatpush1.bf16.msra.mxu0 0
      %5226 = vmatprep.subr.bf16.mxu0 0
      %5227 = vmatpush1.bf16.msra.mxu0 0
      %5228 = vmatprep.subr.bf16.mxu0 0
      %5229 = vmatpush1.bf16.msra.mxu0 0
      %5230 = vmatprep.subr.bf16.mxu0 0
      %5231 = vmatpush1.bf16.msra.mxu0 0
      %5232 = vmatprep.subr.bf16.mxu0 0
      %5233 = vmatpush1.bf16.msra.mxu0 0
      %5234 = vmatprep.subr.bf16.mxu0 0
      %5235 = vmatpush1.bf16.msra.mxu0 0
      %5236 = vmatprep.mubr.bf16.mxu0 0
      %5237 = vmatmul.mubr.bf16.gmra.mrb[0].mxu0 %v5052
      %v5238 = vpop.f32.mrb[0].mxu0
      %v5239 = vadd.f32 0.0, %v5238
      %v5240 = vpop.f32.mrb[0].mxu0
      %v5241 = vadd.f32 0.0, %v5240
      %v5242 = vpop.f32.mrb[0].mxu0
      %v5243 = vpop.f32.mrb[0].mxu0
      %5244 = vdwg.mxu0
      %5245 = vmatprep.subr.bf16.mxu0 0
      %5246 = vmatpush1.bf16.msra.mxu0 %v5079
      %5247 = vmatprep.subr.bf16.mxu0 0
      %5248 = vmatpush1.bf16.msra.mxu0 0
      %5249 = vmatprep.subr.bf16.mxu0 0
      %5250 = vmatpush1.bf16.msra.mxu0 0
      %5251 = vmatprep.subr.bf16.mxu0 0
      %5252 = vmatpush1.bf16.msra.mxu0 0
      %5253 = vmatprep.subr.bf16.mxu0 0
      %5254 = vmatpush1.bf16.msra.mxu0 0
      %5255 = vmatprep.subr.bf16.mxu0 0
      %5256 = vmatpush1.bf16.msra.mxu0 0
      %5257 = vmatprep.subr.bf16.mxu0 0
      %5258 = vmatpush1.bf16.msra.mxu0 0
      %5259 = vmatprep.subr.bf16.mxu0 0
      %5260 = vmatpush1.bf16.msra.mxu0 0
      %5261 = vmatprep.subr.bf16.mxu0 0
      %5262 = vmatpush1.bf16.msra.mxu0 0
      %5263 = vmatprep.subr.bf16.mxu0 0
      %5264 = vmatpush1.bf16.msra.mxu0 0
      %5265 = vmatprep.subr.bf16.mxu0 0
      %5266 = vmatpush1.bf16.msra.mxu0 0
      %5267 = vmatprep.subr.bf16.mxu0 0
      %5268 = vmatpush1.bf16.msra.mxu0 0
      %5269 = vmatprep.subr.bf16.mxu0 0
      %5270 = vmatpush1.bf16.msra.mxu0 0
      %5271 = vmatprep.subr.bf16.mxu0 0
      %5272 = vmatpush1.bf16.msra.mxu0 0
      %5273 = vmatprep.subr.bf16.mxu0 0
      %5274 = vmatpush1.bf16.msra.mxu0 0
      %5275 = vmatprep.subr.bf16.mxu0 0
      %5276 = vmatpush1.bf16.msra.mxu0 0
      %5277 = vmatprep.mubr.bf16.mxu0 0
      %5278 = vmatmul.mubr.bf16.gmra.mrb[0].mxu0 %v5052
      %v5279 = vpop.f32.mrb[0].mxu0
      %v5280 = vadd.f32 0.0, %v5279
      %v5281 = vpop.f32.mrb[0].mxu0
      %v5282 = vpop.f32.mrb[0].mxu0
      %v5283 = vpop.f32.mrb[0].mxu0
      %5284 = vdwg.mxu0
      %v5285 = vadd.f32 %v4963, %v5116
      %v5286 = vadd.f32 %v4964, %v5118
      %v5287 = vadd.f32 %v4965, %v5157
      %v5288 = vadd.f32 %v4966, %v5159
      %v5289 = vadd.f32 %v4967, %v5198
      %v5290 = vadd.f32 %v4968, %v5200
      %v5291 = vadd.f32 %v4969, %v5239
      %v5292 = vadd.f32 %v4970, %v5241
      %v5293 = vadd.f32 %v4971, %v5280
      %v5294 = vld [vmem:[%s285] sm:$0xff]
      %v5295 = vld [vmem:[%s285 + $0x8] sm:$0xff]
      %v5296 = vld [vmem:[%s285 + $0x10] sm:$0xf]
      %s5297 = scalar_lea.vmem %s3, 32
      %v5298 = vld [vmem:[%s5297] sm:$0xf]
      %v5302 = vcombine.high %v5294, %v5294
      %v5304 = vunpack.c.l.s4 1983009808
      %v5305 = vunpack.c.0.s8 %v5304
      %v5306 = vlaneseq
      %v5307 = vshrl.u32 %v5306, 7
      %v5308 = vsub.s32 %v5305, %v5307
      %v5309 = vrot.slane %v5294, %v5308
      %v5311 = vunpack.c.l.s4 1983009808
      %v5312 = vunpack.c.0.s8 %v5311
      %v5313 = vlaneseq
      %v5314 = vshrl.u32 %v5313, 7
      %v5315 = vsub.s32 %v5312, %v5314
      %v5316 = vrot.slane %v5302, %v5315
      %v5317 = vcombine.high %v5309, %v5309
      %v5318 = vcombine.high %v5316, %v5316
      %v5319 = vcombine.high %v5295, %v5295
      %v5321 = vunpack.c.l.s4 1983009808
      %v5322 = vunpack.c.0.s8 %v5321
      %v5323 = vlaneseq
      %v5324 = vshrl.u32 %v5323, 7
      %v5325 = vsub.s32 %v5322, %v5324
      %v5326 = vrot.slane %v5295, %v5325
      %v5328 = vunpack.c.l.s4 1983009808
      %v5329 = vunpack.c.0.s8 %v5328
      %v5330 = vlaneseq
      %v5331 = vshrl.u32 %v5330, 7
      %v5332 = vsub.s32 %v5329, %v5331
      %v5333 = vrot.slane %v5319, %v5332
      %v5334 = vcombine.high %v5326, %v5326
      %v5335 = vcombine.high %v5333, %v5333
      %v5337 = vunpack.c.l.s4 1983009808
      %v5338 = vunpack.c.0.s8 %v5337
      %v5339 = vlaneseq
      %v5340 = vshrl.u32 %v5339, 7
      %v5341 = vsub.s32 %v5338, %v5340
      %v5342 = vrot.slane %v5296, %v5341
      %v5343 = vcombine.high %v5342, %v5342
      %5344 = vrot.lane.b32.xlu0 %v5309, 58
      %v5345 = vpop.permute.xlu0 %5344
      %5346 = vrot.lane.b32.xlu0 %v5317, 58
      %v5347 = vpop.permute.xlu0 %5346
      %5348 = vrot.lane.b32.xlu0 %v5316, 58
      %v5349 = vpop.permute.xlu0 %5348
      %5350 = vrot.lane.b32.xlu0 %v5318, 58
      %v5351 = vpop.permute.xlu0 %5350
      %5352 = vrot.lane.b32.xlu0 %v5326, 58
      %v5353 = vpop.permute.xlu0 %5352
      %5354 = vrot.lane.b32.xlu0 %v5334, 58
      %v5355 = vpop.permute.xlu0 %5354
      %5356 = vrot.lane.b32.xlu0 %v5333, 58
      %v5357 = vpop.permute.xlu0 %5356
      %5358 = vrot.lane.b32.xlu0 %v5335, 58
      %v5359 = vpop.permute.xlu0 %5358
      %5360 = vrot.lane.b32.xlu0 %v5342, 58
      %v5361 = vpop.permute.xlu0 %5360
      %5362 = vrot.lane.b32.xlu0 %v5343, 58
      %v5363 = vpop.permute.xlu0 %5362
      %v5364 = vsel %vm2514, %v5345, %v5347
      %v5365 = vsel %vm2514, %v5347, %v5349
      %v5366 = vsel %vm2514, %v5349, %v5351
      %v5367 = vsel %vm2514, %v5351, %v5353
      %v5368 = vsel %vm2514, %v5353, %v5355
      %v5369 = vsel %vm2514, %v5355, %v5357
      %v5370 = vsel %vm2514, %v5357, %v5359
      %v5371 = vsel %vm2514, %v5359, %v5361
      %v5372 = vsel %vm2514, %v5361, %v5363
      %v5374 = vsel %vm2815, %v5298, 0
      %v5377 = vsel %vm2819, %v5364, 0
      %v5380 = vsel %vm2819, %v5365, 0
      %v5383 = vsel %vm2819, %v5366, 0
      %v5386 = vsel %vm2819, %v5367, 0
      %v5389 = vsel %vm2819, %v5368, 0
      %v5392 = vsel %vm2819, %v5369, 0
      %v5395 = vsel %vm2819, %v5370, 0
      %v5398 = vsel %vm2819, %v5371, 0
      %v5401 = vsel %vm2819, %v5372, 0
      %5403 = vmatprep.subr.bf16.mxu0 %v5380
      %5404 = vmatpush1.bf16.msra.mxu0 %v5377
      %5405 = vmatprep.subr.bf16.mxu0 0
      %5406 = vmatpush1.bf16.msra.mxu0 0
      %5407 = vmatprep.subr.bf16.mxu0 0
      %5408 = vmatpush1.bf16.msra.mxu0 0
      %5409 = vmatprep.subr.bf16.mxu0 0
      %5410 = vmatpush1.bf16.msra.mxu0 0
      %5411 = vmatprep.subr.bf16.mxu0 0
      %5412 = vmatpush1.bf16.msra.mxu0 0
      %5413 = vmatprep.subr.bf16.mxu0 0
      %5414 = vmatpush1.bf16.msra.mxu0 0
      %5415 = vmatprep.subr.bf16.mxu0 0
      %5416 = vmatpush1.bf16.msra.mxu0 0
      %5417 = vmatprep.subr.bf16.mxu0 0
      %5418 = vmatpush1.bf16.msra.mxu0 0
      %5419 = vmatprep.subr.bf16.mxu0 0
      %5420 = vmatpush1.bf16.msra.mxu0 0
      %5421 = vmatprep.subr.bf16.mxu0 0
      %5422 = vmatpush1.bf16.msra.mxu0 0
      %5423 = vmatprep.subr.bf16.mxu0 0
      %5424 = vmatpush1.bf16.msra.mxu0 0
      %5425 = vmatprep.subr.bf16.mxu0 0
      %5426 = vmatpush1.bf16.msra.mxu0 0
      %5427 = vmatprep.subr.bf16.mxu0 0
      %5428 = vmatpush1.bf16.msra.mxu0 0
      %5429 = vmatprep.subr.bf16.mxu0 0
      %5430 = vmatpush1.bf16.msra.mxu0 0
      %5431 = vmatprep.subr.bf16.mxu0 0
      %5432 = vmatpush1.bf16.msra.mxu0 0
      %5433 = vmatprep.subr.bf16.mxu0 0
      %5434 = vmatpush1.bf16.msra.mxu0 0
      %5435 = vmatprep.mubr.bf16.mxu0 0
      %5436 = vmatmul.mubr.bf16.gmra.mrb[0].mxu0 %v5374
      %v5437 = vpop.f32.mrb[0].mxu0
      %v5438 = vadd.f32 0.0, %v5437
      %v5439 = vpop.f32.mrb[0].mxu0
      %v5440 = vadd.f32 0.0, %v5439
      %v5441 = vpop.f32.mrb[0].mxu0
      %v5442 = vpop.f32.mrb[0].mxu0
      %5443 = vdwg.mxu0
      %5444 = vmatprep.subr.bf16.mxu0 %v5386
      %5445 = vmatpush1.bf16.msra.mxu0 %v5383
      %5446 = vmatprep.subr.bf16.mxu0 0
      %5447 = vmatpush1.bf16.msra.mxu0 0
      %5448 = vmatprep.subr.bf16.mxu0 0
      %5449 = vmatpush1.bf16.msra.mxu0 0
      %5450 = vmatprep.subr.bf16.mxu0 0
      %5451 = vmatpush1.bf16.msra.mxu0 0
      %5452 = vmatprep.subr.bf16.mxu0 0
      %5453 = vmatpush1.bf16.msra.mxu0 0
      %5454 = vmatprep.subr.bf16.mxu0 0
      %5455 = vmatpush1.bf16.msra.mxu0 0
      %5456 = vmatprep.subr.bf16.mxu0 0
      %5457 = vmatpush1.bf16.msra.mxu0 0
      %5458 = vmatprep.subr.bf16.mxu0 0
      %5459 = vmatpush1.bf16.msra.mxu0 0
      %5460 = vmatprep.subr.bf16.mxu0 0
      %5461 = vmatpush1.bf16.msra.mxu0 0
      %5462 = vmatprep.subr.bf16.mxu0 0
      %5463 = vmatpush1.bf16.msra.mxu0 0
      %5464 = vmatprep.subr.bf16.mxu0 0
      %5465 = vmatpush1.bf16.msra.mxu0 0
      %5466 = vmatprep.subr.bf16.mxu0 0
      %5467 = vmatpush1.bf16.msra.mxu0 0
      %5468 = vmatprep.subr.bf16.mxu0 0
      %5469 = vmatpush1.bf16.msra.mxu0 0
      %5470 = vmatprep.subr.bf16.mxu0 0
      %5471 = vmatpush1.bf16.msra.mxu0 0
      %5472 = vmatprep.subr.bf16.mxu0 0
      %5473 = vmatpush1.bf16.msra.mxu0 0
      %5474 = vmatprep.subr.bf16.mxu0 0
      %5475 = vmatpush1.bf16.msra.mxu0 0
      %5476 = vmatprep.mubr.bf16.mxu0 0
      %5477 = vmatmul.mubr.bf16.gmra.mrb[0].mxu0 %v5374
      %v5478 = vpop.f32.mrb[0].mxu0
      %v5479 = vadd.f32 0.0, %v5478
      %v5480 = vpop.f32.mrb[0].mxu0
      %v5481 = vadd.f32 0.0, %v5480
      %v5482 = vpop.f32.mrb[0].mxu0
      %v5483 = vpop.f32.mrb[0].mxu0
      %5484 = vdwg.mxu0
      %5485 = vmatprep.subr.bf16.mxu0 %v5392
      %5486 = vmatpush1.bf16.msra.mxu0 %v5389
      %5487 = vmatprep.subr.bf16.mxu0 0
      %5488 = vmatpush1.bf16.msra.mxu0 0
      %5489 = vmatprep.subr.bf16.mxu0 0
      %5490 = vmatpush1.bf16.msra.mxu0 0
      %5491 = vmatprep.subr.bf16.mxu0 0
      %5492 = vmatpush1.bf16.msra.mxu0 0
      %5493 = vmatprep.subr.bf16.mxu0 0
      %5494 = vmatpush1.bf16.msra.mxu0 0
      %5495 = vmatprep.subr.bf16.mxu0 0
      %5496 = vmatpush1.bf16.msra.mxu0 0
      %5497 = vmatprep.subr.bf16.mxu0 0
      %5498 = vmatpush1.bf16.msra.mxu0 0
      %5499 = vmatprep.subr.bf16.mxu0 0
      %5500 = vmatpush1.bf16.msra.mxu0 0
      %5501 = vmatprep.subr.bf16.mxu0 0
      %5502 = vmatpush1.bf16.msra.mxu0 0
      %5503 = vmatprep.subr.bf16.mxu0 0
      %5504 = vmatpush1.bf16.msra.mxu0 0
      %5505 = vmatprep.subr.bf16.mxu0 0
      %5506 = vmatpush1.bf16.msra.mxu0 0
      %5507 = vmatprep.subr.bf16.mxu0 0
      %5508 = vmatpush1.bf16.msra.mxu0 0
      %5509 = vmatprep.subr.bf16.mxu0 0
      %5510 = vmatpush1.bf16.msra.mxu0 0
      %5511 = vmatprep.subr.bf16.mxu0 0
      %5512 = vmatpush1.bf16.msra.mxu0 0
      %5513 = vmatprep.subr.bf16.mxu0 0
      %5514 = vmatpush1.bf16.msra.mxu0 0
      %5515 = vmatprep.subr.bf16.mxu0 0
      %5516 = vmatpush1.bf16.msra.mxu0 0
      %5517 = vmatprep.mubr.bf16.mxu0 0
      %5518 = vmatmul.mubr.bf16.gmra.mrb[0].mxu0 %v5374
      %v5519 = vpop.f32.mrb[0].mxu0
      %v5520 = vadd.f32 0.0, %v5519
      %v5521 = vpop.f32.mrb[0].mxu0
      %v5522 = vadd.f32 0.0, %v5521
      %v5523 = vpop.f32.mrb[0].mxu0
      %v5524 = vpop.f32.mrb[0].mxu0
      %5525 = vdwg.mxu0
      %5526 = vmatprep.subr.bf16.mxu0 %v5398
      %5527 = vmatpush1.bf16.msra.mxu0 %v5395
      %5528 = vmatprep.subr.bf16.mxu0 0
      %5529 = vmatpush1.bf16.msra.mxu0 0
      %5530 = vmatprep.subr.bf16.mxu0 0
      %5531 = vmatpush1.bf16.msra.mxu0 0
      %5532 = vmatprep.subr.bf16.mxu0 0
      %5533 = vmatpush1.bf16.msra.mxu0 0
      %5534 = vmatprep.subr.bf16.mxu0 0
      %5535 = vmatpush1.bf16.msra.mxu0 0
      %5536 = vmatprep.subr.bf16.mxu0 0
      %5537 = vmatpush1.bf16.msra.mxu0 0
      %5538 = vmatprep.subr.bf16.mxu0 0
      %5539 = vmatpush1.bf16.msra.mxu0 0
      %5540 = vmatprep.subr.bf16.mxu0 0
      %5541 = vmatpush1.bf16.msra.mxu0 0
      %5542 = vmatprep.subr.bf16.mxu0 0
      %5543 = vmatpush1.bf16.msra.mxu0 0
      %5544 = vmatprep.subr.bf16.mxu0 0
      %5545 = vmatpush1.bf16.msra.mxu0 0
      %5546 = vmatprep.subr.bf16.mxu0 0
      %5547 = vmatpush1.bf16.msra.mxu0 0
      %5548 = vmatprep.subr.bf16.mxu0 0
      %5549 = vmatpush1.bf16.msra.mxu0 0
      %5550 = vmatprep.subr.bf16.mxu0 0
      %5551 = vmatpush1.bf16.msra.mxu0 0
      %5552 = vmatprep.subr.bf16.mxu0 0
      %5553 = vmatpush1.bf16.msra.mxu0 0
      %5554 = vmatprep.subr.bf16.mxu0 0
      %5555 = vmatpush1.bf16.msra.mxu0 0
      %5556 = vmatprep.subr.bf16.mxu0 0
      %5557 = vmatpush1.bf16.msra.mxu0 0
      %5558 = vmatprep.mubr.bf16.mxu0 0
      %5559 = vmatmul.mubr.bf16.gmra.mrb[0].mxu0 %v5374
      %v5560 = vpop.f32.mrb[0].mxu0
      %v5561 = vadd.f32 0.0, %v5560
      %v5562 = vpop.f32.mrb[0].mxu0
      %v5563 = vadd.f32 0.0, %v5562
      %v5564 = vpop.f32.mrb[0].mxu0
      %v5565 = vpop.f32.mrb[0].mxu0
      %5566 = vdwg.mxu0
      %5567 = vmatprep.subr.bf16.mxu0 0
      %5568 = vmatpush1.bf16.msra.mxu0 %v5401
      %5569 = vmatprep.subr.bf16.mxu0 0
      %5570 = vmatpush1.bf16.msra.mxu0 0
      %5571 = vmatprep.subr.bf16.mxu0 0
      %5572 = vmatpush1.bf16.msra.mxu0 0
      %5573 = vmatprep.subr.bf16.mxu0 0
      %5574 = vmatpush1.bf16.msra.mxu0 0
      %5575 = vmatprep.subr.bf16.mxu0 0
      %5576 = vmatpush1.bf16.msra.mxu0 0
      %5577 = vmatprep.subr.bf16.mxu0 0
      %5578 = vmatpush1.bf16.msra.mxu0 0
      %5579 = vmatprep.subr.bf16.mxu0 0
      %5580 = vmatpush1.bf16.msra.mxu0 0
      %5581 = vmatprep.subr.bf16.mxu0 0
      %5582 = vmatpush1.bf16.msra.mxu0 0
      %5583 = vmatprep.subr.bf16.mxu0 0
      %5584 = vmatpush1.bf16.msra.mxu0 0
      %5585 = vmatprep.subr.bf16.mxu0 0
      %5586 = vmatpush1.bf16.msra.mxu0 0
      %5587 = vmatprep.subr.bf16.mxu0 0
      %5588 = vmatpush1.bf16.msra.mxu0 0
      %5589 = vmatprep.subr.bf16.mxu0 0
      %5590 = vmatpush1.bf16.msra.mxu0 0
      %5591 = vmatprep.subr.bf16.mxu0 0
      %5592 = vmatpush1.bf16.msra.mxu0 0
      %5593 = vmatprep.subr.bf16.mxu0 0
      %5594 = vmatpush1.bf16.msra.mxu0 0
      %5595 = vmatprep.subr.bf16.mxu0 0
      %5596 = vmatpush1.bf16.msra.mxu0 0
      %5597 = vmatprep.subr.bf16.mxu0 0
      %5598 = vmatpush1.bf16.msra.mxu0 0
      %5599 = vmatprep.mubr.bf16.mxu0 0
      %5600 = vmatmul.mubr.bf16.gmra.mrb[0].mxu0 %v5374
      %v5601 = vpop.f32.mrb[0].mxu0
      %v5602 = vadd.f32 0.0, %v5601
      %v5603 = vpop.f32.mrb[0].mxu0
      %v5604 = vpop.f32.mrb[0].mxu0
      %v5605 = vpop.f32.mrb[0].mxu0
      %5606 = vdwg.mxu0
      %v5607 = vadd.f32 %v5285, %v5438
      %v5608 = vadd.f32 %v5286, %v5440
      %v5609 = vadd.f32 %v5287, %v5479
      %v5610 = vadd.f32 %v5288, %v5481
      %v5611 = vadd.f32 %v5289, %v5520
      %v5612 = vadd.f32 %v5290, %v5522
      %v5613 = vadd.f32 %v5291, %v5561
      %v5614 = vadd.f32 %v5292, %v5563
      %v5615 = vadd.f32 %v5293, %v5602
      %v5616 = vld [vmem:[%s4] sm:$0xff]
      %5618 = vset.pattern.permute.xlu0 0
      %5619 = vperm.xlu0 %5618, %v5616
      %v5620 = vpop.permute.xlu0 %5619
      %v5622 = vadd.f32 %v5607, %v5620
      %v5623 = vadd.f32 %v5608, %v5620
      %v5624 = vadd.f32 %v5609, %v5620
      %v5625 = vadd.f32 %v5610, %v5620
      %v5626 = vadd.f32 %v5611, %v5620
      %v5627 = vadd.f32 %v5612, %v5620
      %v5628 = vadd.f32 %v5613, %v5620
      %v5629 = vadd.f32 %v5614, %v5620
      %v5630 = vadd.f32 %v5615, %v5620
      %vm5631 = vcmp.gt.f32.partialorder %v5622, 0.0
      %vm5632 = vcmp.gt.f32.partialorder %v5623, 0.0
      %vm5633 = vcmp.gt.f32.partialorder %v5624, 0.0
      %vm5634 = vcmp.gt.f32.partialorder %v5625, 0.0
      %vm5635 = vcmp.gt.f32.partialorder %v5626, 0.0
      %vm5636 = vcmp.gt.f32.partialorder %v5627, 0.0
      %vm5637 = vcmp.gt.f32.partialorder %v5628, 0.0
      %vm5638 = vcmp.gt.f32.partialorder %v5629, 0.0
      %vm5639 = vcmp.gt.f32.partialorder %v5630, 0.0
      %v5640 = vmin.f32 %v5622, 0.0
      %v5641 = vmin.f32 %v5623, 0.0
      %v5642 = vmin.f32 %v5624, 0.0
      %v5643 = vmin.f32 %v5625, 0.0
      %v5644 = vmin.f32 %v5626, 0.0
      %v5645 = vmin.f32 %v5627, 0.0
      %v5646 = vmin.f32 %v5628, 0.0
      %v5647 = vmin.f32 %v5629, 0.0
      %v5648 = vmin.f32 %v5630, 0.0
      %v5649 = vmul.f32 %v5640, 1.442695
      %v5650 = vpow.pop %v5649
      %v5651 = vmul.f32 %v5641, 1.442695
      %v5652 = vpow.pop %v5651
      %v5653 = vmul.f32 %v5642, 1.442695
      %v5654 = vpow.pop %v5653
      %v5655 = vmul.f32 %v5643, 1.442695
      %v5656 = vpow.pop %v5655
      %v5657 = vmul.f32 %v5644, 1.442695
      %v5658 = vpow.pop %v5657
      %v5659 = vmul.f32 %v5645, 1.442695
      %v5660 = vpow.pop %v5659
      %v5661 = vmul.f32 %v5646, 1.442695
      %v5662 = vpow.pop %v5661
      %v5663 = vmul.f32 %v5647, 1.442695
      %v5664 = vpow.pop %v5663
      %v5665 = vmul.f32 %v5648, 1.442695
      %v5666 = vpow.pop %v5665
      %v5667 = vsub.f32 %v5650, 1.0
      %v5668 = vsub.f32 %v5652, 1.0
      %v5669 = vsub.f32 %v5654, 1.0
      %v5670 = vsub.f32 %v5656, 1.0
      %v5671 = vsub.f32 %v5658, 1.0
      %v5672 = vsub.f32 %v5660, 1.0
      %v5673 = vsub.f32 %v5662, 1.0
      %v5674 = vsub.f32 %v5664, 1.0
      %v5675 = vsub.f32 %v5666, 1.0
      %v5676 = vsel %vm5631, %v5622, %v5667
      %v5677 = vsel %vm5632, %v5623, %v5668
      %v5678 = vsel %vm5633, %v5624, %v5669
      %v5679 = vsel %vm5634, %v5625, %v5670
      %v5680 = vsel %vm5635, %v5626, %v5671
      %v5681 = vsel %vm5636, %v5627, %v5672
      %v5682 = vsel %vm5637, %v5628, %v5673
      %v5683 = vsel %vm5638, %v5629, %v5674
      %v5684 = vsel %vm5639, %v5630, %v5675
      %5685 = vst [vmem:[%s294] sm:$0xff] %v5676
      %5686 = vst [vmem:[%s294 + $0x8] sm:$0xff] %v5677
      %5687 = vst [vmem:[%s294 + $0x10] sm:$0xff] %v5678
      %5688 = vst [vmem:[%s294 + $0x18] sm:$0xff] %v5679
      %5689 = vst [vmem:[%s294 + $0x20] sm:$0xff] %v5680
      %5690 = vst [vmem:[%s294 + $0x28] sm:$0xff] %v5681
      %5691 = vst [vmem:[%s294 + $0x30] sm:$0xff] %v5682
      %5692 = vst [vmem:[%s294 + $0x38] sm:$0xff] %v5683
      %vm5693 = vcmask 523264
      %5694 = vst.msk [vmem:[%s294 + $0x40] sm:$0xff] %vm5693, %v5684
      %p5695 = scmp.lt.s32.totalorder %s20, 1
      %s5696 = scalar_select %p5695, %s20, 1
      %p5697 = scmp.lt.s32.totalorder %s21, 0
      %s5698 = scalar_select %p5697, %s21, 0
      %s5699 = smul.addr %s5698, 9
      %s5700 = smul.addr %s5696, 9
      %s5701 = sadd.s32 %s5699, %s5700
      %s5702 = smul.addr %s5701, 8
      %s5703 = scalar_lea.vmem %s5, %s5702
      // Predicated region
      $region41: #{decoder_layer_forward.4} parent=39 // pred_check
        %p5704 = pneg %p167
      $region42: #{decoder_layer_forward.4} parent=39 // pred_check_branch
        %5706 = sbr.rel (%p5704) target = $region44
      $region43: #{decoder_layer_forward.4} parent=39 // pred_region
        _
      $region44: #{decoder_layer_forward.4} parent=39 // pred_fallthru
        _
    $region40: #{decoder_layer_forward.4} parent=5 // pred_fallthru
      _
    %p5707 = scmp.le.s32.totalorder 2, %s11
    // Predicated region
    $region45: #{decoder_layer_forward.4} parent=5 // pred_check
      %p5708 = pneg %p5707
    $region46: #{decoder_layer_forward.4} parent=5 // pred_check_branch
      %5710 = sbr.rel (%p5708) target = $region48
    $region47: #{decoder_layer_forward.4} parent=5 // pred_region
      %s5711 = ssub.s32 %s11, 2
      // Predicated region
      $region49: #{decoder_layer_forward.4} parent=47 // pred_check
        %p5712 = pneg %p173
      $region50: #{decoder_layer_forward.4} parent=47 // pred_check_branch
        %5714 = sbr.rel (%p5712) target = $region52
      $region51: #{decoder_layer_forward.4} parent=47 // pred_region
        %p5715 = scmp.lt.s32.totalorder %s22, 1
        %s5716 = scalar_select %p5715, %s22, 1
        %p5717 = scmp.lt.s32.totalorder %s23, 0
        %s5718 = scalar_select %p5717, %s23, 0
        %s5719 = smul.addr %s5718, 9
        %s5720 = smul.addr %s5716, 9
        %s5721 = sadd.s32 %s5719, %s5720
        %s5722 = smul.addr %s5721, 8
        %s5723 = scalar_lea.vmem %s5, %s5722
      $region52: #{decoder_layer_forward.4} parent=47 // pred_fallthru
        _
    $region48: #{decoder_layer_forward.4} parent=5 // pred_fallthru
      _
  $region6: #{decoder_layer_forward.4} parent=0 // loop_footer
    %s15 = sadd.s32 1, %s11
  $region7: #{decoder_layer_forward.4} parent=0 // loop_footer_branch
    %10 = sbr.rel target = $region3
  $region8: #{decoder_layer_forward.4} parent=0 // loop_exit
    _

</llo_original>
